<compile_context>
chip_gen: v6e
topology: v6e:2x2x1
jax: 0.10.0
libtpu: 0.0.40
codegen_flags: <defaults>
</compile_context>

<pallas_src>
import functools
import math

import jax
import jax.numpy as jnp
from jax.experimental import pallas as pl
from jax.experimental.pallas import tpu as pltpu

# Hyperparameters from the reference script (kept, but fewer tokens for demo).
EMBED_DIM = 256
FF_DIM = 512
NUM_HEADS = 4
NUM_LAYERS = 4
VOCAB_SIZE = 10000
MAX_SEQ_LEN = 64

HEAD_DIM = EMBED_DIM // NUM_HEADS
HEAD_PAD = max(128, HEAD_DIM)                  # per-head Q/K padded to 128 lanes
QKV_N = 2 * NUM_HEADS * HEAD_PAD + NUM_HEADS * EMBED_DIM   # fused QKV columns
OUT_TILE_N = 2048                              # vocab-projection tile (5 steps)
LN_EPS = 1e-5                                  # torch.nn.LayerNorm default

# The reference module applies plain softmax over the full sequence (no causal
# mask).  We match that literally; flip to True for causal GPT-2 semantics.
CAUSAL = False


# ---------------------------------------------------------------------------
# Pallas kernel 1: all transformer layers fused, grid = (batch, layer)
# ---------------------------------------------------------------------------
def fused_layers_kernel(x_ref, wqkv_ref, bqkv_ref, bv_ref,
                        g1_ref, be1_ref, w1_ref, b1_ref,
                        w2_ref, b2_ref, g2_ref, be2_ref,
                        o_ref, x_vmem,
                        *, nheads, head_dim, head_pad, causal):
    l = pl.program_id(1)
    S, E = x_vmem.shape

    # Load the embedded tokens into the resident activation scratch at layer 0.
    @pl.when(l == 0)
    def _():
        x_vmem[...] = x_ref[...]

    x = x_vmem[...]                                        # (S, E) f32 residual
    xb = x.astype(jnp.bfloat16)

    # Single fused QKV projection (bf16 x bf16 on the MXU, f32 accumulate).
    # NOTE: with S=16 rows the MXU is heavily row-underfilled on all
    # generations; batching more tokens per block is the real fix at scale.
    qkv = jnp.dot(xb, wqkv_ref[...],
                  preferred_element_type=jnp.float32) + bqkv_ref[...]

    koff = nheads * head_pad
    voff = 2 * nheads * head_pad
    scale = 1.0 / math.sqrt(head_dim)

    # Per-head attention: every slice is 128-lane aligned (heads padded to
    # 128 for Q/K, E-wide zero-masked blocks for V), and head outputs land in
    # disjoint columns of the (S, E) accumulator -- no concatenates/transposes.
    # TODO(synk): reference GQA omits num_groups; we use num_groups==num_heads
    # (standard multi-head attention) and fold heads back to (S, E) since the
    # reference's (B, H, S, hd) return cannot be added to the residual.
    attn = jnp.zeros((S, E), jnp.float32)
    for h in range(nheads):                                # static unroll, H=4
        q_h = qkv[:, h * head_pad:(h + 1) * head_pad].astype(jnp.bfloat16)
        k_h = qkv[:, koff + h * head_pad:koff + (h + 1) * head_pad].astype(jnp.bfloat16)
        v_h = qkv[:, voff + h * E:voff + (h + 1) * E].astype(jnp.bfloat16)
        s = jax.lax.dot_general(q_h, k_h, (((1,), (1,)), ((), ())),
                                preferred_element_type=jnp.float32) * scale
        if causal:
            row = jax.lax.broadcasted_iota(jnp.int32, (S, S), 0)
            col = jax.lax.broadcasted_iota(jnp.int32, (S, S), 1)
            s = jnp.where(col <= row, s, -jnp.inf)
        s = s - jnp.max(s, axis=-1, keepdims=True)
        p = jnp.exp(s)
        p = p * pl.reciprocal(jnp.sum(p, axis=-1, keepdims=True), approx=True)
        attn = attn + jnp.dot(p.astype(jnp.bfloat16), v_h,
                              preferred_element_type=jnp.float32)
    attn = attn + bv_ref[...]                              # value bias, once

    def layer_norm(h, gamma, beta):
        mu = jnp.mean(h, axis=-1, keepdims=True)
        var = jnp.mean((h - mu) ** 2, axis=-1, keepdims=True)
        return (h - mu) * jax.lax.rsqrt(var + LN_EPS) * gamma + beta

    # TODO(synk): no attention output projection (W_O) before the residual --
    # this matches the reference GroupQueryAttention, which has none.
    h1 = layer_norm(x + attn, g1_ref[...], be1_ref[...])

    ff = jnp.dot(h1.astype(jnp.bfloat16), w1_ref[...],
                 preferred_element_type=jnp.float32) + b1_ref[...]
    ff = jnp.maximum(ff, 0.0)
    ff = jnp.dot(ff.astype(jnp.bfloat16), w2_ref[...],
                 preferred_element_type=jnp.float32) + b2_ref[...]

    out = layer_norm(h1 + ff, g2_ref[...], be2_ref[...])

    x_vmem[...] = out                                      # carry to next layer
    o_ref[...] = out                                       # flushed when b changes


def run_layers(x2d, params, batch, seq):
    M, E = x2d.shape
    num_layers = params['wqkv'].shape[0]
    kernel = functools.partial(fused_layers_kernel, nheads=NUM_HEADS,
                               head_dim=HEAD_DIM, head_pad=HEAD_PAD,
                               causal=CAUSAL)

    row_spec = pl.BlockSpec((seq, E), lambda b, l: (b, 0))

    def wspec(shape):
        # Layer-stacked parameter: squeeze the leading layer axis, index by l.
        return pl.BlockSpec((None,) + shape,
                            lambda b, l: (l,) + (0,) * len(shape))

    return pl.pallas_call(
        kernel,
        out_shape=jax.ShapeDtypeStruct((M, E), jnp.float32),
        grid=(batch, num_layers),
        in_specs=[
            row_spec,
            wspec((E, QKV_N)),      # wqkv (bf16)
            wspec((1, QKV_N)),      # bqkv (f32, v-region zero)
            wspec((1, E)),          # bv
            wspec((1, E)),          # g1
            wspec((1, E)),          # be1
            wspec((E, FF_DIM)),     # w1 (bf16)
            wspec((1, FF_DIM)),     # b1
            wspec((FF_DIM, E)),     # w2 (bf16)
            wspec((1, E)),          # b2
            wspec((1, E)),          # g2
            wspec((1, E)),          # be2
        ],
        out_specs=row_spec,
        scratch_shapes=[pltpu.VMEM((seq, E), jnp.float32)],
        compiler_params=pltpu.CompilerParams(
            dimension_semantics=("parallel", "arbitrary"),
            vmem_limit_bytes=32 * 1024 * 1024),
    )(x2d, params['wqkv'], params['bqkv'], params['bv'],
      params['g1'], params['be1'], params['w1'], params['b1'],
      params['w2'], params['b2'], params['g2'], params['be2'])


# ---------------------------------------------------------------------------
# Pallas kernel 2: output projection to vocab, tiled over the (padded) vocab
# ---------------------------------------------------------------------------
def out_proj_kernel(x_ref, w_ref, b_ref, o_ref):
    o_ref[...] = (jnp.dot(x_ref[...], w_ref[...],
                          preferred_element_type=jnp.float32) + b_ref[...])


def out_projection(x2d_bf16, w_pad, b_pad, tile_n=OUT_TILE_N):
    M, E = x2d_bf16.shape
    Vp = w_pad.shape[1]
    return pl.pallas_call(
        out_proj_kernel,
        out_shape=jax.ShapeDtypeStruct((M, Vp), jnp.float32),
        grid=(Vp // tile_n,),
        in_specs=[
            pl.BlockSpec((M, E), lambda j: (0, 0)),
            pl.BlockSpec((E, tile_n), lambda j: (0, j)),
            pl.BlockSpec((1, tile_n), lambda j: (0, j)),
        ],
        out_specs=pl.BlockSpec((M, tile_n), lambda j: (0, j)),
        compiler_params=pltpu.CompilerParams(
            dimension_semantics=("parallel",),
            vmem_limit_bytes=32 * 1024 * 1024),
    )(x2d_bf16, w_pad, b_pad)


# ---------------------------------------------------------------------------
# Plain-JAX glue: embedding gather + rotary positional table
# ---------------------------------------------------------------------------
def rotary_positional_encoding(pos_weight, batch, seq):
    # pos_weight: (MAX_SEQ_LEN, EMBED_DIM // 2), uniform(-1, 1) per reference.
    positions = jnp.arange(seq)
    sin_emb = pos_weight[positions]                              # (S, E/2)
    # TODO(synk): reference takes cos of the whole rolled table (shape mismatch
    # with the batched sin term); we gather the rolled table at the positions.
    cos_emb = jnp.roll(pos_weight, shift=-1, axis=0)[positions]  # (S, E/2)
    rot = jnp.concatenate([jnp.sin(sin_emb), jnp.cos(cos_emb)], axis=-1)
    return jnp.broadcast_to(rot[None], (batch, seq, rot.shape[-1]))


def gpt2_forward(params, token_ids):
    B, S = token_ids.shape
    # TODO(synk): token-embedding gather stays in plain JAX glue.
    x = params['embedding'][token_ids]                           # (B, S, E)
    # TODO(synk): reference forward calls the undefined self.positional_encoding
    # and would *replace* x; we use the standard additive interpretation.
    x = x + rotary_positional_encoding(params['pos_weight'], B, S)
    x2d = x.reshape(B * S, EMBED_DIM).astype(jnp.float32)
    x2d = run_layers(x2d, params, B, S)
    logits_p = out_projection(x2d.astype(jnp.bfloat16),
                              params['w_out_pad'], params['b_out_pad'])
    # Lazy consumer-side slice of the 240 padded vocab columns (cheap).
    return logits_p[:, :VOCAB_SIZE].reshape(B, S, VOCAB_SIZE)


# ---------------------------------------------------------------------------
# Deterministic parameter init (nn.Linear / nn.Embedding shapes) + packing
# ---------------------------------------------------------------------------
def _pack_heads_padded(w):
    # (E, E) -> (E, H*HEAD_PAD): each head's 64 columns at a 128-lane slot.
    w3 = w.reshape(EMBED_DIM, NUM_HEADS, HEAD_DIM)
    w3 = jnp.pad(w3, ((0, 0), (0, 0), (0, HEAD_PAD - HEAD_DIM)))
    return w3.reshape(EMBED_DIM, NUM_HEADS * HEAD_PAD)


def _pack_bias_padded(b):
    b2 = b.reshape(NUM_HEADS, HEAD_DIM)
    b2 = jnp.pad(b2, ((0, 0), (0, HEAD_PAD - HEAD_DIM)))
    return b2.reshape(NUM_HEADS * HEAD_PAD)


def _pack_v_wide(wv):
    # (E, E) -> (E, H*E): head h's value columns placed at columns
    # h*E + h*HEAD_DIM .. within an otherwise-zero E-wide block, so per-head
    # p @ v_wide outputs land in the correct residual columns and sum cleanly.
    blocks = []
    for h in range(NUM_HEADS):
        blk = jnp.zeros((EMBED_DIM, EMBED_DIM), jnp.float32)
        blk = blk.at[:, h * HEAD_DIM:(h + 1) * HEAD_DIM].set(
            wv[:, h * HEAD_DIM:(h + 1) * HEAD_DIM])
        blocks.append(blk)
    return jnp.concatenate(blocks, axis=1)


def init_params(key):
    keys = jax.random.split(key, NUM_LAYERS + 4)

    def lin(k, fan_in, shape):
        bound = 1.0 / math.sqrt(fan_in)
        return jax.random.uniform(k, shape, jnp.float32, -bound, bound)

    params = {
        'embedding': jax.random.normal(
            keys[0], (VOCAB_SIZE, EMBED_DIM), jnp.float32) * 0.02,
        'pos_weight': jax.random.uniform(
            keys[1], (MAX_SEQ_LEN, EMBED_DIM // 2), jnp.float32, -1.0, 1.0),
    }

    wqkv_l, bqkv_l, bv_l = [], [], []
    w1_l, b1_l, w2_l, b2_l = [], [], [], []
    for l in range(NUM_LAYERS):
        lk = jax.random.split(keys[2 + l], 10)
        wq = lin(lk[0], EMBED_DIM, (EMBED_DIM, EMBED_DIM))
        bq = lin(lk[1], EMBED_DIM, (EMBED_DIM,))
        wk = lin(lk[2], EMBED_DIM, (EMBED_DIM, EMBED_DIM))
        bk = lin(lk[3], EMBED_DIM, (EMBED_DIM,))
        wv = lin(lk[4], EMBED_DIM, (EMBED_DIM, EMBED_DIM))
        bv = lin(lk[5], EMBED_DIM, (EMBED_DIM,))
        w1 = lin(lk[6], EMBED_DIM, (EMBED_DIM, FF_DIM))
        b1 = lin(lk[7], EMBED_DIM, (FF_DIM,))
        w2 = lin(lk[8], FF_DIM, (FF_DIM, EMBED_DIM))
        b2 = lin(lk[9], FF_DIM, (EMBED_DIM,))

        wqkv_l.append(jnp.concatenate(
            [_pack_heads_padded(wq), _pack_heads_padded(wk), _pack_v_wide(wv)],
            axis=1))
        bqkv_l.append(jnp.concatenate(
            [_pack_bias_padded(bq), _pack_bias_padded(bk),
             jnp.zeros((NUM_HEADS * EMBED_DIM,), jnp.float32)]))
        bv_l.append(bv)
        w1_l.append(w1); b1_l.append(b1)
        w2_l.append(w2); b2_l.append(b2)

    params['wqkv'] = jnp.stack(wqkv_l).astype(jnp.bfloat16)       # (L, E, QKV_N)
    params['bqkv'] = jnp.stack(bqkv_l)[:, None, :]                # (L, 1, QKV_N)
    params['bv'] = jnp.stack(bv_l)[:, None, :]                    # (L, 1, E)
    params['g1'] = jnp.ones((NUM_LAYERS, 1, EMBED_DIM), jnp.float32)
    params['be1'] = jnp.zeros((NUM_LAYERS, 1, EMBED_DIM), jnp.float32)
    params['g2'] = jnp.ones((NUM_LAYERS, 1, EMBED_DIM), jnp.float32)
    params['be2'] = jnp.zeros((NUM_LAYERS, 1, EMBED_DIM), jnp.float32)
    params['w1'] = jnp.stack(w1_l).astype(jnp.bfloat16)           # (L, E, FF)
    params['b1'] = jnp.stack(b1_l)[:, None, :]                    # (L, 1, FF)
    params['w2'] = jnp.stack(w2_l).astype(jnp.bfloat16)           # (L, FF, E)
    params['b2'] = jnp.stack(b2_l)[:, None, :]                    # (L, 1, E)

    # Vocab projection: pre-pad once at init (no runtime pad) and store bf16.
    w_out = lin(keys[2 + NUM_LAYERS], EMBED_DIM, (EMBED_DIM, VOCAB_SIZE))
    b_out = lin(keys[3 + NUM_LAYERS], EMBED_DIM, (VOCAB_SIZE,))
    vp = pl.cdiv(VOCAB_SIZE, OUT_TILE_N) * OUT_TILE_N
    params['w_out_pad'] = jnp.pad(
        w_out, ((0, 0), (0, vp - VOCAB_SIZE))).astype(jnp.bfloat16)
    params['b_out_pad'] = jnp.pad(b_out, (0, vp - VOCAB_SIZE))[None, :]
    return params


if __name__ == "__main__":
    key = jax.random.PRNGKey(0)
    pkey, dkey = jax.random.split(key)
    params = init_params(pkey)

    B, S = 2, 16
    token_ids = jax.random.randint(dkey, (B, S), 0, VOCAB_SIZE)

    fwd = jax.jit(gpt2_forward)
    logits = fwd(params, token_ids)
    jax.block_until_ready(logits)
    assert logits.shape == (B, S, VOCAB_SIZE)
    assert bool(jnp.all(jnp.isfinite(logits)))
    print("KERNEL_OK")
</pallas_src>

<mosaic_0001>
module attributes {stable_mosaic.version = 11 : i64} {
  func.func @fused_layers_kernel(%arg0: i32, %arg1: i32, %arg2: memref<16x256xf32, #tpu.memory_space<vmem>>, %arg3: memref<1x256x2048xbf16, #tpu.memory_space<vmem>>, %arg4: memref<1x1x2048xf32, #tpu.memory_space<vmem>>, %arg5: memref<1x1x256xf32, #tpu.memory_space<vmem>>, %arg6: memref<1x1x256xf32, #tpu.memory_space<vmem>>, %arg7: memref<1x1x256xf32, #tpu.memory_space<vmem>>, %arg8: memref<1x256x512xbf16, #tpu.memory_space<vmem>>, %arg9: memref<1x1x512xf32, #tpu.memory_space<vmem>>, %arg10: memref<1x512x256xbf16, #tpu.memory_space<vmem>>, %arg11: memref<1x1x256xf32, #tpu.memory_space<vmem>>, %arg12: memref<1x1x256xf32, #tpu.memory_space<vmem>>, %arg13: memref<1x1x256xf32, #tpu.memory_space<vmem>>, %arg14: memref<16x256xf32, #tpu.memory_space<vmem>>, %arg15: memref<16x256xf32, #tpu.memory_space<vmem>>) attributes {dimension_semantics = [#tpu.dimension_semantics<parallel>, #tpu.dimension_semantics<arbitrary>], iteration_bounds = array<i64: 2, 4>, scalar_prefetch = 0 : i64, scratch_operands = 1 : i64, tpu.core_type = #tpu.core_type<tc>, window_params = [{transform_indices = @transform_0, window_bounds = array<i64: 16, 256>}, {transform_indices = @transform_1, window_bounds = array<i64: 1, 256, 2048>}, {transform_indices = @transform_2, window_bounds = array<i64: 1, 1, 2048>}, {transform_indices = @transform_3, window_bounds = array<i64: 1, 1, 256>}, {transform_indices = @transform_4, window_bounds = array<i64: 1, 1, 256>}, {transform_indices = @transform_5, window_bounds = array<i64: 1, 1, 256>}, {transform_indices = @transform_6, window_bounds = array<i64: 1, 256, 512>}, {transform_indices = @transform_7, window_bounds = array<i64: 1, 1, 512>}, {transform_indices = @transform_8, window_bounds = array<i64: 1, 512, 256>}, {transform_indices = @transform_9, window_bounds = array<i64: 1, 1, 256>}, {transform_indices = @transform_10, window_bounds = array<i64: 1, 1, 256>}, {transform_indices = @transform_11, window_bounds = array<i64: 1, 1, 256>}, {transform_indices = @transform_12, window_bounds = array<i64: 16, 256>}]} {
    %c0_i32 = arith.constant 0 : i32
    %0 = arith.cmpi eq, %arg1, %c0_i32 : i32
    %1 = arith.extui %0 : i1 to i32
    %c0_i32_0 = arith.constant 0 : i32
    %2 = arith.cmpi ne, %1, %c0_i32_0 : i32
    scf.if %2 {
      %c0_73 = arith.constant 0 : index
      %c0_74 = arith.constant 0 : index
      %179 = vector.load %arg2[%c0_73, %c0_74] : memref<16x256xf32, #tpu.memory_space<vmem>>, vector<16x256xf32>
      %c0_75 = arith.constant 0 : index
      %c0_76 = arith.constant 0 : index
      %180 = vector.load %arg15[%c0_75, %c0_76] : memref<16x256xf32, #tpu.memory_space<vmem>>, vector<16x256xf32>
      tpu.vector_store %arg15[%c0_75, %c0_76], %179 {strides = array<i32>} : memref<16x256xf32, #tpu.memory_space<vmem>>, vector<16x256xf32>,
    } else {
    }
    %c0 = arith.constant 0 : index
    %c0_1 = arith.constant 0 : index
    %3 = vector.load %arg15[%c0, %c0_1] : memref<16x256xf32, #tpu.memory_space<vmem>>, vector<16x256xf32>
    %4 = arith.truncf %3 : vector<16x256xf32> to vector<16x256xbf16>
    %c0_2 = arith.constant 0 : index
    %c0_3 = arith.constant 0 : index
    %c0_4 = arith.constant 0 : index
    %5 = vector.load %arg3[%c0_2, %c0_3, %c0_4] : memref<1x256x2048xbf16, #tpu.memory_space<vmem>>, vector<1x256x2048xbf16>
    %6 = vector.shape_cast %5 : vector<1x256x2048xbf16> to vector<256x2048xbf16>
    %cst = arith.constant dense<0.000000e+00> : vector<16x2048xf32>
    %7 = tpu.matmul %4, %6, %cst {dimension_numbers = #tpu.dot_dimension_numbers<[1], [0], [0], [1], [0, 0, 1, 1], [], []>} : vector<16x256xbf16>, vector<256x2048xbf16>, vector<16x2048xf32> -> vector<16x2048xf32>
    %c0_5 = arith.constant 0 : index
    %c0_6 = arith.constant 0 : index
    %c0_7 = arith.constant 0 : index
    %8 = vector.load %arg4[%c0_5, %c0_6, %c0_7] : memref<1x1x2048xf32, #tpu.memory_space<vmem>>, vector<1x1x2048xf32>
    %9 = vector.shape_cast %8 : vector<1x1x2048xf32> to vector<1x2048xf32>
    %10 = vector.broadcast %9 : vector<1x2048xf32> to vector<16x2048xf32>
    %11 = arith.addf %7, %10 : vector<16x2048xf32>
    %cst_8 = arith.constant 0.000000e+00 : f32
    %12 = vector.broadcast %cst_8 : f32 to vector<16x256xf32>
    %13 = vector.extract_strided_slice %11 {offsets = [0, 0], sizes = [16, 128], strides = [1, 1]} : vector<16x2048xf32> to vector<16x128xf32>
    %14 = arith.truncf %13 : vector<16x128xf32> to vector<16x128xbf16>
    %15 = vector.extract_strided_slice %11 {offsets = [0, 512], sizes = [16, 128], strides = [1, 1]} : vector<16x2048xf32> to vector<16x128xf32>
    %16 = arith.truncf %15 : vector<16x128xf32> to vector<16x128xbf16>
    %17 = vector.extract_strided_slice %11 {offsets = [0, 1024], sizes = [16, 256], strides = [1, 1]} : vector<16x2048xf32> to vector<16x256xf32>
    %18 = arith.truncf %17 : vector<16x256xf32> to vector<16x256xbf16>
    %cst_9 = arith.constant dense<0.000000e+00> : vector<16x16xf32>
    %19 = tpu.matmul %14, %16, %cst_9 {dimension_numbers = #tpu.dot_dimension_numbers<[1], [1], [0], [0], [0, 0, 1, 0], [], []>} : vector<16x128xbf16>, vector<16x128xbf16>, vector<16x16xf32> -> vector<16x16xf32>
    %cst_10 = arith.constant 1.250000e-01 : f32
    %20 = vector.broadcast %cst_10 : f32 to vector<16x16xf32>
    %21 = arith.mulf %19, %20 : vector<16x16xf32>
    %cst_11 = arith.constant dense<0xFF800000> : vector<16xf32>
    %22 = vector.multi_reduction <maximumf>, %21, %cst_11 [1] : vector<16x16xf32> to vector<16xf32>
    %23 = vector.shape_cast %22 : vector<16xf32> to vector<16x1xf32>
    %24 = vector.broadcast %23 : vector<16x1xf32> to vector<16x16xf32>
    %25 = arith.subf %21, %24 : vector<16x16xf32>
    %26 = math.exp %25 : vector<16x16xf32>
    %cst_12 = arith.constant dense<0.000000e+00> : vector<16xf32>
    %27 = vector.multi_reduction <add>, %26, %cst_12 [1] : vector<16x16xf32> to vector<16xf32>
    %28 = vector.shape_cast %27 : vector<16xf32> to vector<16x1xf32>
    %29 = tpu.reciprocal %28 {approx = true} : vector<16x1xf32> -> vector<16x1xf32>
    %30 = vector.broadcast %29 : vector<16x1xf32> to vector<16x16xf32>
    %31 = arith.mulf %26, %30 : vector<16x16xf32>
    %32 = arith.truncf %31 : vector<16x16xf32> to vector<16x16xbf16>
    %cst_13 = arith.constant dense<0.000000e+00> : vector<16x256xf32>
    %33 = tpu.matmul %32, %18, %cst_13 {dimension_numbers = #tpu.dot_dimension_numbers<[1], [0], [0], [1], [0, 0, 1, 1], [], []>} : vector<16x16xbf16>, vector<16x256xbf16>, vector<16x256xf32> -> vector<16x256xf32>
    %34 = arith.addf %12, %33 : vector<16x256xf32>
    %35 = vector.extract_strided_slice %11 {offsets = [0, 128], sizes = [16, 128], strides = [1, 1]} : vector<16x2048xf32> to vector<16x128xf32>
    %36 = arith.truncf %35 : vector<16x128xf32> to vector<16x128xbf16>
    %37 = vector.extract_strided_slice %11 {offsets = [0, 640], sizes = [16, 128], strides = [1, 1]} : vector<16x2048xf32> to vector<16x128xf32>
    %38 = arith.truncf %37 : vector<16x128xf32> to vector<16x128xbf16>
    %39 = vector.extract_strided_slice %11 {offsets = [0, 1280], sizes = [16, 256], strides = [1, 1]} : vector<16x2048xf32> to vector<16x256xf32>
    %40 = arith.truncf %39 : vector<16x256xf32> to vector<16x256xbf16>
    %cst_14 = arith.constant dense<0.000000e+00> : vector<16x16xf32>
    %41 = tpu.matmul %36, %38, %cst_14 {dimension_numbers = #tpu.dot_dimension_numbers<[1], [1], [0], [0], [0, 0, 1, 0], [], []>} : vector<16x128xbf16>, vector<16x128xbf16>, vector<16x16xf32> -> vector<16x16xf32>
    %cst_15 = arith.constant 1.250000e-01 : f32
    %42 = vector.broadcast %cst_15 : f32 to vector<16x16xf32>
    %43 = arith.mulf %41, %42 : vector<16x16xf32>
    %cst_16 = arith.constant dense<0xFF800000> : vector<16xf32>
    %44 = vector.multi_reduction <maximumf>, %43, %cst_16 [1] : vector<16x16xf32> to vector<16xf32>
    %45 = vector.shape_cast %44 : vector<16xf32> to vector<16x1xf32>
    %46 = vector.broadcast %45 : vector<16x1xf32> to vector<16x16xf32>
    %47 = arith.subf %43, %46 : vector<16x16xf32>
    %48 = math.exp %47 : vector<16x16xf32>
    %cst_17 = arith.constant dense<0.000000e+00> : vector<16xf32>
    %49 = vector.multi_reduction <add>, %48, %cst_17 [1] : vector<16x16xf32> to vector<16xf32>
    %50 = vector.shape_cast %49 : vector<16xf32> to vector<16x1xf32>
    %51 = tpu.reciprocal %50 {approx = true} : vector<16x1xf32> -> vector<16x1xf32>
    %52 = vector.broadcast %51 : vector<16x1xf32> to vector<16x16xf32>
    %53 = arith.mulf %48, %52 : vector<16x16xf32>
    %54 = arith.truncf %53 : vector<16x16xf32> to vector<16x16xbf16>
    %cst_18 = arith.constant dense<0.000000e+00> : vector<16x256xf32>
    %55 = tpu.matmul %54, %40, %cst_18 {dimension_numbers = #tpu.dot_dimension_numbers<[1], [0], [0], [1], [0, 0, 1, 1], [], []>} : vector<16x16xbf16>, vector<16x256xbf16>, vector<16x256xf32> -> vector<16x256xf32>
    %56 = arith.addf %34, %55 : vector<16x256xf32>
    %57 = vector.extract_strided_slice %11 {offsets = [0, 256], sizes = [16, 128], strides = [1, 1]} : vector<16x2048xf32> to vector<16x128xf32>
    %58 = arith.truncf %57 : vector<16x128xf32> to vector<16x128xbf16>
    %59 = vector.extract_strided_slice %11 {offsets = [0, 768], sizes = [16, 128], strides = [1, 1]} : vector<16x2048xf32> to vector<16x128xf32>
    %60 = arith.truncf %59 : vector<16x128xf32> to vector<16x128xbf16>
    %61 = vector.extract_strided_slice %11 {offsets = [0, 1536], sizes = [16, 256], strides = [1, 1]} : vector<16x2048xf32> to vector<16x256xf32>
    %62 = arith.truncf %61 : vector<16x256xf32> to vector<16x256xbf16>
    %cst_19 = arith.constant dense<0.000000e+00> : vector<16x16xf32>
    %63 = tpu.matmul %58, %60, %cst_19 {dimension_numbers = #tpu.dot_dimension_numbers<[1], [1], [0], [0], [0, 0, 1, 0], [], []>} : vector<16x128xbf16>, vector<16x128xbf16>, vector<16x16xf32> -> vector<16x16xf32>
    %cst_20 = arith.constant 1.250000e-01 : f32
    %64 = vector.broadcast %cst_20 : f32 to vector<16x16xf32>
    %65 = arith.mulf %63, %64 : vector<16x16xf32>
    %cst_21 = arith.constant dense<0xFF800000> : vector<16xf32>
    %66 = vector.multi_reduction <maximumf>, %65, %cst_21 [1] : vector<16x16xf32> to vector<16xf32>
    %67 = vector.shape_cast %66 : vector<16xf32> to vector<16x1xf32>
    %68 = vector.broadcast %67 : vector<16x1xf32> to vector<16x16xf32>
    %69 = arith.subf %65, %68 : vector<16x16xf32>
    %70 = math.exp %69 : vector<16x16xf32>
    %cst_22 = arith.constant dense<0.000000e+00> : vector<16xf32>
    %71 = vector.multi_reduction <add>, %70, %cst_22 [1] : vector<16x16xf32> to vector<16xf32>
    %72 = vector.shape_cast %71 : vector<16xf32> to vector<16x1xf32>
    %73 = tpu.reciprocal %72 {approx = true} : vector<16x1xf32> -> vector<16x1xf32>
    %74 = vector.broadcast %73 : vector<16x1xf32> to vector<16x16xf32>
    %75 = arith.mulf %70, %74 : vector<16x16xf32>
    %76 = arith.truncf %75 : vector<16x16xf32> to vector<16x16xbf16>
    %cst_23 = arith.constant dense<0.000000e+00> : vector<16x256xf32>
    %77 = tpu.matmul %76, %62, %cst_23 {dimension_numbers = #tpu.dot_dimension_numbers<[1], [0], [0], [1], [0, 0, 1, 1], [], []>} : vector<16x16xbf16>, vector<16x256xbf16>, vector<16x256xf32> -> vector<16x256xf32>
    %78 = arith.addf %56, %77 : vector<16x256xf32>
    %79 = vector.extract_strided_slice %11 {offsets = [0, 384], sizes = [16, 128], strides = [1, 1]} : vector<16x2048xf32> to vector<16x128xf32>
    %80 = arith.truncf %79 : vector<16x128xf32> to vector<16x128xbf16>
    %81 = vector.extract_strided_slice %11 {offsets = [0, 896], sizes = [16, 128], strides = [1, 1]} : vector<16x2048xf32> to vector<16x128xf32>
    %82 = arith.truncf %81 : vector<16x128xf32> to vector<16x128xbf16>
    %83 = vector.extract_strided_slice %11 {offsets = [0, 1792], sizes = [16, 256], strides = [1, 1]} : vector<16x2048xf32> to vector<16x256xf32>
    %84 = arith.truncf %83 : vector<16x256xf32> to vector<16x256xbf16>
    %cst_24 = arith.constant dense<0.000000e+00> : vector<16x16xf32>
    %85 = tpu.matmul %80, %82, %cst_24 {dimension_numbers = #tpu.dot_dimension_numbers<[1], [1], [0], [0], [0, 0, 1, 0], [], []>} : vector<16x128xbf16>, vector<16x128xbf16>, vector<16x16xf32> -> vector<16x16xf32>
    %cst_25 = arith.constant 1.250000e-01 : f32
    %86 = vector.broadcast %cst_25 : f32 to vector<16x16xf32>
    %87 = arith.mulf %85, %86 : vector<16x16xf32>
    %cst_26 = arith.constant dense<0xFF800000> : vector<16xf32>
    %88 = vector.multi_reduction <maximumf>, %87, %cst_26 [1] : vector<16x16xf32> to vector<16xf32>
    %89 = vector.shape_cast %88 : vector<16xf32> to vector<16x1xf32>
    %90 = vector.broadcast %89 : vector<16x1xf32> to vector<16x16xf32>
    %91 = arith.subf %87, %90 : vector<16x16xf32>
    %92 = math.exp %91 : vector<16x16xf32>
    %cst_27 = arith.constant dense<0.000000e+00> : vector<16xf32>
    %93 = vector.multi_reduction <add>, %92, %cst_27 [1] : vector<16x16xf32> to vector<16xf32>
    %94 = vector.shape_cast %93 : vector<16xf32> to vector<16x1xf32>
    %95 = tpu.reciprocal %94 {approx = true} : vector<16x1xf32> -> vector<16x1xf32>
    %96 = vector.broadcast %95 : vector<16x1xf32> to vector<16x16xf32>
    %97 = arith.mulf %92, %96 : vector<16x16xf32>
    %98 = arith.truncf %97 : vector<16x16xf32> to vector<16x16xbf16>
    %cst_28 = arith.constant dense<0.000000e+00> : vector<16x256xf32>
    %99 = tpu.matmul %98, %84, %cst_28 {dimension_numbers = #tpu.dot_dimension_numbers<[1], [0], [0], [1], [0, 0, 1, 1], [], []>} : vector<16x16xbf16>, vector<16x256xbf16>, vector<16x256xf32> -> vector<16x256xf32>
    %100 = arith.addf %78, %99 : vector<16x256xf32>
    %c0_29 = arith.constant 0 : index
    %c0_30 = arith.constant 0 : index
    %c0_31 = arith.constant 0 : index
    %101 = vector.load %arg5[%c0_29, %c0_30, %c0_31] : memref<1x1x256xf32, #tpu.memory_space<vmem>>, vector<1x1x256xf32>
    %102 = vector.shape_cast %101 : vector<1x1x256xf32> to vector<1x256xf32>
    %103 = vector.broadcast %102 : vector<1x256xf32> to vector<16x256xf32>
    %104 = arith.addf %100, %103 : vector<16x256xf32>
    %105 = arith.addf %3, %104 : vector<16x256xf32>
    %c0_32 = arith.constant 0 : index
    %c0_33 = arith.constant 0 : index
    %c0_34 = arith.constant 0 : index
    %106 = vector.load %arg6[%c0_32, %c0_33, %c0_34] : memref<1x1x256xf32, #tpu.memory_space<vmem>>, vector<1x1x256xf32>
    %107 = vector.shape_cast %106 : vector<1x1x256xf32> to vector<1x256xf32>
    %c0_35 = arith.constant 0 : index
    %c0_36 = arith.constant 0 : index
    %c0_37 = arith.constant 0 : index
    %108 = vector.load %arg7[%c0_35, %c0_36, %c0_37] : memref<1x1x256xf32, #tpu.memory_space<vmem>>, vector<1x1x256xf32>
    %109 = vector.shape_cast %108 : vector<1x1x256xf32> to vector<1x256xf32>
    %cst_38 = arith.constant dense<0.000000e+00> : vector<16xf32>
    %110 = vector.multi_reduction <add>, %105, %cst_38 [1] : vector<16x256xf32> to vector<16xf32>
    %111 = vector.shape_cast %110 : vector<16xf32> to vector<16x1xf32>
    %cst_39 = arith.constant 2.560000e+02 : f32
    %112 = vector.broadcast %cst_39 : f32 to vector<16x1xf32>
    %113 = arith.divf %111, %112 : vector<16x1xf32>
    %114 = vector.broadcast %113 : vector<16x1xf32> to vector<16x256xf32>
    %115 = arith.subf %105, %114 : vector<16x256xf32>
    %116 = arith.mulf %115, %115 : vector<16x256xf32>
    %cst_40 = arith.constant dense<0.000000e+00> : vector<16xf32>
    %117 = vector.multi_reduction <add>, %116, %cst_40 [1] : vector<16x256xf32> to vector<16xf32>
    %118 = vector.shape_cast %117 : vector<16xf32> to vector<16x1xf32>
    %cst_41 = arith.constant 2.560000e+02 : f32
    %119 = vector.broadcast %cst_41 : f32 to vector<16x1xf32>
    %120 = arith.divf %118, %119 : vector<16x1xf32>
    %121 = vector.broadcast %113 : vector<16x1xf32> to vector<16x256xf32>
    %122 = arith.subf %105, %121 : vector<16x256xf32>
    %cst_42 = arith.constant 9.99999974E-6 : f32
    %123 = vector.broadcast %cst_42 : f32 to vector<16x1xf32>
    %124 = arith.addf %120, %123 : vector<16x1xf32>
    %125 = math.rsqrt %124 : vector<16x1xf32>
    %126 = vector.broadcast %125 : vector<16x1xf32> to vector<16x256xf32>
    %127 = arith.mulf %122, %126 : vector<16x256xf32>
    %128 = vector.broadcast %107 : vector<1x256xf32> to vector<16x256xf32>
    %129 = arith.mulf %127, %128 : vector<16x256xf32>
    %130 = vector.broadcast %109 : vector<1x256xf32> to vector<16x256xf32>
    %131 = arith.addf %129, %130 : vector<16x256xf32>
    %132 = arith.truncf %131 : vector<16x256xf32> to vector<16x256xbf16>
    %c0_43 = arith.constant 0 : index
    %c0_44 = arith.constant 0 : index
    %c0_45 = arith.constant 0 : index
    %133 = vector.load %arg8[%c0_43, %c0_44, %c0_45] : memref<1x256x512xbf16, #tpu.memory_space<vmem>>, vector<1x256x512xbf16>
    %134 = vector.shape_cast %133 : vector<1x256x512xbf16> to vector<256x512xbf16>
    %cst_46 = arith.constant dense<0.000000e+00> : vector<16x512xf32>
    %135 = tpu.matmul %132, %134, %cst_46 {dimension_numbers = #tpu.dot_dimension_numbers<[1], [0], [0], [1], [0, 0, 1, 1], [], []>} : vector<16x256xbf16>, vector<256x512xbf16>, vector<16x512xf32> -> vector<16x512xf32>
    %c0_47 = arith.constant 0 : index
    %c0_48 = arith.constant 0 : index
    %c0_49 = arith.constant 0 : index
    %136 = vector.load %arg9[%c0_47, %c0_48, %c0_49] : memref<1x1x512xf32, #tpu.memory_space<vmem>>, vector<1x1x512xf32>
    %137 = vector.shape_cast %136 : vector<1x1x512xf32> to vector<1x512xf32>
    %138 = vector.broadcast %137 : vector<1x512xf32> to vector<16x512xf32>
    %139 = arith.addf %135, %138 : vector<16x512xf32>
    %cst_50 = arith.constant 0.000000e+00 : f32
    %140 = vector.broadcast %cst_50 : f32 to vector<16x512xf32>
    %141 = arith.maximumf %139, %140 : vector<16x512xf32>
    %142 = arith.truncf %141 : vector<16x512xf32> to vector<16x512xbf16>
    %c0_51 = arith.constant 0 : index
    %c0_52 = arith.constant 0 : index
    %c0_53 = arith.constant 0 : index
    %143 = vector.load %arg10[%c0_51, %c0_52, %c0_53] : memref<1x512x256xbf16, #tpu.memory_space<vmem>>, vector<1x512x256xbf16>
    %144 = vector.shape_cast %143 : vector<1x512x256xbf16> to vector<512x256xbf16>
    %cst_54 = arith.constant dense<0.000000e+00> : vector<16x256xf32>
    %145 = tpu.matmul %142, %144, %cst_54 {dimension_numbers = #tpu.dot_dimension_numbers<[1], [0], [0], [1], [0, 0, 1, 1], [], []>} : vector<16x512xbf16>, vector<512x256xbf16>, vector<16x256xf32> -> vector<16x256xf32>
    %c0_55 = arith.constant 0 : index
    %c0_56 = arith.constant 0 : index
    %c0_57 = arith.constant 0 : index
    %146 = vector.load %arg11[%c0_55, %c0_56, %c0_57] : memref<1x1x256xf32, #tpu.memory_space<vmem>>, vector<1x1x256xf32>
    %147 = vector.shape_cast %146 : vector<1x1x256xf32> to vector<1x256xf32>
    %148 = vector.broadcast %147 : vector<1x256xf32> to vector<16x256xf32>
    %149 = arith.addf %145, %148 : vector<16x256xf32>
    %150 = arith.addf %131, %149 : vector<16x256xf32>
    %c0_58 = arith.constant 0 : index
    %c0_59 = arith.constant 0 : index
    %c0_60 = arith.constant 0 : index
    %151 = vector.load %arg12[%c0_58, %c0_59, %c0_60] : memref<1x1x256xf32, #tpu.memory_space<vmem>>, vector<1x1x256xf32>
    %152 = vector.shape_cast %151 : vector<1x1x256xf32> to vector<1x256xf32>
    %c0_61 = arith.constant 0 : index
    %c0_62 = arith.constant 0 : index
    %c0_63 = arith.constant 0 : index
    %153 = vector.load %arg13[%c0_61, %c0_62, %c0_63] : memref<1x1x256xf32, #tpu.memory_space<vmem>>, vector<1x1x256xf32>
    %154 = vector.shape_cast %153 : vector<1x1x256xf32> to vector<1x256xf32>
    %cst_64 = arith.constant dense<0.000000e+00> : vector<16xf32>
    %155 = vector.multi_reduction <add>, %150, %cst_64 [1] : vector<16x256xf32> to vector<16xf32>
    %156 = vector.shape_cast %155 : vector<16xf32> to vector<16x1xf32>
    %cst_65 = arith.constant 2.560000e+02 : f32
    %157 = vector.broadcast %cst_65 : f32 to vector<16x1xf32>
    %158 = arith.divf %156, %157 : vector<16x1xf32>
    %159 = vector.broadcast %158 : vector<16x1xf32> to vector<16x256xf32>
    %160 = arith.subf %150, %159 : vector<16x256xf32>
    %161 = arith.mulf %160, %160 : vector<16x256xf32>
    %cst_66 = arith.constant dense<0.000000e+00> : vector<16xf32>
    %162 = vector.multi_reduction <add>, %161, %cst_66 [1] : vector<16x256xf32> to vector<16xf32>
    %163 = vector.shape_cast %162 : vector<16xf32> to vector<16x1xf32>
    %cst_67 = arith.constant 2.560000e+02 : f32
    %164 = vector.broadcast %cst_67 : f32 to vector<16x1xf32>
    %165 = arith.divf %163, %164 : vector<16x1xf32>
    %166 = vector.broadcast %158 : vector<16x1xf32> to vector<16x256xf32>
    %167 = arith.subf %150, %166 : vector<16x256xf32>
    %cst_68 = arith.constant 9.99999974E-6 : f32
    %168 = vector.broadcast %cst_68 : f32 to vector<16x1xf32>
    %169 = arith.addf %165, %168 : vector<16x1xf32>
    %170 = math.rsqrt %169 : vector<16x1xf32>
    %171 = vector.broadcast %170 : vector<16x1xf32> to vector<16x256xf32>
    %172 = arith.mulf %167, %171 : vector<16x256xf32>
    %173 = vector.broadcast %152 : vector<1x256xf32> to vector<16x256xf32>
    %174 = arith.mulf %172, %173 : vector<16x256xf32>
    %175 = vector.broadcast %154 : vector<1x256xf32> to vector<16x256xf32>
    %176 = arith.addf %174, %175 : vector<16x256xf32>
    %c0_69 = arith.constant 0 : index
    %c0_70 = arith.constant 0 : index
    %177 = vector.load %arg15[%c0_69, %c0_70] : memref<16x256xf32, #tpu.memory_space<vmem>>, vector<16x256xf32>
    tpu.vector_store %arg15[%c0_69, %c0_70], %176 {strides = array<i32>} : memref<16x256xf32, #tpu.memory_space<vmem>>, vector<16x256xf32>,
    %c0_71 = arith.constant 0 : index
    %c0_72 = arith.constant 0 : index
    %178 = vector.load %arg14[%c0_71, %c0_72] : memref<16x256xf32, #tpu.memory_space<vmem>>, vector<16x256xf32>
    tpu.vector_store %arg14[%c0_71, %c0_72], %176 {strides = array<i32>} : memref<16x256xf32, #tpu.memory_space<vmem>>, vector<16x256xf32>,
    return
  }
  func.func @transform_0(%arg0: i32, %arg1: i32) -> (i32, i32) {
    %c0_i32 = arith.constant 0 : i32
    %c0_i32_0 = arith.constant 0 : i32
    return %arg0, %c0_i32 : i32, i32
  }
  func.func @transform_1(%arg0: i32, %arg1: i32) -> (i32, i32, i32) {
    %c0_i32 = arith.constant 0 : i32
    %c0_i32_0 = arith.constant 0 : i32
    %c0_i32_1 = arith.constant 0 : i32
    return %arg1, %c0_i32, %c0_i32_0 : i32, i32, i32
  }
  func.func @transform_2(%arg0: i32, %arg1: i32) -> (i32, i32, i32) {
    %c0_i32 = arith.constant 0 : i32
    %c0_i32_0 = arith.constant 0 : i32
    %c0_i32_1 = arith.constant 0 : i32
    return %arg1, %c0_i32, %c0_i32_0 : i32, i32, i32
  }
  func.func @transform_3(%arg0: i32, %arg1: i32) -> (i32, i32, i32) {
    %c0_i32 = arith.constant 0 : i32
    %c0_i32_0 = arith.constant 0 : i32
    %c0_i32_1 = arith.constant 0 : i32
    return %arg1, %c0_i32, %c0_i32_0 : i32, i32, i32
  }
  func.func @transform_4(%arg0: i32, %arg1: i32) -> (i32, i32, i32) {
    %c0_i32 = arith.constant 0 : i32
    %c0_i32_0 = arith.constant 0 : i32
    %c0_i32_1 = arith.constant 0 : i32
    return %arg1, %c0_i32, %c0_i32_0 : i32, i32, i32
  }
  func.func @transform_5(%arg0: i32, %arg1: i32) -> (i32, i32, i32) {
    %c0_i32 = arith.constant 0 : i32
    %c0_i32_0 = arith.constant 0 : i32
    %c0_i32_1 = arith.constant 0 : i32
    return %arg1, %c0_i32, %c0_i32_0 : i32, i32, i32
  }
  func.func @transform_6(%arg0: i32, %arg1: i32) -> (i32, i32, i32) {
    %c0_i32 = arith.constant 0 : i32
    %c0_i32_0 = arith.constant 0 : i32
    %c0_i32_1 = arith.constant 0 : i32
    return %arg1, %c0_i32, %c0_i32_0 : i32, i32, i32
  }
  func.func @transform_7(%arg0: i32, %arg1: i32) -> (i32, i32, i32) {
    %c0_i32 = arith.constant 0 : i32
    %c0_i32_0 = arith.constant 0 : i32
    %c0_i32_1 = arith.constant 0 : i32
    return %arg1, %c0_i32, %c0_i32_0 : i32, i32, i32
  }
  func.func @transform_8(%arg0: i32, %arg1: i32) -> (i32, i32, i32) {
    %c0_i32 = arith.constant 0 : i32
    %c0_i32_0 = arith.constant 0 : i32
    %c0_i32_1 = arith.constant 0 : i32
    return %arg1, %c0_i32, %c0_i32_0 : i32, i32, i32
  }
  func.func @transform_9(%arg0: i32, %arg1: i32) -> (i32, i32, i32) {
    %c0_i32 = arith.constant 0 : i32
    %c0_i32_0 = arith.constant 0 : i32
    %c0_i32_1 = arith.constant 0 : i32
    return %arg1, %c0_i32, %c0_i32_0 : i32, i32, i32
  }
  func.func @transform_10(%arg0: i32, %arg1: i32) -> (i32, i32, i32) {
    %c0_i32 = arith.constant 0 : i32
    %c0_i32_0 = arith.constant 0 : i32
    %c0_i32_1 = arith.constant 0 : i32
    return %arg1, %c0_i32, %c0_i32_0 : i32, i32, i32
  }
  func.func @transform_11(%arg0: i32, %arg1: i32) -> (i32, i32, i32) {
    %c0_i32 = arith.constant 0 : i32
    %c0_i32_0 = arith.constant 0 : i32
    %c0_i32_1 = arith.constant 0 : i32
    return %arg1, %c0_i32, %c0_i32_0 : i32, i32, i32
  }
  func.func @transform_12(%arg0: i32, %arg1: i32) -> (i32, i32) {
    %c0_i32 = arith.constant 0 : i32
    %c0_i32_0 = arith.constant 0 : i32
    return %arg0, %c0_i32 : i32, i32
  }
}

module attributes {stable_mosaic.version = 11 : i64} {
  func.func @out_proj_kernel(%arg0: i32, %arg1: memref<32x256xbf16, #tpu.memory_space<vmem>>, %arg2: memref<256x2048xbf16, #tpu.memory_space<vmem>>, %arg3: memref<1x2048xf32, #tpu.memory_space<vmem>>, %arg4: memref<32x2048xf32, #tpu.memory_space<vmem>>) attributes {dimension_semantics = [#tpu.dimension_semantics<parallel>], iteration_bounds = array<i64: 5>, scalar_prefetch = 0 : i64, scratch_operands = 0 : i64, tpu.core_type = #tpu.core_type<tc>, window_params = [{pipeline_mode = #tpu.pipeline_mode<synchronous>, transform_indices = @transform_0, window_bounds = array<i64: 32, 256>}, {transform_indices = @transform_1, window_bounds = array<i64: 256, 2048>}, {transform_indices = @transform_2, window_bounds = array<i64: 1, 2048>}, {transform_indices = @transform_3, window_bounds = array<i64: 32, 2048>}]} {
    %c0 = arith.constant 0 : index
    %c0_0 = arith.constant 0 : index
    %0 = vector.load %arg1[%c0, %c0_0] : memref<32x256xbf16, #tpu.memory_space<vmem>>, vector<32x256xbf16>
    %c0_1 = arith.constant 0 : index
    %c0_2 = arith.constant 0 : index
    %1 = vector.load %arg2[%c0_1, %c0_2] : memref<256x2048xbf16, #tpu.memory_space<vmem>>, vector<256x2048xbf16>
    %cst = arith.constant dense<0.000000e+00> : vector<32x2048xf32>
    %2 = tpu.matmul %0, %1, %cst {dimension_numbers = #tpu.dot_dimension_numbers<[1], [0], [0], [1], [0, 0, 1, 1], [], []>} : vector<32x256xbf16>, vector<256x2048xbf16>, vector<32x2048xf32> -> vector<32x2048xf32>
    %c0_3 = arith.constant 0 : index
    %c0_4 = arith.constant 0 : index
    %3 = vector.load %arg3[%c0_3, %c0_4] : memref<1x2048xf32, #tpu.memory_space<vmem>>, vector<1x2048xf32>
    %4 = vector.broadcast %3 : vector<1x2048xf32> to vector<32x2048xf32>
    %5 = arith.addf %2, %4 : vector<32x2048xf32>
    %c0_5 = arith.constant 0 : index
    %c0_6 = arith.constant 0 : index
    %6 = vector.load %arg4[%c0_5, %c0_6] : memref<32x2048xf32, #tpu.memory_space<vmem>>, vector<32x2048xf32>
    tpu.vector_store %arg4[%c0_5, %c0_6], %5 {strides = array<i32>} : memref<32x2048xf32, #tpu.memory_space<vmem>>, vector<32x2048xf32>,
    return
  }
  func.func @transform_0(%arg0: i32) -> (i32, i32) {
    %c0_i32 = arith.constant 0 : i32
    %c0_i32_0 = arith.constant 0 : i32
    %c0_i32_1 = arith.constant 0 : i32
    return %c0_i32, %c0_i32_0 : i32, i32
  }
  func.func @transform_1(%arg0: i32) -> (i32, i32) {
    %c0_i32 = arith.constant 0 : i32
    %c0_i32_0 = arith.constant 0 : i32
    return %c0_i32, %arg0 : i32, i32
  }
  func.func @transform_2(%arg0: i32) -> (i32, i32) {
    %c0_i32 = arith.constant 0 : i32
    %c0_i32_0 = arith.constant 0 : i32
    return %c0_i32, %arg0 : i32, i32
  }
  func.func @transform_3(%arg0: i32) -> (i32, i32) {
    %c0_i32 = arith.constant 0 : i32
    %c0_i32_0 = arith.constant 0 : i32
    return %c0_i32, %arg0 : i32, i32
  }
}

</mosaic_0001>

<llo_original>
// kernel: sin.1
$region0: #{sin.1}
  #allocation0 [shape = 's32[1]{0}', space=sflag, size = 0x4, scoped, tag = 'scoped memory for sin.1']
  %s0 = inlined_call_operand.vmem [shape: f32[16,128], index: 0, kind: input, shape index: {}]
  %s1 = inlined_call_operand.vmem [shape: f32[16,128], index: 1, kind: output, shape index: {}]
  %v2 = vld [vmem:[%s0] sm:$0xff]
  %v3 = vand.u32 2147483647, %v2
  %vm4 = vcmp.le.f32.partialorder %v3, 0.7853982
  %vm5 = vcmp.lt.s32.totalorder %v2, 0
  %v6 = vand.u32 %v2, 2139095040
  %v7 = vshrl.u32 %v6, 23
  %v8 = vsub.s32 %v7, 127
  %v9 = vand.u32 2147483647, %v2
  %v10 = vand.u32 %v9, 8388607
  %v11 = vor.u32 %v10, 8388608
  %v12 = vsub.s32 0, %v11
  %v13 = vadd.s32 %v8, 1
  %vm14 = vcmp.gt.s32.totalorder %v13, 0
  %v15 = vsel %vm14, %v13, 0
  %v16 = vshrl.u32 %v15, 5
  %v17 = vand.u32 %v15, 31
  %v18 = vsub.s32 32, %v17
  %v19 = vshrl.u32 683565275, %v18
  %v20 = vshll.u32 683565275, %v17
  %v21 = vshrl.u32 2475754826, %v18
  %v22 = vor.u32 %v20, %v21
  %v23 = vshll.u32 2475754826, %v17
  %v24 = vshrl.u32 2131351028, %v18
  %v25 = vor.u32 %v23, %v24
  %v26 = vshll.u32 2131351028, %v17
  %v27 = vshrl.u32 2102212464, %v18
  %v28 = vor.u32 %v26, %v27
  %v29 = vshll.u32 2102212464, %v17
  %v30 = vshrl.u32 920167782, %v18
  %v31 = vor.u32 %v29, %v30
  %v32 = vshll.u32 920167782, %v17
  %v33 = vshrl.u32 1326507024, %v18
  %v34 = vor.u32 %v32, %v33
  %vm35 = vcmp.lt.s32.totalorder %v16, 1
  %vm36 = vcmp.lt.s32.totalorder %v16, 2
  %vm37 = vcmp.lt.s32.totalorder %v16, 3
  %vm38 = vcmp.lt.s32.totalorder %v16, 4
  %v39 = vsel %vm35, %v19, %v22
  %v40 = vsel %vm38, %v28, 2102212464
  %v41 = vsel %vm37, %v25, %v40
  %v42 = vsel %vm36, %v39, %v41
  %v43 = vsel %vm35, %v22, %v25
  %v44 = vsel %vm38, %v31, 920167782
  %v45 = vsel %vm37, %v28, %v44
  %v46 = vsel %vm36, %v43, %v45
  %v47 = vsel %vm35, %v25, %v28
  %v48 = vsel %vm38, %v34, 1326507024
  %v49 = vsel %vm37, %v31, %v48
  %v50 = vsel %vm36, %v47, %v49
  %v51 = vshll.u32 %v11, 8
  %v52 = vmul.u32.u64.compose %v51, %v50
  %v53 = vextract.low.u32 %v52
  %v54 = vextract.high.u32 %v52
  %v55 = vmul.u32.u64.compose %v51, %v46
  %v56 = vextract.low.u32 %v55
  %v57 = vextract.high.u32 %v55
  %v58 = vmul.u32 %v51, %v42
  %v59 = vadd.s32 %v54, %v56
  %vm60 = vc.u32 %v54, %v56
  %v61 = vadd.s32 %v57, 1
  %v62 = vsel %vm60, %v61, %v57
  %v63 = vadd.s32 %v58, %v62
  %v64 = vadd.s32 %v63, 536870912
  %v65 = vshrl.u32 %v64, 30
  %v66 = vshll.u32 %v65, 30
  %v67 = vsub.s32 %v63, %v66
  %vm68 = vcmp.lt.s32.totalorder %v67, 0
  %v69 = vsub.s32 0, %v67
  %v70 = vsel %vm68, %v69, %v67
  %v71 = vclz %v70
  %v72 = vsub.s32 %v71, 2
  %vm73 = vcmp.gt.s32.totalorder 0, %v72
  %v74 = vsel %vm73, 0, %v72
  %v75 = vsub.s32 32, %v74
  %v76 = vshll.u32 %v67, %v74
  %v77 = vshrl.u32 %v59, %v75
  %v78 = vor.u32 %v76, %v77
  %v79 = vsub.s32 4294967266, %v74
  %v80 = vadd.s32 %v79, 127
  %v81 = vshll.u32 %v80, 23
  %v82 = vor.u32 4788187, %v81
  %v83 = vand.u32 2147483647, %v82
  %v85 = vcvt.s32.f32 %v78
  %v86 = vmul.f32 %v85, %v83
  %v87 = vxor.u32 %v86, 2147483648
  %v88 = vsel %vm5, %v87, %v86
  %v89 = vsub.s32 4, %v65
  %v90 = vsel %vm5, %v89, %v65
  %v91 = vsel %vm4, %v2, %v88
  %v92 = vsel %vm4, 0, %v90
  %v93 = vcosq.f32.pop %v91
  %v94 = vsinq.f32.pop %v91
  %vm95 = vweird.f32 %v2
  %v96 = vadd.s32 %v92, 3
  %v97 = vand.u32 %v96, 3
  %vm98 = vcmp.lt.s32.totalorder %v97, 2
  %vm99 = vcmp.eq.s32.totalorder %v97, 0
  %v100 = vxor.u32 %v94, 2147483648
  %v101 = vsel %vm99, %v93, %v100
  %vm102 = vcmp.eq.s32.totalorder %v97, 2
  %v103 = vxor.u32 %v93, 2147483648
  %v104 = vsel %vm102, %v103, %v94
  %v105 = vsel %vm98, %v101, %v104
  %v106 = vsel %vm95, nan, %v105
  %107 = vst [vmem:[%s1] sm:$0xff] %v106
  %s108 = scalar_lea.vmem %s0, 8
  %v109 = vld [vmem:[%s108] sm:$0xff]
  %v110 = vand.u32 2147483647, %v109
  %vm111 = vcmp.le.f32.partialorder %v110, 0.7853982
  %vm112 = vcmp.lt.s32.totalorder %v109, 0
  %v113 = vand.u32 %v109, 2139095040
  %v114 = vshrl.u32 %v113, 23
  %v115 = vsub.s32 %v114, 127
  %v116 = vand.u32 2147483647, %v109
  %v117 = vand.u32 %v116, 8388607
  %v118 = vor.u32 %v117, 8388608
  %v119 = vsub.s32 0, %v118
  %v120 = vadd.s32 %v115, 1
  %vm121 = vcmp.gt.s32.totalorder %v120, 0
  %v122 = vsel %vm121, %v120, 0
  %v123 = vshrl.u32 %v122, 5
  %v124 = vand.u32 %v122, 31
  %v125 = vsub.s32 32, %v124
  %v126 = vshrl.u32 683565275, %v125
  %v127 = vshll.u32 683565275, %v124
  %v128 = vshrl.u32 2475754826, %v125
  %v129 = vor.u32 %v127, %v128
  %v130 = vshll.u32 2475754826, %v124
  %v131 = vshrl.u32 2131351028, %v125
  %v132 = vor.u32 %v130, %v131
  %v133 = vshll.u32 2131351028, %v124
  %v134 = vshrl.u32 2102212464, %v125
  %v135 = vor.u32 %v133, %v134
  %v136 = vshll.u32 2102212464, %v124
  %v137 = vshrl.u32 920167782, %v125
  %v138 = vor.u32 %v136, %v137
  %v139 = vshll.u32 920167782, %v124
  %v140 = vshrl.u32 1326507024, %v125
  %v141 = vor.u32 %v139, %v140
  %vm142 = vcmp.lt.s32.totalorder %v123, 1
  %vm143 = vcmp.lt.s32.totalorder %v123, 2
  %vm144 = vcmp.lt.s32.totalorder %v123, 3
  %vm145 = vcmp.lt.s32.totalorder %v123, 4
  %v146 = vsel %vm142, %v126, %v129
  %v147 = vsel %vm145, %v135, 2102212464
  %v148 = vsel %vm144, %v132, %v147
  %v149 = vsel %vm143, %v146, %v148
  %v150 = vsel %vm142, %v129, %v132
  %v151 = vsel %vm145, %v138, 920167782
  %v152 = vsel %vm144, %v135, %v151
  %v153 = vsel %vm143, %v150, %v152
  %v154 = vsel %vm142, %v132, %v135
  %v155 = vsel %vm145, %v141, 1326507024
  %v156 = vsel %vm144, %v138, %v155
  %v157 = vsel %vm143, %v154, %v156
  %v158 = vshll.u32 %v118, 8
  %v159 = vmul.u32.u64.compose %v158, %v157
  %v160 = vextract.low.u32 %v159
  %v161 = vextract.high.u32 %v159
  %v162 = vmul.u32.u64.compose %v158, %v153
  %v163 = vextract.low.u32 %v162
  %v164 = vextract.high.u32 %v162
  %v165 = vmul.u32 %v158, %v149
  %v166 = vadd.s32 %v161, %v163
  %vm167 = vc.u32 %v161, %v163
  %v168 = vadd.s32 %v164, 1
  %v169 = vsel %vm167, %v168, %v164
  %v170 = vadd.s32 %v165, %v169
  %v171 = vadd.s32 %v170, 536870912
  %v172 = vshrl.u32 %v171, 30
  %v173 = vshll.u32 %v172, 30
  %v174 = vsub.s32 %v170, %v173
  %vm175 = vcmp.lt.s32.totalorder %v174, 0
  %v176 = vsub.s32 0, %v174
  %v177 = vsel %vm175, %v176, %v174
  %v178 = vclz %v177
  %v179 = vsub.s32 %v178, 2
  %vm180 = vcmp.gt.s32.totalorder 0, %v179
  %v181 = vsel %vm180, 0, %v179
  %v182 = vsub.s32 32, %v181
  %v183 = vshll.u32 %v174, %v181
  %v184 = vshrl.u32 %v166, %v182
  %v185 = vor.u32 %v183, %v184
  %v186 = vsub.s32 4294967266, %v181
  %v187 = vadd.s32 %v186, 127
  %v188 = vshll.u32 %v187, 23
  %v189 = vor.u32 4788187, %v188
  %v190 = vand.u32 2147483647, %v189
  %v192 = vcvt.s32.f32 %v185
  %v193 = vmul.f32 %v192, %v190
  %v194 = vxor.u32 %v193, 2147483648
  %v195 = vsel %vm112, %v194, %v193
  %v196 = vsub.s32 4, %v172
  %v197 = vsel %vm112, %v196, %v172
  %v198 = vsel %vm111, %v109, %v195
  %v199 = vsel %vm111, 0, %v197
  %v200 = vcosq.f32.pop %v198
  %v201 = vsinq.f32.pop %v198
  %vm202 = vweird.f32 %v109
  %v203 = vadd.s32 %v199, 3
  %v204 = vand.u32 %v203, 3
  %vm205 = vcmp.lt.s32.totalorder %v204, 2
  %vm206 = vcmp.eq.s32.totalorder %v204, 0
  %v207 = vxor.u32 %v201, 2147483648
  %v208 = vsel %vm206, %v200, %v207
  %vm209 = vcmp.eq.s32.totalorder %v204, 2
  %v210 = vxor.u32 %v200, 2147483648
  %v211 = vsel %vm209, %v210, %v201
  %v212 = vsel %vm205, %v208, %v211
  %v213 = vsel %vm202, nan, %v212
  %s214 = scalar_lea.vmem %s1, 8
  %215 = vst [vmem:[%s214] sm:$0xff] %v213

// kernel: cos.1
$region0: #{cos.1}
  #allocation0 [shape = 's32[1]{0}', space=sflag, size = 0x4, scoped, tag = 'scoped memory for cos.1']
  %s0 = inlined_call_operand.vmem [shape: f32[16,128], index: 0, kind: input, shape index: {}]
  %s1 = inlined_call_operand.vmem [shape: f32[16,128], index: 1, kind: output, shape index: {}]
  %v2 = vld [vmem:[%s0] sm:$0xff]
  %v3 = vand.u32 2147483647, %v2
  %vm4 = vcmp.le.f32.partialorder %v3, 0.7853982
  %vm5 = vcmp.lt.s32.totalorder %v2, 0
  %v6 = vand.u32 %v2, 2139095040
  %v7 = vshrl.u32 %v6, 23
  %v8 = vsub.s32 %v7, 127
  %v9 = vand.u32 2147483647, %v2
  %v10 = vand.u32 %v9, 8388607
  %v11 = vor.u32 %v10, 8388608
  %v12 = vsub.s32 0, %v11
  %v13 = vadd.s32 %v8, 1
  %vm14 = vcmp.gt.s32.totalorder %v13, 0
  %v15 = vsel %vm14, %v13, 0
  %v16 = vshrl.u32 %v15, 5
  %v17 = vand.u32 %v15, 31
  %v18 = vsub.s32 32, %v17
  %v19 = vshrl.u32 683565275, %v18
  %v20 = vshll.u32 683565275, %v17
  %v21 = vshrl.u32 2475754826, %v18
  %v22 = vor.u32 %v20, %v21
  %v23 = vshll.u32 2475754826, %v17
  %v24 = vshrl.u32 2131351028, %v18
  %v25 = vor.u32 %v23, %v24
  %v26 = vshll.u32 2131351028, %v17
  %v27 = vshrl.u32 2102212464, %v18
  %v28 = vor.u32 %v26, %v27
  %v29 = vshll.u32 2102212464, %v17
  %v30 = vshrl.u32 920167782, %v18
  %v31 = vor.u32 %v29, %v30
  %v32 = vshll.u32 920167782, %v17
  %v33 = vshrl.u32 1326507024, %v18
  %v34 = vor.u32 %v32, %v33
  %vm35 = vcmp.lt.s32.totalorder %v16, 1
  %vm36 = vcmp.lt.s32.totalorder %v16, 2
  %vm37 = vcmp.lt.s32.totalorder %v16, 3
  %vm38 = vcmp.lt.s32.totalorder %v16, 4
  %v39 = vsel %vm35, %v19, %v22
  %v40 = vsel %vm38, %v28, 2102212464
  %v41 = vsel %vm37, %v25, %v40
  %v42 = vsel %vm36, %v39, %v41
  %v43 = vsel %vm35, %v22, %v25
  %v44 = vsel %vm38, %v31, 920167782
  %v45 = vsel %vm37, %v28, %v44
  %v46 = vsel %vm36, %v43, %v45
  %v47 = vsel %vm35, %v25, %v28
  %v48 = vsel %vm38, %v34, 1326507024
  %v49 = vsel %vm37, %v31, %v48
  %v50 = vsel %vm36, %v47, %v49
  %v51 = vshll.u32 %v11, 8
  %v52 = vmul.u32.u64.compose %v51, %v50
  %v53 = vextract.low.u32 %v52
  %v54 = vextract.high.u32 %v52
  %v55 = vmul.u32.u64.compose %v51, %v46
  %v56 = vextract.low.u32 %v55
  %v57 = vextract.high.u32 %v55
  %v58 = vmul.u32 %v51, %v42
  %v59 = vadd.s32 %v54, %v56
  %vm60 = vc.u32 %v54, %v56
  %v61 = vadd.s32 %v57, 1
  %v62 = vsel %vm60, %v61, %v57
  %v63 = vadd.s32 %v58, %v62
  %v64 = vadd.s32 %v63, 536870912
  %v65 = vshrl.u32 %v64, 30
  %v66 = vshll.u32 %v65, 30
  %v67 = vsub.s32 %v63, %v66
  %vm68 = vcmp.lt.s32.totalorder %v67, 0
  %v69 = vsub.s32 0, %v67
  %v70 = vsel %vm68, %v69, %v67
  %v71 = vclz %v70
  %v72 = vsub.s32 %v71, 2
  %vm73 = vcmp.gt.s32.totalorder 0, %v72
  %v74 = vsel %vm73, 0, %v72
  %v75 = vsub.s32 32, %v74
  %v76 = vshll.u32 %v67, %v74
  %v77 = vshrl.u32 %v59, %v75
  %v78 = vor.u32 %v76, %v77
  %v79 = vsub.s32 4294967266, %v74
  %v80 = vadd.s32 %v79, 127
  %v81 = vshll.u32 %v80, 23
  %v82 = vor.u32 4788187, %v81
  %v83 = vand.u32 2147483647, %v82
  %v85 = vcvt.s32.f32 %v78
  %v86 = vmul.f32 %v85, %v83
  %v87 = vxor.u32 %v86, 2147483648
  %v88 = vsel %vm5, %v87, %v86
  %v89 = vsub.s32 4, %v65
  %v90 = vsel %vm5, %v89, %v65
  %v91 = vsel %vm4, %v2, %v88
  %v92 = vsel %vm4, 0, %v90
  %v93 = vcosq.f32.pop %v91
  %v94 = vsinq.f32.pop %v91
  %vm95 = vweird.f32 %v2
  %v96 = vand.u32 %v92, 3
  %vm97 = vcmp.lt.s32.totalorder %v96, 2
  %vm98 = vcmp.eq.s32.totalorder %v96, 0
  %v99 = vxor.u32 %v94, 2147483648
  %v100 = vsel %vm98, %v93, %v99
  %vm101 = vcmp.eq.s32.totalorder %v96, 2
  %v102 = vxor.u32 %v93, 2147483648
  %v103 = vsel %vm101, %v102, %v94
  %v104 = vsel %vm97, %v100, %v103
  %v105 = vsel %vm95, nan, %v104
  %106 = vst [vmem:[%s1] sm:$0xff] %v105
  %s107 = scalar_lea.vmem %s0, 8
  %v108 = vld [vmem:[%s107] sm:$0xff]
  %v109 = vand.u32 2147483647, %v108
  %vm110 = vcmp.le.f32.partialorder %v109, 0.7853982
  %vm111 = vcmp.lt.s32.totalorder %v108, 0
  %v112 = vand.u32 %v108, 2139095040
  %v113 = vshrl.u32 %v112, 23
  %v114 = vsub.s32 %v113, 127
  %v115 = vand.u32 2147483647, %v108
  %v116 = vand.u32 %v115, 8388607
  %v117 = vor.u32 %v116, 8388608
  %v118 = vsub.s32 0, %v117
  %v119 = vadd.s32 %v114, 1
  %vm120 = vcmp.gt.s32.totalorder %v119, 0
  %v121 = vsel %vm120, %v119, 0
  %v122 = vshrl.u32 %v121, 5
  %v123 = vand.u32 %v121, 31
  %v124 = vsub.s32 32, %v123
  %v125 = vshrl.u32 683565275, %v124
  %v126 = vshll.u32 683565275, %v123
  %v127 = vshrl.u32 2475754826, %v124
  %v128 = vor.u32 %v126, %v127
  %v129 = vshll.u32 2475754826, %v123
  %v130 = vshrl.u32 2131351028, %v124
  %v131 = vor.u32 %v129, %v130
  %v132 = vshll.u32 2131351028, %v123
  %v133 = vshrl.u32 2102212464, %v124
  %v134 = vor.u32 %v132, %v133
  %v135 = vshll.u32 2102212464, %v123
  %v136 = vshrl.u32 920167782, %v124
  %v137 = vor.u32 %v135, %v136
  %v138 = vshll.u32 920167782, %v123
  %v139 = vshrl.u32 1326507024, %v124
  %v140 = vor.u32 %v138, %v139
  %vm141 = vcmp.lt.s32.totalorder %v122, 1
  %vm142 = vcmp.lt.s32.totalorder %v122, 2
  %vm143 = vcmp.lt.s32.totalorder %v122, 3
  %vm144 = vcmp.lt.s32.totalorder %v122, 4
  %v145 = vsel %vm141, %v125, %v128
  %v146 = vsel %vm144, %v134, 2102212464
  %v147 = vsel %vm143, %v131, %v146
  %v148 = vsel %vm142, %v145, %v147
  %v149 = vsel %vm141, %v128, %v131
  %v150 = vsel %vm144, %v137, 920167782
  %v151 = vsel %vm143, %v134, %v150
  %v152 = vsel %vm142, %v149, %v151
  %v153 = vsel %vm141, %v131, %v134
  %v154 = vsel %vm144, %v140, 1326507024
  %v155 = vsel %vm143, %v137, %v154
  %v156 = vsel %vm142, %v153, %v155
  %v157 = vshll.u32 %v117, 8
  %v158 = vmul.u32.u64.compose %v157, %v156
  %v159 = vextract.low.u32 %v158
  %v160 = vextract.high.u32 %v158
  %v161 = vmul.u32.u64.compose %v157, %v152
  %v162 = vextract.low.u32 %v161
  %v163 = vextract.high.u32 %v161
  %v164 = vmul.u32 %v157, %v148
  %v165 = vadd.s32 %v160, %v162
  %vm166 = vc.u32 %v160, %v162
  %v167 = vadd.s32 %v163, 1
  %v168 = vsel %vm166, %v167, %v163
  %v169 = vadd.s32 %v164, %v168
  %v170 = vadd.s32 %v169, 536870912
  %v171 = vshrl.u32 %v170, 30
  %v172 = vshll.u32 %v171, 30
  %v173 = vsub.s32 %v169, %v172
  %vm174 = vcmp.lt.s32.totalorder %v173, 0
  %v175 = vsub.s32 0, %v173
  %v176 = vsel %vm174, %v175, %v173
  %v177 = vclz %v176
  %v178 = vsub.s32 %v177, 2
  %vm179 = vcmp.gt.s32.totalorder 0, %v178
  %v180 = vsel %vm179, 0, %v178
  %v181 = vsub.s32 32, %v180
  %v182 = vshll.u32 %v173, %v180
  %v183 = vshrl.u32 %v165, %v181
  %v184 = vor.u32 %v182, %v183
  %v185 = vsub.s32 4294967266, %v180
  %v186 = vadd.s32 %v185, 127
  %v187 = vshll.u32 %v186, 23
  %v188 = vor.u32 4788187, %v187
  %v189 = vand.u32 2147483647, %v188
  %v191 = vcvt.s32.f32 %v184
  %v192 = vmul.f32 %v191, %v189
  %v193 = vxor.u32 %v192, 2147483648
  %v194 = vsel %vm111, %v193, %v192
  %v195 = vsub.s32 4, %v171
  %v196 = vsel %vm111, %v195, %v171
  %v197 = vsel %vm110, %v108, %v194
  %v198 = vsel %vm110, 0, %v196
  %v199 = vcosq.f32.pop %v197
  %v200 = vsinq.f32.pop %v197
  %vm201 = vweird.f32 %v108
  %v202 = vand.u32 %v198, 3
  %vm203 = vcmp.lt.s32.totalorder %v202, 2
  %vm204 = vcmp.eq.s32.totalorder %v202, 0
  %v205 = vxor.u32 %v200, 2147483648
  %v206 = vsel %vm204, %v199, %v205
  %vm207 = vcmp.eq.s32.totalorder %v202, 2
  %v208 = vxor.u32 %v199, 2147483648
  %v209 = vsel %vm207, %v208, %v200
  %v210 = vsel %vm203, %v206, %v209
  %v211 = vsel %vm201, nan, %v210
  %s212 = scalar_lea.vmem %s1, 8
  %213 = vst [vmem:[%s212] sm:$0xff] %v211

// kernel: gpt2_forward.3
$region0: #{gpt2_forward.3}
  #allocation0 [shape = 'u32[]', space=smem, size = 0x4, offset = 0x4, fixed_abs, tag = 'smem constant byte address 0x4 - core index']
  #allocation1 [shape = 'u32[144,128]{1,0:T(1,128)}', space=vmem, size = 0x12000, scoped, tag = 'internal scratch']
  %s0 = inlined_call_operand.vmem [shape: bf16[32,256], index: 0, kind: input, shape index: {}]
  %s1 = inlined_call_operand.vmem [shape: bf16[256,10240], index: 1, kind: input, shape index: {}]
  %s2 = inlined_call_operand.vmem [shape: f32[1,10240], index: 2, kind: input, shape index: {}]
  %s3 = inlined_call_operand.vmem [shape: f32[32,10240], index: 3, kind: output, shape index: {}]
  %s4 = sld [smem:[#allocation0]]
  $region87: #{gpt2_forward.3} parent=0
    _
  %s6 = ssub.s32 1, %s4
  %s7 = scalar_select 0, %s6, %s4
  $region1: #{gpt2_forward.3} parent=0
    #allocation2 [shape = 'u8[2097152]{0}', space=vmem, size = 0x200000, scoped, tag = 'input window, operand 1']
    #allocation3 [shape = 'u8[524288]{0}', space=vmem, size = 0x80000, scoped, tag = 'output window, operand 0']
    loop: start=0, step=1, limit=7
    $region2: #{gpt2_forward.3} parent=1 // loop_pre_header
      _
    $region3: #{gpt2_forward.3} parent=1 // loop_header
      %s9 = sphi 0, %s13
      %p10 = scmp.ge.s32.totalorder %s9, 7
      %s17 = sphi 0, %s17
      %s19 = sphi 0, %s17
      %s20 = sphi 0, %s19
      %s34 = sphi 0, %s20
      %s40 = sphi 0, %s42
      %s43 = sphi 0, %s40
      %s44 = sphi 0, %s43
      %s60 = sphi 0, %s44
      %s66 = sphi 0, %s68
      %s69 = sphi 0, %s66
      %s70 = sphi 0, %s69
      %s86 = sphi 0, %s70
      %s92 = sphi 0, %s94
      %s95 = sphi 0, %s92
      %s96 = sphi 0, %s95
      %s112 = sphi 0, %s96
    $region4: #{gpt2_forward.3} parent=1 // loop_header_branch
      %12 = sbr.rel (%p10) target = $region8
    $region5: #{gpt2_forward.3} parent=1 // loop_body
      %s14 = ssub.s32 %s9, 1
      %s15 = ssub.s32 %s9, 2
      %s16 = sadd.s32 %s9, 1
      %s18 = sadd.s32 %s17, 1
      %p21 = scmp.eq.s32.totalorder %s9, 4
      %p22 = scmp.ne.s32.totalorder %s17, %s19
      %p23 = scmp.eq.s32.totalorder %s9, 0
      %p24 = por %p22, %p23
      %p25 = scmp.ne.s32.totalorder %s17, %s19
      %p26 = scmp.eq.s32.totalorder %s14, 4
      %p27 = por %p25, %p26
      %p28 = scmp.ne.s32.totalorder %s19, %s20
      %p29 = scmp.eq.s32.totalorder %s14, 0
      %p30 = por %p28, %p29
      %p31 = scmp.ne.s32.totalorder %s19, %s20
      %p32 = scmp.eq.s32.totalorder %s15, 4
      %p33 = por %p31, %p32
      %p35 = scmp.ne.s32.totalorder %s20, %s34
      %p36 = scmp.eq.s32.totalorder %s15, 0
      %p37 = por %p35, %p36
      %s38 = ssub.s32 %s9, %s16
      %p39 = scmp.eq.s32.totalorder %s38, 0
      %s41 = sadd.s32 %s40, 1
      %s42 = scalar_select %p39, %s40, %s41
      %p45 = pneg %p39
      %p46 = scmp.eq.s32.totalorder %s9, 4
      %p47 = por %p45, %p46
      %p48 = scmp.ne.s32.totalorder %s40, %s43
      %p49 = scmp.eq.s32.totalorder %s9, 0
      %p50 = por %p48, %p49
      %p51 = scmp.ne.s32.totalorder %s40, %s43
      %p52 = scmp.eq.s32.totalorder %s14, 4
      %p53 = por %p51, %p52
      %p54 = scmp.ne.s32.totalorder %s43, %s44
      %p55 = scmp.eq.s32.totalorder %s14, 0
      %p56 = por %p54, %p55
      %p57 = scmp.ne.s32.totalorder %s43, %s44
      %p58 = scmp.eq.s32.totalorder %s15, 4
      %p59 = por %p57, %p58
      %p61 = scmp.ne.s32.totalorder %s44, %s60
      %p62 = scmp.eq.s32.totalorder %s15, 0
      %p63 = por %p61, %p62
      %s64 = ssub.s32 %s9, %s16
      %p65 = scmp.eq.s32.totalorder %s64, 0
      %s67 = sadd.s32 %s66, 1
      %s68 = scalar_select %p65, %s66, %s67
      %p71 = pneg %p65
      %p72 = scmp.eq.s32.totalorder %s9, 4
      %p73 = por %p71, %p72
      %p74 = scmp.ne.s32.totalorder %s66, %s69
      %p75 = scmp.eq.s32.totalorder %s9, 0
      %p76 = por %p74, %p75
      %p77 = scmp.ne.s32.totalorder %s66, %s69
      %p78 = scmp.eq.s32.totalorder %s14, 4
      %p79 = por %p77, %p78
      %p80 = scmp.ne.s32.totalorder %s69, %s70
      %p81 = scmp.eq.s32.totalorder %s14, 0
      %p82 = por %p80, %p81
      %p83 = scmp.ne.s32.totalorder %s69, %s70
      %p84 = scmp.eq.s32.totalorder %s15, 4
      %p85 = por %p83, %p84
      %p87 = scmp.ne.s32.totalorder %s70, %s86
      %p88 = scmp.eq.s32.totalorder %s15, 0
      %p89 = por %p87, %p88
      %s90 = ssub.s32 %s9, %s16
      %p91 = scmp.eq.s32.totalorder %s90, 0
      %s93 = sadd.s32 %s92, 1
      %s94 = scalar_select %p91, %s92, %s93
      %p97 = pneg %p91
      %p98 = scmp.eq.s32.totalorder %s9, 4
      %p99 = por %p97, %p98
      %p100 = scmp.ne.s32.totalorder %s92, %s95
      %p101 = scmp.eq.s32.totalorder %s9, 0
      %p102 = por %p100, %p101
      %p103 = scmp.ne.s32.totalorder %s92, %s95
      %p104 = scmp.eq.s32.totalorder %s14, 4
      %p105 = por %p103, %p104
      %p106 = scmp.ne.s32.totalorder %s95, %s96
      %p107 = scmp.eq.s32.totalorder %s14, 0
      %p108 = por %p106, %p107
      %p109 = scmp.ne.s32.totalorder %s95, %s96
      %p110 = scmp.eq.s32.totalorder %s15, 4
      %p111 = por %p109, %p110
      %p113 = scmp.ne.s32.totalorder %s96, %s112
      %p114 = scmp.eq.s32.totalorder %s15, 0
      %p115 = por %p113, %p114
      %p116 = scmp.le.s32.totalorder 1, %s9
      %p117 = scmp.lt.s32.totalorder %s9, 6
      %p118 = pnand %p116, %p117
      %p119 = pneg %p118
      // Predicated region
      $region9: #{gpt2_forward.3} parent=5 // pred_check
        _
      $region10: #{gpt2_forward.3} parent=5 // pred_check_branch
        %121 = sbr.rel (%p118) target = $region12
      $region11: #{gpt2_forward.3} parent=5 // pred_region
        %s122 = ssub.s32 %s9, 1
        // Predicated region
        $region13: #{gpt2_forward.3} parent=11 // pred_check
          %p123 = pneg %p30
        $region14: #{gpt2_forward.3} parent=11 // pred_check_branch
          %125 = sbr.rel (%p123) target = $region16
        $region15: #{gpt2_forward.3} parent=11 // pred_region
          _
        $region16: #{gpt2_forward.3} parent=11 // pred_fallthru
          _
      $region12: #{gpt2_forward.3} parent=5 // pred_fallthru
        _
      %p126 = scmp.lt.s32.totalorder %s9, 5
      // Predicated region
      $region17: #{gpt2_forward.3} parent=5 // pred_check
        %p127 = pneg %p126
      $region18: #{gpt2_forward.3} parent=5 // pred_check_branch
        %129 = sbr.rel (%p127) target = $region20
      $region19: #{gpt2_forward.3} parent=5 // pred_region
        // Predicated region
        $region21: #{gpt2_forward.3} parent=19 // pred_check
          %p130 = pneg %p50
        $region22: #{gpt2_forward.3} parent=19 // pred_check_branch
          %132 = sbr.rel (%p130) target = $region24
        $region23: #{gpt2_forward.3} parent=19 // pred_region
          %s133 = sand.u32 %s40, 1
          %s134 = sand.u32 %s40, 1
          %s135 = smul.addr %s134, 2048
          %s136 = scalar_lea.vmem [#allocation2], %s135
          %s137 = smul.u32 16, %s9
          %s138 = smul.addr %s137, 4
          %s139 = scalar_lea.vmem %s1, %s138
          // Predicated region
          $region25: #{gpt2_forward.3} parent=23 // pred_check
            _
          $region26: #{gpt2_forward.3} parent=23 // pred_check_branch
            %141 = sbr.rel (0) target = $region28
          $region27: #{gpt2_forward.3} parent=23 // pred_region
            // Predicated region
            $region29: #{gpt2_forward.3} parent=27 // pred_check
              _
            $region30: #{gpt2_forward.3} parent=27 // pred_check_branch
              %143 = sbr.rel (0) target = $region32
            $region31: #{gpt2_forward.3} parent=27 // pred_region
              loop: start=0, step=1, limit=1
              $region33: #{gpt2_forward.3} parent=31 // loop_pre_header
                _
              $region34: #{gpt2_forward.3} parent=31 // loop_header
                %s145 = sphi 0, %s149
                %p146 = scmp.ge.s32.totalorder %s145, 1
                %s150 = sphi %s139, %s139
                %s151 = sphi %s136, %s136
              $region35: #{gpt2_forward.3} parent=31 // loop_header_branch
                %148 = sbr.rel (%p146) target = $region39
              $region36: #{gpt2_forward.3} parent=31 // loop_body
                %v152 = vld [vmem:[%s150] sm:$0xff]
                %153 = vst [vmem:[%s151] sm:$0xff] %v152
                %v154 = vld [vmem:[%s150 + $0x8] sm:$0xff]
                %155 = vst [vmem:[%s151 + $0x8] sm:$0xff] %v154
                %v156 = vld [vmem:[%s150 + $0x10] sm:$0xff]
                %157 = vst [vmem:[%s151 + $0x10] sm:$0xff] %v156
                %v158 = vld [vmem:[%s150 + $0x18] sm:$0xff]
                %159 = vst [vmem:[%s151 + $0x18] sm:$0xff] %v158
                %v160 = vld [vmem:[%s150 + $0x20] sm:$0xff]
                %161 = vst [vmem:[%s151 + $0x20] sm:$0xff] %v160
                %v162 = vld [vmem:[%s150 + $0x28] sm:$0xff]
                %163 = vst [vmem:[%s151 + $0x28] sm:$0xff] %v162
                %v164 = vld [vmem:[%s150 + $0x30] sm:$0xff]
                %165 = vst [vmem:[%s151 + $0x30] sm:$0xff] %v164
                %v166 = vld [vmem:[%s150 + $0x38] sm:$0xff]
                %167 = vst [vmem:[%s151 + $0x38] sm:$0xff] %v166
                %v168 = vld [vmem:[%s150 + $0x140] sm:$0xff]
                %169 = vst [vmem:[%s151 + $0x40] sm:$0xff] %v168
                %v170 = vld [vmem:[%s150 + $0x148] sm:$0xff]
                %171 = vst [vmem:[%s151 + $0x48] sm:$0xff] %v170
                %v172 = vld [vmem:[%s150 + $0x150] sm:$0xff]
                %173 = vst [vmem:[%s151 + $0x50] sm:$0xff] %v172
                %v174 = vld [vmem:[%s150 + $0x158] sm:$0xff]
                %175 = vst [vmem:[%s151 + $0x58] sm:$0xff] %v174
                %v176 = vld [vmem:[%s150 + $0x160] sm:$0xff]
                %177 = vst [vmem:[%s151 + $0x60] sm:$0xff] %v176
                %v178 = vld [vmem:[%s150 + $0x168] sm:$0xff]
                %179 = vst [vmem:[%s151 + $0x68] sm:$0xff] %v178
                %v180 = vld [vmem:[%s150 + $0x170] sm:$0xff]
                %181 = vst [vmem:[%s151 + $0x70] sm:$0xff] %v180
                %v182 = vld [vmem:[%s150 + $0x178] sm:$0xff]
                %183 = vst [vmem:[%s151 + $0x78] sm:$0xff] %v182
                %v184 = vld [vmem:[%s150 + $0x280] sm:$0xff]
                %185 = vst [vmem:[%s151 + $0x80] sm:$0xff] %v184
                %v186 = vld [vmem:[%s150 + $0x288] sm:$0xff]
                %187 = vst [vmem:[%s151 + $0x88] sm:$0xff] %v186
                %v188 = vld [vmem:[%s150 + $0x290] sm:$0xff]
                %189 = vst [vmem:[%s151 + $0x90] sm:$0xff] %v188
                %v190 = vld [vmem:[%s150 + $0x298] sm:$0xff]
                %191 = vst [vmem:[%s151 + $0x98] sm:$0xff] %v190
                %v192 = vld [vmem:[%s150 + $0x2a0] sm:$0xff]
                %193 = vst [vmem:[%s151 + $0xa0] sm:$0xff] %v192
                %v194 = vld [vmem:[%s150 + $0x2a8] sm:$0xff]
                %195 = vst [vmem:[%s151 + $0xa8] sm:$0xff] %v194
                %v196 = vld [vmem:[%s150 + $0x2b0] sm:$0xff]
                %197 = vst [vmem:[%s151 + $0xb0] sm:$0xff] %v196
                %v198 = vld [vmem:[%s150 + $0x2b8] sm:$0xff]
                %199 = vst [vmem:[%s151 + $0xb8] sm:$0xff] %v198
                %v200 = vld [vmem:[%s150 + $0x3c0] sm:$0xff]
                %201 = vst [vmem:[%s151 + $0xc0] sm:$0xff] %v200
                %v202 = vld [vmem:[%s150 + $0x3c8] sm:$0xff]
                %203 = vst [vmem:[%s151 + $0xc8] sm:$0xff] %v202
                %v204 = vld [vmem:[%s150 + $0x3d0] sm:$0xff]
                %205 = vst [vmem:[%s151 + $0xd0] sm:$0xff] %v204
                %v206 = vld [vmem:[%s150 + $0x3d8] sm:$0xff]
                %207 = vst [vmem:[%s151 + $0xd8] sm:$0xff] %v206
                %v208 = vld [vmem:[%s150 + $0x3e0] sm:$0xff]
                %209 = vst [vmem:[%s151 + $0xe0] sm:$0xff] %v208
                %v210 = vld [vmem:[%s150 + $0x3e8] sm:$0xff]
                %211 = vst [vmem:[%s151 + $0xe8] sm:$0xff] %v210
                %v212 = vld [vmem:[%s150 + $0x3f0] sm:$0xff]
                %213 = vst [vmem:[%s151 + $0xf0] sm:$0xff] %v212
                %v214 = vld [vmem:[%s150 + $0x3f8] sm:$0xff]
                %215 = vst [vmem:[%s151 + $0xf8] sm:$0xff] %v214
                %v216 = vld [vmem:[%s150 + $0x500] sm:$0xff]
                %217 = vst [vmem:[%s151 + $0x100] sm:$0xff] %v216
                %v218 = vld [vmem:[%s150 + $0x508] sm:$0xff]
                %219 = vst [vmem:[%s151 + $0x108] sm:$0xff] %v218
                %v220 = vld [vmem:[%s150 + $0x510] sm:$0xff]
                %221 = vst [vmem:[%s151 + $0x110] sm:$0xff] %v220
                %v222 = vld [vmem:[%s150 + $0x518] sm:$0xff]
                %223 = vst [vmem:[%s151 + $0x118] sm:$0xff] %v222
                %v224 = vld [vmem:[%s150 + $0x520] sm:$0xff]
                %225 = vst [vmem:[%s151 + $0x120] sm:$0xff] %v224
                %v226 = vld [vmem:[%s150 + $0x528] sm:$0xff]
                %227 = vst [vmem:[%s151 + $0x128] sm:$0xff] %v226
                %v228 = vld [vmem:[%s150 + $0x530] sm:$0xff]
                %229 = vst [vmem:[%s151 + $0x130] sm:$0xff] %v228
                %v230 = vld [vmem:[%s150 + $0x538] sm:$0xff]
                %231 = vst [vmem:[%s151 + $0x138] sm:$0xff] %v230
                %v232 = vld [vmem:[%s150 + $0x640] sm:$0xff]
                %233 = vst [vmem:[%s151 + $0x140] sm:$0xff] %v232
                %v234 = vld [vmem:[%s150 + $0x648] sm:$0xff]
                %235 = vst [vmem:[%s151 + $0x148] sm:$0xff] %v234
                %v236 = vld [vmem:[%s150 + $0x650] sm:$0xff]
                %237 = vst [vmem:[%s151 + $0x150] sm:$0xff] %v236
                %v238 = vld [vmem:[%s150 + $0x658] sm:$0xff]
                %239 = vst [vmem:[%s151 + $0x158] sm:$0xff] %v238
                %v240 = vld [vmem:[%s150 + $0x660] sm:$0xff]
                %241 = vst [vmem:[%s151 + $0x160] sm:$0xff] %v240
                %v242 = vld [vmem:[%s150 + $0x668] sm:$0xff]
                %243 = vst [vmem:[%s151 + $0x168] sm:$0xff] %v242
                %v244 = vld [vmem:[%s150 + $0x670] sm:$0xff]
                %245 = vst [vmem:[%s151 + $0x170] sm:$0xff] %v244
                %v246 = vld [vmem:[%s150 + $0x678] sm:$0xff]
                %247 = vst [vmem:[%s151 + $0x178] sm:$0xff] %v246
                %v248 = vld [vmem:[%s150 + $0x780] sm:$0xff]
                %249 = vst [vmem:[%s151 + $0x180] sm:$0xff] %v248
                %v250 = vld [vmem:[%s150 + $0x788] sm:$0xff]
                %251 = vst [vmem:[%s151 + $0x188] sm:$0xff] %v250
                %v252 = vld [vmem:[%s150 + $0x790] sm:$0xff]
                %253 = vst [vmem:[%s151 + $0x190] sm:$0xff] %v252
                %v254 = vld [vmem:[%s150 + $0x798] sm:$0xff]
                %255 = vst [vmem:[%s151 + $0x198] sm:$0xff] %v254
                %v256 = vld [vmem:[%s150 + $0x7a0] sm:$0xff]
                %257 = vst [vmem:[%s151 + $0x1a0] sm:$0xff] %v256
                %v258 = vld [vmem:[%s150 + $0x7a8] sm:$0xff]
                %259 = vst [vmem:[%s151 + $0x1a8] sm:$0xff] %v258
                %v260 = vld [vmem:[%s150 + $0x7b0] sm:$0xff]
                %261 = vst [vmem:[%s151 + $0x1b0] sm:$0xff] %v260
                %v262 = vld [vmem:[%s150 + $0x7b8] sm:$0xff]
                %263 = vst [vmem:[%s151 + $0x1b8] sm:$0xff] %v262
                %v264 = vld [vmem:[%s150 + $0x8c0] sm:$0xff]
                %265 = vst [vmem:[%s151 + $0x1c0] sm:$0xff] %v264
                %v266 = vld [vmem:[%s150 + $0x8c8] sm:$0xff]
                %267 = vst [vmem:[%s151 + $0x1c8] sm:$0xff] %v266
                %v268 = vld [vmem:[%s150 + $0x8d0] sm:$0xff]
                %269 = vst [vmem:[%s151 + $0x1d0] sm:$0xff] %v268
                %v270 = vld [vmem:[%s150 + $0x8d8] sm:$0xff]
                %271 = vst [vmem:[%s151 + $0x1d8] sm:$0xff] %v270
                %v272 = vld [vmem:[%s150 + $0x8e0] sm:$0xff]
                %273 = vst [vmem:[%s151 + $0x1e0] sm:$0xff] %v272
                %v274 = vld [vmem:[%s150 + $0x8e8] sm:$0xff]
                %275 = vst [vmem:[%s151 + $0x1e8] sm:$0xff] %v274
                %v276 = vld [vmem:[%s150 + $0x8f0] sm:$0xff]
                %277 = vst [vmem:[%s151 + $0x1f0] sm:$0xff] %v276
                %v278 = vld [vmem:[%s150 + $0x8f8] sm:$0xff]
                %279 = vst [vmem:[%s151 + $0x1f8] sm:$0xff] %v278
                %v280 = vld [vmem:[%s150 + $0xa00] sm:$0xff]
                %281 = vst [vmem:[%s151 + $0x200] sm:$0xff] %v280
                %v282 = vld [vmem:[%s150 + $0xa08] sm:$0xff]
                %283 = vst [vmem:[%s151 + $0x208] sm:$0xff] %v282
                %v284 = vld [vmem:[%s150 + $0xa10] sm:$0xff]
                %285 = vst [vmem:[%s151 + $0x210] sm:$0xff] %v284
                %v286 = vld [vmem:[%s150 + $0xa18] sm:$0xff]
                %287 = vst [vmem:[%s151 + $0x218] sm:$0xff] %v286
                %v288 = vld [vmem:[%s150 + $0xa20] sm:$0xff]
                %289 = vst [vmem:[%s151 + $0x220] sm:$0xff] %v288
                %v290 = vld [vmem:[%s150 + $0xa28] sm:$0xff]
                %291 = vst [vmem:[%s151 + $0x228] sm:$0xff] %v290
                %v292 = vld [vmem:[%s150 + $0xa30] sm:$0xff]
                %293 = vst [vmem:[%s151 + $0x230] sm:$0xff] %v292
                %v294 = vld [vmem:[%s150 + $0xa38] sm:$0xff]
                %295 = vst [vmem:[%s151 + $0x238] sm:$0xff] %v294
                %v296 = vld [vmem:[%s150 + $0xb40] sm:$0xff]
                %297 = vst [vmem:[%s151 + $0x240] sm:$0xff] %v296
                %v298 = vld [vmem:[%s150 + $0xb48] sm:$0xff]
                %299 = vst [vmem:[%s151 + $0x248] sm:$0xff] %v298
                %v300 = vld [vmem:[%s150 + $0xb50] sm:$0xff]
                %301 = vst [vmem:[%s151 + $0x250] sm:$0xff] %v300
                %v302 = vld [vmem:[%s150 + $0xb58] sm:$0xff]
                %303 = vst [vmem:[%s151 + $0x258] sm:$0xff] %v302
                %v304 = vld [vmem:[%s150 + $0xb60] sm:$0xff]
                %305 = vst [vmem:[%s151 + $0x260] sm:$0xff] %v304
                %v306 = vld [vmem:[%s150 + $0xb68] sm:$0xff]
                %307 = vst [vmem:[%s151 + $0x268] sm:$0xff] %v306
                %v308 = vld [vmem:[%s150 + $0xb70] sm:$0xff]
                %309 = vst [vmem:[%s151 + $0x270] sm:$0xff] %v308
                %v310 = vld [vmem:[%s150 + $0xb78] sm:$0xff]
                %311 = vst [vmem:[%s151 + $0x278] sm:$0xff] %v310
                %v312 = vld [vmem:[%s150 + $0xc80] sm:$0xff]
                %313 = vst [vmem:[%s151 + $0x280] sm:$0xff] %v312
                %v314 = vld [vmem:[%s150 + $0xc88] sm:$0xff]
                %315 = vst [vmem:[%s151 + $0x288] sm:$0xff] %v314
                %v316 = vld [vmem:[%s150 + $0xc90] sm:$0xff]
                %317 = vst [vmem:[%s151 + $0x290] sm:$0xff] %v316
                %v318 = vld [vmem:[%s150 + $0xc98] sm:$0xff]
                %319 = vst [vmem:[%s151 + $0x298] sm:$0xff] %v318
                %v320 = vld [vmem:[%s150 + $0xca0] sm:$0xff]
                %321 = vst [vmem:[%s151 + $0x2a0] sm:$0xff] %v320
                %v322 = vld [vmem:[%s150 + $0xca8] sm:$0xff]
                %323 = vst [vmem:[%s151 + $0x2a8] sm:$0xff] %v322
                %v324 = vld [vmem:[%s150 + $0xcb0] sm:$0xff]
                %325 = vst [vmem:[%s151 + $0x2b0] sm:$0xff] %v324
                %v326 = vld [vmem:[%s150 + $0xcb8] sm:$0xff]
                %327 = vst [vmem:[%s151 + $0x2b8] sm:$0xff] %v326
                %v328 = vld [vmem:[%s150 + $0xdc0] sm:$0xff]
                %329 = vst [vmem:[%s151 + $0x2c0] sm:$0xff] %v328
                %v330 = vld [vmem:[%s150 + $0xdc8] sm:$0xff]
                %331 = vst [vmem:[%s151 + $0x2c8] sm:$0xff] %v330
                %v332 = vld [vmem:[%s150 + $0xdd0] sm:$0xff]
                %333 = vst [vmem:[%s151 + $0x2d0] sm:$0xff] %v332
                %v334 = vld [vmem:[%s150 + $0xdd8] sm:$0xff]
                %335 = vst [vmem:[%s151 + $0x2d8] sm:$0xff] %v334
                %v336 = vld [vmem:[%s150 + $0xde0] sm:$0xff]
                %337 = vst [vmem:[%s151 + $0x2e0] sm:$0xff] %v336
                %v338 = vld [vmem:[%s150 + $0xde8] sm:$0xff]
                %339 = vst [vmem:[%s151 + $0x2e8] sm:$0xff] %v338
                %v340 = vld [vmem:[%s150 + $0xdf0] sm:$0xff]
                %341 = vst [vmem:[%s151 + $0x2f0] sm:$0xff] %v340
                %v342 = vld [vmem:[%s150 + $0xdf8] sm:$0xff]
                %343 = vst [vmem:[%s151 + $0x2f8] sm:$0xff] %v342
                %v344 = vld [vmem:[%s150 + $0xf00] sm:$0xff]
                %345 = vst [vmem:[%s151 + $0x300] sm:$0xff] %v344
                %v346 = vld [vmem:[%s150 + $0xf08] sm:$0xff]
                %347 = vst [vmem:[%s151 + $0x308] sm:$0xff] %v346
                %v348 = vld [vmem:[%s150 + $0xf10] sm:$0xff]
                %349 = vst [vmem:[%s151 + $0x310] sm:$0xff] %v348
                %v350 = vld [vmem:[%s150 + $0xf18] sm:$0xff]
                %351 = vst [vmem:[%s151 + $0x318] sm:$0xff] %v350
                %v352 = vld [vmem:[%s150 + $0xf20] sm:$0xff]
                %353 = vst [vmem:[%s151 + $0x320] sm:$0xff] %v352
                %v354 = vld [vmem:[%s150 + $0xf28] sm:$0xff]
                %355 = vst [vmem:[%s151 + $0x328] sm:$0xff] %v354
                %v356 = vld [vmem:[%s150 + $0xf30] sm:$0xff]
                %357 = vst [vmem:[%s151 + $0x330] sm:$0xff] %v356
                %v358 = vld [vmem:[%s150 + $0xf38] sm:$0xff]
                %359 = vst [vmem:[%s151 + $0x338] sm:$0xff] %v358
                %v360 = vld [vmem:[%s150 + $0x1040] sm:$0xff]
                %361 = vst [vmem:[%s151 + $0x340] sm:$0xff] %v360
                %v362 = vld [vmem:[%s150 + $0x1048] sm:$0xff]
                %363 = vst [vmem:[%s151 + $0x348] sm:$0xff] %v362
                %v364 = vld [vmem:[%s150 + $0x1050] sm:$0xff]
                %365 = vst [vmem:[%s151 + $0x350] sm:$0xff] %v364
                %v366 = vld [vmem:[%s150 + $0x1058] sm:$0xff]
                %367 = vst [vmem:[%s151 + $0x358] sm:$0xff] %v366
                %v368 = vld [vmem:[%s150 + $0x1060] sm:$0xff]
                %369 = vst [vmem:[%s151 + $0x360] sm:$0xff] %v368
                %v370 = vld [vmem:[%s150 + $0x1068] sm:$0xff]
                %371 = vst [vmem:[%s151 + $0x368] sm:$0xff] %v370
                %v372 = vld [vmem:[%s150 + $0x1070] sm:$0xff]
                %373 = vst [vmem:[%s151 + $0x370] sm:$0xff] %v372
                %v374 = vld [vmem:[%s150 + $0x1078] sm:$0xff]
                %375 = vst [vmem:[%s151 + $0x378] sm:$0xff] %v374
                %v376 = vld [vmem:[%s150 + $0x1180] sm:$0xff]
                %377 = vst [vmem:[%s151 + $0x380] sm:$0xff] %v376
                %v378 = vld [vmem:[%s150 + $0x1188] sm:$0xff]
                %379 = vst [vmem:[%s151 + $0x388] sm:$0xff] %v378
                %v380 = vld [vmem:[%s150 + $0x1190] sm:$0xff]
                %381 = vst [vmem:[%s151 + $0x390] sm:$0xff] %v380
                %v382 = vld [vmem:[%s150 + $0x1198] sm:$0xff]
                %383 = vst [vmem:[%s151 + $0x398] sm:$0xff] %v382
                %v384 = vld [vmem:[%s150 + $0x11a0] sm:$0xff]
                %385 = vst [vmem:[%s151 + $0x3a0] sm:$0xff] %v384
                %v386 = vld [vmem:[%s150 + $0x11a8] sm:$0xff]
                %387 = vst [vmem:[%s151 + $0x3a8] sm:$0xff] %v386
                %v388 = vld [vmem:[%s150 + $0x11b0] sm:$0xff]
                %389 = vst [vmem:[%s151 + $0x3b0] sm:$0xff] %v388
                %v390 = vld [vmem:[%s150 + $0x11b8] sm:$0xff]
                %391 = vst [vmem:[%s151 + $0x3b8] sm:$0xff] %v390
                %v392 = vld [vmem:[%s150 + $0x12c0] sm:$0xff]
                %393 = vst [vmem:[%s151 + $0x3c0] sm:$0xff] %v392
                %v394 = vld [vmem:[%s150 + $0x12c8] sm:$0xff]
                %395 = vst [vmem:[%s151 + $0x3c8] sm:$0xff] %v394
                %v396 = vld [vmem:[%s150 + $0x12d0] sm:$0xff]
                %397 = vst [vmem:[%s151 + $0x3d0] sm:$0xff] %v396
                %v398 = vld [vmem:[%s150 + $0x12d8] sm:$0xff]
                %399 = vst [vmem:[%s151 + $0x3d8] sm:$0xff] %v398
                %v400 = vld [vmem:[%s150 + $0x12e0] sm:$0xff]
                %401 = vst [vmem:[%s151 + $0x3e0] sm:$0xff] %v400
                %v402 = vld [vmem:[%s150 + $0x12e8] sm:$0xff]
                %403 = vst [vmem:[%s151 + $0x3e8] sm:$0xff] %v402
                %v404 = vld [vmem:[%s150 + $0x12f0] sm:$0xff]
                %405 = vst [vmem:[%s151 + $0x3f0] sm:$0xff] %v404
                %v406 = vld [vmem:[%s150 + $0x12f8] sm:$0xff]
                %407 = vst [vmem:[%s151 + $0x3f8] sm:$0xff] %v406
                %v408 = vld [vmem:[%s150 + $0x1400] sm:$0xff]
                %409 = vst [vmem:[%s151 + $0x400] sm:$0xff] %v408
                %v410 = vld [vmem:[%s150 + $0x1408] sm:$0xff]
                %411 = vst [vmem:[%s151 + $0x408] sm:$0xff] %v410
                %v412 = vld [vmem:[%s150 + $0x1410] sm:$0xff]
                %413 = vst [vmem:[%s151 + $0x410] sm:$0xff] %v412
                %v414 = vld [vmem:[%s150 + $0x1418] sm:$0xff]
                %415 = vst [vmem:[%s151 + $0x418] sm:$0xff] %v414
                %v416 = vld [vmem:[%s150 + $0x1420] sm:$0xff]
                %417 = vst [vmem:[%s151 + $0x420] sm:$0xff] %v416
                %v418 = vld [vmem:[%s150 + $0x1428] sm:$0xff]
                %419 = vst [vmem:[%s151 + $0x428] sm:$0xff] %v418
                %v420 = vld [vmem:[%s150 + $0x1430] sm:$0xff]
                %421 = vst [vmem:[%s151 + $0x430] sm:$0xff] %v420
                %v422 = vld [vmem:[%s150 + $0x1438] sm:$0xff]
                %423 = vst [vmem:[%s151 + $0x438] sm:$0xff] %v422
                %v424 = vld [vmem:[%s150 + $0x1540] sm:$0xff]
                %425 = vst [vmem:[%s151 + $0x440] sm:$0xff] %v424
                %v426 = vld [vmem:[%s150 + $0x1548] sm:$0xff]
                %427 = vst [vmem:[%s151 + $0x448] sm:$0xff] %v426
                %v428 = vld [vmem:[%s150 + $0x1550] sm:$0xff]
                %429 = vst [vmem:[%s151 + $0x450] sm:$0xff] %v428
                %v430 = vld [vmem:[%s150 + $0x1558] sm:$0xff]
                %431 = vst [vmem:[%s151 + $0x458] sm:$0xff] %v430
                %v432 = vld [vmem:[%s150 + $0x1560] sm:$0xff]
                %433 = vst [vmem:[%s151 + $0x460] sm:$0xff] %v432
                %v434 = vld [vmem:[%s150 + $0x1568] sm:$0xff]
                %435 = vst [vmem:[%s151 + $0x468] sm:$0xff] %v434
                %v436 = vld [vmem:[%s150 + $0x1570] sm:$0xff]
                %437 = vst [vmem:[%s151 + $0x470] sm:$0xff] %v436
                %v438 = vld [vmem:[%s150 + $0x1578] sm:$0xff]
                %439 = vst [vmem:[%s151 + $0x478] sm:$0xff] %v438
                %v440 = vld [vmem:[%s150 + $0x1680] sm:$0xff]
                %441 = vst [vmem:[%s151 + $0x480] sm:$0xff] %v440
                %v442 = vld [vmem:[%s150 + $0x1688] sm:$0xff]
                %443 = vst [vmem:[%s151 + $0x488] sm:$0xff] %v442
                %v444 = vld [vmem:[%s150 + $0x1690] sm:$0xff]
                %445 = vst [vmem:[%s151 + $0x490] sm:$0xff] %v444
                %v446 = vld [vmem:[%s150 + $0x1698] sm:$0xff]
                %447 = vst [vmem:[%s151 + $0x498] sm:$0xff] %v446
                %v448 = vld [vmem:[%s150 + $0x16a0] sm:$0xff]
                %449 = vst [vmem:[%s151 + $0x4a0] sm:$0xff] %v448
                %v450 = vld [vmem:[%s150 + $0x16a8] sm:$0xff]
                %451 = vst [vmem:[%s151 + $0x4a8] sm:$0xff] %v450
                %v452 = vld [vmem:[%s150 + $0x16b0] sm:$0xff]
                %453 = vst [vmem:[%s151 + $0x4b0] sm:$0xff] %v452
                %v454 = vld [vmem:[%s150 + $0x16b8] sm:$0xff]
                %455 = vst [vmem:[%s151 + $0x4b8] sm:$0xff] %v454
                %v456 = vld [vmem:[%s150 + $0x17c0] sm:$0xff]
                %457 = vst [vmem:[%s151 + $0x4c0] sm:$0xff] %v456
                %v458 = vld [vmem:[%s150 + $0x17c8] sm:$0xff]
                %459 = vst [vmem:[%s151 + $0x4c8] sm:$0xff] %v458
                %v460 = vld [vmem:[%s150 + $0x17d0] sm:$0xff]
                %461 = vst [vmem:[%s151 + $0x4d0] sm:$0xff] %v460
                %v462 = vld [vmem:[%s150 + $0x17d8] sm:$0xff]
                %463 = vst [vmem:[%s151 + $0x4d8] sm:$0xff] %v462
                %v464 = vld [vmem:[%s150 + $0x17e0] sm:$0xff]
                %465 = vst [vmem:[%s151 + $0x4e0] sm:$0xff] %v464
                %v466 = vld [vmem:[%s150 + $0x17e8] sm:$0xff]
                %467 = vst [vmem:[%s151 + $0x4e8] sm:$0xff] %v466
                %v468 = vld [vmem:[%s150 + $0x17f0] sm:$0xff]
                %469 = vst [vmem:[%s151 + $0x4f0] sm:$0xff] %v468
                %v470 = vld [vmem:[%s150 + $0x17f8] sm:$0xff]
                %471 = vst [vmem:[%s151 + $0x4f8] sm:$0xff] %v470
                %v472 = vld [vmem:[%s150 + $0x1900] sm:$0xff]
                %473 = vst [vmem:[%s151 + $0x500] sm:$0xff] %v472
                %v474 = vld [vmem:[%s150 + $0x1908] sm:$0xff]
                %475 = vst [vmem:[%s151 + $0x508] sm:$0xff] %v474
                %v476 = vld [vmem:[%s150 + $0x1910] sm:$0xff]
                %477 = vst [vmem:[%s151 + $0x510] sm:$0xff] %v476
                %v478 = vld [vmem:[%s150 + $0x1918] sm:$0xff]
                %479 = vst [vmem:[%s151 + $0x518] sm:$0xff] %v478
                %v480 = vld [vmem:[%s150 + $0x1920] sm:$0xff]
                %481 = vst [vmem:[%s151 + $0x520] sm:$0xff] %v480
                %v482 = vld [vmem:[%s150 + $0x1928] sm:$0xff]
                %483 = vst [vmem:[%s151 + $0x528] sm:$0xff] %v482
                %v484 = vld [vmem:[%s150 + $0x1930] sm:$0xff]
                %485 = vst [vmem:[%s151 + $0x530] sm:$0xff] %v484
                %v486 = vld [vmem:[%s150 + $0x1938] sm:$0xff]
                %487 = vst [vmem:[%s151 + $0x538] sm:$0xff] %v486
                %v488 = vld [vmem:[%s150 + $0x1a40] sm:$0xff]
                %489 = vst [vmem:[%s151 + $0x540] sm:$0xff] %v488
                %v490 = vld [vmem:[%s150 + $0x1a48] sm:$0xff]
                %491 = vst [vmem:[%s151 + $0x548] sm:$0xff] %v490
                %v492 = vld [vmem:[%s150 + $0x1a50] sm:$0xff]
                %493 = vst [vmem:[%s151 + $0x550] sm:$0xff] %v492
                %v494 = vld [vmem:[%s150 + $0x1a58] sm:$0xff]
                %495 = vst [vmem:[%s151 + $0x558] sm:$0xff] %v494
                %v496 = vld [vmem:[%s150 + $0x1a60] sm:$0xff]
                %497 = vst [vmem:[%s151 + $0x560] sm:$0xff] %v496
                %v498 = vld [vmem:[%s150 + $0x1a68] sm:$0xff]
                %499 = vst [vmem:[%s151 + $0x568] sm:$0xff] %v498
                %v500 = vld [vmem:[%s150 + $0x1a70] sm:$0xff]
                %501 = vst [vmem:[%s151 + $0x570] sm:$0xff] %v500
                %v502 = vld [vmem:[%s150 + $0x1a78] sm:$0xff]
                %503 = vst [vmem:[%s151 + $0x578] sm:$0xff] %v502
                %v504 = vld [vmem:[%s150 + $0x1b80] sm:$0xff]
                %505 = vst [vmem:[%s151 + $0x580] sm:$0xff] %v504
                %v506 = vld [vmem:[%s150 + $0x1b88] sm:$0xff]
                %507 = vst [vmem:[%s151 + $0x588] sm:$0xff] %v506
                %v508 = vld [vmem:[%s150 + $0x1b90] sm:$0xff]
                %509 = vst [vmem:[%s151 + $0x590] sm:$0xff] %v508
                %v510 = vld [vmem:[%s150 + $0x1b98] sm:$0xff]
                %511 = vst [vmem:[%s151 + $0x598] sm:$0xff] %v510
                %v512 = vld [vmem:[%s150 + $0x1ba0] sm:$0xff]
                %513 = vst [vmem:[%s151 + $0x5a0] sm:$0xff] %v512
                %v514 = vld [vmem:[%s150 + $0x1ba8] sm:$0xff]
                %515 = vst [vmem:[%s151 + $0x5a8] sm:$0xff] %v514
                %v516 = vld [vmem:[%s150 + $0x1bb0] sm:$0xff]
                %517 = vst [vmem:[%s151 + $0x5b0] sm:$0xff] %v516
                %v518 = vld [vmem:[%s150 + $0x1bb8] sm:$0xff]
                %519 = vst [vmem:[%s151 + $0x5b8] sm:$0xff] %v518
                %v520 = vld [vmem:[%s150 + $0x1cc0] sm:$0xff]
                %521 = vst [vmem:[%s151 + $0x5c0] sm:$0xff] %v520
                %v522 = vld [vmem:[%s150 + $0x1cc8] sm:$0xff]
                %523 = vst [vmem:[%s151 + $0x5c8] sm:$0xff] %v522
                %v524 = vld [vmem:[%s150 + $0x1cd0] sm:$0xff]
                %525 = vst [vmem:[%s151 + $0x5d0] sm:$0xff] %v524
                %v526 = vld [vmem:[%s150 + $0x1cd8] sm:$0xff]
                %527 = vst [vmem:[%s151 + $0x5d8] sm:$0xff] %v526
                %v528 = vld [vmem:[%s150 + $0x1ce0] sm:$0xff]
                %529 = vst [vmem:[%s151 + $0x5e0] sm:$0xff] %v528
                %v530 = vld [vmem:[%s150 + $0x1ce8] sm:$0xff]
                %531 = vst [vmem:[%s151 + $0x5e8] sm:$0xff] %v530
                %v532 = vld [vmem:[%s150 + $0x1cf0] sm:$0xff]
                %533 = vst [vmem:[%s151 + $0x5f0] sm:$0xff] %v532
                %v534 = vld [vmem:[%s150 + $0x1cf8] sm:$0xff]
                %535 = vst [vmem:[%s151 + $0x5f8] sm:$0xff] %v534
                %v536 = vld [vmem:[%s150 + $0x1e00] sm:$0xff]
                %537 = vst [vmem:[%s151 + $0x600] sm:$0xff] %v536
                %v538 = vld [vmem:[%s150 + $0x1e08] sm:$0xff]
                %539 = vst [vmem:[%s151 + $0x608] sm:$0xff] %v538
                %v540 = vld [vmem:[%s150 + $0x1e10] sm:$0xff]
                %541 = vst [vmem:[%s151 + $0x610] sm:$0xff] %v540
                %v542 = vld [vmem:[%s150 + $0x1e18] sm:$0xff]
                %543 = vst [vmem:[%s151 + $0x618] sm:$0xff] %v542
                %v544 = vld [vmem:[%s150 + $0x1e20] sm:$0xff]
                %545 = vst [vmem:[%s151 + $0x620] sm:$0xff] %v544
                %v546 = vld [vmem:[%s150 + $0x1e28] sm:$0xff]
                %547 = vst [vmem:[%s151 + $0x628] sm:$0xff] %v546
                %v548 = vld [vmem:[%s150 + $0x1e30] sm:$0xff]
                %549 = vst [vmem:[%s151 + $0x630] sm:$0xff] %v548
                %v550 = vld [vmem:[%s150 + $0x1e38] sm:$0xff]
                %551 = vst [vmem:[%s151 + $0x638] sm:$0xff] %v550
                %v552 = vld [vmem:[%s150 + $0x1f40] sm:$0xff]
                %553 = vst [vmem:[%s151 + $0x640] sm:$0xff] %v552
                %v554 = vld [vmem:[%s150 + $0x1f48] sm:$0xff]
                %555 = vst [vmem:[%s151 + $0x648] sm:$0xff] %v554
                %v556 = vld [vmem:[%s150 + $0x1f50] sm:$0xff]
                %557 = vst [vmem:[%s151 + $0x650] sm:$0xff] %v556
                %v558 = vld [vmem:[%s150 + $0x1f58] sm:$0xff]
                %559 = vst [vmem:[%s151 + $0x658] sm:$0xff] %v558
                %v560 = vld [vmem:[%s150 + $0x1f60] sm:$0xff]
                %561 = vst [vmem:[%s151 + $0x660] sm:$0xff] %v560
                %v562 = vld [vmem:[%s150 + $0x1f68] sm:$0xff]
                %563 = vst [vmem:[%s151 + $0x668] sm:$0xff] %v562
                %v564 = vld [vmem:[%s150 + $0x1f70] sm:$0xff]
                %565 = vst [vmem:[%s151 + $0x670] sm:$0xff] %v564
                %v566 = vld [vmem:[%s150 + $0x1f78] sm:$0xff]
                %567 = vst [vmem:[%s151 + $0x678] sm:$0xff] %v566
                %v568 = vld [vmem:[%s150 + $0x2080] sm:$0xff]
                %569 = vst [vmem:[%s151 + $0x680] sm:$0xff] %v568
                %v570 = vld [vmem:[%s150 + $0x2088] sm:$0xff]
                %571 = vst [vmem:[%s151 + $0x688] sm:$0xff] %v570
                %v572 = vld [vmem:[%s150 + $0x2090] sm:$0xff]
                %573 = vst [vmem:[%s151 + $0x690] sm:$0xff] %v572
                %v574 = vld [vmem:[%s150 + $0x2098] sm:$0xff]
                %575 = vst [vmem:[%s151 + $0x698] sm:$0xff] %v574
                %v576 = vld [vmem:[%s150 + $0x20a0] sm:$0xff]
                %577 = vst [vmem:[%s151 + $0x6a0] sm:$0xff] %v576
                %v578 = vld [vmem:[%s150 + $0x20a8] sm:$0xff]
                %579 = vst [vmem:[%s151 + $0x6a8] sm:$0xff] %v578
                %v580 = vld [vmem:[%s150 + $0x20b0] sm:$0xff]
                %581 = vst [vmem:[%s151 + $0x6b0] sm:$0xff] %v580
                %v582 = vld [vmem:[%s150 + $0x20b8] sm:$0xff]
                %583 = vst [vmem:[%s151 + $0x6b8] sm:$0xff] %v582
                %v584 = vld [vmem:[%s150 + $0x21c0] sm:$0xff]
                %585 = vst [vmem:[%s151 + $0x6c0] sm:$0xff] %v584
                %v586 = vld [vmem:[%s150 + $0x21c8] sm:$0xff]
                %587 = vst [vmem:[%s151 + $0x6c8] sm:$0xff] %v586
                %v588 = vld [vmem:[%s150 + $0x21d0] sm:$0xff]
                %589 = vst [vmem:[%s151 + $0x6d0] sm:$0xff] %v588
                %v590 = vld [vmem:[%s150 + $0x21d8] sm:$0xff]
                %591 = vst [vmem:[%s151 + $0x6d8] sm:$0xff] %v590
                %v592 = vld [vmem:[%s150 + $0x21e0] sm:$0xff]
                %593 = vst [vmem:[%s151 + $0x6e0] sm:$0xff] %v592
                %v594 = vld [vmem:[%s150 + $0x21e8] sm:$0xff]
                %595 = vst [vmem:[%s151 + $0x6e8] sm:$0xff] %v594
                %v596 = vld [vmem:[%s150 + $0x21f0] sm:$0xff]
                %597 = vst [vmem:[%s151 + $0x6f0] sm:$0xff] %v596
                %v598 = vld [vmem:[%s150 + $0x21f8] sm:$0xff]
                %599 = vst [vmem:[%s151 + $0x6f8] sm:$0xff] %v598
                %v600 = vld [vmem:[%s150 + $0x2300] sm:$0xff]
                %601 = vst [vmem:[%s151 + $0x700] sm:$0xff] %v600
                %v602 = vld [vmem:[%s150 + $0x2308] sm:$0xff]
                %603 = vst [vmem:[%s151 + $0x708] sm:$0xff] %v602
                %v604 = vld [vmem:[%s150 + $0x2310] sm:$0xff]
                %605 = vst [vmem:[%s151 + $0x710] sm:$0xff] %v604
                %v606 = vld [vmem:[%s150 + $0x2318] sm:$0xff]
                %607 = vst [vmem:[%s151 + $0x718] sm:$0xff] %v606
                %v608 = vld [vmem:[%s150 + $0x2320] sm:$0xff]
                %609 = vst [vmem:[%s151 + $0x720] sm:$0xff] %v608
                %v610 = vld [vmem:[%s150 + $0x2328] sm:$0xff]
                %611 = vst [vmem:[%s151 + $0x728] sm:$0xff] %v610
                %v612 = vld [vmem:[%s150 + $0x2330] sm:$0xff]
                %613 = vst [vmem:[%s151 + $0x730] sm:$0xff] %v612
                %v614 = vld [vmem:[%s150 + $0x2338] sm:$0xff]
                %615 = vst [vmem:[%s151 + $0x738] sm:$0xff] %v614
                %v616 = vld [vmem:[%s150 + $0x2440] sm:$0xff]
                %617 = vst [vmem:[%s151 + $0x740] sm:$0xff] %v616
                %v618 = vld [vmem:[%s150 + $0x2448] sm:$0xff]
                %619 = vst [vmem:[%s151 + $0x748] sm:$0xff] %v618
                %v620 = vld [vmem:[%s150 + $0x2450] sm:$0xff]
                %621 = vst [vmem:[%s151 + $0x750] sm:$0xff] %v620
                %v622 = vld [vmem:[%s150 + $0x2458] sm:$0xff]
                %623 = vst [vmem:[%s151 + $0x758] sm:$0xff] %v622
                %v624 = vld [vmem:[%s150 + $0x2460] sm:$0xff]
                %625 = vst [vmem:[%s151 + $0x760] sm:$0xff] %v624
                %v626 = vld [vmem:[%s150 + $0x2468] sm:$0xff]
                %627 = vst [vmem:[%s151 + $0x768] sm:$0xff] %v626
                %v628 = vld [vmem:[%s150 + $0x2470] sm:$0xff]
                %629 = vst [vmem:[%s151 + $0x770] sm:$0xff] %v628
                %v630 = vld [vmem:[%s150 + $0x2478] sm:$0xff]
                %631 = vst [vmem:[%s151 + $0x778] sm:$0xff] %v630
                %v632 = vld [vmem:[%s150 + $0x2580] sm:$0xff]
                %633 = vst [vmem:[%s151 + $0x780] sm:$0xff] %v632
                %v634 = vld [vmem:[%s150 + $0x2588] sm:$0xff]
                %635 = vst [vmem:[%s151 + $0x788] sm:$0xff] %v634
                %v636 = vld [vmem:[%s150 + $0x2590] sm:$0xff]
                %637 = vst [vmem:[%s151 + $0x790] sm:$0xff] %v636
                %v638 = vld [vmem:[%s150 + $0x2598] sm:$0xff]
                %639 = vst [vmem:[%s151 + $0x798] sm:$0xff] %v638
                %v640 = vld [vmem:[%s150 + $0x25a0] sm:$0xff]
                %641 = vst [vmem:[%s151 + $0x7a0] sm:$0xff] %v640
                %v642 = vld [vmem:[%s150 + $0x25a8] sm:$0xff]
                %643 = vst [vmem:[%s151 + $0x7a8] sm:$0xff] %v642
                %v644 = vld [vmem:[%s150 + $0x25b0] sm:$0xff]
                %645 = vst [vmem:[%s151 + $0x7b0] sm:$0xff] %v644
                %v646 = vld [vmem:[%s150 + $0x25b8] sm:$0xff]
                %647 = vst [vmem:[%s151 + $0x7b8] sm:$0xff] %v646
                %v648 = vld [vmem:[%s150 + $0x26c0] sm:$0xff]
                %649 = vst [vmem:[%s151 + $0x7c0] sm:$0xff] %v648
                %v650 = vld [vmem:[%s150 + $0x26c8] sm:$0xff]
                %651 = vst [vmem:[%s151 + $0x7c8] sm:$0xff] %v650
                %v652 = vld [vmem:[%s150 + $0x26d0] sm:$0xff]
                %653 = vst [vmem:[%s151 + $0x7d0] sm:$0xff] %v652
                %v654 = vld [vmem:[%s150 + $0x26d8] sm:$0xff]
                %655 = vst [vmem:[%s151 + $0x7d8] sm:$0xff] %v654
                %v656 = vld [vmem:[%s150 + $0x26e0] sm:$0xff]
                %657 = vst [vmem:[%s151 + $0x7e0] sm:$0xff] %v656
                %v658 = vld [vmem:[%s150 + $0x26e8] sm:$0xff]
                %659 = vst [vmem:[%s151 + $0x7e8] sm:$0xff] %v658
                %v660 = vld [vmem:[%s150 + $0x26f0] sm:$0xff]
                %661 = vst [vmem:[%s151 + $0x7f0] sm:$0xff] %v660
                %v662 = vld [vmem:[%s150 + $0x26f8] sm:$0xff]
                %663 = vst [vmem:[%s151 + $0x7f8] sm:$0xff] %v662
              $region37: #{gpt2_forward.3} parent=31 // loop_footer
                %s149 = sadd.s32 1, %s145
              $region38: #{gpt2_forward.3} parent=31 // loop_footer_branch
                %144 = sbr.rel target = $region34
              $region39: #{gpt2_forward.3} parent=31 // loop_exit
                _
            $region32: #{gpt2_forward.3} parent=27 // pred_fallthru
              _
            // Predicated region
            $region40: #{gpt2_forward.3} parent=27 // pred_check
              _
            $region41: #{gpt2_forward.3} parent=27 // pred_check_branch
              %665 = sbr.rel target = $region43
            $region42: #{gpt2_forward.3} parent=27 // pred_region
              _
            $region43: #{gpt2_forward.3} parent=27 // pred_fallthru
              _
          $region28: #{gpt2_forward.3} parent=23 // pred_fallthru
            _
          %666 = vnop
        $region24: #{gpt2_forward.3} parent=19 // pred_fallthru
          _
        // Predicated region
        $region44: #{gpt2_forward.3} parent=19 // pred_check
          %p667 = pneg %p76
        $region45: #{gpt2_forward.3} parent=19 // pred_check_branch
          %669 = sbr.rel (%p667) target = $region47
        $region46: #{gpt2_forward.3} parent=19 // pred_region
          %s670 = smul.u32 16, %s9
          %p671 = scmp.lt.s32.totalorder %s670, 79
          %s672 = scalar_select %p671, %s670, 79
          %s673 = scalar_lea.vmem %s2, %s672
          %s674 = smul.u32 16, %s9
        $region47: #{gpt2_forward.3} parent=19 // pred_fallthru
          _
      $region20: #{gpt2_forward.3} parent=5 // pred_fallthru
        _
      %p675 = scmp.le.s32.totalorder 1, %s9
      %p676 = scmp.lt.s32.totalorder %s9, 6
      %p677 = pnand %p675, %p676
      %p678 = pneg %p677
      // Predicated region
      $region48: #{gpt2_forward.3} parent=5 // pred_check
        _
      $region49: #{gpt2_forward.3} parent=5 // pred_check_branch
        %680 = sbr.rel (%p677) target = $region51
      $region50: #{gpt2_forward.3} parent=5 // pred_region
        %s681 = ssub.s32 %s9, 1
        %s682 = sand.u32 %s43, 1
        %s683 = sand.u32 %s43, 1
        %s684 = smul.addr %s683, 2048
        %s685 = scalar_lea.vmem [#allocation2], %s684
        // Predicated region
        $region52: #{gpt2_forward.3} parent=50 // pred_check
          %p686 = pneg %p56
        $region53: #{gpt2_forward.3} parent=50 // pred_check_branch
          %688 = sbr.rel (%p686) target = $region55
        $region54: #{gpt2_forward.3} parent=50 // pred_region
          _
        $region55: #{gpt2_forward.3} parent=50 // pred_fallthru
          _
        %p689 = pneg %p30
        %p690 = pneg %p27
        %s691 = sand.u32 %s43, 1
        %s692 = sand.u32 %s43, 1
        %s693 = smul.addr %s692, 2048
        %s694 = scalar_lea.vmem [#allocation2], %s693
        %p695 = pneg %p56
        %p696 = pneg %p53
        %s697 = smul.u32 16, %s14
        %p698 = scmp.lt.s32.totalorder %s697, 79
        %s699 = scalar_select %p698, %s697, 79
        %s700 = scalar_lea.vmem %s2, %s699
        %p701 = pneg %p82
        %p702 = pneg %p79
        %p703 = pneg %p108
        %p704 = pneg %p105
        %s705 = sand.u32 %s95, 1
        %s706 = sand.u32 %s95, 1
        %s707 = smul.addr %s706, 512
        %s708 = scalar_lea.vmem [#allocation3], %s707
        %s709 = smul.u32 16, %s14
        %s710 = smul.u32 16, %s14
        %p711 = scmp.lt.s32.totalorder %s710, 79
        %s712 = scalar_select %p711, %s710, 79
        %s713 = scalar_lea.vmem %s2, %s712
        %s714 = smul.u32 16, %s14
        %s715 = smul.u32 16, %s14
        %v716 = vld [vmem:[%s0] sm:$0xff]
        %v717 = vld [vmem:[%s0 + $0x8] sm:$0xff]
        %v718 = vld [vmem:[%s0 + $0x10] sm:$0xff]
        %v719 = vld [vmem:[%s0 + $0x18] sm:$0xff]
        %v720 = vld [vmem:[%s685] sm:$0xff]
        %v721 = vld [vmem:[%s685 + $0x8] sm:$0xff]
        %v722 = vld [vmem:[%s685 + $0x10] sm:$0xff]
        %v723 = vld [vmem:[%s685 + $0x18] sm:$0xff]
        %v724 = vld [vmem:[%s685 + $0x20] sm:$0xff]
        %v725 = vld [vmem:[%s685 + $0x28] sm:$0xff]
        %v726 = vld [vmem:[%s685 + $0x30] sm:$0xff]
        %v727 = vld [vmem:[%s685 + $0x38] sm:$0xff]
        %v728 = vld [vmem:[%s685 + $0x40] sm:$0xff]
        %v729 = vld [vmem:[%s685 + $0x48] sm:$0xff]
        %v730 = vld [vmem:[%s685 + $0x50] sm:$0xff]
        %v731 = vld [vmem:[%s685 + $0x58] sm:$0xff]
        %v732 = vld [vmem:[%s685 + $0x60] sm:$0xff]
        %v733 = vld [vmem:[%s685 + $0x68] sm:$0xff]
        %v734 = vld [vmem:[%s685 + $0x70] sm:$0xff]
        %v735 = vld [vmem:[%s685 + $0x78] sm:$0xff]
        %v736 = vld [vmem:[%s685 + $0x80] sm:$0xff]
        %v737 = vld [vmem:[%s685 + $0x88] sm:$0xff]
        %v738 = vld [vmem:[%s685 + $0x90] sm:$0xff]
        %v739 = vld [vmem:[%s685 + $0x98] sm:$0xff]
        %v740 = vld [vmem:[%s685 + $0xa0] sm:$0xff]
        %v741 = vld [vmem:[%s685 + $0xa8] sm:$0xff]
        %v742 = vld [vmem:[%s685 + $0xb0] sm:$0xff]
        %v743 = vld [vmem:[%s685 + $0xb8] sm:$0xff]
        %v744 = vld [vmem:[%s685 + $0xc0] sm:$0xff]
        %v745 = vld [vmem:[%s685 + $0xc8] sm:$0xff]
        %v746 = vld [vmem:[%s685 + $0xd0] sm:$0xff]
        %v747 = vld [vmem:[%s685 + $0xd8] sm:$0xff]
        %v748 = vld [vmem:[%s685 + $0xe0] sm:$0xff]
        %v749 = vld [vmem:[%s685 + $0xe8] sm:$0xff]
        %v750 = vld [vmem:[%s685 + $0xf0] sm:$0xff]
        %v751 = vld [vmem:[%s685 + $0xf8] sm:$0xff]
        %v752 = vld [vmem:[%s685 + $0x100] sm:$0xff]
        %v753 = vld [vmem:[%s685 + $0x108] sm:$0xff]
        %v754 = vld [vmem:[%s685 + $0x110] sm:$0xff]
        %v755 = vld [vmem:[%s685 + $0x118] sm:$0xff]
        %v756 = vld [vmem:[%s685 + $0x120] sm:$0xff]
        %v757 = vld [vmem:[%s685 + $0x128] sm:$0xff]
        %v758 = vld [vmem:[%s685 + $0x130] sm:$0xff]
        %v759 = vld [vmem:[%s685 + $0x138] sm:$0xff]
        %v760 = vld [vmem:[%s685 + $0x140] sm:$0xff]
        %v761 = vld [vmem:[%s685 + $0x148] sm:$0xff]
        %v762 = vld [vmem:[%s685 + $0x150] sm:$0xff]
        %v763 = vld [vmem:[%s685 + $0x158] sm:$0xff]
        %v764 = vld [vmem:[%s685 + $0x160] sm:$0xff]
        %v765 = vld [vmem:[%s685 + $0x168] sm:$0xff]
        %v766 = vld [vmem:[%s685 + $0x170] sm:$0xff]
        %v767 = vld [vmem:[%s685 + $0x178] sm:$0xff]
        %v768 = vld [vmem:[%s685 + $0x180] sm:$0xff]
        %v769 = vld [vmem:[%s685 + $0x188] sm:$0xff]
        %v770 = vld [vmem:[%s685 + $0x190] sm:$0xff]
        %v771 = vld [vmem:[%s685 + $0x198] sm:$0xff]
        %v772 = vld [vmem:[%s685 + $0x1a0] sm:$0xff]
        %v773 = vld [vmem:[%s685 + $0x1a8] sm:$0xff]
        %v774 = vld [vmem:[%s685 + $0x1b0] sm:$0xff]
        %v775 = vld [vmem:[%s685 + $0x1b8] sm:$0xff]
        %v776 = vld [vmem:[%s685 + $0x1c0] sm:$0xff]
        %v777 = vld [vmem:[%s685 + $0x1c8] sm:$0xff]
        %v778 = vld [vmem:[%s685 + $0x1d0] sm:$0xff]
        %v779 = vld [vmem:[%s685 + $0x1d8] sm:$0xff]
        %v780 = vld [vmem:[%s685 + $0x1e0] sm:$0xff]
        %v781 = vld [vmem:[%s685 + $0x1e8] sm:$0xff]
        %v782 = vld [vmem:[%s685 + $0x1f0] sm:$0xff]
        %v783 = vld [vmem:[%s685 + $0x1f8] sm:$0xff]
        %v784 = vld [vmem:[%s685 + $0x200] sm:$0xff]
        %v785 = vld [vmem:[%s685 + $0x208] sm:$0xff]
        %v786 = vld [vmem:[%s685 + $0x210] sm:$0xff]
        %v787 = vld [vmem:[%s685 + $0x218] sm:$0xff]
        %v788 = vld [vmem:[%s685 + $0x220] sm:$0xff]
        %v789 = vld [vmem:[%s685 + $0x228] sm:$0xff]
        %v790 = vld [vmem:[%s685 + $0x230] sm:$0xff]
        %v791 = vld [vmem:[%s685 + $0x238] sm:$0xff]
        %v792 = vld [vmem:[%s685 + $0x240] sm:$0xff]
        %v793 = vld [vmem:[%s685 + $0x248] sm:$0xff]
        %v794 = vld [vmem:[%s685 + $0x250] sm:$0xff]
        %v795 = vld [vmem:[%s685 + $0x258] sm:$0xff]
        %v796 = vld [vmem:[%s685 + $0x260] sm:$0xff]
        %v797 = vld [vmem:[%s685 + $0x268] sm:$0xff]
        %v798 = vld [vmem:[%s685 + $0x270] sm:$0xff]
        %v799 = vld [vmem:[%s685 + $0x278] sm:$0xff]
        %v800 = vld [vmem:[%s685 + $0x280] sm:$0xff]
        %v801 = vld [vmem:[%s685 + $0x288] sm:$0xff]
        %v802 = vld [vmem:[%s685 + $0x290] sm:$0xff]
        %v803 = vld [vmem:[%s685 + $0x298] sm:$0xff]
        %v804 = vld [vmem:[%s685 + $0x2a0] sm:$0xff]
        %v805 = vld [vmem:[%s685 + $0x2a8] sm:$0xff]
        %v806 = vld [vmem:[%s685 + $0x2b0] sm:$0xff]
        %v807 = vld [vmem:[%s685 + $0x2b8] sm:$0xff]
        %v808 = vld [vmem:[%s685 + $0x2c0] sm:$0xff]
        %v809 = vld [vmem:[%s685 + $0x2c8] sm:$0xff]
        %v810 = vld [vmem:[%s685 + $0x2d0] sm:$0xff]
        %v811 = vld [vmem:[%s685 + $0x2d8] sm:$0xff]
        %v812 = vld [vmem:[%s685 + $0x2e0] sm:$0xff]
        %v813 = vld [vmem:[%s685 + $0x2e8] sm:$0xff]
        %v814 = vld [vmem:[%s685 + $0x2f0] sm:$0xff]
        %v815 = vld [vmem:[%s685 + $0x2f8] sm:$0xff]
        %v816 = vld [vmem:[%s685 + $0x300] sm:$0xff]
        %v817 = vld [vmem:[%s685 + $0x308] sm:$0xff]
        %v818 = vld [vmem:[%s685 + $0x310] sm:$0xff]
        %v819 = vld [vmem:[%s685 + $0x318] sm:$0xff]
        %v820 = vld [vmem:[%s685 + $0x320] sm:$0xff]
        %v821 = vld [vmem:[%s685 + $0x328] sm:$0xff]
        %v822 = vld [vmem:[%s685 + $0x330] sm:$0xff]
        %v823 = vld [vmem:[%s685 + $0x338] sm:$0xff]
        %v824 = vld [vmem:[%s685 + $0x340] sm:$0xff]
        %v825 = vld [vmem:[%s685 + $0x348] sm:$0xff]
        %v826 = vld [vmem:[%s685 + $0x350] sm:$0xff]
        %v827 = vld [vmem:[%s685 + $0x358] sm:$0xff]
        %v828 = vld [vmem:[%s685 + $0x360] sm:$0xff]
        %v829 = vld [vmem:[%s685 + $0x368] sm:$0xff]
        %v830 = vld [vmem:[%s685 + $0x370] sm:$0xff]
        %v831 = vld [vmem:[%s685 + $0x378] sm:$0xff]
        %v832 = vld [vmem:[%s685 + $0x380] sm:$0xff]
        %v833 = vld [vmem:[%s685 + $0x388] sm:$0xff]
        %v834 = vld [vmem:[%s685 + $0x390] sm:$0xff]
        %v835 = vld [vmem:[%s685 + $0x398] sm:$0xff]
        %v836 = vld [vmem:[%s685 + $0x3a0] sm:$0xff]
        %v837 = vld [vmem:[%s685 + $0x3a8] sm:$0xff]
        %v838 = vld [vmem:[%s685 + $0x3b0] sm:$0xff]
        %v839 = vld [vmem:[%s685 + $0x3b8] sm:$0xff]
        %v840 = vld [vmem:[%s685 + $0x3c0] sm:$0xff]
        %v841 = vld [vmem:[%s685 + $0x3c8] sm:$0xff]
        %v842 = vld [vmem:[%s685 + $0x3d0] sm:$0xff]
        %v843 = vld [vmem:[%s685 + $0x3d8] sm:$0xff]
        %v844 = vld [vmem:[%s685 + $0x3e0] sm:$0xff]
        %v845 = vld [vmem:[%s685 + $0x3e8] sm:$0xff]
        %v846 = vld [vmem:[%s685 + $0x3f0] sm:$0xff]
        %v847 = vld [vmem:[%s685 + $0x3f8] sm:$0xff]
        %v848 = vld [vmem:[%s685 + $0x400] sm:$0xff]
        %v849 = vld [vmem:[%s685 + $0x408] sm:$0xff]
        %v850 = vld [vmem:[%s685 + $0x410] sm:$0xff]
        %v851 = vld [vmem:[%s685 + $0x418] sm:$0xff]
        %v852 = vld [vmem:[%s685 + $0x420] sm:$0xff]
        %v853 = vld [vmem:[%s685 + $0x428] sm:$0xff]
        %v854 = vld [vmem:[%s685 + $0x430] sm:$0xff]
        %v855 = vld [vmem:[%s685 + $0x438] sm:$0xff]
        %v856 = vld [vmem:[%s685 + $0x440] sm:$0xff]
        %v857 = vld [vmem:[%s685 + $0x448] sm:$0xff]
        %v858 = vld [vmem:[%s685 + $0x450] sm:$0xff]
        %v859 = vld [vmem:[%s685 + $0x458] sm:$0xff]
        %v860 = vld [vmem:[%s685 + $0x460] sm:$0xff]
        %v861 = vld [vmem:[%s685 + $0x468] sm:$0xff]
        %v862 = vld [vmem:[%s685 + $0x470] sm:$0xff]
        %v863 = vld [vmem:[%s685 + $0x478] sm:$0xff]
        %v864 = vld [vmem:[%s685 + $0x480] sm:$0xff]
        %v865 = vld [vmem:[%s685 + $0x488] sm:$0xff]
        %v866 = vld [vmem:[%s685 + $0x490] sm:$0xff]
        %v867 = vld [vmem:[%s685 + $0x498] sm:$0xff]
        %v868 = vld [vmem:[%s685 + $0x4a0] sm:$0xff]
        %v869 = vld [vmem:[%s685 + $0x4a8] sm:$0xff]
        %v870 = vld [vmem:[%s685 + $0x4b0] sm:$0xff]
        %v871 = vld [vmem:[%s685 + $0x4b8] sm:$0xff]
        %v872 = vld [vmem:[%s685 + $0x4c0] sm:$0xff]
        %v873 = vld [vmem:[%s685 + $0x4c8] sm:$0xff]
        %v874 = vld [vmem:[%s685 + $0x4d0] sm:$0xff]
        %v875 = vld [vmem:[%s685 + $0x4d8] sm:$0xff]
        %v876 = vld [vmem:[%s685 + $0x4e0] sm:$0xff]
        %v877 = vld [vmem:[%s685 + $0x4e8] sm:$0xff]
        %v878 = vld [vmem:[%s685 + $0x4f0] sm:$0xff]
        %v879 = vld [vmem:[%s685 + $0x4f8] sm:$0xff]
        %v880 = vld [vmem:[%s685 + $0x500] sm:$0xff]
        %v881 = vld [vmem:[%s685 + $0x508] sm:$0xff]
        %v882 = vld [vmem:[%s685 + $0x510] sm:$0xff]
        %v883 = vld [vmem:[%s685 + $0x518] sm:$0xff]
        %v884 = vld [vmem:[%s685 + $0x520] sm:$0xff]
        %v885 = vld [vmem:[%s685 + $0x528] sm:$0xff]
        %v886 = vld [vmem:[%s685 + $0x530] sm:$0xff]
        %v887 = vld [vmem:[%s685 + $0x538] sm:$0xff]
        %v888 = vld [vmem:[%s685 + $0x540] sm:$0xff]
        %v889 = vld [vmem:[%s685 + $0x548] sm:$0xff]
        %v890 = vld [vmem:[%s685 + $0x550] sm:$0xff]
        %v891 = vld [vmem:[%s685 + $0x558] sm:$0xff]
        %v892 = vld [vmem:[%s685 + $0x560] sm:$0xff]
        %v893 = vld [vmem:[%s685 + $0x568] sm:$0xff]
        %v894 = vld [vmem:[%s685 + $0x570] sm:$0xff]
        %v895 = vld [vmem:[%s685 + $0x578] sm:$0xff]
        %v896 = vld [vmem:[%s685 + $0x580] sm:$0xff]
        %v897 = vld [vmem:[%s685 + $0x588] sm:$0xff]
        %v898 = vld [vmem:[%s685 + $0x590] sm:$0xff]
        %v899 = vld [vmem:[%s685 + $0x598] sm:$0xff]
        %v900 = vld [vmem:[%s685 + $0x5a0] sm:$0xff]
        %v901 = vld [vmem:[%s685 + $0x5a8] sm:$0xff]
        %v902 = vld [vmem:[%s685 + $0x5b0] sm:$0xff]
        %v903 = vld [vmem:[%s685 + $0x5b8] sm:$0xff]
        %v904 = vld [vmem:[%s685 + $0x5c0] sm:$0xff]
        %v905 = vld [vmem:[%s685 + $0x5c8] sm:$0xff]
        %v906 = vld [vmem:[%s685 + $0x5d0] sm:$0xff]
        %v907 = vld [vmem:[%s685 + $0x5d8] sm:$0xff]
        %v908 = vld [vmem:[%s685 + $0x5e0] sm:$0xff]
        %v909 = vld [vmem:[%s685 + $0x5e8] sm:$0xff]
        %v910 = vld [vmem:[%s685 + $0x5f0] sm:$0xff]
        %v911 = vld [vmem:[%s685 + $0x5f8] sm:$0xff]
        %v912 = vld [vmem:[%s685 + $0x600] sm:$0xff]
        %v913 = vld [vmem:[%s685 + $0x608] sm:$0xff]
        %v914 = vld [vmem:[%s685 + $0x610] sm:$0xff]
        %v915 = vld [vmem:[%s685 + $0x618] sm:$0xff]
        %v916 = vld [vmem:[%s685 + $0x620] sm:$0xff]
        %v917 = vld [vmem:[%s685 + $0x628] sm:$0xff]
        %v918 = vld [vmem:[%s685 + $0x630] sm:$0xff]
        %v919 = vld [vmem:[%s685 + $0x638] sm:$0xff]
        %v920 = vld [vmem:[%s685 + $0x640] sm:$0xff]
        %v921 = vld [vmem:[%s685 + $0x648] sm:$0xff]
        %v922 = vld [vmem:[%s685 + $0x650] sm:$0xff]
        %v923 = vld [vmem:[%s685 + $0x658] sm:$0xff]
        %v924 = vld [vmem:[%s685 + $0x660] sm:$0xff]
        %v925 = vld [vmem:[%s685 + $0x668] sm:$0xff]
        %v926 = vld [vmem:[%s685 + $0x670] sm:$0xff]
        %v927 = vld [vmem:[%s685 + $0x678] sm:$0xff]
        %v928 = vld [vmem:[%s685 + $0x680] sm:$0xff]
        %v929 = vld [vmem:[%s685 + $0x688] sm:$0xff]
        %v930 = vld [vmem:[%s685 + $0x690] sm:$0xff]
        %v931 = vld [vmem:[%s685 + $0x698] sm:$0xff]
        %v932 = vld [vmem:[%s685 + $0x6a0] sm:$0xff]
        %v933 = vld [vmem:[%s685 + $0x6a8] sm:$0xff]
        %v934 = vld [vmem:[%s685 + $0x6b0] sm:$0xff]
        %v935 = vld [vmem:[%s685 + $0x6b8] sm:$0xff]
        %v936 = vld [vmem:[%s685 + $0x6c0] sm:$0xff]
        %v937 = vld [vmem:[%s685 + $0x6c8] sm:$0xff]
        %v938 = vld [vmem:[%s685 + $0x6d0] sm:$0xff]
        %v939 = vld [vmem:[%s685 + $0x6d8] sm:$0xff]
        %v940 = vld [vmem:[%s685 + $0x6e0] sm:$0xff]
        %v941 = vld [vmem:[%s685 + $0x6e8] sm:$0xff]
        %v942 = vld [vmem:[%s685 + $0x6f0] sm:$0xff]
        %v943 = vld [vmem:[%s685 + $0x6f8] sm:$0xff]
        %v944 = vld [vmem:[%s685 + $0x700] sm:$0xff]
        %v945 = vld [vmem:[%s685 + $0x708] sm:$0xff]
        %v946 = vld [vmem:[%s685 + $0x710] sm:$0xff]
        %v947 = vld [vmem:[%s685 + $0x718] sm:$0xff]
        %v948 = vld [vmem:[%s685 + $0x720] sm:$0xff]
        %v949 = vld [vmem:[%s685 + $0x728] sm:$0xff]
        %v950 = vld [vmem:[%s685 + $0x730] sm:$0xff]
        %v951 = vld [vmem:[%s685 + $0x738] sm:$0xff]
        %v952 = vld [vmem:[%s685 + $0x740] sm:$0xff]
        %v953 = vld [vmem:[%s685 + $0x748] sm:$0xff]
        %v954 = vld [vmem:[%s685 + $0x750] sm:$0xff]
        %v955 = vld [vmem:[%s685 + $0x758] sm:$0xff]
        %v956 = vld [vmem:[%s685 + $0x760] sm:$0xff]
        %v957 = vld [vmem:[%s685 + $0x768] sm:$0xff]
        %v958 = vld [vmem:[%s685 + $0x770] sm:$0xff]
        %v959 = vld [vmem:[%s685 + $0x778] sm:$0xff]
        %v960 = vld [vmem:[%s685 + $0x780] sm:$0xff]
        %v961 = vld [vmem:[%s685 + $0x788] sm:$0xff]
        %v962 = vld [vmem:[%s685 + $0x790] sm:$0xff]
        %v963 = vld [vmem:[%s685 + $0x798] sm:$0xff]
        %v964 = vld [vmem:[%s685 + $0x7a0] sm:$0xff]
        %v965 = vld [vmem:[%s685 + $0x7a8] sm:$0xff]
        %v966 = vld [vmem:[%s685 + $0x7b0] sm:$0xff]
        %v967 = vld [vmem:[%s685 + $0x7b8] sm:$0xff]
        %v968 = vld [vmem:[%s685 + $0x7c0] sm:$0xff]
        %v969 = vld [vmem:[%s685 + $0x7c8] sm:$0xff]
        %v970 = vld [vmem:[%s685 + $0x7d0] sm:$0xff]
        %v971 = vld [vmem:[%s685 + $0x7d8] sm:$0xff]
        %v972 = vld [vmem:[%s685 + $0x7e0] sm:$0xff]
        %v973 = vld [vmem:[%s685 + $0x7e8] sm:$0xff]
        %v974 = vld [vmem:[%s685 + $0x7f0] sm:$0xff]
        %v975 = vld [vmem:[%s685 + $0x7f8] sm:$0xff]
        %v976 = vld [vmem:[%s713] sm:$0xff]
        %v977 = vld [vmem:[%s713 + $0x8] sm:$0xff]
        %v980 = vlaneseq
        %v981 = vshrl.u32 %v980, 7
        %v982 = vsub.s32 0, %v981
        %v983 = vrot.slane %v976, %v982
        %v984 = vlaneseq
        %v985 = vshrl.u32 %v984, 7
        %v986 = vsub.s32 1, %v985
        %v987 = vrot.slane %v976, %v986
        %v988 = vlaneseq
        %v989 = vshrl.u32 %v988, 7
        %v990 = vsub.s32 2, %v989
        %v991 = vrot.slane %v976, %v990
        %v992 = vlaneseq
        %v993 = vshrl.u32 %v992, 7
        %v994 = vsub.s32 3, %v993
        %v995 = vrot.slane %v976, %v994
        %v996 = vlaneseq
        %v997 = vshrl.u32 %v996, 7
        %v998 = vsub.s32 4, %v997
        %v999 = vrot.slane %v976, %v998
        %v1000 = vlaneseq
        %v1001 = vshrl.u32 %v1000, 7
        %v1002 = vsub.s32 5, %v1001
        %v1003 = vrot.slane %v976, %v1002
        %v1004 = vlaneseq
        %v1005 = vshrl.u32 %v1004, 7
        %v1006 = vsub.s32 6, %v1005
        %v1007 = vrot.slane %v976, %v1006
        %v1008 = vlaneseq
        %v1009 = vshrl.u32 %v1008, 7
        %v1010 = vsub.s32 7, %v1009
        %v1011 = vrot.slane %v976, %v1010
        %v1012 = vlaneseq
        %v1013 = vshrl.u32 %v1012, 7
        %v1014 = vsub.s32 0, %v1013
        %v1015 = vrot.slane %v977, %v1014
        %v1016 = vlaneseq
        %v1017 = vshrl.u32 %v1016, 7
        %v1018 = vsub.s32 1, %v1017
        %v1019 = vrot.slane %v977, %v1018
        %v1020 = vlaneseq
        %v1021 = vshrl.u32 %v1020, 7
        %v1022 = vsub.s32 2, %v1021
        %v1023 = vrot.slane %v977, %v1022
        %v1024 = vlaneseq
        %v1025 = vshrl.u32 %v1024, 7
        %v1026 = vsub.s32 3, %v1025
        %v1027 = vrot.slane %v977, %v1026
        %v1028 = vlaneseq
        %v1029 = vshrl.u32 %v1028, 7
        %v1030 = vsub.s32 4, %v1029
        %v1031 = vrot.slane %v977, %v1030
        %v1032 = vlaneseq
        %v1033 = vshrl.u32 %v1032, 7
        %v1034 = vsub.s32 5, %v1033
        %v1035 = vrot.slane %v977, %v1034
        %v1036 = vlaneseq
        %v1037 = vshrl.u32 %v1036, 7
        %v1038 = vsub.s32 6, %v1037
        %v1039 = vrot.slane %v977, %v1038
        %v1040 = vlaneseq
        %v1041 = vshrl.u32 %v1040, 7
        %v1042 = vsub.s32 7, %v1041
        %v1043 = vrot.slane %v977, %v1042
        %v1064 = vunpack.c.l.b16 %v716
        %v1065 = vunpack.c.h.b16 %v716
        %v1066 = vunpack.c.l.b16 %v717
        %v1067 = vunpack.c.h.b16 %v717
        %v1068 = vunpack.c.l.b16 %v718
        %v1069 = vunpack.c.h.b16 %v718
        %v1070 = vunpack.c.l.b16 %v719
        %v1071 = vunpack.c.h.b16 %v719
        %v1072 = vpack.c.b16 %v1066, %v1064
        %v1073 = vpack.c.b16 %v1067, %v1065
        %v1074 = vpack.c.b16 %v1070, %v1068
        %v1075 = vpack.c.b16 %v1071, %v1069
        %v1336 = vunpack.c.l.b16 %v720
        %v1337 = vunpack.c.h.b16 %v720
        %v1338 = vunpack.c.l.b16 %v721
        %v1339 = vunpack.c.h.b16 %v721
        %v1340 = vunpack.c.l.b16 %v722
        %v1341 = vunpack.c.h.b16 %v722
        %v1342 = vunpack.c.l.b16 %v723
        %v1343 = vunpack.c.h.b16 %v723
        %v1344 = vunpack.c.l.b16 %v724
        %v1345 = vunpack.c.h.b16 %v724
        %v1346 = vunpack.c.l.b16 %v725
        %v1347 = vunpack.c.h.b16 %v725
        %v1348 = vunpack.c.l.b16 %v726
        %v1349 = vunpack.c.h.b16 %v726
        %v1350 = vunpack.c.l.b16 %v727
        %v1351 = vunpack.c.h.b16 %v727
        %v1352 = vunpack.c.l.b16 %v728
        %v1353 = vunpack.c.h.b16 %v728
        %v1354 = vunpack.c.l.b16 %v729
        %v1355 = vunpack.c.h.b16 %v729
        %v1356 = vunpack.c.l.b16 %v730
        %v1357 = vunpack.c.h.b16 %v730
        %v1358 = vunpack.c.l.b16 %v731
        %v1359 = vunpack.c.h.b16 %v731
        %v1360 = vunpack.c.l.b16 %v732
        %v1361 = vunpack.c.h.b16 %v732
        %v1362 = vunpack.c.l.b16 %v733
        %v1363 = vunpack.c.h.b16 %v733
        %v1364 = vunpack.c.l.b16 %v734
        %v1365 = vunpack.c.h.b16 %v734
        %v1366 = vunpack.c.l.b16 %v735
        %v1367 = vunpack.c.h.b16 %v735
        %v1368 = vunpack.c.l.b16 %v736
        %v1369 = vunpack.c.h.b16 %v736
        %v1370 = vunpack.c.l.b16 %v737
        %v1371 = vunpack.c.h.b16 %v737
        %v1372 = vunpack.c.l.b16 %v738
        %v1373 = vunpack.c.h.b16 %v738
        %v1374 = vunpack.c.l.b16 %v739
        %v1375 = vunpack.c.h.b16 %v739
        %v1376 = vunpack.c.l.b16 %v740
        %v1377 = vunpack.c.h.b16 %v740
        %v1378 = vunpack.c.l.b16 %v741
        %v1379 = vunpack.c.h.b16 %v741
        %v1380 = vunpack.c.l.b16 %v742
        %v1381 = vunpack.c.h.b16 %v742
        %v1382 = vunpack.c.l.b16 %v743
        %v1383 = vunpack.c.h.b16 %v743
        %v1384 = vunpack.c.l.b16 %v744
        %v1385 = vunpack.c.h.b16 %v744
        %v1386 = vunpack.c.l.b16 %v745
        %v1387 = vunpack.c.h.b16 %v745
        %v1388 = vunpack.c.l.b16 %v746
        %v1389 = vunpack.c.h.b16 %v746
        %v1390 = vunpack.c.l.b16 %v747
        %v1391 = vunpack.c.h.b16 %v747
        %v1392 = vunpack.c.l.b16 %v748
        %v1393 = vunpack.c.h.b16 %v748
        %v1394 = vunpack.c.l.b16 %v749
        %v1395 = vunpack.c.h.b16 %v749
        %v1396 = vunpack.c.l.b16 %v750
        %v1397 = vunpack.c.h.b16 %v750
        %v1398 = vunpack.c.l.b16 %v751
        %v1399 = vunpack.c.h.b16 %v751
        %v1400 = vunpack.c.l.b16 %v752
        %v1401 = vunpack.c.h.b16 %v752
        %v1402 = vunpack.c.l.b16 %v753
        %v1403 = vunpack.c.h.b16 %v753
        %v1404 = vunpack.c.l.b16 %v754
        %v1405 = vunpack.c.h.b16 %v754
        %v1406 = vunpack.c.l.b16 %v755
        %v1407 = vunpack.c.h.b16 %v755
        %v1408 = vunpack.c.l.b16 %v756
        %v1409 = vunpack.c.h.b16 %v756
        %v1410 = vunpack.c.l.b16 %v757
        %v1411 = vunpack.c.h.b16 %v757
        %v1412 = vunpack.c.l.b16 %v758
        %v1413 = vunpack.c.h.b16 %v758
        %v1414 = vunpack.c.l.b16 %v759
        %v1415 = vunpack.c.h.b16 %v759
        %v1416 = vunpack.c.l.b16 %v760
        %v1417 = vunpack.c.h.b16 %v760
        %v1418 = vunpack.c.l.b16 %v761
        %v1419 = vunpack.c.h.b16 %v761
        %v1420 = vunpack.c.l.b16 %v762
        %v1421 = vunpack.c.h.b16 %v762
        %v1422 = vunpack.c.l.b16 %v763
        %v1423 = vunpack.c.h.b16 %v763
        %v1424 = vunpack.c.l.b16 %v764
        %v1425 = vunpack.c.h.b16 %v764
        %v1426 = vunpack.c.l.b16 %v765
        %v1427 = vunpack.c.h.b16 %v765
        %v1428 = vunpack.c.l.b16 %v766
        %v1429 = vunpack.c.h.b16 %v766
        %v1430 = vunpack.c.l.b16 %v767
        %v1431 = vunpack.c.h.b16 %v767
        %v1432 = vunpack.c.l.b16 %v768
        %v1433 = vunpack.c.h.b16 %v768
        %v1434 = vunpack.c.l.b16 %v769
        %v1435 = vunpack.c.h.b16 %v769
        %v1436 = vunpack.c.l.b16 %v770
        %v1437 = vunpack.c.h.b16 %v770
        %v1438 = vunpack.c.l.b16 %v771
        %v1439 = vunpack.c.h.b16 %v771
        %v1440 = vunpack.c.l.b16 %v772
        %v1441 = vunpack.c.h.b16 %v772
        %v1442 = vunpack.c.l.b16 %v773
        %v1443 = vunpack.c.h.b16 %v773
        %v1444 = vunpack.c.l.b16 %v774
        %v1445 = vunpack.c.h.b16 %v774
        %v1446 = vunpack.c.l.b16 %v775
        %v1447 = vunpack.c.h.b16 %v775
        %v1448 = vunpack.c.l.b16 %v776
        %v1449 = vunpack.c.h.b16 %v776
        %v1450 = vunpack.c.l.b16 %v777
        %v1451 = vunpack.c.h.b16 %v777
        %v1452 = vunpack.c.l.b16 %v778
        %v1453 = vunpack.c.h.b16 %v778
        %v1454 = vunpack.c.l.b16 %v779
        %v1455 = vunpack.c.h.b16 %v779
        %v1456 = vunpack.c.l.b16 %v780
        %v1457 = vunpack.c.h.b16 %v780
        %v1458 = vunpack.c.l.b16 %v781
        %v1459 = vunpack.c.h.b16 %v781
        %v1460 = vunpack.c.l.b16 %v782
        %v1461 = vunpack.c.h.b16 %v782
        %v1462 = vunpack.c.l.b16 %v783
        %v1463 = vunpack.c.h.b16 %v783
        %v1464 = vunpack.c.l.b16 %v784
        %v1465 = vunpack.c.h.b16 %v784
        %v1466 = vunpack.c.l.b16 %v785
        %v1467 = vunpack.c.h.b16 %v785
        %v1468 = vunpack.c.l.b16 %v786
        %v1469 = vunpack.c.h.b16 %v786
        %v1470 = vunpack.c.l.b16 %v787
        %v1471 = vunpack.c.h.b16 %v787
        %v1472 = vunpack.c.l.b16 %v788
        %v1473 = vunpack.c.h.b16 %v788
        %v1474 = vunpack.c.l.b16 %v789
        %v1475 = vunpack.c.h.b16 %v789
        %v1476 = vunpack.c.l.b16 %v790
        %v1477 = vunpack.c.h.b16 %v790
        %v1478 = vunpack.c.l.b16 %v791
        %v1479 = vunpack.c.h.b16 %v791
        %v1480 = vunpack.c.l.b16 %v792
        %v1481 = vunpack.c.h.b16 %v792
        %v1482 = vunpack.c.l.b16 %v793
        %v1483 = vunpack.c.h.b16 %v793
        %v1484 = vunpack.c.l.b16 %v794
        %v1485 = vunpack.c.h.b16 %v794
        %v1486 = vunpack.c.l.b16 %v795
        %v1487 = vunpack.c.h.b16 %v795
        %v1488 = vunpack.c.l.b16 %v796
        %v1489 = vunpack.c.h.b16 %v796
        %v1490 = vunpack.c.l.b16 %v797
        %v1491 = vunpack.c.h.b16 %v797
        %v1492 = vunpack.c.l.b16 %v798
        %v1493 = vunpack.c.h.b16 %v798
        %v1494 = vunpack.c.l.b16 %v799
        %v1495 = vunpack.c.h.b16 %v799
        %v1496 = vunpack.c.l.b16 %v800
        %v1497 = vunpack.c.h.b16 %v800
        %v1498 = vunpack.c.l.b16 %v801
        %v1499 = vunpack.c.h.b16 %v801
        %v1500 = vunpack.c.l.b16 %v802
        %v1501 = vunpack.c.h.b16 %v802
        %v1502 = vunpack.c.l.b16 %v803
        %v1503 = vunpack.c.h.b16 %v803
        %v1504 = vunpack.c.l.b16 %v804
        %v1505 = vunpack.c.h.b16 %v804
        %v1506 = vunpack.c.l.b16 %v805
        %v1507 = vunpack.c.h.b16 %v805
        %v1508 = vunpack.c.l.b16 %v806
        %v1509 = vunpack.c.h.b16 %v806
        %v1510 = vunpack.c.l.b16 %v807
        %v1511 = vunpack.c.h.b16 %v807
        %v1512 = vunpack.c.l.b16 %v808
        %v1513 = vunpack.c.h.b16 %v808
        %v1514 = vunpack.c.l.b16 %v809
        %v1515 = vunpack.c.h.b16 %v809
        %v1516 = vunpack.c.l.b16 %v810
        %v1517 = vunpack.c.h.b16 %v810
        %v1518 = vunpack.c.l.b16 %v811
        %v1519 = vunpack.c.h.b16 %v811
        %v1520 = vunpack.c.l.b16 %v812
        %v1521 = vunpack.c.h.b16 %v812
        %v1522 = vunpack.c.l.b16 %v813
        %v1523 = vunpack.c.h.b16 %v813
        %v1524 = vunpack.c.l.b16 %v814
        %v1525 = vunpack.c.h.b16 %v814
        %v1526 = vunpack.c.l.b16 %v815
        %v1527 = vunpack.c.h.b16 %v815
        %v1528 = vunpack.c.l.b16 %v816
        %v1529 = vunpack.c.h.b16 %v816
        %v1530 = vunpack.c.l.b16 %v817
        %v1531 = vunpack.c.h.b16 %v817
        %v1532 = vunpack.c.l.b16 %v818
        %v1533 = vunpack.c.h.b16 %v818
        %v1534 = vunpack.c.l.b16 %v819
        %v1535 = vunpack.c.h.b16 %v819
        %v1536 = vunpack.c.l.b16 %v820
        %v1537 = vunpack.c.h.b16 %v820
        %v1538 = vunpack.c.l.b16 %v821
        %v1539 = vunpack.c.h.b16 %v821
        %v1540 = vunpack.c.l.b16 %v822
        %v1541 = vunpack.c.h.b16 %v822
        %v1542 = vunpack.c.l.b16 %v823
        %v1543 = vunpack.c.h.b16 %v823
        %v1544 = vunpack.c.l.b16 %v824
        %v1545 = vunpack.c.h.b16 %v824
        %v1546 = vunpack.c.l.b16 %v825
        %v1547 = vunpack.c.h.b16 %v825
        %v1548 = vunpack.c.l.b16 %v826
        %v1549 = vunpack.c.h.b16 %v826
        %v1550 = vunpack.c.l.b16 %v827
        %v1551 = vunpack.c.h.b16 %v827
        %v1552 = vunpack.c.l.b16 %v828
        %v1553 = vunpack.c.h.b16 %v828
        %v1554 = vunpack.c.l.b16 %v829
        %v1555 = vunpack.c.h.b16 %v829
        %v1556 = vunpack.c.l.b16 %v830
        %v1557 = vunpack.c.h.b16 %v830
        %v1558 = vunpack.c.l.b16 %v831
        %v1559 = vunpack.c.h.b16 %v831
        %v1560 = vunpack.c.l.b16 %v832
        %v1561 = vunpack.c.h.b16 %v832
        %v1562 = vunpack.c.l.b16 %v833
        %v1563 = vunpack.c.h.b16 %v833
        %v1564 = vunpack.c.l.b16 %v834
        %v1565 = vunpack.c.h.b16 %v834
        %v1566 = vunpack.c.l.b16 %v835
        %v1567 = vunpack.c.h.b16 %v835
        %v1568 = vunpack.c.l.b16 %v836
        %v1569 = vunpack.c.h.b16 %v836
        %v1570 = vunpack.c.l.b16 %v837
        %v1571 = vunpack.c.h.b16 %v837
        %v1572 = vunpack.c.l.b16 %v838
        %v1573 = vunpack.c.h.b16 %v838
        %v1574 = vunpack.c.l.b16 %v839
        %v1575 = vunpack.c.h.b16 %v839
        %v1576 = vunpack.c.l.b16 %v840
        %v1577 = vunpack.c.h.b16 %v840
        %v1578 = vunpack.c.l.b16 %v841
        %v1579 = vunpack.c.h.b16 %v841
        %v1580 = vunpack.c.l.b16 %v842
        %v1581 = vunpack.c.h.b16 %v842
        %v1582 = vunpack.c.l.b16 %v843
        %v1583 = vunpack.c.h.b16 %v843
        %v1584 = vunpack.c.l.b16 %v844
        %v1585 = vunpack.c.h.b16 %v844
        %v1586 = vunpack.c.l.b16 %v845
        %v1587 = vunpack.c.h.b16 %v845
        %v1588 = vunpack.c.l.b16 %v846
        %v1589 = vunpack.c.h.b16 %v846
        %v1590 = vunpack.c.l.b16 %v847
        %v1591 = vunpack.c.h.b16 %v847
        %v1592 = vunpack.c.l.b16 %v848
        %v1593 = vunpack.c.h.b16 %v848
        %v1594 = vunpack.c.l.b16 %v849
        %v1595 = vunpack.c.h.b16 %v849
        %v1596 = vunpack.c.l.b16 %v850
        %v1597 = vunpack.c.h.b16 %v850
        %v1598 = vunpack.c.l.b16 %v851
        %v1599 = vunpack.c.h.b16 %v851
        %v1600 = vunpack.c.l.b16 %v852
        %v1601 = vunpack.c.h.b16 %v852
        %v1602 = vunpack.c.l.b16 %v853
        %v1603 = vunpack.c.h.b16 %v853
        %v1604 = vunpack.c.l.b16 %v854
        %v1605 = vunpack.c.h.b16 %v854
        %v1606 = vunpack.c.l.b16 %v855
        %v1607 = vunpack.c.h.b16 %v855
        %v1608 = vunpack.c.l.b16 %v856
        %v1609 = vunpack.c.h.b16 %v856
        %v1610 = vunpack.c.l.b16 %v857
        %v1611 = vunpack.c.h.b16 %v857
        %v1612 = vunpack.c.l.b16 %v858
        %v1613 = vunpack.c.h.b16 %v858
        %v1614 = vunpack.c.l.b16 %v859
        %v1615 = vunpack.c.h.b16 %v859
        %v1616 = vunpack.c.l.b16 %v860
        %v1617 = vunpack.c.h.b16 %v860
        %v1618 = vunpack.c.l.b16 %v861
        %v1619 = vunpack.c.h.b16 %v861
        %v1620 = vunpack.c.l.b16 %v862
        %v1621 = vunpack.c.h.b16 %v862
        %v1622 = vunpack.c.l.b16 %v863
        %v1623 = vunpack.c.h.b16 %v863
        %v1624 = vunpack.c.l.b16 %v864
        %v1625 = vunpack.c.h.b16 %v864
        %v1626 = vunpack.c.l.b16 %v865
        %v1627 = vunpack.c.h.b16 %v865
        %v1628 = vunpack.c.l.b16 %v866
        %v1629 = vunpack.c.h.b16 %v866
        %v1630 = vunpack.c.l.b16 %v867
        %v1631 = vunpack.c.h.b16 %v867
        %v1632 = vunpack.c.l.b16 %v868
        %v1633 = vunpack.c.h.b16 %v868
        %v1634 = vunpack.c.l.b16 %v869
        %v1635 = vunpack.c.h.b16 %v869
        %v1636 = vunpack.c.l.b16 %v870
        %v1637 = vunpack.c.h.b16 %v870
        %v1638 = vunpack.c.l.b16 %v871
        %v1639 = vunpack.c.h.b16 %v871
        %v1640 = vunpack.c.l.b16 %v872
        %v1641 = vunpack.c.h.b16 %v872
        %v1642 = vunpack.c.l.b16 %v873
        %v1643 = vunpack.c.h.b16 %v873
        %v1644 = vunpack.c.l.b16 %v874
        %v1645 = vunpack.c.h.b16 %v874
        %v1646 = vunpack.c.l.b16 %v875
        %v1647 = vunpack.c.h.b16 %v875
        %v1648 = vunpack.c.l.b16 %v876
        %v1649 = vunpack.c.h.b16 %v876
        %v1650 = vunpack.c.l.b16 %v877
        %v1651 = vunpack.c.h.b16 %v877
        %v1652 = vunpack.c.l.b16 %v878
        %v1653 = vunpack.c.h.b16 %v878
        %v1654 = vunpack.c.l.b16 %v879
        %v1655 = vunpack.c.h.b16 %v879
        %v1656 = vunpack.c.l.b16 %v880
        %v1657 = vunpack.c.h.b16 %v880
        %v1658 = vunpack.c.l.b16 %v881
        %v1659 = vunpack.c.h.b16 %v881
        %v1660 = vunpack.c.l.b16 %v882
        %v1661 = vunpack.c.h.b16 %v882
        %v1662 = vunpack.c.l.b16 %v883
        %v1663 = vunpack.c.h.b16 %v883
        %v1664 = vunpack.c.l.b16 %v884
        %v1665 = vunpack.c.h.b16 %v884
        %v1666 = vunpack.c.l.b16 %v885
        %v1667 = vunpack.c.h.b16 %v885
        %v1668 = vunpack.c.l.b16 %v886
        %v1669 = vunpack.c.h.b16 %v886
        %v1670 = vunpack.c.l.b16 %v887
        %v1671 = vunpack.c.h.b16 %v887
        %v1672 = vunpack.c.l.b16 %v888
        %v1673 = vunpack.c.h.b16 %v888
        %v1674 = vunpack.c.l.b16 %v889
        %v1675 = vunpack.c.h.b16 %v889
        %v1676 = vunpack.c.l.b16 %v890
        %v1677 = vunpack.c.h.b16 %v890
        %v1678 = vunpack.c.l.b16 %v891
        %v1679 = vunpack.c.h.b16 %v891
        %v1680 = vunpack.c.l.b16 %v892
        %v1681 = vunpack.c.h.b16 %v892
        %v1682 = vunpack.c.l.b16 %v893
        %v1683 = vunpack.c.h.b16 %v893
        %v1684 = vunpack.c.l.b16 %v894
        %v1685 = vunpack.c.h.b16 %v894
        %v1686 = vunpack.c.l.b16 %v895
        %v1687 = vunpack.c.h.b16 %v895
        %v1688 = vunpack.c.l.b16 %v896
        %v1689 = vunpack.c.h.b16 %v896
        %v1690 = vunpack.c.l.b16 %v897
        %v1691 = vunpack.c.h.b16 %v897
        %v1692 = vunpack.c.l.b16 %v898
        %v1693 = vunpack.c.h.b16 %v898
        %v1694 = vunpack.c.l.b16 %v899
        %v1695 = vunpack.c.h.b16 %v899
        %v1696 = vunpack.c.l.b16 %v900
        %v1697 = vunpack.c.h.b16 %v900
        %v1698 = vunpack.c.l.b16 %v901
        %v1699 = vunpack.c.h.b16 %v901
        %v1700 = vunpack.c.l.b16 %v902
        %v1701 = vunpack.c.h.b16 %v902
        %v1702 = vunpack.c.l.b16 %v903
        %v1703 = vunpack.c.h.b16 %v903
        %v1704 = vunpack.c.l.b16 %v904
        %v1705 = vunpack.c.h.b16 %v904
        %v1706 = vunpack.c.l.b16 %v905
        %v1707 = vunpack.c.h.b16 %v905
        %v1708 = vunpack.c.l.b16 %v906
        %v1709 = vunpack.c.h.b16 %v906
        %v1710 = vunpack.c.l.b16 %v907
        %v1711 = vunpack.c.h.b16 %v907
        %v1712 = vunpack.c.l.b16 %v908
        %v1713 = vunpack.c.h.b16 %v908
        %v1714 = vunpack.c.l.b16 %v909
        %v1715 = vunpack.c.h.b16 %v909
        %v1716 = vunpack.c.l.b16 %v910
        %v1717 = vunpack.c.h.b16 %v910
        %v1718 = vunpack.c.l.b16 %v911
        %v1719 = vunpack.c.h.b16 %v911
        %v1720 = vunpack.c.l.b16 %v912
        %v1721 = vunpack.c.h.b16 %v912
        %v1722 = vunpack.c.l.b16 %v913
        %v1723 = vunpack.c.h.b16 %v913
        %v1724 = vunpack.c.l.b16 %v914
        %v1725 = vunpack.c.h.b16 %v914
        %v1726 = vunpack.c.l.b16 %v915
        %v1727 = vunpack.c.h.b16 %v915
        %v1728 = vunpack.c.l.b16 %v916
        %v1729 = vunpack.c.h.b16 %v916
        %v1730 = vunpack.c.l.b16 %v917
        %v1731 = vunpack.c.h.b16 %v917
        %v1732 = vunpack.c.l.b16 %v918
        %v1733 = vunpack.c.h.b16 %v918
        %v1734 = vunpack.c.l.b16 %v919
        %v1735 = vunpack.c.h.b16 %v919
        %v1736 = vunpack.c.l.b16 %v920
        %v1737 = vunpack.c.h.b16 %v920
        %v1738 = vunpack.c.l.b16 %v921
        %v1739 = vunpack.c.h.b16 %v921
        %v1740 = vunpack.c.l.b16 %v922
        %v1741 = vunpack.c.h.b16 %v922
        %v1742 = vunpack.c.l.b16 %v923
        %v1743 = vunpack.c.h.b16 %v923
        %v1744 = vunpack.c.l.b16 %v924
        %v1745 = vunpack.c.h.b16 %v924
        %v1746 = vunpack.c.l.b16 %v925
        %v1747 = vunpack.c.h.b16 %v925
        %v1748 = vunpack.c.l.b16 %v926
        %v1749 = vunpack.c.h.b16 %v926
        %v1750 = vunpack.c.l.b16 %v927
        %v1751 = vunpack.c.h.b16 %v927
        %v1752 = vunpack.c.l.b16 %v928
        %v1753 = vunpack.c.h.b16 %v928
        %v1754 = vunpack.c.l.b16 %v929
        %v1755 = vunpack.c.h.b16 %v929
        %v1756 = vunpack.c.l.b16 %v930
        %v1757 = vunpack.c.h.b16 %v930
        %v1758 = vunpack.c.l.b16 %v931
        %v1759 = vunpack.c.h.b16 %v931
        %v1760 = vunpack.c.l.b16 %v932
        %v1761 = vunpack.c.h.b16 %v932
        %v1762 = vunpack.c.l.b16 %v933
        %v1763 = vunpack.c.h.b16 %v933
        %v1764 = vunpack.c.l.b16 %v934
        %v1765 = vunpack.c.h.b16 %v934
        %v1766 = vunpack.c.l.b16 %v935
        %v1767 = vunpack.c.h.b16 %v935
        %v1768 = vunpack.c.l.b16 %v936
        %v1769 = vunpack.c.h.b16 %v936
        %v1770 = vunpack.c.l.b16 %v937
        %v1771 = vunpack.c.h.b16 %v937
        %v1772 = vunpack.c.l.b16 %v938
        %v1773 = vunpack.c.h.b16 %v938
        %v1774 = vunpack.c.l.b16 %v939
        %v1775 = vunpack.c.h.b16 %v939
        %v1776 = vunpack.c.l.b16 %v940
        %v1777 = vunpack.c.h.b16 %v940
        %v1778 = vunpack.c.l.b16 %v941
        %v1779 = vunpack.c.h.b16 %v941
        %v1780 = vunpack.c.l.b16 %v942
        %v1781 = vunpack.c.h.b16 %v942
        %v1782 = vunpack.c.l.b16 %v943
        %v1783 = vunpack.c.h.b16 %v943
        %v1784 = vunpack.c.l.b16 %v944
        %v1785 = vunpack.c.h.b16 %v944
        %v1786 = vunpack.c.l.b16 %v945
        %v1787 = vunpack.c.h.b16 %v945
        %v1788 = vunpack.c.l.b16 %v946
        %v1789 = vunpack.c.h.b16 %v946
        %v1790 = vunpack.c.l.b16 %v947
        %v1791 = vunpack.c.h.b16 %v947
        %v1792 = vunpack.c.l.b16 %v948
        %v1793 = vunpack.c.h.b16 %v948
        %v1794 = vunpack.c.l.b16 %v949
        %v1795 = vunpack.c.h.b16 %v949
        %v1796 = vunpack.c.l.b16 %v950
        %v1797 = vunpack.c.h.b16 %v950
        %v1798 = vunpack.c.l.b16 %v951
        %v1799 = vunpack.c.h.b16 %v951
        %v1800 = vunpack.c.l.b16 %v952
        %v1801 = vunpack.c.h.b16 %v952
        %v1802 = vunpack.c.l.b16 %v953
        %v1803 = vunpack.c.h.b16 %v953
        %v1804 = vunpack.c.l.b16 %v954
        %v1805 = vunpack.c.h.b16 %v954
        %v1806 = vunpack.c.l.b16 %v955
        %v1807 = vunpack.c.h.b16 %v955
        %v1808 = vunpack.c.l.b16 %v956
        %v1809 = vunpack.c.h.b16 %v956
        %v1810 = vunpack.c.l.b16 %v957
        %v1811 = vunpack.c.h.b16 %v957
        %v1812 = vunpack.c.l.b16 %v958
        %v1813 = vunpack.c.h.b16 %v958
        %v1814 = vunpack.c.l.b16 %v959
        %v1815 = vunpack.c.h.b16 %v959
        %v1816 = vunpack.c.l.b16 %v960
        %v1817 = vunpack.c.h.b16 %v960
        %v1818 = vunpack.c.l.b16 %v961
        %v1819 = vunpack.c.h.b16 %v961
        %v1820 = vunpack.c.l.b16 %v962
        %v1821 = vunpack.c.h.b16 %v962
        %v1822 = vunpack.c.l.b16 %v963
        %v1823 = vunpack.c.h.b16 %v963
        %v1824 = vunpack.c.l.b16 %v964
        %v1825 = vunpack.c.h.b16 %v964
        %v1826 = vunpack.c.l.b16 %v965
        %v1827 = vunpack.c.h.b16 %v965
        %v1828 = vunpack.c.l.b16 %v966
        %v1829 = vunpack.c.h.b16 %v966
        %v1830 = vunpack.c.l.b16 %v967
        %v1831 = vunpack.c.h.b16 %v967
        %v1832 = vunpack.c.l.b16 %v968
        %v1833 = vunpack.c.h.b16 %v968
        %v1834 = vunpack.c.l.b16 %v969
        %v1835 = vunpack.c.h.b16 %v969
        %v1836 = vunpack.c.l.b16 %v970
        %v1837 = vunpack.c.h.b16 %v970
        %v1838 = vunpack.c.l.b16 %v971
        %v1839 = vunpack.c.h.b16 %v971
        %v1840 = vunpack.c.l.b16 %v972
        %v1841 = vunpack.c.h.b16 %v972
        %v1842 = vunpack.c.l.b16 %v973
        %v1843 = vunpack.c.h.b16 %v973
        %v1844 = vunpack.c.l.b16 %v974
        %v1845 = vunpack.c.h.b16 %v974
        %v1846 = vunpack.c.l.b16 %v975
        %v1847 = vunpack.c.h.b16 %v975
        %v1848 = vpack.c.b16 %v1352, %v1336
        %v1849 = vpack.c.b16 %v1353, %v1337
        %v1850 = vpack.c.b16 %v1354, %v1338
        %v1851 = vpack.c.b16 %v1355, %v1339
        %v1852 = vpack.c.b16 %v1356, %v1340
        %v1853 = vpack.c.b16 %v1357, %v1341
        %v1854 = vpack.c.b16 %v1358, %v1342
        %v1855 = vpack.c.b16 %v1359, %v1343
        %v1856 = vpack.c.b16 %v1360, %v1344
        %v1857 = vpack.c.b16 %v1361, %v1345
        %v1858 = vpack.c.b16 %v1362, %v1346
        %v1859 = vpack.c.b16 %v1363, %v1347
        %v1860 = vpack.c.b16 %v1364, %v1348
        %v1861 = vpack.c.b16 %v1365, %v1349
        %v1862 = vpack.c.b16 %v1366, %v1350
        %v1863 = vpack.c.b16 %v1367, %v1351
        %v1864 = vpack.c.b16 %v1384, %v1368
        %v1865 = vpack.c.b16 %v1385, %v1369
        %v1866 = vpack.c.b16 %v1386, %v1370
        %v1867 = vpack.c.b16 %v1387, %v1371
        %v1868 = vpack.c.b16 %v1388, %v1372
        %v1869 = vpack.c.b16 %v1389, %v1373
        %v1870 = vpack.c.b16 %v1390, %v1374
        %v1871 = vpack.c.b16 %v1391, %v1375
        %v1872 = vpack.c.b16 %v1392, %v1376
        %v1873 = vpack.c.b16 %v1393, %v1377
        %v1874 = vpack.c.b16 %v1394, %v1378
        %v1875 = vpack.c.b16 %v1395, %v1379
        %v1876 = vpack.c.b16 %v1396, %v1380
        %v1877 = vpack.c.b16 %v1397, %v1381
        %v1878 = vpack.c.b16 %v1398, %v1382
        %v1879 = vpack.c.b16 %v1399, %v1383
        %v1880 = vpack.c.b16 %v1416, %v1400
        %v1881 = vpack.c.b16 %v1417, %v1401
        %v1882 = vpack.c.b16 %v1418, %v1402
        %v1883 = vpack.c.b16 %v1419, %v1403
        %v1884 = vpack.c.b16 %v1420, %v1404
        %v1885 = vpack.c.b16 %v1421, %v1405
        %v1886 = vpack.c.b16 %v1422, %v1406
        %v1887 = vpack.c.b16 %v1423, %v1407
        %v1888 = vpack.c.b16 %v1424, %v1408
        %v1889 = vpack.c.b16 %v1425, %v1409
        %v1890 = vpack.c.b16 %v1426, %v1410
        %v1891 = vpack.c.b16 %v1427, %v1411
        %v1892 = vpack.c.b16 %v1428, %v1412
        %v1893 = vpack.c.b16 %v1429, %v1413
        %v1894 = vpack.c.b16 %v1430, %v1414
        %v1895 = vpack.c.b16 %v1431, %v1415
        %v1896 = vpack.c.b16 %v1448, %v1432
        %v1897 = vpack.c.b16 %v1449, %v1433
        %v1898 = vpack.c.b16 %v1450, %v1434
        %v1899 = vpack.c.b16 %v1451, %v1435
        %v1900 = vpack.c.b16 %v1452, %v1436
        %v1901 = vpack.c.b16 %v1453, %v1437
        %v1902 = vpack.c.b16 %v1454, %v1438
        %v1903 = vpack.c.b16 %v1455, %v1439
        %v1904 = vpack.c.b16 %v1456, %v1440
        %v1905 = vpack.c.b16 %v1457, %v1441
        %v1906 = vpack.c.b16 %v1458, %v1442
        %v1907 = vpack.c.b16 %v1459, %v1443
        %v1908 = vpack.c.b16 %v1460, %v1444
        %v1909 = vpack.c.b16 %v1461, %v1445
        %v1910 = vpack.c.b16 %v1462, %v1446
        %v1911 = vpack.c.b16 %v1463, %v1447
        %v1912 = vpack.c.b16 %v1480, %v1464
        %v1913 = vpack.c.b16 %v1481, %v1465
        %v1914 = vpack.c.b16 %v1482, %v1466
        %v1915 = vpack.c.b16 %v1483, %v1467
        %v1916 = vpack.c.b16 %v1484, %v1468
        %v1917 = vpack.c.b16 %v1485, %v1469
        %v1918 = vpack.c.b16 %v1486, %v1470
        %v1919 = vpack.c.b16 %v1487, %v1471
        %v1920 = vpack.c.b16 %v1488, %v1472
        %v1921 = vpack.c.b16 %v1489, %v1473
        %v1922 = vpack.c.b16 %v1490, %v1474
        %v1923 = vpack.c.b16 %v1491, %v1475
        %v1924 = vpack.c.b16 %v1492, %v1476
        %v1925 = vpack.c.b16 %v1493, %v1477
        %v1926 = vpack.c.b16 %v1494, %v1478
        %v1927 = vpack.c.b16 %v1495, %v1479
        %v1928 = vpack.c.b16 %v1512, %v1496
        %v1929 = vpack.c.b16 %v1513, %v1497
        %v1930 = vpack.c.b16 %v1514, %v1498
        %v1931 = vpack.c.b16 %v1515, %v1499
        %v1932 = vpack.c.b16 %v1516, %v1500
        %v1933 = vpack.c.b16 %v1517, %v1501
        %v1934 = vpack.c.b16 %v1518, %v1502
        %v1935 = vpack.c.b16 %v1519, %v1503
        %v1936 = vpack.c.b16 %v1520, %v1504
        %v1937 = vpack.c.b16 %v1521, %v1505
        %v1938 = vpack.c.b16 %v1522, %v1506
        %v1939 = vpack.c.b16 %v1523, %v1507
        %v1940 = vpack.c.b16 %v1524, %v1508
        %v1941 = vpack.c.b16 %v1525, %v1509
        %v1942 = vpack.c.b16 %v1526, %v1510
        %v1943 = vpack.c.b16 %v1527, %v1511
        %v1944 = vpack.c.b16 %v1544, %v1528
        %v1945 = vpack.c.b16 %v1545, %v1529
        %v1946 = vpack.c.b16 %v1546, %v1530
        %v1947 = vpack.c.b16 %v1547, %v1531
        %v1948 = vpack.c.b16 %v1548, %v1532
        %v1949 = vpack.c.b16 %v1549, %v1533
        %v1950 = vpack.c.b16 %v1550, %v1534
        %v1951 = vpack.c.b16 %v1551, %v1535
        %v1952 = vpack.c.b16 %v1552, %v1536
        %v1953 = vpack.c.b16 %v1553, %v1537
        %v1954 = vpack.c.b16 %v1554, %v1538
        %v1955 = vpack.c.b16 %v1555, %v1539
        %v1956 = vpack.c.b16 %v1556, %v1540
        %v1957 = vpack.c.b16 %v1557, %v1541
        %v1958 = vpack.c.b16 %v1558, %v1542
        %v1959 = vpack.c.b16 %v1559, %v1543
        %v1960 = vpack.c.b16 %v1576, %v1560
        %v1961 = vpack.c.b16 %v1577, %v1561
        %v1962 = vpack.c.b16 %v1578, %v1562
        %v1963 = vpack.c.b16 %v1579, %v1563
        %v1964 = vpack.c.b16 %v1580, %v1564
        %v1965 = vpack.c.b16 %v1581, %v1565
        %v1966 = vpack.c.b16 %v1582, %v1566
        %v1967 = vpack.c.b16 %v1583, %v1567
        %v1968 = vpack.c.b16 %v1584, %v1568
        %v1969 = vpack.c.b16 %v1585, %v1569
        %v1970 = vpack.c.b16 %v1586, %v1570
        %v1971 = vpack.c.b16 %v1587, %v1571
        %v1972 = vpack.c.b16 %v1588, %v1572
        %v1973 = vpack.c.b16 %v1589, %v1573
        %v1974 = vpack.c.b16 %v1590, %v1574
        %v1975 = vpack.c.b16 %v1591, %v1575
        %v1976 = vpack.c.b16 %v1608, %v1592
        %v1977 = vpack.c.b16 %v1609, %v1593
        %v1978 = vpack.c.b16 %v1610, %v1594
        %v1979 = vpack.c.b16 %v1611, %v1595
        %v1980 = vpack.c.b16 %v1612, %v1596
        %v1981 = vpack.c.b16 %v1613, %v1597
        %v1982 = vpack.c.b16 %v1614, %v1598
        %v1983 = vpack.c.b16 %v1615, %v1599
        %v1984 = vpack.c.b16 %v1616, %v1600
        %v1985 = vpack.c.b16 %v1617, %v1601
        %v1986 = vpack.c.b16 %v1618, %v1602
        %v1987 = vpack.c.b16 %v1619, %v1603
        %v1988 = vpack.c.b16 %v1620, %v1604
        %v1989 = vpack.c.b16 %v1621, %v1605
        %v1990 = vpack.c.b16 %v1622, %v1606
        %v1991 = vpack.c.b16 %v1623, %v1607
        %v1992 = vpack.c.b16 %v1640, %v1624
        %v1993 = vpack.c.b16 %v1641, %v1625
        %v1994 = vpack.c.b16 %v1642, %v1626
        %v1995 = vpack.c.b16 %v1643, %v1627
        %v1996 = vpack.c.b16 %v1644, %v1628
        %v1997 = vpack.c.b16 %v1645, %v1629
        %v1998 = vpack.c.b16 %v1646, %v1630
        %v1999 = vpack.c.b16 %v1647, %v1631
        %v2000 = vpack.c.b16 %v1648, %v1632
        %v2001 = vpack.c.b16 %v1649, %v1633
        %v2002 = vpack.c.b16 %v1650, %v1634
        %v2003 = vpack.c.b16 %v1651, %v1635
        %v2004 = vpack.c.b16 %v1652, %v1636
        %v2005 = vpack.c.b16 %v1653, %v1637
        %v2006 = vpack.c.b16 %v1654, %v1638
        %v2007 = vpack.c.b16 %v1655, %v1639
        %v2008 = vpack.c.b16 %v1672, %v1656
        %v2009 = vpack.c.b16 %v1673, %v1657
        %v2010 = vpack.c.b16 %v1674, %v1658
        %v2011 = vpack.c.b16 %v1675, %v1659
        %v2012 = vpack.c.b16 %v1676, %v1660
        %v2013 = vpack.c.b16 %v1677, %v1661
        %v2014 = vpack.c.b16 %v1678, %v1662
        %v2015 = vpack.c.b16 %v1679, %v1663
        %v2016 = vpack.c.b16 %v1680, %v1664
        %v2017 = vpack.c.b16 %v1681, %v1665
        %v2018 = vpack.c.b16 %v1682, %v1666
        %v2019 = vpack.c.b16 %v1683, %v1667
        %v2020 = vpack.c.b16 %v1684, %v1668
        %v2021 = vpack.c.b16 %v1685, %v1669
        %v2022 = vpack.c.b16 %v1686, %v1670
        %v2023 = vpack.c.b16 %v1687, %v1671
        %v2024 = vpack.c.b16 %v1704, %v1688
        %v2025 = vpack.c.b16 %v1705, %v1689
        %v2026 = vpack.c.b16 %v1706, %v1690
        %v2027 = vpack.c.b16 %v1707, %v1691
        %v2028 = vpack.c.b16 %v1708, %v1692
        %v2029 = vpack.c.b16 %v1709, %v1693
        %v2030 = vpack.c.b16 %v1710, %v1694
        %v2031 = vpack.c.b16 %v1711, %v1695
        %v2032 = vpack.c.b16 %v1712, %v1696
        %v2033 = vpack.c.b16 %v1713, %v1697
        %v2034 = vpack.c.b16 %v1714, %v1698
        %v2035 = vpack.c.b16 %v1715, %v1699
        %v2036 = vpack.c.b16 %v1716, %v1700
        %v2037 = vpack.c.b16 %v1717, %v1701
        %v2038 = vpack.c.b16 %v1718, %v1702
        %v2039 = vpack.c.b16 %v1719, %v1703
        %v2040 = vpack.c.b16 %v1736, %v1720
        %v2041 = vpack.c.b16 %v1737, %v1721
        %v2042 = vpack.c.b16 %v1738, %v1722
        %v2043 = vpack.c.b16 %v1739, %v1723
        %v2044 = vpack.c.b16 %v1740, %v1724
        %v2045 = vpack.c.b16 %v1741, %v1725
        %v2046 = vpack.c.b16 %v1742, %v1726
        %v2047 = vpack.c.b16 %v1743, %v1727
        %v2048 = vpack.c.b16 %v1744, %v1728
        %v2049 = vpack.c.b16 %v1745, %v1729
        %v2050 = vpack.c.b16 %v1746, %v1730
        %v2051 = vpack.c.b16 %v1747, %v1731
        %v2052 = vpack.c.b16 %v1748, %v1732
        %v2053 = vpack.c.b16 %v1749, %v1733
        %v2054 = vpack.c.b16 %v1750, %v1734
        %v2055 = vpack.c.b16 %v1751, %v1735
        %v2056 = vpack.c.b16 %v1768, %v1752
        %v2057 = vpack.c.b16 %v1769, %v1753
        %v2058 = vpack.c.b16 %v1770, %v1754
        %v2059 = vpack.c.b16 %v1771, %v1755
        %v2060 = vpack.c.b16 %v1772, %v1756
        %v2061 = vpack.c.b16 %v1773, %v1757
        %v2062 = vpack.c.b16 %v1774, %v1758
        %v2063 = vpack.c.b16 %v1775, %v1759
        %v2064 = vpack.c.b16 %v1776, %v1760
        %v2065 = vpack.c.b16 %v1777, %v1761
        %v2066 = vpack.c.b16 %v1778, %v1762
        %v2067 = vpack.c.b16 %v1779, %v1763
        %v2068 = vpack.c.b16 %v1780, %v1764
        %v2069 = vpack.c.b16 %v1781, %v1765
        %v2070 = vpack.c.b16 %v1782, %v1766
        %v2071 = vpack.c.b16 %v1783, %v1767
        %v2072 = vpack.c.b16 %v1800, %v1784
        %v2073 = vpack.c.b16 %v1801, %v1785
        %v2074 = vpack.c.b16 %v1802, %v1786
        %v2075 = vpack.c.b16 %v1803, %v1787
        %v2076 = vpack.c.b16 %v1804, %v1788
        %v2077 = vpack.c.b16 %v1805, %v1789
        %v2078 = vpack.c.b16 %v1806, %v1790
        %v2079 = vpack.c.b16 %v1807, %v1791
        %v2080 = vpack.c.b16 %v1808, %v1792
        %v2081 = vpack.c.b16 %v1809, %v1793
        %v2082 = vpack.c.b16 %v1810, %v1794
        %v2083 = vpack.c.b16 %v1811, %v1795
        %v2084 = vpack.c.b16 %v1812, %v1796
        %v2085 = vpack.c.b16 %v1813, %v1797
        %v2086 = vpack.c.b16 %v1814, %v1798
        %v2087 = vpack.c.b16 %v1815, %v1799
        %v2088 = vpack.c.b16 %v1832, %v1816
        %v2089 = vpack.c.b16 %v1833, %v1817
        %v2090 = vpack.c.b16 %v1834, %v1818
        %v2091 = vpack.c.b16 %v1835, %v1819
        %v2092 = vpack.c.b16 %v1836, %v1820
        %v2093 = vpack.c.b16 %v1837, %v1821
        %v2094 = vpack.c.b16 %v1838, %v1822
        %v2095 = vpack.c.b16 %v1839, %v1823
        %v2096 = vpack.c.b16 %v1840, %v1824
        %v2097 = vpack.c.b16 %v1841, %v1825
        %v2098 = vpack.c.b16 %v1842, %v1826
        %v2099 = vpack.c.b16 %v1843, %v1827
        %v2100 = vpack.c.b16 %v1844, %v1828
        %v2101 = vpack.c.b16 %v1845, %v1829
        %v2102 = vpack.c.b16 %v1846, %v1830
        %v2103 = vpack.c.b16 %v1847, %v1831
        %2360 = vmatprep.subr.bf16.mxu0 %v1961
        %2361 = vmatpush1.bf16.msra.mxu0 %v1960
        %2362 = vmatprep.subr.bf16.mxu0 %v1945
        %2363 = vmatpush1.bf16.msra.mxu0 %v1944
        %2364 = vmatprep.subr.bf16.mxu0 %v1929
        %2365 = vmatpush1.bf16.msra.mxu0 %v1928
        %2366 = vmatprep.subr.bf16.mxu0 %v1913
        %2367 = vmatpush1.bf16.msra.mxu0 %v1912
        %2368 = vmatprep.subr.bf16.mxu0 %v1897
        %2369 = vmatpush1.bf16.msra.mxu0 %v1896
        %2370 = vmatprep.subr.bf16.mxu0 %v1881
        %2371 = vmatpush1.bf16.msra.mxu0 %v1880
        %2372 = vmatprep.subr.bf16.mxu0 %v1865
        %2373 = vmatpush1.bf16.msra.mxu0 %v1864
        %2374 = vmatprep.subr.bf16.mxu0 %v1849
        %2375 = vmatpush1.bf16.msra.mxu0 %v1848
        %2376 = vmatprep.subr.bf16.mxu0 %v2089
        %2377 = vmatpush2.bf16.msra.mxu0 %v2088
        %2378 = vmatprep.subr.bf16.mxu0 %v2073
        %2379 = vmatpush2.bf16.msra.mxu0 %v2072
        %2380 = vmatprep.subr.bf16.mxu0 %v2057
        %2381 = vmatpush2.bf16.msra.mxu0 %v2056
        %2382 = vmatprep.subr.bf16.mxu0 %v2041
        %2383 = vmatpush2.bf16.msra.mxu0 %v2040
        %2384 = vmatprep.subr.bf16.mxu0 %v2025
        %2385 = vmatpush2.bf16.msra.mxu0 %v2024
        %2386 = vmatprep.subr.bf16.mxu0 %v2009
        %2387 = vmatpush2.bf16.msra.mxu0 %v2008
        %2388 = vmatprep.subr.bf16.mxu0 %v1993
        %2389 = vmatpush2.bf16.msra.mxu0 %v1992
        %2390 = vmatprep.subr.bf16.mxu0 %v1977
        %2391 = vmatpush2.bf16.msra.mxu0 %v1976
        %2392 = vmatprep.mubr.bf16.mxu0 %v1073
        %2393 = vmatmul.mubr.bf16.gmra.mxu0 %v1072
        %v2394 = vpop.f32.mrf.mxu0
        %v2395 = vadd.f32 %v983, %v2394
        %v2396 = vpop.f32.mrf.mxu0
        %v2397 = vadd.f32 %v987, %v2396
        %v2398 = vpop.f32.mrf.mxu0
        %v2399 = vadd.f32 %v983, %v2398
        %v2400 = vpop.f32.mrf.mxu0
        %v2401 = vadd.f32 %v987, %v2400
        %2402 = vmatprep.mubr.bf16.mxu0 %v1075
        %2403 = vmatmul.mubr.bf16.gmra.mxu0 %v1074
        %v2404 = vpop.f32.mrf.mxu0
        %v2405 = vadd.f32 %v983, %v2404
        %v2406 = vpop.f32.mrf.mxu0
        %v2407 = vadd.f32 %v987, %v2406
        %v2408 = vpop.f32.mrf.mxu0
        %v2409 = vadd.f32 %v983, %v2408
        %v2410 = vpop.f32.mrf.mxu0
        %v2411 = vadd.f32 %v987, %v2410
        %2412 = vdwg.mxu0
        %2413 = vmatprep.subr.bf16.mxu0 %v1963
        %2414 = vmatpush1.bf16.msra.mxu0 %v1962
        %2415 = vmatprep.subr.bf16.mxu0 %v1947
        %2416 = vmatpush1.bf16.msra.mxu0 %v1946
        %2417 = vmatprep.subr.bf16.mxu0 %v1931
        %2418 = vmatpush1.bf16.msra.mxu0 %v1930
        %2419 = vmatprep.subr.bf16.mxu0 %v1915
        %2420 = vmatpush1.bf16.msra.mxu0 %v1914
        %2421 = vmatprep.subr.bf16.mxu0 %v1899
        %2422 = vmatpush1.bf16.msra.mxu0 %v1898
        %2423 = vmatprep.subr.bf16.mxu0 %v1883
        %2424 = vmatpush1.bf16.msra.mxu0 %v1882
        %2425 = vmatprep.subr.bf16.mxu0 %v1867
        %2426 = vmatpush1.bf16.msra.mxu0 %v1866
        %2427 = vmatprep.subr.bf16.mxu0 %v1851
        %2428 = vmatpush1.bf16.msra.mxu0 %v1850
        %2429 = vmatprep.subr.bf16.mxu0 %v2091
        %2430 = vmatpush2.bf16.msra.mxu0 %v2090
        %2431 = vmatprep.subr.bf16.mxu0 %v2075
        %2432 = vmatpush2.bf16.msra.mxu0 %v2074
        %2433 = vmatprep.subr.bf16.mxu0 %v2059
        %2434 = vmatpush2.bf16.msra.mxu0 %v2058
        %2435 = vmatprep.subr.bf16.mxu0 %v2043
        %2436 = vmatpush2.bf16.msra.mxu0 %v2042
        %2437 = vmatprep.subr.bf16.mxu0 %v2027
        %2438 = vmatpush2.bf16.msra.mxu0 %v2026
        %2439 = vmatprep.subr.bf16.mxu0 %v2011
        %2440 = vmatpush2.bf16.msra.mxu0 %v2010
        %2441 = vmatprep.subr.bf16.mxu0 %v1995
        %2442 = vmatpush2.bf16.msra.mxu0 %v1994
        %2443 = vmatprep.subr.bf16.mxu0 %v1979
        %2444 = vmatpush2.bf16.msra.mxu0 %v1978
        %2445 = vmatprep.mubr.bf16.mxu0 %v1073
        %2446 = vmatmul.mubr.bf16.gmra.mxu0 %v1072
        %v2447 = vpop.f32.mrf.mxu0
        %v2448 = vadd.f32 %v991, %v2447
        %v2449 = vpop.f32.mrf.mxu0
        %v2450 = vadd.f32 %v995, %v2449
        %v2451 = vpop.f32.mrf.mxu0
        %v2452 = vadd.f32 %v991, %v2451
        %v2453 = vpop.f32.mrf.mxu0
        %v2454 = vadd.f32 %v995, %v2453
        %2455 = vmatprep.mubr.bf16.mxu0 %v1075
        %2456 = vmatmul.mubr.bf16.gmra.mxu0 %v1074
        %v2457 = vpop.f32.mrf.mxu0
        %v2458 = vadd.f32 %v991, %v2457
        %v2459 = vpop.f32.mrf.mxu0
        %v2460 = vadd.f32 %v995, %v2459
        %v2461 = vpop.f32.mrf.mxu0
        %v2462 = vadd.f32 %v991, %v2461
        %v2463 = vpop.f32.mrf.mxu0
        %v2464 = vadd.f32 %v995, %v2463
        %2465 = vdwg.mxu0
        %2466 = vmatprep.subr.bf16.mxu0 %v1965
        %2467 = vmatpush1.bf16.msra.mxu0 %v1964
        %2468 = vmatprep.subr.bf16.mxu0 %v1949
        %2469 = vmatpush1.bf16.msra.mxu0 %v1948
        %2470 = vmatprep.subr.bf16.mxu0 %v1933
        %2471 = vmatpush1.bf16.msra.mxu0 %v1932
        %2472 = vmatprep.subr.bf16.mxu0 %v1917
        %2473 = vmatpush1.bf16.msra.mxu0 %v1916
        %2474 = vmatprep.subr.bf16.mxu0 %v1901
        %2475 = vmatpush1.bf16.msra.mxu0 %v1900
        %2476 = vmatprep.subr.bf16.mxu0 %v1885
        %2477 = vmatpush1.bf16.msra.mxu0 %v1884
        %2478 = vmatprep.subr.bf16.mxu0 %v1869
        %2479 = vmatpush1.bf16.msra.mxu0 %v1868
        %2480 = vmatprep.subr.bf16.mxu0 %v1853
        %2481 = vmatpush1.bf16.msra.mxu0 %v1852
        %2482 = vmatprep.subr.bf16.mxu0 %v2093
        %2483 = vmatpush2.bf16.msra.mxu0 %v2092
        %2484 = vmatprep.subr.bf16.mxu0 %v2077
        %2485 = vmatpush2.bf16.msra.mxu0 %v2076
        %2486 = vmatprep.subr.bf16.mxu0 %v2061
        %2487 = vmatpush2.bf16.msra.mxu0 %v2060
        %2488 = vmatprep.subr.bf16.mxu0 %v2045
        %2489 = vmatpush2.bf16.msra.mxu0 %v2044
        %2490 = vmatprep.subr.bf16.mxu0 %v2029
        %2491 = vmatpush2.bf16.msra.mxu0 %v2028
        %2492 = vmatprep.subr.bf16.mxu0 %v2013
        %2493 = vmatpush2.bf16.msra.mxu0 %v2012
        %2494 = vmatprep.subr.bf16.mxu0 %v1997
        %2495 = vmatpush2.bf16.msra.mxu0 %v1996
        %2496 = vmatprep.subr.bf16.mxu0 %v1981
        %2497 = vmatpush2.bf16.msra.mxu0 %v1980
        %2498 = vmatprep.mubr.bf16.mxu0 %v1073
        %2499 = vmatmul.mubr.bf16.gmra.mxu0 %v1072
        %v2500 = vpop.f32.mrf.mxu0
        %v2501 = vadd.f32 %v999, %v2500
        %v2502 = vpop.f32.mrf.mxu0
        %v2503 = vadd.f32 %v1003, %v2502
        %v2504 = vpop.f32.mrf.mxu0
        %v2505 = vadd.f32 %v999, %v2504
        %v2506 = vpop.f32.mrf.mxu0
        %v2507 = vadd.f32 %v1003, %v2506
        %2508 = vmatprep.mubr.bf16.mxu0 %v1075
        %2509 = vmatmul.mubr.bf16.gmra.mxu0 %v1074
        %v2510 = vpop.f32.mrf.mxu0
        %v2511 = vadd.f32 %v999, %v2510
        %v2512 = vpop.f32.mrf.mxu0
        %v2513 = vadd.f32 %v1003, %v2512
        %v2514 = vpop.f32.mrf.mxu0
        %v2515 = vadd.f32 %v999, %v2514
        %v2516 = vpop.f32.mrf.mxu0
        %v2517 = vadd.f32 %v1003, %v2516
        %2518 = vdwg.mxu0
        %2519 = vmatprep.subr.bf16.mxu0 %v1967
        %2520 = vmatpush1.bf16.msra.mxu0 %v1966
        %2521 = vmatprep.subr.bf16.mxu0 %v1951
        %2522 = vmatpush1.bf16.msra.mxu0 %v1950
        %2523 = vmatprep.subr.bf16.mxu0 %v1935
        %2524 = vmatpush1.bf16.msra.mxu0 %v1934
        %2525 = vmatprep.subr.bf16.mxu0 %v1919
        %2526 = vmatpush1.bf16.msra.mxu0 %v1918
        %2527 = vmatprep.subr.bf16.mxu0 %v1903
        %2528 = vmatpush1.bf16.msra.mxu0 %v1902
        %2529 = vmatprep.subr.bf16.mxu0 %v1887
        %2530 = vmatpush1.bf16.msra.mxu0 %v1886
        %2531 = vmatprep.subr.bf16.mxu0 %v1871
        %2532 = vmatpush1.bf16.msra.mxu0 %v1870
        %2533 = vmatprep.subr.bf16.mxu0 %v1855
        %2534 = vmatpush1.bf16.msra.mxu0 %v1854
        %2535 = vmatprep.subr.bf16.mxu0 %v2095
        %2536 = vmatpush2.bf16.msra.mxu0 %v2094
        %2537 = vmatprep.subr.bf16.mxu0 %v2079
        %2538 = vmatpush2.bf16.msra.mxu0 %v2078
        %2539 = vmatprep.subr.bf16.mxu0 %v2063
        %2540 = vmatpush2.bf16.msra.mxu0 %v2062
        %2541 = vmatprep.subr.bf16.mxu0 %v2047
        %2542 = vmatpush2.bf16.msra.mxu0 %v2046
        %2543 = vmatprep.subr.bf16.mxu0 %v2031
        %2544 = vmatpush2.bf16.msra.mxu0 %v2030
        %2545 = vmatprep.subr.bf16.mxu0 %v2015
        %2546 = vmatpush2.bf16.msra.mxu0 %v2014
        %2547 = vmatprep.subr.bf16.mxu0 %v1999
        %2548 = vmatpush2.bf16.msra.mxu0 %v1998
        %2549 = vmatprep.subr.bf16.mxu0 %v1983
        %2550 = vmatpush2.bf16.msra.mxu0 %v1982
        %2551 = vmatprep.mubr.bf16.mxu0 %v1073
        %2552 = vmatmul.mubr.bf16.gmra.mxu0 %v1072
        %v2553 = vpop.f32.mrf.mxu0
        %v2554 = vadd.f32 %v1007, %v2553
        %v2555 = vpop.f32.mrf.mxu0
        %v2556 = vadd.f32 %v1011, %v2555
        %v2557 = vpop.f32.mrf.mxu0
        %v2558 = vadd.f32 %v1007, %v2557
        %v2559 = vpop.f32.mrf.mxu0
        %v2560 = vadd.f32 %v1011, %v2559
        %2561 = vmatprep.mubr.bf16.mxu0 %v1075
        %2562 = vmatmul.mubr.bf16.gmra.mxu0 %v1074
        %v2563 = vpop.f32.mrf.mxu0
        %v2564 = vadd.f32 %v1007, %v2563
        %v2565 = vpop.f32.mrf.mxu0
        %v2566 = vadd.f32 %v1011, %v2565
        %v2567 = vpop.f32.mrf.mxu0
        %v2568 = vadd.f32 %v1007, %v2567
        %v2569 = vpop.f32.mrf.mxu0
        %v2570 = vadd.f32 %v1011, %v2569
        %2571 = vdwg.mxu0
        %2572 = vmatprep.subr.bf16.mxu0 %v1969
        %2573 = vmatpush1.bf16.msra.mxu0 %v1968
        %2574 = vmatprep.subr.bf16.mxu0 %v1953
        %2575 = vmatpush1.bf16.msra.mxu0 %v1952
        %2576 = vmatprep.subr.bf16.mxu0 %v1937
        %2577 = vmatpush1.bf16.msra.mxu0 %v1936
        %2578 = vmatprep.subr.bf16.mxu0 %v1921
        %2579 = vmatpush1.bf16.msra.mxu0 %v1920
        %2580 = vmatprep.subr.bf16.mxu0 %v1905
        %2581 = vmatpush1.bf16.msra.mxu0 %v1904
        %2582 = vmatprep.subr.bf16.mxu0 %v1889
        %2583 = vmatpush1.bf16.msra.mxu0 %v1888
        %2584 = vmatprep.subr.bf16.mxu0 %v1873
        %2585 = vmatpush1.bf16.msra.mxu0 %v1872
        %2586 = vmatprep.subr.bf16.mxu0 %v1857
        %2587 = vmatpush1.bf16.msra.mxu0 %v1856
        %2588 = vmatprep.subr.bf16.mxu0 %v2097
        %2589 = vmatpush2.bf16.msra.mxu0 %v2096
        %2590 = vmatprep.subr.bf16.mxu0 %v2081
        %2591 = vmatpush2.bf16.msra.mxu0 %v2080
        %2592 = vmatprep.subr.bf16.mxu0 %v2065
        %2593 = vmatpush2.bf16.msra.mxu0 %v2064
        %2594 = vmatprep.subr.bf16.mxu0 %v2049
        %2595 = vmatpush2.bf16.msra.mxu0 %v2048
        %2596 = vmatprep.subr.bf16.mxu0 %v2033
        %2597 = vmatpush2.bf16.msra.mxu0 %v2032
        %2598 = vmatprep.subr.bf16.mxu0 %v2017
        %2599 = vmatpush2.bf16.msra.mxu0 %v2016
        %2600 = vmatprep.subr.bf16.mxu0 %v2001
        %2601 = vmatpush2.bf16.msra.mxu0 %v2000
        %2602 = vmatprep.subr.bf16.mxu0 %v1985
        %2603 = vmatpush2.bf16.msra.mxu0 %v1984
        %2604 = vmatprep.mubr.bf16.mxu0 %v1073
        %2605 = vmatmul.mubr.bf16.gmra.mxu0 %v1072
        %v2606 = vpop.f32.mrf.mxu0
        %v2607 = vadd.f32 %v1015, %v2606
        %v2608 = vpop.f32.mrf.mxu0
        %v2609 = vadd.f32 %v1019, %v2608
        %v2610 = vpop.f32.mrf.mxu0
        %v2611 = vadd.f32 %v1015, %v2610
        %v2612 = vpop.f32.mrf.mxu0
        %v2613 = vadd.f32 %v1019, %v2612
        %2614 = vmatprep.mubr.bf16.mxu0 %v1075
        %2615 = vmatmul.mubr.bf16.gmra.mxu0 %v1074
        %v2616 = vpop.f32.mrf.mxu0
        %v2617 = vadd.f32 %v1015, %v2616
        %v2618 = vpop.f32.mrf.mxu0
        %v2619 = vadd.f32 %v1019, %v2618
        %v2620 = vpop.f32.mrf.mxu0
        %v2621 = vadd.f32 %v1015, %v2620
        %v2622 = vpop.f32.mrf.mxu0
        %v2623 = vadd.f32 %v1019, %v2622
        %2624 = vdwg.mxu0
        %2625 = vmatprep.subr.bf16.mxu0 %v1971
        %2626 = vmatpush1.bf16.msra.mxu0 %v1970
        %2627 = vmatprep.subr.bf16.mxu0 %v1955
        %2628 = vmatpush1.bf16.msra.mxu0 %v1954
        %2629 = vmatprep.subr.bf16.mxu0 %v1939
        %2630 = vmatpush1.bf16.msra.mxu0 %v1938
        %2631 = vmatprep.subr.bf16.mxu0 %v1923
        %2632 = vmatpush1.bf16.msra.mxu0 %v1922
        %2633 = vmatprep.subr.bf16.mxu0 %v1907
        %2634 = vmatpush1.bf16.msra.mxu0 %v1906
        %2635 = vmatprep.subr.bf16.mxu0 %v1891
        %2636 = vmatpush1.bf16.msra.mxu0 %v1890
        %2637 = vmatprep.subr.bf16.mxu0 %v1875
        %2638 = vmatpush1.bf16.msra.mxu0 %v1874
        %2639 = vmatprep.subr.bf16.mxu0 %v1859
        %2640 = vmatpush1.bf16.msra.mxu0 %v1858
        %2641 = vmatprep.subr.bf16.mxu0 %v2099
        %2642 = vmatpush2.bf16.msra.mxu0 %v2098
        %2643 = vmatprep.subr.bf16.mxu0 %v2083
        %2644 = vmatpush2.bf16.msra.mxu0 %v2082
        %2645 = vmatprep.subr.bf16.mxu0 %v2067
        %2646 = vmatpush2.bf16.msra.mxu0 %v2066
        %2647 = vmatprep.subr.bf16.mxu0 %v2051
        %2648 = vmatpush2.bf16.msra.mxu0 %v2050
        %2649 = vmatprep.subr.bf16.mxu0 %v2035
        %2650 = vmatpush2.bf16.msra.mxu0 %v2034
        %2651 = vmatprep.subr.bf16.mxu0 %v2019
        %2652 = vmatpush2.bf16.msra.mxu0 %v2018
        %2653 = vmatprep.subr.bf16.mxu0 %v2003
        %2654 = vmatpush2.bf16.msra.mxu0 %v2002
        %2655 = vmatprep.subr.bf16.mxu0 %v1987
        %2656 = vmatpush2.bf16.msra.mxu0 %v1986
        %2657 = vmatprep.mubr.bf16.mxu0 %v1073
        %2658 = vmatmul.mubr.bf16.gmra.mxu0 %v1072
        %v2659 = vpop.f32.mrf.mxu0
        %v2660 = vadd.f32 %v1023, %v2659
        %v2661 = vpop.f32.mrf.mxu0
        %v2662 = vadd.f32 %v1027, %v2661
        %v2663 = vpop.f32.mrf.mxu0
        %v2664 = vadd.f32 %v1023, %v2663
        %v2665 = vpop.f32.mrf.mxu0
        %v2666 = vadd.f32 %v1027, %v2665
        %2667 = vmatprep.mubr.bf16.mxu0 %v1075
        %2668 = vmatmul.mubr.bf16.gmra.mxu0 %v1074
        %v2669 = vpop.f32.mrf.mxu0
        %v2670 = vadd.f32 %v1023, %v2669
        %v2671 = vpop.f32.mrf.mxu0
        %v2672 = vadd.f32 %v1027, %v2671
        %v2673 = vpop.f32.mrf.mxu0
        %v2674 = vadd.f32 %v1023, %v2673
        %v2675 = vpop.f32.mrf.mxu0
        %v2676 = vadd.f32 %v1027, %v2675
        %2677 = vdwg.mxu0
        %2678 = vmatprep.subr.bf16.mxu0 %v1973
        %2679 = vmatpush1.bf16.msra.mxu0 %v1972
        %2680 = vmatprep.subr.bf16.mxu0 %v1957
        %2681 = vmatpush1.bf16.msra.mxu0 %v1956
        %2682 = vmatprep.subr.bf16.mxu0 %v1941
        %2683 = vmatpush1.bf16.msra.mxu0 %v1940
        %2684 = vmatprep.subr.bf16.mxu0 %v1925
        %2685 = vmatpush1.bf16.msra.mxu0 %v1924
        %2686 = vmatprep.subr.bf16.mxu0 %v1909
        %2687 = vmatpush1.bf16.msra.mxu0 %v1908
        %2688 = vmatprep.subr.bf16.mxu0 %v1893
        %2689 = vmatpush1.bf16.msra.mxu0 %v1892
        %2690 = vmatprep.subr.bf16.mxu0 %v1877
        %2691 = vmatpush1.bf16.msra.mxu0 %v1876
        %2692 = vmatprep.subr.bf16.mxu0 %v1861
        %2693 = vmatpush1.bf16.msra.mxu0 %v1860
        %2694 = vmatprep.subr.bf16.mxu0 %v2101
        %2695 = vmatpush2.bf16.msra.mxu0 %v2100
        %2696 = vmatprep.subr.bf16.mxu0 %v2085
        %2697 = vmatpush2.bf16.msra.mxu0 %v2084
        %2698 = vmatprep.subr.bf16.mxu0 %v2069
        %2699 = vmatpush2.bf16.msra.mxu0 %v2068
        %2700 = vmatprep.subr.bf16.mxu0 %v2053
        %2701 = vmatpush2.bf16.msra.mxu0 %v2052
        %2702 = vmatprep.subr.bf16.mxu0 %v2037
        %2703 = vmatpush2.bf16.msra.mxu0 %v2036
        %2704 = vmatprep.subr.bf16.mxu0 %v2021
        %2705 = vmatpush2.bf16.msra.mxu0 %v2020
        %2706 = vmatprep.subr.bf16.mxu0 %v2005
        %2707 = vmatpush2.bf16.msra.mxu0 %v2004
        %2708 = vmatprep.subr.bf16.mxu0 %v1989
        %2709 = vmatpush2.bf16.msra.mxu0 %v1988
        %2710 = vmatprep.mubr.bf16.mxu0 %v1073
        %2711 = vmatmul.mubr.bf16.gmra.mxu0 %v1072
        %v2712 = vpop.f32.mrf.mxu0
        %v2713 = vadd.f32 %v1031, %v2712
        %v2714 = vpop.f32.mrf.mxu0
        %v2715 = vadd.f32 %v1035, %v2714
        %v2716 = vpop.f32.mrf.mxu0
        %v2717 = vadd.f32 %v1031, %v2716
        %v2718 = vpop.f32.mrf.mxu0
        %v2719 = vadd.f32 %v1035, %v2718
        %2720 = vmatprep.mubr.bf16.mxu0 %v1075
        %2721 = vmatmul.mubr.bf16.gmra.mxu0 %v1074
        %v2722 = vpop.f32.mrf.mxu0
        %v2723 = vadd.f32 %v1031, %v2722
        %v2724 = vpop.f32.mrf.mxu0
        %v2725 = vadd.f32 %v1035, %v2724
        %v2726 = vpop.f32.mrf.mxu0
        %v2727 = vadd.f32 %v1031, %v2726
        %v2728 = vpop.f32.mrf.mxu0
        %v2729 = vadd.f32 %v1035, %v2728
        %2730 = vdwg.mxu0
        %2731 = vmatprep.subr.bf16.mxu0 %v1975
        %2732 = vmatpush1.bf16.msra.mxu0 %v1974
        %2733 = vmatprep.subr.bf16.mxu0 %v1959
        %2734 = vmatpush1.bf16.msra.mxu0 %v1958
        %2735 = vmatprep.subr.bf16.mxu0 %v1943
        %2736 = vmatpush1.bf16.msra.mxu0 %v1942
        %2737 = vmatprep.subr.bf16.mxu0 %v1927
        %2738 = vmatpush1.bf16.msra.mxu0 %v1926
        %2739 = vmatprep.subr.bf16.mxu0 %v1911
        %2740 = vmatpush1.bf16.msra.mxu0 %v1910
        %2741 = vmatprep.subr.bf16.mxu0 %v1895
        %2742 = vmatpush1.bf16.msra.mxu0 %v1894
        %2743 = vmatprep.subr.bf16.mxu0 %v1879
        %2744 = vmatpush1.bf16.msra.mxu0 %v1878
        %2745 = vmatprep.subr.bf16.mxu0 %v1863
        %2746 = vmatpush1.bf16.msra.mxu0 %v1862
        %2747 = vmatprep.subr.bf16.mxu0 %v2103
        %2748 = vmatpush2.bf16.msra.mxu0 %v2102
        %2749 = vmatprep.subr.bf16.mxu0 %v2087
        %2750 = vmatpush2.bf16.msra.mxu0 %v2086
        %2751 = vmatprep.subr.bf16.mxu0 %v2071
        %2752 = vmatpush2.bf16.msra.mxu0 %v2070
        %2753 = vmatprep.subr.bf16.mxu0 %v2055
        %2754 = vmatpush2.bf16.msra.mxu0 %v2054
        %2755 = vmatprep.subr.bf16.mxu0 %v2039
        %2756 = vmatpush2.bf16.msra.mxu0 %v2038
        %2757 = vmatprep.subr.bf16.mxu0 %v2023
        %2758 = vmatpush2.bf16.msra.mxu0 %v2022
        %2759 = vmatprep.subr.bf16.mxu0 %v2007
        %2760 = vmatpush2.bf16.msra.mxu0 %v2006
        %2761 = vmatprep.subr.bf16.mxu0 %v1991
        %2762 = vmatpush2.bf16.msra.mxu0 %v1990
        %2763 = vmatprep.mubr.bf16.mxu0 %v1073
        %2764 = vmatmul.mubr.bf16.gmra.mxu0 %v1072
        %v2765 = vpop.f32.mrf.mxu0
        %v2766 = vadd.f32 %v1039, %v2765
        %v2767 = vpop.f32.mrf.mxu0
        %v2768 = vadd.f32 %v1043, %v2767
        %v2769 = vpop.f32.mrf.mxu0
        %v2770 = vadd.f32 %v1039, %v2769
        %v2771 = vpop.f32.mrf.mxu0
        %v2772 = vadd.f32 %v1043, %v2771
        %2773 = vmatprep.mubr.bf16.mxu0 %v1075
        %2774 = vmatmul.mubr.bf16.gmra.mxu0 %v1074
        %v2775 = vpop.f32.mrf.mxu0
        %v2776 = vadd.f32 %v1039, %v2775
        %v2777 = vpop.f32.mrf.mxu0
        %v2778 = vadd.f32 %v1043, %v2777
        %v2779 = vpop.f32.mrf.mxu0
        %v2780 = vadd.f32 %v1039, %v2779
        %v2781 = vpop.f32.mrf.mxu0
        %v2782 = vadd.f32 %v1043, %v2781
        %2783 = vdwg.mxu0
        %2784 = vst [vmem:[%s708] sm:$0xff] %v2395
        %2785 = vst [vmem:[%s708 + $0x8] sm:$0xff] %v2397
        %2786 = vst [vmem:[%s708 + $0x10] sm:$0xff] %v2448
        %2787 = vst [vmem:[%s708 + $0x18] sm:$0xff] %v2450
        %2788 = vst [vmem:[%s708 + $0x20] sm:$0xff] %v2501
        %2789 = vst [vmem:[%s708 + $0x28] sm:$0xff] %v2503
        %2790 = vst [vmem:[%s708 + $0x30] sm:$0xff] %v2554
        %2791 = vst [vmem:[%s708 + $0x38] sm:$0xff] %v2556
        %2792 = vst [vmem:[%s708 + $0x40] sm:$0xff] %v2607
        %2793 = vst [vmem:[%s708 + $0x48] sm:$0xff] %v2609
        %2794 = vst [vmem:[%s708 + $0x50] sm:$0xff] %v2660
        %2795 = vst [vmem:[%s708 + $0x58] sm:$0xff] %v2662
        %2796 = vst [vmem:[%s708 + $0x60] sm:$0xff] %v2713
        %2797 = vst [vmem:[%s708 + $0x68] sm:$0xff] %v2715
        %2798 = vst [vmem:[%s708 + $0x70] sm:$0xff] %v2766
        %2799 = vst [vmem:[%s708 + $0x78] sm:$0xff] %v2768
        %2800 = vst [vmem:[%s708 + $0x80] sm:$0xff] %v2399
        %2801 = vst [vmem:[%s708 + $0x88] sm:$0xff] %v2401
        %2802 = vst [vmem:[%s708 + $0x90] sm:$0xff] %v2452
        %2803 = vst [vmem:[%s708 + $0x98] sm:$0xff] %v2454
        %2804 = vst [vmem:[%s708 + $0xa0] sm:$0xff] %v2505
        %2805 = vst [vmem:[%s708 + $0xa8] sm:$0xff] %v2507
        %2806 = vst [vmem:[%s708 + $0xb0] sm:$0xff] %v2558
        %2807 = vst [vmem:[%s708 + $0xb8] sm:$0xff] %v2560
        %2808 = vst [vmem:[%s708 + $0xc0] sm:$0xff] %v2611
        %2809 = vst [vmem:[%s708 + $0xc8] sm:$0xff] %v2613
        %2810 = vst [vmem:[%s708 + $0xd0] sm:$0xff] %v2664
        %2811 = vst [vmem:[%s708 + $0xd8] sm:$0xff] %v2666
        %2812 = vst [vmem:[%s708 + $0xe0] sm:$0xff] %v2717
        %2813 = vst [vmem:[%s708 + $0xe8] sm:$0xff] %v2719
        %2814 = vst [vmem:[%s708 + $0xf0] sm:$0xff] %v2770
        %2815 = vst [vmem:[%s708 + $0xf8] sm:$0xff] %v2772
        %2816 = vst [vmem:[%s708 + $0x100] sm:$0xff] %v2405
        %2817 = vst [vmem:[%s708 + $0x108] sm:$0xff] %v2407
        %2818 = vst [vmem:[%s708 + $0x110] sm:$0xff] %v2458
        %2819 = vst [vmem:[%s708 + $0x118] sm:$0xff] %v2460
        %2820 = vst [vmem:[%s708 + $0x120] sm:$0xff] %v2511
        %2821 = vst [vmem:[%s708 + $0x128] sm:$0xff] %v2513
        %2822 = vst [vmem:[%s708 + $0x130] sm:$0xff] %v2564
        %2823 = vst [vmem:[%s708 + $0x138] sm:$0xff] %v2566
        %2824 = vst [vmem:[%s708 + $0x140] sm:$0xff] %v2617
        %2825 = vst [vmem:[%s708 + $0x148] sm:$0xff] %v2619
        %2826 = vst [vmem:[%s708 + $0x150] sm:$0xff] %v2670
        %2827 = vst [vmem:[%s708 + $0x158] sm:$0xff] %v2672
        %2828 = vst [vmem:[%s708 + $0x160] sm:$0xff] %v2723
        %2829 = vst [vmem:[%s708 + $0x168] sm:$0xff] %v2725
        %2830 = vst [vmem:[%s708 + $0x170] sm:$0xff] %v2776
        %2831 = vst [vmem:[%s708 + $0x178] sm:$0xff] %v2778
        %2832 = vst [vmem:[%s708 + $0x180] sm:$0xff] %v2409
        %2833 = vst [vmem:[%s708 + $0x188] sm:$0xff] %v2411
        %2834 = vst [vmem:[%s708 + $0x190] sm:$0xff] %v2462
        %2835 = vst [vmem:[%s708 + $0x198] sm:$0xff] %v2464
        %2836 = vst [vmem:[%s708 + $0x1a0] sm:$0xff] %v2515
        %2837 = vst [vmem:[%s708 + $0x1a8] sm:$0xff] %v2517
        %2838 = vst [vmem:[%s708 + $0x1b0] sm:$0xff] %v2568
        %2839 = vst [vmem:[%s708 + $0x1b8] sm:$0xff] %v2570
        %2840 = vst [vmem:[%s708 + $0x1c0] sm:$0xff] %v2621
        %2841 = vst [vmem:[%s708 + $0x1c8] sm:$0xff] %v2623
        %2842 = vst [vmem:[%s708 + $0x1d0] sm:$0xff] %v2674
        %2843 = vst [vmem:[%s708 + $0x1d8] sm:$0xff] %v2676
        %2844 = vst [vmem:[%s708 + $0x1e0] sm:$0xff] %v2727
        %2845 = vst [vmem:[%s708 + $0x1e8] sm:$0xff] %v2729
        %2846 = vst [vmem:[%s708 + $0x1f0] sm:$0xff] %v2780
        %2847 = vst [vmem:[%s708 + $0x1f8] sm:$0xff] %v2782
        %s2848 = sand.u32 %s95, 1
        %s2849 = sand.u32 %s95, 1
        %s2850 = smul.addr %s2849, 512
        %s2851 = scalar_lea.vmem [#allocation3], %s2850
        // Predicated region
        $region56: #{gpt2_forward.3} parent=50 // pred_check
          %p2852 = pneg %p105
        $region57: #{gpt2_forward.3} parent=50 // pred_check_branch
          %2854 = sbr.rel (%p2852) target = $region59
        $region58: #{gpt2_forward.3} parent=50 // pred_region
          %s2855 = smul.u32 16, %s14
          %s2856 = smul.addr %s2855, 8
          %s2857 = scalar_lea.vmem %s3, %s2856
          // Predicated region
          $region60: #{gpt2_forward.3} parent=58 // pred_check
            _
          $region61: #{gpt2_forward.3} parent=58 // pred_check_branch
            %2859 = sbr.rel (0) target = $region63
          $region62: #{gpt2_forward.3} parent=58 // pred_region
            // Predicated region
            $region64: #{gpt2_forward.3} parent=62 // pred_check
              _
            $region65: #{gpt2_forward.3} parent=62 // pred_check_branch
              %2861 = sbr.rel (0) target = $region67
            $region66: #{gpt2_forward.3} parent=62 // pred_region
              loop: start=0, step=1, limit=1
              $region68: #{gpt2_forward.3} parent=66 // loop_pre_header
                _
              $region69: #{gpt2_forward.3} parent=66 // loop_header
                %s2863 = sphi 0, %s2867
                %p2864 = scmp.ge.s32.totalorder %s2863, 1
                %s2868 = sphi %s2851, %s2851
                %s2869 = sphi %s2857, %s2857
              $region70: #{gpt2_forward.3} parent=66 // loop_header_branch
                %2866 = sbr.rel (%p2864) target = $region74
              $region71: #{gpt2_forward.3} parent=66 // loop_body
                %v2870 = vld [vmem:[%s2868] sm:$0xff]
                %2871 = vst [vmem:[%s2869] sm:$0xff] %v2870
                %v2872 = vld [vmem:[%s2868 + $0x8] sm:$0xff]
                %2873 = vst [vmem:[%s2869 + $0x8] sm:$0xff] %v2872
                %v2874 = vld [vmem:[%s2868 + $0x10] sm:$0xff]
                %2875 = vst [vmem:[%s2869 + $0x10] sm:$0xff] %v2874
                %v2876 = vld [vmem:[%s2868 + $0x18] sm:$0xff]
                %2877 = vst [vmem:[%s2869 + $0x18] sm:$0xff] %v2876
                %v2878 = vld [vmem:[%s2868 + $0x20] sm:$0xff]
                %2879 = vst [vmem:[%s2869 + $0x20] sm:$0xff] %v2878
                %v2880 = vld [vmem:[%s2868 + $0x28] sm:$0xff]
                %2881 = vst [vmem:[%s2869 + $0x28] sm:$0xff] %v2880
                %v2882 = vld [vmem:[%s2868 + $0x30] sm:$0xff]
                %2883 = vst [vmem:[%s2869 + $0x30] sm:$0xff] %v2882
                %v2884 = vld [vmem:[%s2868 + $0x38] sm:$0xff]
                %2885 = vst [vmem:[%s2869 + $0x38] sm:$0xff] %v2884
                %v2886 = vld [vmem:[%s2868 + $0x40] sm:$0xff]
                %2887 = vst [vmem:[%s2869 + $0x40] sm:$0xff] %v2886
                %v2888 = vld [vmem:[%s2868 + $0x48] sm:$0xff]
                %2889 = vst [vmem:[%s2869 + $0x48] sm:$0xff] %v2888
                %v2890 = vld [vmem:[%s2868 + $0x50] sm:$0xff]
                %2891 = vst [vmem:[%s2869 + $0x50] sm:$0xff] %v2890
                %v2892 = vld [vmem:[%s2868 + $0x58] sm:$0xff]
                %2893 = vst [vmem:[%s2869 + $0x58] sm:$0xff] %v2892
                %v2894 = vld [vmem:[%s2868 + $0x60] sm:$0xff]
                %2895 = vst [vmem:[%s2869 + $0x60] sm:$0xff] %v2894
                %v2896 = vld [vmem:[%s2868 + $0x68] sm:$0xff]
                %2897 = vst [vmem:[%s2869 + $0x68] sm:$0xff] %v2896
                %v2898 = vld [vmem:[%s2868 + $0x70] sm:$0xff]
                %2899 = vst [vmem:[%s2869 + $0x70] sm:$0xff] %v2898
                %v2900 = vld [vmem:[%s2868 + $0x78] sm:$0xff]
                %2901 = vst [vmem:[%s2869 + $0x78] sm:$0xff] %v2900
                %v2902 = vld [vmem:[%s2868 + $0x80] sm:$0xff]
                %2903 = vst [vmem:[%s2869 + $0x280] sm:$0xff] %v2902
                %v2904 = vld [vmem:[%s2868 + $0x88] sm:$0xff]
                %2905 = vst [vmem:[%s2869 + $0x288] sm:$0xff] %v2904
                %v2906 = vld [vmem:[%s2868 + $0x90] sm:$0xff]
                %2907 = vst [vmem:[%s2869 + $0x290] sm:$0xff] %v2906
                %v2908 = vld [vmem:[%s2868 + $0x98] sm:$0xff]
                %2909 = vst [vmem:[%s2869 + $0x298] sm:$0xff] %v2908
                %v2910 = vld [vmem:[%s2868 + $0xa0] sm:$0xff]
                %2911 = vst [vmem:[%s2869 + $0x2a0] sm:$0xff] %v2910
                %v2912 = vld [vmem:[%s2868 + $0xa8] sm:$0xff]
                %2913 = vst [vmem:[%s2869 + $0x2a8] sm:$0xff] %v2912
                %v2914 = vld [vmem:[%s2868 + $0xb0] sm:$0xff]
                %2915 = vst [vmem:[%s2869 + $0x2b0] sm:$0xff] %v2914
                %v2916 = vld [vmem:[%s2868 + $0xb8] sm:$0xff]
                %2917 = vst [vmem:[%s2869 + $0x2b8] sm:$0xff] %v2916
                %v2918 = vld [vmem:[%s2868 + $0xc0] sm:$0xff]
                %2919 = vst [vmem:[%s2869 + $0x2c0] sm:$0xff] %v2918
                %v2920 = vld [vmem:[%s2868 + $0xc8] sm:$0xff]
                %2921 = vst [vmem:[%s2869 + $0x2c8] sm:$0xff] %v2920
                %v2922 = vld [vmem:[%s2868 + $0xd0] sm:$0xff]
                %2923 = vst [vmem:[%s2869 + $0x2d0] sm:$0xff] %v2922
                %v2924 = vld [vmem:[%s2868 + $0xd8] sm:$0xff]
                %2925 = vst [vmem:[%s2869 + $0x2d8] sm:$0xff] %v2924
                %v2926 = vld [vmem:[%s2868 + $0xe0] sm:$0xff]
                %2927 = vst [vmem:[%s2869 + $0x2e0] sm:$0xff] %v2926
                %v2928 = vld [vmem:[%s2868 + $0xe8] sm:$0xff]
                %2929 = vst [vmem:[%s2869 + $0x2e8] sm:$0xff] %v2928
                %v2930 = vld [vmem:[%s2868 + $0xf0] sm:$0xff]
                %2931 = vst [vmem:[%s2869 + $0x2f0] sm:$0xff] %v2930
                %v2932 = vld [vmem:[%s2868 + $0xf8] sm:$0xff]
                %2933 = vst [vmem:[%s2869 + $0x2f8] sm:$0xff] %v2932
                %v2934 = vld [vmem:[%s2868 + $0x100] sm:$0xff]
                %2935 = vst [vmem:[%s2869 + $0x500] sm:$0xff] %v2934
                %v2936 = vld [vmem:[%s2868 + $0x108] sm:$0xff]
                %2937 = vst [vmem:[%s2869 + $0x508] sm:$0xff] %v2936
                %v2938 = vld [vmem:[%s2868 + $0x110] sm:$0xff]
                %2939 = vst [vmem:[%s2869 + $0x510] sm:$0xff] %v2938
                %v2940 = vld [vmem:[%s2868 + $0x118] sm:$0xff]
                %2941 = vst [vmem:[%s2869 + $0x518] sm:$0xff] %v2940
                %v2942 = vld [vmem:[%s2868 + $0x120] sm:$0xff]
                %2943 = vst [vmem:[%s2869 + $0x520] sm:$0xff] %v2942
                %v2944 = vld [vmem:[%s2868 + $0x128] sm:$0xff]
                %2945 = vst [vmem:[%s2869 + $0x528] sm:$0xff] %v2944
                %v2946 = vld [vmem:[%s2868 + $0x130] sm:$0xff]
                %2947 = vst [vmem:[%s2869 + $0x530] sm:$0xff] %v2946
                %v2948 = vld [vmem:[%s2868 + $0x138] sm:$0xff]
                %2949 = vst [vmem:[%s2869 + $0x538] sm:$0xff] %v2948
                %v2950 = vld [vmem:[%s2868 + $0x140] sm:$0xff]
                %2951 = vst [vmem:[%s2869 + $0x540] sm:$0xff] %v2950
                %v2952 = vld [vmem:[%s2868 + $0x148] sm:$0xff]
                %2953 = vst [vmem:[%s2869 + $0x548] sm:$0xff] %v2952
                %v2954 = vld [vmem:[%s2868 + $0x150] sm:$0xff]
                %2955 = vst [vmem:[%s2869 + $0x550] sm:$0xff] %v2954
                %v2956 = vld [vmem:[%s2868 + $0x158] sm:$0xff]
                %2957 = vst [vmem:[%s2869 + $0x558] sm:$0xff] %v2956
                %v2958 = vld [vmem:[%s2868 + $0x160] sm:$0xff]
                %2959 = vst [vmem:[%s2869 + $0x560] sm:$0xff] %v2958
                %v2960 = vld [vmem:[%s2868 + $0x168] sm:$0xff]
                %2961 = vst [vmem:[%s2869 + $0x568] sm:$0xff] %v2960
                %v2962 = vld [vmem:[%s2868 + $0x170] sm:$0xff]
                %2963 = vst [vmem:[%s2869 + $0x570] sm:$0xff] %v2962
                %v2964 = vld [vmem:[%s2868 + $0x178] sm:$0xff]
                %2965 = vst [vmem:[%s2869 + $0x578] sm:$0xff] %v2964
                %v2966 = vld [vmem:[%s2868 + $0x180] sm:$0xff]
                %2967 = vst [vmem:[%s2869 + $0x780] sm:$0xff] %v2966
                %v2968 = vld [vmem:[%s2868 + $0x188] sm:$0xff]
                %2969 = vst [vmem:[%s2869 + $0x788] sm:$0xff] %v2968
                %v2970 = vld [vmem:[%s2868 + $0x190] sm:$0xff]
                %2971 = vst [vmem:[%s2869 + $0x790] sm:$0xff] %v2970
                %v2972 = vld [vmem:[%s2868 + $0x198] sm:$0xff]
                %2973 = vst [vmem:[%s2869 + $0x798] sm:$0xff] %v2972
                %v2974 = vld [vmem:[%s2868 + $0x1a0] sm:$0xff]
                %2975 = vst [vmem:[%s2869 + $0x7a0] sm:$0xff] %v2974
                %v2976 = vld [vmem:[%s2868 + $0x1a8] sm:$0xff]
                %2977 = vst [vmem:[%s2869 + $0x7a8] sm:$0xff] %v2976
                %v2978 = vld [vmem:[%s2868 + $0x1b0] sm:$0xff]
                %2979 = vst [vmem:[%s2869 + $0x7b0] sm:$0xff] %v2978
                %v2980 = vld [vmem:[%s2868 + $0x1b8] sm:$0xff]
                %2981 = vst [vmem:[%s2869 + $0x7b8] sm:$0xff] %v2980
                %v2982 = vld [vmem:[%s2868 + $0x1c0] sm:$0xff]
                %2983 = vst [vmem:[%s2869 + $0x7c0] sm:$0xff] %v2982
                %v2984 = vld [vmem:[%s2868 + $0x1c8] sm:$0xff]
                %2985 = vst [vmem:[%s2869 + $0x7c8] sm:$0xff] %v2984
                %v2986 = vld [vmem:[%s2868 + $0x1d0] sm:$0xff]
                %2987 = vst [vmem:[%s2869 + $0x7d0] sm:$0xff] %v2986
                %v2988 = vld [vmem:[%s2868 + $0x1d8] sm:$0xff]
                %2989 = vst [vmem:[%s2869 + $0x7d8] sm:$0xff] %v2988
                %v2990 = vld [vmem:[%s2868 + $0x1e0] sm:$0xff]
                %2991 = vst [vmem:[%s2869 + $0x7e0] sm:$0xff] %v2990
                %v2992 = vld [vmem:[%s2868 + $0x1e8] sm:$0xff]
                %2993 = vst [vmem:[%s2869 + $0x7e8] sm:$0xff] %v2992
                %v2994 = vld [vmem:[%s2868 + $0x1f0] sm:$0xff]
                %2995 = vst [vmem:[%s2869 + $0x7f0] sm:$0xff] %v2994
                %v2996 = vld [vmem:[%s2868 + $0x1f8] sm:$0xff]
                %2997 = vst [vmem:[%s2869 + $0x7f8] sm:$0xff] %v2996
              $region72: #{gpt2_forward.3} parent=66 // loop_footer
                %s2867 = sadd.s32 1, %s2863
              $region73: #{gpt2_forward.3} parent=66 // loop_footer_branch
                %2862 = sbr.rel target = $region69
              $region74: #{gpt2_forward.3} parent=66 // loop_exit
                _
            $region67: #{gpt2_forward.3} parent=62 // pred_fallthru
              _
            // Predicated region
            $region75: #{gpt2_forward.3} parent=62 // pred_check
              _
            $region76: #{gpt2_forward.3} parent=62 // pred_check_branch
              %2999 = sbr.rel target = $region78
            $region77: #{gpt2_forward.3} parent=62 // pred_region
              _
            $region78: #{gpt2_forward.3} parent=62 // pred_fallthru
              _
          $region63: #{gpt2_forward.3} parent=58 // pred_fallthru
            _
          %3000 = vnop
        $region59: #{gpt2_forward.3} parent=50 // pred_fallthru
          _
      $region51: #{gpt2_forward.3} parent=5 // pred_fallthru
        _
      %p3001 = scmp.le.s32.totalorder 2, %s9
      // Predicated region
      $region79: #{gpt2_forward.3} parent=5 // pred_check
        %p3002 = pneg %p3001
      $region80: #{gpt2_forward.3} parent=5 // pred_check_branch
        %3004 = sbr.rel (%p3002) target = $region82
      $region81: #{gpt2_forward.3} parent=5 // pred_region
        %s3005 = ssub.s32 %s9, 2
        // Predicated region
        $region83: #{gpt2_forward.3} parent=81 // pred_check
          %p3006 = pneg %p111
        $region84: #{gpt2_forward.3} parent=81 // pred_check_branch
          %3008 = sbr.rel (%p3006) target = $region86
        $region85: #{gpt2_forward.3} parent=81 // pred_region
          %s3009 = sand.u32 %s96, 1
          %s3010 = sand.u32 %s96, 1
          %s3011 = smul.addr %s3010, 512
          %s3012 = scalar_lea.vmem [#allocation3], %s3011
        $region86: #{gpt2_forward.3} parent=81 // pred_fallthru
          _
      $region82: #{gpt2_forward.3} parent=5 // pred_fallthru
        _
    $region6: #{gpt2_forward.3} parent=1 // loop_footer
      %s13 = sadd.s32 1, %s9
    $region7: #{gpt2_forward.3} parent=1 // loop_footer_branch
      %8 = sbr.rel target = $region3
    $region8: #{gpt2_forward.3} parent=1 // loop_exit
      _

// kernel: gpt2_forward.2
$region0: #{gpt2_forward.2}
  #allocation0 [shape = 'u32[]', space=smem, size = 0x4, offset = 0x4, fixed_abs, tag = 'smem constant byte address 0x4 - core index']
  #allocation1 [shape = 'u32[144,128]{1,0:T(1,128)}', space=vmem, size = 0x12000, scoped, tag = 'internal scratch']
  #allocation2 [shape = 'f32[16,256]{1,0:T(8,128)}', space=vmem, size = 0x4000, scoped, tag = 'scratch operand']
  %s0 = inlined_call_operand.vmem [shape: f32[32,256], index: 0, kind: input, shape index: {}]
  %s1 = inlined_call_operand.hbm [shape: bf16[4,256,2048], index: 1, kind: input, shape index: {}]
  %s2 = inlined_call_operand.hbm [shape: f32[4,1,2048], index: 2, kind: input, shape index: {}]
  %s3 = inlined_call_operand.hbm [shape: f32[4,1,256], index: 3, kind: input, shape index: {}]
  %s4 = inlined_call_operand.hbm [shape: f32[4,1,256], index: 4, kind: input, shape index: {}]
  %s5 = inlined_call_operand.hbm [shape: f32[4,1,256], index: 5, kind: input, shape index: {}]
  %s6 = inlined_call_operand.hbm [shape: bf16[4,256,512], index: 6, kind: input, shape index: {}]
  %s7 = inlined_call_operand.hbm [shape: f32[4,1,512], index: 7, kind: input, shape index: {}]
  %s8 = inlined_call_operand.hbm [shape: bf16[4,512,256], index: 8, kind: input, shape index: {}]
  %s9 = inlined_call_operand.hbm [shape: f32[4,1,256], index: 9, kind: input, shape index: {}]
  %s10 = inlined_call_operand.hbm [shape: f32[4,1,256], index: 10, kind: input, shape index: {}]
  %s11 = inlined_call_operand.hbm [shape: f32[4,1,256], index: 11, kind: input, shape index: {}]
  %s12 = inlined_call_operand.vmem [shape: f32[32,256], index: 12, kind: output, shape index: {}]
  %s13 = sld [smem:[#allocation0]]
  $region129: #{gpt2_forward.2} parent=0
    _
  %s15 = ssub.s32 1, %s13
  %s16 = scalar_select 0, %s15, %s13
  $region1: #{gpt2_forward.2} parent=0
    #allocation3 [shape = 'u8[2097152]{0}', space=vmem, size = 0x200000, scoped, tag = 'input window, operand 1']
    #allocation4 [shape = 's32[2]{0}', space=sflag, size = 0x8, scoped, tag = 'scoped memory for gpt2_forward.2']
    #allocation5 [shape = 'u8[16384]{0}', space=vmem, size = 0x4000, scoped, tag = 'input window, operand 2']
    #allocation6 [shape = 's32[2]{0}', space=sflag, size = 0x8, scoped, tag = 'scoped memory for gpt2_forward.2']
    #allocation7 [shape = 'u8[2048]{0}', space=vmem, size = 0x800, scoped, tag = 'input window, operand 3']
    #allocation8 [shape = 'u8[2048]{0}', space=vmem, size = 0x800, scoped, tag = 'input window, operand 4']
    #allocation9 [shape = 's32[2]{0}', space=sflag, size = 0x8, scoped, tag = 'scoped memory for gpt2_forward.2']
    #allocation10 [shape = 'u8[2048]{0}', space=vmem, size = 0x800, scoped, tag = 'input window, operand 5']
    #allocation11 [shape = 'u8[524288]{0}', space=vmem, size = 0x80000, scoped, tag = 'input window, operand 6']
    #allocation12 [shape = 's32[2]{0}', space=sflag, size = 0x8, scoped, tag = 'scoped memory for gpt2_forward.2']
    #allocation13 [shape = 'u8[4096]{0}', space=vmem, size = 0x1000, scoped, tag = 'input window, operand 7']
    #allocation14 [shape = 'u8[524288]{0}', space=vmem, size = 0x80000, scoped, tag = 'input window, operand 8']
    #allocation15 [shape = 's32[2]{0}', space=sflag, size = 0x8, scoped, tag = 'scoped memory for gpt2_forward.2']
    #allocation16 [shape = 'u8[2048]{0}', space=vmem, size = 0x800, scoped, tag = 'input window, operand 9']
    #allocation17 [shape = 'u8[2048]{0}', space=vmem, size = 0x800, scoped, tag = 'input window, operand 10']
    #allocation18 [shape = 's32[2]{0}', space=sflag, size = 0x8, scoped, tag = 'scoped memory for gpt2_forward.2']
    #allocation19 [shape = 'u8[2048]{0}', space=vmem, size = 0x800, scoped, tag = 'input window, operand 11']
    %17 = vsyncpa [#allocation4], 0
    %s18 = scalar_lea.sflag [#allocation4], 1
    %19 = vsyncpa %s18, 0
    %20 = vsyncpa [#allocation6], 0
    %s21 = scalar_lea.sflag [#allocation6], 1
    %22 = vsyncpa %s21, 0
    %23 = vsyncpa [#allocation9], 0
    %s24 = scalar_lea.sflag [#allocation9], 1
    %25 = vsyncpa %s24, 0
    %26 = vsyncpa [#allocation12], 0
    %s27 = scalar_lea.sflag [#allocation12], 1
    %28 = vsyncpa %s27, 0
    %29 = vsyncpa [#allocation15], 0
    %s30 = scalar_lea.sflag [#allocation15], 1
    %31 = vsyncpa %s30, 0
    %32 = vsyncpa [#allocation18], 0
    %s33 = scalar_lea.sflag [#allocation18], 1
    %34 = vsyncpa %s33, 0
    loop: start=0, step=1, limit=10
    $region2: #{gpt2_forward.2} parent=1 // loop_pre_header
      _
    $region3: #{gpt2_forward.2} parent=1 // loop_header
      %s36 = sphi 0, %s40
      %p37 = scmp.ge.s32.totalorder %s36, 10
      %s43 = sphi 0, %s55
      %s44 = sphi 0, %s51
      %s45 = sphi 0, %s43
      %s46 = sphi 0, %s44
      %s47 = sphi 0, %s45
      %s48 = sphi 0, %s46
      %s58 = sphi 0, %s60
      %s61 = sphi 0, %s58
      %s62 = sphi 0, %s61
      %s78 = sphi 0, %s62
      %s84 = sphi 0, %s86
      %s87 = sphi 0, %s84
      %s88 = sphi 0, %s87
      %s104 = sphi 0, %s88
      %s110 = sphi 0, %s112
      %s113 = sphi 0, %s110
      %s114 = sphi 0, %s113
      %s130 = sphi 0, %s114
      %s136 = sphi 0, %s138
      %s139 = sphi 0, %s136
      %s140 = sphi 0, %s139
      %s156 = sphi 0, %s140
      %s162 = sphi 0, %s164
      %s165 = sphi 0, %s162
      %s166 = sphi 0, %s165
      %s182 = sphi 0, %s166
      %s188 = sphi 0, %s190
      %s191 = sphi 0, %s188
      %s192 = sphi 0, %s191
      %s208 = sphi 0, %s192
      %s214 = sphi 0, %s216
      %s217 = sphi 0, %s214
      %s218 = sphi 0, %s217
      %s234 = sphi 0, %s218
      %s240 = sphi 0, %s242
      %s243 = sphi 0, %s240
      %s244 = sphi 0, %s243
      %s260 = sphi 0, %s244
      %s266 = sphi 0, %s268
      %s269 = sphi 0, %s266
      %s270 = sphi 0, %s269
      %s286 = sphi 0, %s270
      %s292 = sphi 0, %s294
      %s295 = sphi 0, %s292
      %s296 = sphi 0, %s295
      %s312 = sphi 0, %s296
      %s318 = sphi 0, %s320
      %s321 = sphi 0, %s318
      %s322 = sphi 0, %s321
      %s338 = sphi 0, %s322
      %s344 = sphi 0, %s346
      %s347 = sphi 0, %s344
      %s348 = sphi 0, %s347
      %s364 = sphi 0, %s348
      %s370 = sphi 0, %s372
      %s373 = sphi 0, %s370
      %s374 = sphi 0, %s373
      %s390 = sphi 0, %s374
    $region4: #{gpt2_forward.2} parent=1 // loop_header_branch
      %39 = sbr.rel (%p37) target = $region8
    $region5: #{gpt2_forward.2} parent=1 // loop_body
      %s41 = ssub.s32 %s36, 1
      %s42 = ssub.s32 %s36, 2
      %s49 = sadd.s32 1, %s44
      %p50 = scmp.ge.s32.totalorder %s49, 4
      %s51 = scalar_select %p50, 0, %s49
      %s52 = sadd.s32 1, %s43
      %s53 = scalar_select %p50, %s52, %s43
      %p54 = scmp.ge.s32.totalorder %s53, 2
      %s55 = scalar_select %p54, 0, %s53
      %s56 = ssub.s32 %s43, %s55
      %p57 = scmp.eq.s32.totalorder %s56, 0
      %s59 = sadd.s32 %s58, 1
      %s60 = scalar_select %p57, %s58, %s59
      %p63 = pneg %p57
      %p64 = scmp.eq.s32.totalorder %s36, 7
      %p65 = por %p63, %p64
      %p66 = scmp.ne.s32.totalorder %s58, %s61
      %p67 = scmp.eq.s32.totalorder %s36, 0
      %p68 = por %p66, %p67
      %p69 = scmp.ne.s32.totalorder %s58, %s61
      %p70 = scmp.eq.s32.totalorder %s41, 7
      %p71 = por %p69, %p70
      %p72 = scmp.ne.s32.totalorder %s61, %s62
      %p73 = scmp.eq.s32.totalorder %s41, 0
      %p74 = por %p72, %p73
      %p75 = scmp.ne.s32.totalorder %s61, %s62
      %p76 = scmp.eq.s32.totalorder %s42, 7
      %p77 = por %p75, %p76
      %p79 = scmp.ne.s32.totalorder %s62, %s78
      %p80 = scmp.eq.s32.totalorder %s42, 0
      %p81 = por %p79, %p80
      %s82 = ssub.s32 %s44, %s51
      %p83 = scmp.eq.s32.totalorder %s82, 0
      %s85 = sadd.s32 %s84, 1
      %s86 = scalar_select %p83, %s84, %s85
      %p89 = pneg %p83
      %p90 = scmp.eq.s32.totalorder %s36, 7
      %p91 = por %p89, %p90
      %p92 = scmp.ne.s32.totalorder %s84, %s87
      %p93 = scmp.eq.s32.totalorder %s36, 0
      %p94 = por %p92, %p93
      %p95 = scmp.ne.s32.totalorder %s84, %s87
      %p96 = scmp.eq.s32.totalorder %s41, 7
      %p97 = por %p95, %p96
      %p98 = scmp.ne.s32.totalorder %s87, %s88
      %p99 = scmp.eq.s32.totalorder %s41, 0
      %p100 = por %p98, %p99
      %p101 = scmp.ne.s32.totalorder %s87, %s88
      %p102 = scmp.eq.s32.totalorder %s42, 7
      %p103 = por %p101, %p102
      %p105 = scmp.ne.s32.totalorder %s88, %s104
      %p106 = scmp.eq.s32.totalorder %s42, 0
      %p107 = por %p105, %p106
      %s108 = ssub.s32 %s44, %s51
      %p109 = scmp.eq.s32.totalorder %s108, 0
      %s111 = sadd.s32 %s110, 1
      %s112 = scalar_select %p109, %s110, %s111
      %p115 = pneg %p109
      %p116 = scmp.eq.s32.totalorder %s36, 7
      %p117 = por %p115, %p116
      %p118 = scmp.ne.s32.totalorder %s110, %s113
      %p119 = scmp.eq.s32.totalorder %s36, 0
      %p120 = por %p118, %p119
      %p121 = scmp.ne.s32.totalorder %s110, %s113
      %p122 = scmp.eq.s32.totalorder %s41, 7
      %p123 = por %p121, %p122
      %p124 = scmp.ne.s32.totalorder %s113, %s114
      %p125 = scmp.eq.s32.totalorder %s41, 0
      %p126 = por %p124, %p125
      %p127 = scmp.ne.s32.totalorder %s113, %s114
      %p128 = scmp.eq.s32.totalorder %s42, 7
      %p129 = por %p127, %p128
      %p131 = scmp.ne.s32.totalorder %s114, %s130
      %p132 = scmp.eq.s32.totalorder %s42, 0
      %p133 = por %p131, %p132
      %s134 = ssub.s32 %s44, %s51
      %p135 = scmp.eq.s32.totalorder %s134, 0
      %s137 = sadd.s32 %s136, 1
      %s138 = scalar_select %p135, %s136, %s137
      %p141 = pneg %p135
      %p142 = scmp.eq.s32.totalorder %s36, 7
      %p143 = por %p141, %p142
      %p144 = scmp.ne.s32.totalorder %s136, %s139
      %p145 = scmp.eq.s32.totalorder %s36, 0
      %p146 = por %p144, %p145
      %p147 = scmp.ne.s32.totalorder %s136, %s139
      %p148 = scmp.eq.s32.totalorder %s41, 7
      %p149 = por %p147, %p148
      %p150 = scmp.ne.s32.totalorder %s139, %s140
      %p151 = scmp.eq.s32.totalorder %s41, 0
      %p152 = por %p150, %p151
      %p153 = scmp.ne.s32.totalorder %s139, %s140
      %p154 = scmp.eq.s32.totalorder %s42, 7
      %p155 = por %p153, %p154
      %p157 = scmp.ne.s32.totalorder %s140, %s156
      %p158 = scmp.eq.s32.totalorder %s42, 0
      %p159 = por %p157, %p158
      %s160 = ssub.s32 %s44, %s51
      %p161 = scmp.eq.s32.totalorder %s160, 0
      %s163 = sadd.s32 %s162, 1
      %s164 = scalar_select %p161, %s162, %s163
      %p167 = pneg %p161
      %p168 = scmp.eq.s32.totalorder %s36, 7
      %p169 = por %p167, %p168
      %p170 = scmp.ne.s32.totalorder %s162, %s165
      %p171 = scmp.eq.s32.totalorder %s36, 0
      %p172 = por %p170, %p171
      %p173 = scmp.ne.s32.totalorder %s162, %s165
      %p174 = scmp.eq.s32.totalorder %s41, 7
      %p175 = por %p173, %p174
      %p176 = scmp.ne.s32.totalorder %s165, %s166
      %p177 = scmp.eq.s32.totalorder %s41, 0
      %p178 = por %p176, %p177
      %p179 = scmp.ne.s32.totalorder %s165, %s166
      %p180 = scmp.eq.s32.totalorder %s42, 7
      %p181 = por %p179, %p180
      %p183 = scmp.ne.s32.totalorder %s166, %s182
      %p184 = scmp.eq.s32.totalorder %s42, 0
      %p185 = por %p183, %p184
      %s186 = ssub.s32 %s44, %s51
      %p187 = scmp.eq.s32.totalorder %s186, 0
      %s189 = sadd.s32 %s188, 1
      %s190 = scalar_select %p187, %s188, %s189
      %p193 = pneg %p187
      %p194 = scmp.eq.s32.totalorder %s36, 7
      %p195 = por %p193, %p194
      %p196 = scmp.ne.s32.totalorder %s188, %s191
      %p197 = scmp.eq.s32.totalorder %s36, 0
      %p198 = por %p196, %p197
      %p199 = scmp.ne.s32.totalorder %s188, %s191
      %p200 = scmp.eq.s32.totalorder %s41, 7
      %p201 = por %p199, %p200
      %p202 = scmp.ne.s32.totalorder %s191, %s192
      %p203 = scmp.eq.s32.totalorder %s41, 0
      %p204 = por %p202, %p203
      %p205 = scmp.ne.s32.totalorder %s191, %s192
      %p206 = scmp.eq.s32.totalorder %s42, 7
      %p207 = por %p205, %p206
      %p209 = scmp.ne.s32.totalorder %s192, %s208
      %p210 = scmp.eq.s32.totalorder %s42, 0
      %p211 = por %p209, %p210
      %s212 = ssub.s32 %s44, %s51
      %p213 = scmp.eq.s32.totalorder %s212, 0
      %s215 = sadd.s32 %s214, 1
      %s216 = scalar_select %p213, %s214, %s215
      %p219 = pneg %p213
      %p220 = scmp.eq.s32.totalorder %s36, 7
      %p221 = por %p219, %p220
      %p222 = scmp.ne.s32.totalorder %s214, %s217
      %p223 = scmp.eq.s32.totalorder %s36, 0
      %p224 = por %p222, %p223
      %p225 = scmp.ne.s32.totalorder %s214, %s217
      %p226 = scmp.eq.s32.totalorder %s41, 7
      %p227 = por %p225, %p226
      %p228 = scmp.ne.s32.totalorder %s217, %s218
      %p229 = scmp.eq.s32.totalorder %s41, 0
      %p230 = por %p228, %p229
      %p231 = scmp.ne.s32.totalorder %s217, %s218
      %p232 = scmp.eq.s32.totalorder %s42, 7
      %p233 = por %p231, %p232
      %p235 = scmp.ne.s32.totalorder %s218, %s234
      %p236 = scmp.eq.s32.totalorder %s42, 0
      %p237 = por %p235, %p236
      %s238 = ssub.s32 %s44, %s51
      %p239 = scmp.eq.s32.totalorder %s238, 0
      %s241 = sadd.s32 %s240, 1
      %s242 = scalar_select %p239, %s240, %s241
      %p245 = pneg %p239
      %p246 = scmp.eq.s32.totalorder %s36, 7
      %p247 = por %p245, %p246
      %p248 = scmp.ne.s32.totalorder %s240, %s243
      %p249 = scmp.eq.s32.totalorder %s36, 0
      %p250 = por %p248, %p249
      %p251 = scmp.ne.s32.totalorder %s240, %s243
      %p252 = scmp.eq.s32.totalorder %s41, 7
      %p253 = por %p251, %p252
      %p254 = scmp.ne.s32.totalorder %s243, %s244
      %p255 = scmp.eq.s32.totalorder %s41, 0
      %p256 = por %p254, %p255
      %p257 = scmp.ne.s32.totalorder %s243, %s244
      %p258 = scmp.eq.s32.totalorder %s42, 7
      %p259 = por %p257, %p258
      %p261 = scmp.ne.s32.totalorder %s244, %s260
      %p262 = scmp.eq.s32.totalorder %s42, 0
      %p263 = por %p261, %p262
      %s264 = ssub.s32 %s44, %s51
      %p265 = scmp.eq.s32.totalorder %s264, 0
      %s267 = sadd.s32 %s266, 1
      %s268 = scalar_select %p265, %s266, %s267
      %p271 = pneg %p265
      %p272 = scmp.eq.s32.totalorder %s36, 7
      %p273 = por %p271, %p272
      %p274 = scmp.ne.s32.totalorder %s266, %s269
      %p275 = scmp.eq.s32.totalorder %s36, 0
      %p276 = por %p274, %p275
      %p277 = scmp.ne.s32.totalorder %s266, %s269
      %p278 = scmp.eq.s32.totalorder %s41, 7
      %p279 = por %p277, %p278
      %p280 = scmp.ne.s32.totalorder %s269, %s270
      %p281 = scmp.eq.s32.totalorder %s41, 0
      %p282 = por %p280, %p281
      %p283 = scmp.ne.s32.totalorder %s269, %s270
      %p284 = scmp.eq.s32.totalorder %s42, 7
      %p285 = por %p283, %p284
      %p287 = scmp.ne.s32.totalorder %s270, %s286
      %p288 = scmp.eq.s32.totalorder %s42, 0
      %p289 = por %p287, %p288
      %s290 = ssub.s32 %s44, %s51
      %p291 = scmp.eq.s32.totalorder %s290, 0
      %s293 = sadd.s32 %s292, 1
      %s294 = scalar_select %p291, %s292, %s293
      %p297 = pneg %p291
      %p298 = scmp.eq.s32.totalorder %s36, 7
      %p299 = por %p297, %p298
      %p300 = scmp.ne.s32.totalorder %s292, %s295
      %p301 = scmp.eq.s32.totalorder %s36, 0
      %p302 = por %p300, %p301
      %p303 = scmp.ne.s32.totalorder %s292, %s295
      %p304 = scmp.eq.s32.totalorder %s41, 7
      %p305 = por %p303, %p304
      %p306 = scmp.ne.s32.totalorder %s295, %s296
      %p307 = scmp.eq.s32.totalorder %s41, 0
      %p308 = por %p306, %p307
      %p309 = scmp.ne.s32.totalorder %s295, %s296
      %p310 = scmp.eq.s32.totalorder %s42, 7
      %p311 = por %p309, %p310
      %p313 = scmp.ne.s32.totalorder %s296, %s312
      %p314 = scmp.eq.s32.totalorder %s42, 0
      %p315 = por %p313, %p314
      %s316 = ssub.s32 %s44, %s51
      %p317 = scmp.eq.s32.totalorder %s316, 0
      %s319 = sadd.s32 %s318, 1
      %s320 = scalar_select %p317, %s318, %s319
      %p323 = pneg %p317
      %p324 = scmp.eq.s32.totalorder %s36, 7
      %p325 = por %p323, %p324
      %p326 = scmp.ne.s32.totalorder %s318, %s321
      %p327 = scmp.eq.s32.totalorder %s36, 0
      %p328 = por %p326, %p327
      %p329 = scmp.ne.s32.totalorder %s318, %s321
      %p330 = scmp.eq.s32.totalorder %s41, 7
      %p331 = por %p329, %p330
      %p332 = scmp.ne.s32.totalorder %s321, %s322
      %p333 = scmp.eq.s32.totalorder %s41, 0
      %p334 = por %p332, %p333
      %p335 = scmp.ne.s32.totalorder %s321, %s322
      %p336 = scmp.eq.s32.totalorder %s42, 7
      %p337 = por %p335, %p336
      %p339 = scmp.ne.s32.totalorder %s322, %s338
      %p340 = scmp.eq.s32.totalorder %s42, 0
      %p341 = por %p339, %p340
      %s342 = ssub.s32 %s44, %s51
      %p343 = scmp.eq.s32.totalorder %s342, 0
      %s345 = sadd.s32 %s344, 1
      %s346 = scalar_select %p343, %s344, %s345
      %p349 = pneg %p343
      %p350 = scmp.eq.s32.totalorder %s36, 7
      %p351 = por %p349, %p350
      %p352 = scmp.ne.s32.totalorder %s344, %s347
      %p353 = scmp.eq.s32.totalorder %s36, 0
      %p354 = por %p352, %p353
      %p355 = scmp.ne.s32.totalorder %s344, %s347
      %p356 = scmp.eq.s32.totalorder %s41, 7
      %p357 = por %p355, %p356
      %p358 = scmp.ne.s32.totalorder %s347, %s348
      %p359 = scmp.eq.s32.totalorder %s41, 0
      %p360 = por %p358, %p359
      %p361 = scmp.ne.s32.totalorder %s347, %s348
      %p362 = scmp.eq.s32.totalorder %s42, 7
      %p363 = por %p361, %p362
      %p365 = scmp.ne.s32.totalorder %s348, %s364
      %p366 = scmp.eq.s32.totalorder %s42, 0
      %p367 = por %p365, %p366
      %s368 = ssub.s32 %s43, %s55
      %p369 = scmp.eq.s32.totalorder %s368, 0
      %s371 = sadd.s32 %s370, 1
      %s372 = scalar_select %p369, %s370, %s371
      %p375 = pneg %p369
      %p376 = scmp.eq.s32.totalorder %s36, 7
      %p377 = por %p375, %p376
      %p378 = scmp.ne.s32.totalorder %s370, %s373
      %p379 = scmp.eq.s32.totalorder %s36, 0
      %p380 = por %p378, %p379
      %p381 = scmp.ne.s32.totalorder %s370, %s373
      %p382 = scmp.eq.s32.totalorder %s41, 7
      %p383 = por %p381, %p382
      %p384 = scmp.ne.s32.totalorder %s373, %s374
      %p385 = scmp.eq.s32.totalorder %s41, 0
      %p386 = por %p384, %p385
      %p387 = scmp.ne.s32.totalorder %s373, %s374
      %p388 = scmp.eq.s32.totalorder %s42, 7
      %p389 = por %p387, %p388
      %p391 = scmp.ne.s32.totalorder %s374, %s390
      %p392 = scmp.eq.s32.totalorder %s42, 0
      %p393 = por %p391, %p392
      %p394 = scmp.le.s32.totalorder 1, %s36
      %p395 = scmp.lt.s32.totalorder %s36, 9
      %p396 = pnand %p394, %p395
      %p397 = pneg %p396
      // Predicated region
      $region9: #{gpt2_forward.2} parent=5 // pred_check
        _
      $region10: #{gpt2_forward.2} parent=5 // pred_check_branch
        %399 = sbr.rel (%p396) target = $region12
      $region11: #{gpt2_forward.2} parent=5 // pred_region
        %s400 = ssub.s32 %s36, 1
      $region12: #{gpt2_forward.2} parent=5 // pred_fallthru
        _
      %p401 = scmp.lt.s32.totalorder %s36, 8
      // Predicated region
      $region13: #{gpt2_forward.2} parent=5 // pred_check
        %p402 = pneg %p401
      $region14: #{gpt2_forward.2} parent=5 // pred_check_branch
        %404 = sbr.rel (%p402) target = $region16
      $region15: #{gpt2_forward.2} parent=5 // pred_region
        // Predicated region
        $region17: #{gpt2_forward.2} parent=15 // pred_check
          %p405 = pneg %p68
        $region18: #{gpt2_forward.2} parent=15 // pred_check_branch
          %407 = sbr.rel (%p405) target = $region20
        $region19: #{gpt2_forward.2} parent=15 // pred_region
          %s408 = smul.u32 2, %s43
          %p409 = scmp.lt.s32.totalorder %s408, 3
          %s410 = scalar_select %p409, %s408, 3
          %s411 = smul.addr %s410, 2
          %s412 = smul.addr %s411, 8
          %s413 = scalar_lea.vmem %s0, %s412
          %s414 = smul.u32 2, %s43
        $region20: #{gpt2_forward.2} parent=15 // pred_fallthru
          _
        // Predicated region
        $region21: #{gpt2_forward.2} parent=15 // pred_check
          %p415 = pneg %p94
        $region22: #{gpt2_forward.2} parent=15 // pred_check_branch
          %417 = sbr.rel (%p415) target = $region24
        $region23: #{gpt2_forward.2} parent=15 // pred_region
          %s418 = sand.u32 %s84, 1
          %s419 = scalar_lea.sflag [#allocation4], %s418
          %s420 = sand.u32 %s84, 1
          %s421 = smul.addr %s420, 2048
          %s422 = scalar_lea.vmem [#allocation3], %s421
          %s424 = ssub.s32 32768, 32768
          %425 = vsyncadd %s419, %s424
          %s426 = smul.addr %s44, 512
          %s427 = smul.addr %s426, 64
          %s428 = scalar_lea.hbm %s1, %s427
          %s429 = sshll.u32 %s422, 4
          %s430 = int_to_ptr.vmem [resolvable:$true] %s429
          %435 = dma.hbm_to_vmem [thread:$0]  %s428, 32768, %s430, %s419, 1024, 1024, 64
        $region24: #{gpt2_forward.2} parent=15 // pred_fallthru
          _
        // Predicated region
        $region25: #{gpt2_forward.2} parent=15 // pred_check
          %p436 = pneg %p120
        $region26: #{gpt2_forward.2} parent=15 // pred_check_branch
          %438 = sbr.rel (%p436) target = $region28
        $region27: #{gpt2_forward.2} parent=15 // pred_region
          %s439 = sand.u32 %s36, 1
          %s440 = scalar_lea.sflag [#allocation6], %s439
          %s441 = sand.u32 %s110, 1
          %s442 = smul.addr %s441, 16
          %s443 = scalar_lea.vmem [#allocation5], %s442
          %s445 = ssub.s32 256, 256
          %446 = vsyncadd %s440, %s445
          %s447 = smul.addr %s44, 16
          %s448 = smul.addr %s447, 16
          %s449 = scalar_lea.hbm %s2, %s448
          %s451 = sshll.u32 %s443, 4
          %s452 = int_to_ptr.vmem [resolvable:$true] %s451
          %454 = dma.hbm_to_vmem [thread:$0]  %s449, 256, %s452, %s440
        $region28: #{gpt2_forward.2} parent=15 // pred_fallthru
          _
        // Predicated region
        $region29: #{gpt2_forward.2} parent=15 // pred_check
          %p455 = pneg %p146
        $region30: #{gpt2_forward.2} parent=15 // pred_check_branch
          %457 = sbr.rel (%p455) target = $region32
        $region31: #{gpt2_forward.2} parent=15 // pred_region
          %s458 = sand.u32 %s36, 1
          %s459 = scalar_lea.sflag [#allocation6], %s458
          %s460 = sand.u32 %s136, 1
          %s461 = smul.addr %s460, 2
          %s462 = scalar_lea.vmem [#allocation7], %s461
          %s464 = ssub.s32 32, 32
          %465 = vsyncadd %s459, %s464
          %s466 = smul.addr %s44, 2
          %s467 = smul.addr %s466, 16
          %s468 = scalar_lea.hbm %s3, %s467
          %s470 = sshll.u32 %s462, 4
          %s471 = int_to_ptr.vmem [resolvable:$true] %s470
          %473 = dma.hbm_to_vmem [thread:$0]  %s468, 32, %s471, %s459
        $region32: #{gpt2_forward.2} parent=15 // pred_fallthru
          _
        // Predicated region
        $region33: #{gpt2_forward.2} parent=15 // pred_check
          %p474 = pneg %p172
        $region34: #{gpt2_forward.2} parent=15 // pred_check_branch
          %476 = sbr.rel (%p474) target = $region36
        $region35: #{gpt2_forward.2} parent=15 // pred_region
          %s477 = sand.u32 %s36, 1
          %s478 = scalar_lea.sflag [#allocation9], %s477
          %s479 = sand.u32 %s162, 1
          %s480 = smul.addr %s479, 2
          %s481 = scalar_lea.vmem [#allocation8], %s480
          %s483 = ssub.s32 32, 32
          %484 = vsyncadd %s478, %s483
          %s485 = smul.addr %s44, 2
          %s486 = smul.addr %s485, 16
          %s487 = scalar_lea.hbm %s4, %s486
          %s489 = sshll.u32 %s481, 4
          %s490 = int_to_ptr.vmem [resolvable:$true] %s489
          %492 = dma.hbm_to_vmem [thread:$0]  %s487, 32, %s490, %s478
        $region36: #{gpt2_forward.2} parent=15 // pred_fallthru
          _
        // Predicated region
        $region37: #{gpt2_forward.2} parent=15 // pred_check
          %p493 = pneg %p198
        $region38: #{gpt2_forward.2} parent=15 // pred_check_branch
          %495 = sbr.rel (%p493) target = $region40
        $region39: #{gpt2_forward.2} parent=15 // pred_region
          %s496 = sand.u32 %s36, 1
          %s497 = scalar_lea.sflag [#allocation9], %s496
          %s498 = sand.u32 %s188, 1
          %s499 = smul.addr %s498, 2
          %s500 = scalar_lea.vmem [#allocation10], %s499
          %s502 = ssub.s32 32, 32
          %503 = vsyncadd %s497, %s502
          %s504 = smul.addr %s44, 2
          %s505 = smul.addr %s504, 16
          %s506 = scalar_lea.hbm %s5, %s505
          %s508 = sshll.u32 %s500, 4
          %s509 = int_to_ptr.vmem [resolvable:$true] %s508
          %511 = dma.hbm_to_vmem [thread:$0]  %s506, 32, %s509, %s497
        $region40: #{gpt2_forward.2} parent=15 // pred_fallthru
          _
        // Predicated region
        $region41: #{gpt2_forward.2} parent=15 // pred_check
          %p512 = pneg %p224
        $region42: #{gpt2_forward.2} parent=15 // pred_check_branch
          %514 = sbr.rel (%p512) target = $region44
        $region43: #{gpt2_forward.2} parent=15 // pred_region
          %s515 = sand.u32 %s36, 1
          %s516 = scalar_lea.sflag [#allocation12], %s515
          %s517 = sand.u32 %s214, 1
          %s518 = smul.addr %s517, 512
          %s519 = scalar_lea.vmem [#allocation11], %s518
          %s521 = ssub.s32 8192, 8192
          %522 = vsyncadd %s516, %s521
          %s523 = smul.addr %s44, 128
          %s524 = smul.addr %s523, 64
          %s525 = scalar_lea.hbm %s6, %s524
          %s526 = sshll.u32 %s519, 4
          %s527 = int_to_ptr.vmem [resolvable:$true] %s526
          %532 = dma.hbm_to_vmem [thread:$0]  %s525, 8192, %s527, %s516, 256, 256, 16
        $region44: #{gpt2_forward.2} parent=15 // pred_fallthru
          _
        // Predicated region
        $region45: #{gpt2_forward.2} parent=15 // pred_check
          %p533 = pneg %p250
        $region46: #{gpt2_forward.2} parent=15 // pred_check_branch
          %535 = sbr.rel (%p533) target = $region48
        $region47: #{gpt2_forward.2} parent=15 // pred_region
          %s536 = sand.u32 %s36, 1
          %s537 = scalar_lea.sflag [#allocation12], %s536
          %s538 = sand.u32 %s240, 1
          %s539 = smul.addr %s538, 4
          %s540 = scalar_lea.vmem [#allocation13], %s539
          %s542 = ssub.s32 64, 64
          %543 = vsyncadd %s537, %s542
          %s544 = smul.addr %s44, 4
          %s545 = smul.addr %s544, 16
          %s546 = scalar_lea.hbm %s7, %s545
          %s548 = sshll.u32 %s540, 4
          %s549 = int_to_ptr.vmem [resolvable:$true] %s548
          %551 = dma.hbm_to_vmem [thread:$0]  %s546, 64, %s549, %s537
        $region48: #{gpt2_forward.2} parent=15 // pred_fallthru
          _
        // Predicated region
        $region49: #{gpt2_forward.2} parent=15 // pred_check
          %p552 = pneg %p276
        $region50: #{gpt2_forward.2} parent=15 // pred_check_branch
          %554 = sbr.rel (%p552) target = $region52
        $region51: #{gpt2_forward.2} parent=15 // pred_region
          %s555 = sand.u32 %s36, 1
          %s556 = scalar_lea.sflag [#allocation15], %s555
          %s557 = sand.u32 %s266, 1
          %s558 = smul.addr %s557, 512
          %s559 = scalar_lea.vmem [#allocation14], %s558
          %s561 = ssub.s32 8192, 8192
          %562 = vsyncadd %s556, %s561
          %s563 = smul.addr %s44, 128
          %s564 = smul.addr %s563, 64
          %s565 = scalar_lea.hbm %s8, %s564
          %s566 = sshll.u32 %s559, 4
          %s567 = int_to_ptr.vmem [resolvable:$true] %s566
          %572 = dma.hbm_to_vmem [thread:$0]  %s565, 8192, %s567, %s556, 128, 128, 8
        $region52: #{gpt2_forward.2} parent=15 // pred_fallthru
          _
        // Predicated region
        $region53: #{gpt2_forward.2} parent=15 // pred_check
          %p573 = pneg %p302
        $region54: #{gpt2_forward.2} parent=15 // pred_check_branch
          %575 = sbr.rel (%p573) target = $region56
        $region55: #{gpt2_forward.2} parent=15 // pred_region
          %s576 = sand.u32 %s36, 1
          %s577 = scalar_lea.sflag [#allocation15], %s576
          %s578 = sand.u32 %s292, 1
          %s579 = smul.addr %s578, 2
          %s580 = scalar_lea.vmem [#allocation16], %s579
          %s582 = ssub.s32 32, 32
          %583 = vsyncadd %s577, %s582
          %s584 = smul.addr %s44, 2
          %s585 = smul.addr %s584, 16
          %s586 = scalar_lea.hbm %s9, %s585
          %s588 = sshll.u32 %s580, 4
          %s589 = int_to_ptr.vmem [resolvable:$true] %s588
          %591 = dma.hbm_to_vmem [thread:$0]  %s586, 32, %s589, %s577
        $region56: #{gpt2_forward.2} parent=15 // pred_fallthru
          _
        // Predicated region
        $region57: #{gpt2_forward.2} parent=15 // pred_check
          %p592 = pneg %p328
        $region58: #{gpt2_forward.2} parent=15 // pred_check_branch
          %594 = sbr.rel (%p592) target = $region60
        $region59: #{gpt2_forward.2} parent=15 // pred_region
          %s595 = sand.u32 %s36, 1
          %s596 = scalar_lea.sflag [#allocation18], %s595
          %s597 = sand.u32 %s318, 1
          %s598 = smul.addr %s597, 2
          %s599 = scalar_lea.vmem [#allocation17], %s598
          %s601 = ssub.s32 32, 32
          %602 = vsyncadd %s596, %s601
          %s603 = smul.addr %s44, 2
          %s604 = smul.addr %s603, 16
          %s605 = scalar_lea.hbm %s10, %s604
          %s607 = sshll.u32 %s599, 4
          %s608 = int_to_ptr.vmem [resolvable:$true] %s607
          %610 = dma.hbm_to_vmem [thread:$0]  %s605, 32, %s608, %s596
        $region60: #{gpt2_forward.2} parent=15 // pred_fallthru
          _
        // Predicated region
        $region61: #{gpt2_forward.2} parent=15 // pred_check
          %p611 = pneg %p354
        $region62: #{gpt2_forward.2} parent=15 // pred_check_branch
          %613 = sbr.rel (%p611) target = $region64
        $region63: #{gpt2_forward.2} parent=15 // pred_region
          %s614 = sand.u32 %s36, 1
          %s615 = scalar_lea.sflag [#allocation18], %s614
          %s616 = sand.u32 %s344, 1
          %s617 = smul.addr %s616, 2
          %s618 = scalar_lea.vmem [#allocation19], %s617
          %s620 = ssub.s32 32, 32
          %621 = vsyncadd %s615, %s620
          %s622 = smul.addr %s44, 2
          %s623 = smul.addr %s622, 16
          %s624 = scalar_lea.hbm %s11, %s623
          %s626 = sshll.u32 %s618, 4
          %s627 = int_to_ptr.vmem [resolvable:$true] %s626
          %629 = dma.hbm_to_vmem [thread:$0]  %s624, 32, %s627, %s615
        $region64: #{gpt2_forward.2} parent=15 // pred_fallthru
          _
      $region16: #{gpt2_forward.2} parent=5 // pred_fallthru
        _
      %p630 = scmp.le.s32.totalorder 1, %s36
      %p631 = scmp.lt.s32.totalorder %s36, 9
      %p632 = pnand %p630, %p631
      %p633 = pneg %p632
      // Predicated region
      $region65: #{gpt2_forward.2} parent=5 // pred_check
        _
      $region66: #{gpt2_forward.2} parent=5 // pred_check_branch
        %635 = sbr.rel (%p632) target = $region68
      $region67: #{gpt2_forward.2} parent=5 // pred_region
        %s636 = ssub.s32 %s36, 1
        %s637 = sand.u32 %s87, 1
        %s638 = scalar_lea.sflag [#allocation4], %s637
        %s639 = sand.u32 %s87, 1
        %s640 = smul.addr %s639, 2048
        %s641 = scalar_lea.vmem [#allocation3], %s640
        // Predicated region
        $region69: #{gpt2_forward.2} parent=67 // pred_check
          %p642 = pneg %p100
        $region70: #{gpt2_forward.2} parent=67 // pred_check_branch
          %644 = sbr.rel (%p642) target = $region72
        $region71: #{gpt2_forward.2} parent=67 // pred_region
          %645 = dma.done %s638, 32768
        $region72: #{gpt2_forward.2} parent=67 // pred_fallthru
          _
        %s646 = sand.u32 %s41, 1
        %s647 = scalar_lea.sflag [#allocation6], %s646
        %s648 = sand.u32 %s113, 1
        %s649 = smul.addr %s648, 16
        %s650 = scalar_lea.vmem [#allocation5], %s649
        // Predicated region
        $region73: #{gpt2_forward.2} parent=67 // pred_check
          %p651 = pneg %p126
        $region74: #{gpt2_forward.2} parent=67 // pred_check_branch
          %653 = sbr.rel (%p651) target = $region76
        $region75: #{gpt2_forward.2} parent=67 // pred_region
          %654 = dma.done %s647, 256
        $region76: #{gpt2_forward.2} parent=67 // pred_fallthru
          _
        %s655 = sand.u32 %s41, 1
        %s656 = scalar_lea.sflag [#allocation6], %s655
        %s657 = sand.u32 %s139, 1
        %s658 = smul.addr %s657, 2
        %s659 = scalar_lea.vmem [#allocation7], %s658
        // Predicated region
        $region77: #{gpt2_forward.2} parent=67 // pred_check
          %p660 = pneg %p152
        $region78: #{gpt2_forward.2} parent=67 // pred_check_branch
          %662 = sbr.rel (%p660) target = $region80
        $region79: #{gpt2_forward.2} parent=67 // pred_region
          %663 = dma.done %s656, 32
        $region80: #{gpt2_forward.2} parent=67 // pred_fallthru
          _
        %s664 = sand.u32 %s41, 1
        %s665 = scalar_lea.sflag [#allocation9], %s664
        %s666 = sand.u32 %s165, 1
        %s667 = smul.addr %s666, 2
        %s668 = scalar_lea.vmem [#allocation8], %s667
        // Predicated region
        $region81: #{gpt2_forward.2} parent=67 // pred_check
          %p669 = pneg %p178
        $region82: #{gpt2_forward.2} parent=67 // pred_check_branch
          %671 = sbr.rel (%p669) target = $region84
        $region83: #{gpt2_forward.2} parent=67 // pred_region
          %672 = dma.done %s665, 32
        $region84: #{gpt2_forward.2} parent=67 // pred_fallthru
          _
        %s673 = sand.u32 %s41, 1
        %s674 = scalar_lea.sflag [#allocation9], %s673
        %s675 = sand.u32 %s191, 1
        %s676 = smul.addr %s675, 2
        %s677 = scalar_lea.vmem [#allocation10], %s676
        // Predicated region
        $region85: #{gpt2_forward.2} parent=67 // pred_check
          %p678 = pneg %p204
        $region86: #{gpt2_forward.2} parent=67 // pred_check_branch
          %680 = sbr.rel (%p678) target = $region88
        $region87: #{gpt2_forward.2} parent=67 // pred_region
          %681 = dma.done %s674, 32
        $region88: #{gpt2_forward.2} parent=67 // pred_fallthru
          _
        %s682 = sand.u32 %s41, 1
        %s683 = scalar_lea.sflag [#allocation12], %s682
        %s684 = sand.u32 %s217, 1
        %s685 = smul.addr %s684, 512
        %s686 = scalar_lea.vmem [#allocation11], %s685
        // Predicated region
        $region89: #{gpt2_forward.2} parent=67 // pred_check
          %p687 = pneg %p230
        $region90: #{gpt2_forward.2} parent=67 // pred_check_branch
          %689 = sbr.rel (%p687) target = $region92
        $region91: #{gpt2_forward.2} parent=67 // pred_region
          %690 = dma.done %s683, 8192
        $region92: #{gpt2_forward.2} parent=67 // pred_fallthru
          _
        %s691 = sand.u32 %s41, 1
        %s692 = scalar_lea.sflag [#allocation12], %s691
        %s693 = sand.u32 %s243, 1
        %s694 = smul.addr %s693, 4
        %s695 = scalar_lea.vmem [#allocation13], %s694
        // Predicated region
        $region93: #{gpt2_forward.2} parent=67 // pred_check
          %p696 = pneg %p256
        $region94: #{gpt2_forward.2} parent=67 // pred_check_branch
          %698 = sbr.rel (%p696) target = $region96
        $region95: #{gpt2_forward.2} parent=67 // pred_region
          %699 = dma.done %s692, 64
        $region96: #{gpt2_forward.2} parent=67 // pred_fallthru
          _
        %s700 = sand.u32 %s41, 1
        %s701 = scalar_lea.sflag [#allocation15], %s700
        %s702 = sand.u32 %s269, 1
        %s703 = smul.addr %s702, 512
        %s704 = scalar_lea.vmem [#allocation14], %s703
        // Predicated region
        $region97: #{gpt2_forward.2} parent=67 // pred_check
          %p705 = pneg %p282
        $region98: #{gpt2_forward.2} parent=67 // pred_check_branch
          %707 = sbr.rel (%p705) target = $region100
        $region99: #{gpt2_forward.2} parent=67 // pred_region
          %708 = dma.done %s701, 8192
        $region100: #{gpt2_forward.2} parent=67 // pred_fallthru
          _
        %s709 = sand.u32 %s41, 1
        %s710 = scalar_lea.sflag [#allocation15], %s709
        %s711 = sand.u32 %s295, 1
        %s712 = smul.addr %s711, 2
        %s713 = scalar_lea.vmem [#allocation16], %s712
        // Predicated region
        $region101: #{gpt2_forward.2} parent=67 // pred_check
          %p714 = pneg %p308
        $region102: #{gpt2_forward.2} parent=67 // pred_check_branch
          %716 = sbr.rel (%p714) target = $region104
        $region103: #{gpt2_forward.2} parent=67 // pred_region
          %717 = dma.done %s710, 32
        $region104: #{gpt2_forward.2} parent=67 // pred_fallthru
          _
        %s718 = sand.u32 %s41, 1
        %s719 = scalar_lea.sflag [#allocation18], %s718
        %s720 = sand.u32 %s321, 1
        %s721 = smul.addr %s720, 2
        %s722 = scalar_lea.vmem [#allocation17], %s721
        // Predicated region
        $region105: #{gpt2_forward.2} parent=67 // pred_check
          %p723 = pneg %p334
        $region106: #{gpt2_forward.2} parent=67 // pred_check_branch
          %725 = sbr.rel (%p723) target = $region108
        $region107: #{gpt2_forward.2} parent=67 // pred_region
          %726 = dma.done %s719, 32
        $region108: #{gpt2_forward.2} parent=67 // pred_fallthru
          _
        %s727 = sand.u32 %s41, 1
        %s728 = scalar_lea.sflag [#allocation18], %s727
        %s729 = sand.u32 %s347, 1
        %s730 = smul.addr %s729, 2
        %s731 = scalar_lea.vmem [#allocation19], %s730
        // Predicated region
        $region109: #{gpt2_forward.2} parent=67 // pred_check
          %p732 = pneg %p360
        $region110: #{gpt2_forward.2} parent=67 // pred_check_branch
          %734 = sbr.rel (%p732) target = $region112
        $region111: #{gpt2_forward.2} parent=67 // pred_region
          %735 = dma.done %s728, 32
        $region112: #{gpt2_forward.2} parent=67 // pred_fallthru
          _
        %s736 = smul.u32 2, %s45
        %p737 = scmp.lt.s32.totalorder %s736, 3
        %s738 = scalar_select %p737, %s736, 3
        %s739 = smul.addr %s738, 2
        %s740 = smul.addr %s739, 8
        %s741 = scalar_lea.vmem %s0, %s740
        %p742 = pneg %p74
        %p743 = pneg %p71
        %s744 = sand.u32 %s87, 1
        %s745 = scalar_lea.sflag [#allocation4], %s744
        %s746 = sand.u32 %s87, 1
        %s747 = smul.addr %s746, 2048
        %s748 = scalar_lea.vmem [#allocation3], %s747
        %p749 = pneg %p100
        %p750 = pneg %p97
        %s751 = sand.u32 %s41, 1
        %s752 = scalar_lea.sflag [#allocation6], %s751
        %s753 = sand.u32 %s113, 1
        %s754 = smul.addr %s753, 16
        %s755 = scalar_lea.vmem [#allocation5], %s754
        %p756 = pneg %p126
        %p757 = pneg %p123
        %s758 = sand.u32 %s41, 1
        %s759 = scalar_lea.sflag [#allocation6], %s758
        %s760 = sand.u32 %s139, 1
        %s761 = smul.addr %s760, 2
        %s762 = scalar_lea.vmem [#allocation7], %s761
        %p763 = pneg %p152
        %p764 = pneg %p149
        %s765 = sand.u32 %s41, 1
        %s766 = scalar_lea.sflag [#allocation9], %s765
        %s767 = sand.u32 %s165, 1
        %s768 = smul.addr %s767, 2
        %s769 = scalar_lea.vmem [#allocation8], %s768
        %p770 = pneg %p178
        %p771 = pneg %p175
        %s772 = sand.u32 %s41, 1
        %s773 = scalar_lea.sflag [#allocation9], %s772
        %s774 = sand.u32 %s191, 1
        %s775 = smul.addr %s774, 2
        %s776 = scalar_lea.vmem [#allocation10], %s775
        %p777 = pneg %p204
        %p778 = pneg %p201
        %s779 = sand.u32 %s41, 1
        %s780 = scalar_lea.sflag [#allocation12], %s779
        %s781 = sand.u32 %s217, 1
        %s782 = smul.addr %s781, 512
        %s783 = scalar_lea.vmem [#allocation11], %s782
        %p784 = pneg %p230
        %p785 = pneg %p227
        %s786 = sand.u32 %s41, 1
        %s787 = scalar_lea.sflag [#allocation12], %s786
        %s788 = sand.u32 %s243, 1
        %s789 = smul.addr %s788, 4
        %s790 = scalar_lea.vmem [#allocation13], %s789
        %p791 = pneg %p256
        %p792 = pneg %p253
        %s793 = sand.u32 %s41, 1
        %s794 = scalar_lea.sflag [#allocation15], %s793
        %s795 = sand.u32 %s269, 1
        %s796 = smul.addr %s795, 512
        %s797 = scalar_lea.vmem [#allocation14], %s796
        %p798 = pneg %p282
        %p799 = pneg %p279
        %s800 = sand.u32 %s41, 1
        %s801 = scalar_lea.sflag [#allocation15], %s800
        %s802 = sand.u32 %s295, 1
        %s803 = smul.addr %s802, 2
        %s804 = scalar_lea.vmem [#allocation16], %s803
        %p805 = pneg %p308
        %p806 = pneg %p305
        %s807 = sand.u32 %s41, 1
        %s808 = scalar_lea.sflag [#allocation18], %s807
        %s809 = sand.u32 %s321, 1
        %s810 = smul.addr %s809, 2
        %s811 = scalar_lea.vmem [#allocation17], %s810
        %p812 = pneg %p334
        %p813 = pneg %p331
        %s814 = sand.u32 %s41, 1
        %s815 = scalar_lea.sflag [#allocation18], %s814
        %s816 = sand.u32 %s347, 1
        %s817 = smul.addr %s816, 2
        %s818 = scalar_lea.vmem [#allocation19], %s817
        %p819 = pneg %p360
        %p820 = pneg %p357
        %p821 = pneg %p386
        %p822 = pneg %p383
        %s823 = smul.u32 2, %s45
        %p824 = scmp.lt.s32.totalorder %s823, 3
        %s825 = scalar_select %p824, %s823, 3
        %s826 = smul.addr %s825, 2
        %s827 = smul.addr %s826, 8
        %s828 = scalar_lea.vmem %s12, %s827
        %s829 = smul.u32 2, %s45
        %p830 = scmp.lt.s32.totalorder %s829, 3
        %s831 = scalar_select %p830, %s829, 3
        %s832 = smul.addr %s831, 2
        %s833 = smul.addr %s832, 8
        %s834 = scalar_lea.vmem %s0, %s833
        %s835 = smul.u32 2, %s45
        %s836 = smul.u32 2, %s45
        %p837 = scmp.lt.s32.totalorder %s836, 3
        %s838 = scalar_select %p837, %s836, 3
        %s839 = smul.addr %s838, 2
        %s840 = smul.addr %s839, 8
        %s841 = scalar_lea.vmem %s12, %s840
        %s842 = smul.u32 2, %s45
        %p844 = scmp.eq.s32.totalorder %s46, 0
        // Predicated region
        $region113: #{gpt2_forward.2} parent=67 // pred_check
          %p845 = pneg %p844
        $region114: #{gpt2_forward.2} parent=67 // pred_check_branch
          %847 = sbr.rel (%p845) target = $region116
        $region115: #{gpt2_forward.2} parent=67 // pred_region
          %v848 = vld [vmem:[%s834] sm:$0xff]
          %v849 = vld [vmem:[%s834 + $0x8] sm:$0xff]
          %v850 = vld [vmem:[%s834 + $0x10] sm:$0xff]
          %v851 = vld [vmem:[%s834 + $0x18] sm:$0xff]
          %852 = vst [vmem:[#allocation2] sm:$0xff] %v848
          %853 = vst [vmem:[#allocation2 + $0x8] sm:$0xff] %v849
          %854 = vst [vmem:[#allocation2 + $0x10] sm:$0xff] %v850
          %855 = vst [vmem:[#allocation2 + $0x18] sm:$0xff] %v851
        $region116: #{gpt2_forward.2} parent=67 // pred_fallthru
          _
        %v856 = vld [vmem:[#allocation2] sm:$0xff]
        %v857 = vld [vmem:[#allocation2 + $0x8] sm:$0xff]
        %v858 = vld [vmem:[#allocation2 + $0x10] sm:$0xff]
        %v859 = vld [vmem:[#allocation2 + $0x18] sm:$0xff]
        %v860 = vpack.c.bf16 %v858, %v856
        %v861 = vpack.c.bf16 %v859, %v857
        %v862 = vld [vmem:[%s641] sm:$0xff]
        %v863 = vld [vmem:[%s641 + $0x8] sm:$0xff]
        %v864 = vld [vmem:[%s641 + $0x10] sm:$0xff]
        %v865 = vld [vmem:[%s641 + $0x18] sm:$0xff]
        %v866 = vld [vmem:[%s641 + $0x20] sm:$0xff]
        %v867 = vld [vmem:[%s641 + $0x28] sm:$0xff]
        %v868 = vld [vmem:[%s641 + $0x30] sm:$0xff]
        %v869 = vld [vmem:[%s641 + $0x38] sm:$0xff]
        %v870 = vld [vmem:[%s641 + $0x40] sm:$0xff]
        %v871 = vld [vmem:[%s641 + $0x48] sm:$0xff]
        %v872 = vld [vmem:[%s641 + $0x50] sm:$0xff]
        %v873 = vld [vmem:[%s641 + $0x58] sm:$0xff]
        %v874 = vld [vmem:[%s641 + $0x60] sm:$0xff]
        %v875 = vld [vmem:[%s641 + $0x68] sm:$0xff]
        %v876 = vld [vmem:[%s641 + $0x70] sm:$0xff]
        %v877 = vld [vmem:[%s641 + $0x78] sm:$0xff]
        %v878 = vld [vmem:[%s641 + $0x80] sm:$0xff]
        %v879 = vld [vmem:[%s641 + $0x88] sm:$0xff]
        %v880 = vld [vmem:[%s641 + $0x90] sm:$0xff]
        %v881 = vld [vmem:[%s641 + $0x98] sm:$0xff]
        %v882 = vld [vmem:[%s641 + $0xa0] sm:$0xff]
        %v883 = vld [vmem:[%s641 + $0xa8] sm:$0xff]
        %v884 = vld [vmem:[%s641 + $0xb0] sm:$0xff]
        %v885 = vld [vmem:[%s641 + $0xb8] sm:$0xff]
        %v886 = vld [vmem:[%s641 + $0xc0] sm:$0xff]
        %v887 = vld [vmem:[%s641 + $0xc8] sm:$0xff]
        %v888 = vld [vmem:[%s641 + $0xd0] sm:$0xff]
        %v889 = vld [vmem:[%s641 + $0xd8] sm:$0xff]
        %v890 = vld [vmem:[%s641 + $0xe0] sm:$0xff]
        %v891 = vld [vmem:[%s641 + $0xe8] sm:$0xff]
        %v892 = vld [vmem:[%s641 + $0xf0] sm:$0xff]
        %v893 = vld [vmem:[%s641 + $0xf8] sm:$0xff]
        %v894 = vld [vmem:[%s641 + $0x100] sm:$0xff]
        %v895 = vld [vmem:[%s641 + $0x108] sm:$0xff]
        %v896 = vld [vmem:[%s641 + $0x110] sm:$0xff]
        %v897 = vld [vmem:[%s641 + $0x118] sm:$0xff]
        %v898 = vld [vmem:[%s641 + $0x120] sm:$0xff]
        %v899 = vld [vmem:[%s641 + $0x128] sm:$0xff]
        %v900 = vld [vmem:[%s641 + $0x130] sm:$0xff]
        %v901 = vld [vmem:[%s641 + $0x138] sm:$0xff]
        %v902 = vld [vmem:[%s641 + $0x140] sm:$0xff]
        %v903 = vld [vmem:[%s641 + $0x148] sm:$0xff]
        %v904 = vld [vmem:[%s641 + $0x150] sm:$0xff]
        %v905 = vld [vmem:[%s641 + $0x158] sm:$0xff]
        %v906 = vld [vmem:[%s641 + $0x160] sm:$0xff]
        %v907 = vld [vmem:[%s641 + $0x168] sm:$0xff]
        %v908 = vld [vmem:[%s641 + $0x170] sm:$0xff]
        %v909 = vld [vmem:[%s641 + $0x178] sm:$0xff]
        %v910 = vld [vmem:[%s641 + $0x180] sm:$0xff]
        %v911 = vld [vmem:[%s641 + $0x188] sm:$0xff]
        %v912 = vld [vmem:[%s641 + $0x190] sm:$0xff]
        %v913 = vld [vmem:[%s641 + $0x198] sm:$0xff]
        %v914 = vld [vmem:[%s641 + $0x1a0] sm:$0xff]
        %v915 = vld [vmem:[%s641 + $0x1a8] sm:$0xff]
        %v916 = vld [vmem:[%s641 + $0x1b0] sm:$0xff]
        %v917 = vld [vmem:[%s641 + $0x1b8] sm:$0xff]
        %v918 = vld [vmem:[%s641 + $0x1c0] sm:$0xff]
        %v919 = vld [vmem:[%s641 + $0x1c8] sm:$0xff]
        %v920 = vld [vmem:[%s641 + $0x1d0] sm:$0xff]
        %v921 = vld [vmem:[%s641 + $0x1d8] sm:$0xff]
        %v922 = vld [vmem:[%s641 + $0x1e0] sm:$0xff]
        %v923 = vld [vmem:[%s641 + $0x1e8] sm:$0xff]
        %v924 = vld [vmem:[%s641 + $0x1f0] sm:$0xff]
        %v925 = vld [vmem:[%s641 + $0x1f8] sm:$0xff]
        %v926 = vld [vmem:[%s641 + $0x200] sm:$0xff]
        %v927 = vld [vmem:[%s641 + $0x208] sm:$0xff]
        %v928 = vld [vmem:[%s641 + $0x210] sm:$0xff]
        %v929 = vld [vmem:[%s641 + $0x218] sm:$0xff]
        %v930 = vld [vmem:[%s641 + $0x220] sm:$0xff]
        %v931 = vld [vmem:[%s641 + $0x228] sm:$0xff]
        %v932 = vld [vmem:[%s641 + $0x230] sm:$0xff]
        %v933 = vld [vmem:[%s641 + $0x238] sm:$0xff]
        %v934 = vld [vmem:[%s641 + $0x240] sm:$0xff]
        %v935 = vld [vmem:[%s641 + $0x248] sm:$0xff]
        %v936 = vld [vmem:[%s641 + $0x250] sm:$0xff]
        %v937 = vld [vmem:[%s641 + $0x258] sm:$0xff]
        %v938 = vld [vmem:[%s641 + $0x260] sm:$0xff]
        %v939 = vld [vmem:[%s641 + $0x268] sm:$0xff]
        %v940 = vld [vmem:[%s641 + $0x270] sm:$0xff]
        %v941 = vld [vmem:[%s641 + $0x278] sm:$0xff]
        %v942 = vld [vmem:[%s641 + $0x280] sm:$0xff]
        %v943 = vld [vmem:[%s641 + $0x288] sm:$0xff]
        %v944 = vld [vmem:[%s641 + $0x290] sm:$0xff]
        %v945 = vld [vmem:[%s641 + $0x298] sm:$0xff]
        %v946 = vld [vmem:[%s641 + $0x2a0] sm:$0xff]
        %v947 = vld [vmem:[%s641 + $0x2a8] sm:$0xff]
        %v948 = vld [vmem:[%s641 + $0x2b0] sm:$0xff]
        %v949 = vld [vmem:[%s641 + $0x2b8] sm:$0xff]
        %v950 = vld [vmem:[%s641 + $0x2c0] sm:$0xff]
        %v951 = vld [vmem:[%s641 + $0x2c8] sm:$0xff]
        %v952 = vld [vmem:[%s641 + $0x2d0] sm:$0xff]
        %v953 = vld [vmem:[%s641 + $0x2d8] sm:$0xff]
        %v954 = vld [vmem:[%s641 + $0x2e0] sm:$0xff]
        %v955 = vld [vmem:[%s641 + $0x2e8] sm:$0xff]
        %v956 = vld [vmem:[%s641 + $0x2f0] sm:$0xff]
        %v957 = vld [vmem:[%s641 + $0x2f8] sm:$0xff]
        %v958 = vld [vmem:[%s641 + $0x300] sm:$0xff]
        %v959 = vld [vmem:[%s641 + $0x308] sm:$0xff]
        %v960 = vld [vmem:[%s641 + $0x310] sm:$0xff]
        %v961 = vld [vmem:[%s641 + $0x318] sm:$0xff]
        %v962 = vld [vmem:[%s641 + $0x320] sm:$0xff]
        %v963 = vld [vmem:[%s641 + $0x328] sm:$0xff]
        %v964 = vld [vmem:[%s641 + $0x330] sm:$0xff]
        %v965 = vld [vmem:[%s641 + $0x338] sm:$0xff]
        %v966 = vld [vmem:[%s641 + $0x340] sm:$0xff]
        %v967 = vld [vmem:[%s641 + $0x348] sm:$0xff]
        %v968 = vld [vmem:[%s641 + $0x350] sm:$0xff]
        %v969 = vld [vmem:[%s641 + $0x358] sm:$0xff]
        %v970 = vld [vmem:[%s641 + $0x360] sm:$0xff]
        %v971 = vld [vmem:[%s641 + $0x368] sm:$0xff]
        %v972 = vld [vmem:[%s641 + $0x370] sm:$0xff]
        %v973 = vld [vmem:[%s641 + $0x378] sm:$0xff]
        %v974 = vld [vmem:[%s641 + $0x380] sm:$0xff]
        %v975 = vld [vmem:[%s641 + $0x388] sm:$0xff]
        %v976 = vld [vmem:[%s641 + $0x390] sm:$0xff]
        %v977 = vld [vmem:[%s641 + $0x398] sm:$0xff]
        %v978 = vld [vmem:[%s641 + $0x3a0] sm:$0xff]
        %v979 = vld [vmem:[%s641 + $0x3a8] sm:$0xff]
        %v980 = vld [vmem:[%s641 + $0x3b0] sm:$0xff]
        %v981 = vld [vmem:[%s641 + $0x3b8] sm:$0xff]
        %v982 = vld [vmem:[%s641 + $0x3c0] sm:$0xff]
        %v983 = vld [vmem:[%s641 + $0x3c8] sm:$0xff]
        %v984 = vld [vmem:[%s641 + $0x3d0] sm:$0xff]
        %v985 = vld [vmem:[%s641 + $0x3d8] sm:$0xff]
        %v986 = vld [vmem:[%s641 + $0x3e0] sm:$0xff]
        %v987 = vld [vmem:[%s641 + $0x3e8] sm:$0xff]
        %v988 = vld [vmem:[%s641 + $0x3f0] sm:$0xff]
        %v989 = vld [vmem:[%s641 + $0x3f8] sm:$0xff]
        %v990 = vld [vmem:[%s641 + $0x400] sm:$0xff]
        %v991 = vld [vmem:[%s641 + $0x408] sm:$0xff]
        %v992 = vld [vmem:[%s641 + $0x410] sm:$0xff]
        %v993 = vld [vmem:[%s641 + $0x418] sm:$0xff]
        %v994 = vld [vmem:[%s641 + $0x420] sm:$0xff]
        %v995 = vld [vmem:[%s641 + $0x428] sm:$0xff]
        %v996 = vld [vmem:[%s641 + $0x430] sm:$0xff]
        %v997 = vld [vmem:[%s641 + $0x438] sm:$0xff]
        %v998 = vld [vmem:[%s641 + $0x440] sm:$0xff]
        %v999 = vld [vmem:[%s641 + $0x448] sm:$0xff]
        %v1000 = vld [vmem:[%s641 + $0x450] sm:$0xff]
        %v1001 = vld [vmem:[%s641 + $0x458] sm:$0xff]
        %v1002 = vld [vmem:[%s641 + $0x460] sm:$0xff]
        %v1003 = vld [vmem:[%s641 + $0x468] sm:$0xff]
        %v1004 = vld [vmem:[%s641 + $0x470] sm:$0xff]
        %v1005 = vld [vmem:[%s641 + $0x478] sm:$0xff]
        %v1006 = vld [vmem:[%s641 + $0x480] sm:$0xff]
        %v1007 = vld [vmem:[%s641 + $0x488] sm:$0xff]
        %v1008 = vld [vmem:[%s641 + $0x490] sm:$0xff]
        %v1009 = vld [vmem:[%s641 + $0x498] sm:$0xff]
        %v1010 = vld [vmem:[%s641 + $0x4a0] sm:$0xff]
        %v1011 = vld [vmem:[%s641 + $0x4a8] sm:$0xff]
        %v1012 = vld [vmem:[%s641 + $0x4b0] sm:$0xff]
        %v1013 = vld [vmem:[%s641 + $0x4b8] sm:$0xff]
        %v1014 = vld [vmem:[%s641 + $0x4c0] sm:$0xff]
        %v1015 = vld [vmem:[%s641 + $0x4c8] sm:$0xff]
        %v1016 = vld [vmem:[%s641 + $0x4d0] sm:$0xff]
        %v1017 = vld [vmem:[%s641 + $0x4d8] sm:$0xff]
        %v1018 = vld [vmem:[%s641 + $0x4e0] sm:$0xff]
        %v1019 = vld [vmem:[%s641 + $0x4e8] sm:$0xff]
        %v1020 = vld [vmem:[%s641 + $0x4f0] sm:$0xff]
        %v1021 = vld [vmem:[%s641 + $0x4f8] sm:$0xff]
        %v1022 = vld [vmem:[%s641 + $0x500] sm:$0xff]
        %v1023 = vld [vmem:[%s641 + $0x508] sm:$0xff]
        %v1024 = vld [vmem:[%s641 + $0x510] sm:$0xff]
        %v1025 = vld [vmem:[%s641 + $0x518] sm:$0xff]
        %v1026 = vld [vmem:[%s641 + $0x520] sm:$0xff]
        %v1027 = vld [vmem:[%s641 + $0x528] sm:$0xff]
        %v1028 = vld [vmem:[%s641 + $0x530] sm:$0xff]
        %v1029 = vld [vmem:[%s641 + $0x538] sm:$0xff]
        %v1030 = vld [vmem:[%s641 + $0x540] sm:$0xff]
        %v1031 = vld [vmem:[%s641 + $0x548] sm:$0xff]
        %v1032 = vld [vmem:[%s641 + $0x550] sm:$0xff]
        %v1033 = vld [vmem:[%s641 + $0x558] sm:$0xff]
        %v1034 = vld [vmem:[%s641 + $0x560] sm:$0xff]
        %v1035 = vld [vmem:[%s641 + $0x568] sm:$0xff]
        %v1036 = vld [vmem:[%s641 + $0x570] sm:$0xff]
        %v1037 = vld [vmem:[%s641 + $0x578] sm:$0xff]
        %v1038 = vld [vmem:[%s641 + $0x580] sm:$0xff]
        %v1039 = vld [vmem:[%s641 + $0x588] sm:$0xff]
        %v1040 = vld [vmem:[%s641 + $0x590] sm:$0xff]
        %v1041 = vld [vmem:[%s641 + $0x598] sm:$0xff]
        %v1042 = vld [vmem:[%s641 + $0x5a0] sm:$0xff]
        %v1043 = vld [vmem:[%s641 + $0x5a8] sm:$0xff]
        %v1044 = vld [vmem:[%s641 + $0x5b0] sm:$0xff]
        %v1045 = vld [vmem:[%s641 + $0x5b8] sm:$0xff]
        %v1046 = vld [vmem:[%s641 + $0x5c0] sm:$0xff]
        %v1047 = vld [vmem:[%s641 + $0x5c8] sm:$0xff]
        %v1048 = vld [vmem:[%s641 + $0x5d0] sm:$0xff]
        %v1049 = vld [vmem:[%s641 + $0x5d8] sm:$0xff]
        %v1050 = vld [vmem:[%s641 + $0x5e0] sm:$0xff]
        %v1051 = vld [vmem:[%s641 + $0x5e8] sm:$0xff]
        %v1052 = vld [vmem:[%s641 + $0x5f0] sm:$0xff]
        %v1053 = vld [vmem:[%s641 + $0x5f8] sm:$0xff]
        %v1054 = vld [vmem:[%s641 + $0x600] sm:$0xff]
        %v1055 = vld [vmem:[%s641 + $0x608] sm:$0xff]
        %v1056 = vld [vmem:[%s641 + $0x610] sm:$0xff]
        %v1057 = vld [vmem:[%s641 + $0x618] sm:$0xff]
        %v1058 = vld [vmem:[%s641 + $0x620] sm:$0xff]
        %v1059 = vld [vmem:[%s641 + $0x628] sm:$0xff]
        %v1060 = vld [vmem:[%s641 + $0x630] sm:$0xff]
        %v1061 = vld [vmem:[%s641 + $0x638] sm:$0xff]
        %v1062 = vld [vmem:[%s641 + $0x640] sm:$0xff]
        %v1063 = vld [vmem:[%s641 + $0x648] sm:$0xff]
        %v1064 = vld [vmem:[%s641 + $0x650] sm:$0xff]
        %v1065 = vld [vmem:[%s641 + $0x658] sm:$0xff]
        %v1066 = vld [vmem:[%s641 + $0x660] sm:$0xff]
        %v1067 = vld [vmem:[%s641 + $0x668] sm:$0xff]
        %v1068 = vld [vmem:[%s641 + $0x670] sm:$0xff]
        %v1069 = vld [vmem:[%s641 + $0x678] sm:$0xff]
        %v1070 = vld [vmem:[%s641 + $0x680] sm:$0xff]
        %v1071 = vld [vmem:[%s641 + $0x688] sm:$0xff]
        %v1072 = vld [vmem:[%s641 + $0x690] sm:$0xff]
        %v1073 = vld [vmem:[%s641 + $0x698] sm:$0xff]
        %v1074 = vld [vmem:[%s641 + $0x6a0] sm:$0xff]
        %v1075 = vld [vmem:[%s641 + $0x6a8] sm:$0xff]
        %v1076 = vld [vmem:[%s641 + $0x6b0] sm:$0xff]
        %v1077 = vld [vmem:[%s641 + $0x6b8] sm:$0xff]
        %v1078 = vld [vmem:[%s641 + $0x6c0] sm:$0xff]
        %v1079 = vld [vmem:[%s641 + $0x6c8] sm:$0xff]
        %v1080 = vld [vmem:[%s641 + $0x6d0] sm:$0xff]
        %v1081 = vld [vmem:[%s641 + $0x6d8] sm:$0xff]
        %v1082 = vld [vmem:[%s641 + $0x6e0] sm:$0xff]
        %v1083 = vld [vmem:[%s641 + $0x6e8] sm:$0xff]
        %v1084 = vld [vmem:[%s641 + $0x6f0] sm:$0xff]
        %v1085 = vld [vmem:[%s641 + $0x6f8] sm:$0xff]
        %v1086 = vld [vmem:[%s641 + $0x700] sm:$0xff]
        %v1087 = vld [vmem:[%s641 + $0x708] sm:$0xff]
        %v1088 = vld [vmem:[%s641 + $0x710] sm:$0xff]
        %v1089 = vld [vmem:[%s641 + $0x718] sm:$0xff]
        %v1090 = vld [vmem:[%s641 + $0x720] sm:$0xff]
        %v1091 = vld [vmem:[%s641 + $0x728] sm:$0xff]
        %v1092 = vld [vmem:[%s641 + $0x730] sm:$0xff]
        %v1093 = vld [vmem:[%s641 + $0x738] sm:$0xff]
        %v1094 = vld [vmem:[%s641 + $0x740] sm:$0xff]
        %v1095 = vld [vmem:[%s641 + $0x748] sm:$0xff]
        %v1096 = vld [vmem:[%s641 + $0x750] sm:$0xff]
        %v1097 = vld [vmem:[%s641 + $0x758] sm:$0xff]
        %v1098 = vld [vmem:[%s641 + $0x760] sm:$0xff]
        %v1099 = vld [vmem:[%s641 + $0x768] sm:$0xff]
        %v1100 = vld [vmem:[%s641 + $0x770] sm:$0xff]
        %v1101 = vld [vmem:[%s641 + $0x778] sm:$0xff]
        %v1102 = vld [vmem:[%s641 + $0x780] sm:$0xff]
        %v1103 = vld [vmem:[%s641 + $0x788] sm:$0xff]
        %v1104 = vld [vmem:[%s641 + $0x790] sm:$0xff]
        %v1105 = vld [vmem:[%s641 + $0x798] sm:$0xff]
        %v1106 = vld [vmem:[%s641 + $0x7a0] sm:$0xff]
        %v1107 = vld [vmem:[%s641 + $0x7a8] sm:$0xff]
        %v1108 = vld [vmem:[%s641 + $0x7b0] sm:$0xff]
        %v1109 = vld [vmem:[%s641 + $0x7b8] sm:$0xff]
        %v1110 = vld [vmem:[%s641 + $0x7c0] sm:$0xff]
        %v1111 = vld [vmem:[%s641 + $0x7c8] sm:$0xff]
        %v1112 = vld [vmem:[%s641 + $0x7d0] sm:$0xff]
        %v1113 = vld [vmem:[%s641 + $0x7d8] sm:$0xff]
        %v1114 = vld [vmem:[%s641 + $0x7e0] sm:$0xff]
        %v1115 = vld [vmem:[%s641 + $0x7e8] sm:$0xff]
        %v1116 = vld [vmem:[%s641 + $0x7f0] sm:$0xff]
        %v1117 = vld [vmem:[%s641 + $0x7f8] sm:$0xff]
        %v1118 = vld [vmem:[%s650] sm:$0xff]
        %v1119 = vld [vmem:[%s650 + $0x8] sm:$0xff]
        %v1122 = vlaneseq
        %v1123 = vshrl.u32 %v1122, 7
        %v1124 = vsub.s32 0, %v1123
        %v1125 = vrot.slane %v1118, %v1124
        %v1126 = vlaneseq
        %v1127 = vshrl.u32 %v1126, 7
        %v1128 = vsub.s32 1, %v1127
        %v1129 = vrot.slane %v1118, %v1128
        %v1130 = vlaneseq
        %v1131 = vshrl.u32 %v1130, 7
        %v1132 = vsub.s32 2, %v1131
        %v1133 = vrot.slane %v1118, %v1132
        %v1134 = vlaneseq
        %v1135 = vshrl.u32 %v1134, 7
        %v1136 = vsub.s32 3, %v1135
        %v1137 = vrot.slane %v1118, %v1136
        %v1138 = vlaneseq
        %v1139 = vshrl.u32 %v1138, 7
        %v1140 = vsub.s32 4, %v1139
        %v1141 = vrot.slane %v1118, %v1140
        %v1142 = vlaneseq
        %v1143 = vshrl.u32 %v1142, 7
        %v1144 = vsub.s32 5, %v1143
        %v1145 = vrot.slane %v1118, %v1144
        %v1146 = vlaneseq
        %v1147 = vshrl.u32 %v1146, 7
        %v1148 = vsub.s32 6, %v1147
        %v1149 = vrot.slane %v1118, %v1148
        %v1150 = vlaneseq
        %v1151 = vshrl.u32 %v1150, 7
        %v1152 = vsub.s32 7, %v1151
        %v1153 = vrot.slane %v1118, %v1152
        %v1154 = vlaneseq
        %v1155 = vshrl.u32 %v1154, 7
        %v1156 = vsub.s32 0, %v1155
        %v1157 = vrot.slane %v1119, %v1156
        %v1158 = vlaneseq
        %v1159 = vshrl.u32 %v1158, 7
        %v1160 = vsub.s32 1, %v1159
        %v1161 = vrot.slane %v1119, %v1160
        %v1162 = vlaneseq
        %v1163 = vshrl.u32 %v1162, 7
        %v1164 = vsub.s32 2, %v1163
        %v1165 = vrot.slane %v1119, %v1164
        %v1166 = vlaneseq
        %v1167 = vshrl.u32 %v1166, 7
        %v1168 = vsub.s32 3, %v1167
        %v1169 = vrot.slane %v1119, %v1168
        %v1170 = vlaneseq
        %v1171 = vshrl.u32 %v1170, 7
        %v1172 = vsub.s32 4, %v1171
        %v1173 = vrot.slane %v1119, %v1172
        %v1174 = vlaneseq
        %v1175 = vshrl.u32 %v1174, 7
        %v1176 = vsub.s32 5, %v1175
        %v1177 = vrot.slane %v1119, %v1176
        %v1178 = vlaneseq
        %v1179 = vshrl.u32 %v1178, 7
        %v1180 = vsub.s32 6, %v1179
        %v1181 = vrot.slane %v1119, %v1180
        %v1182 = vlaneseq
        %v1183 = vshrl.u32 %v1182, 7
        %v1184 = vsub.s32 7, %v1183
        %v1185 = vrot.slane %v1119, %v1184
        %v1458 = vunpack.c.l.b16 %v862
        %v1459 = vunpack.c.h.b16 %v862
        %v1460 = vunpack.c.l.b16 %v863
        %v1461 = vunpack.c.h.b16 %v863
        %v1462 = vunpack.c.l.b16 %v864
        %v1463 = vunpack.c.h.b16 %v864
        %v1464 = vunpack.c.l.b16 %v865
        %v1465 = vunpack.c.h.b16 %v865
        %v1466 = vunpack.c.l.b16 %v866
        %v1467 = vunpack.c.h.b16 %v866
        %v1468 = vunpack.c.l.b16 %v867
        %v1469 = vunpack.c.h.b16 %v867
        %v1470 = vunpack.c.l.b16 %v868
        %v1471 = vunpack.c.h.b16 %v868
        %v1472 = vunpack.c.l.b16 %v869
        %v1473 = vunpack.c.h.b16 %v869
        %v1474 = vunpack.c.l.b16 %v870
        %v1475 = vunpack.c.h.b16 %v870
        %v1476 = vunpack.c.l.b16 %v871
        %v1477 = vunpack.c.h.b16 %v871
        %v1478 = vunpack.c.l.b16 %v872
        %v1479 = vunpack.c.h.b16 %v872
        %v1480 = vunpack.c.l.b16 %v873
        %v1481 = vunpack.c.h.b16 %v873
        %v1482 = vunpack.c.l.b16 %v874
        %v1483 = vunpack.c.h.b16 %v874
        %v1484 = vunpack.c.l.b16 %v875
        %v1485 = vunpack.c.h.b16 %v875
        %v1486 = vunpack.c.l.b16 %v876
        %v1487 = vunpack.c.h.b16 %v876
        %v1488 = vunpack.c.l.b16 %v877
        %v1489 = vunpack.c.h.b16 %v877
        %v1490 = vunpack.c.l.b16 %v878
        %v1491 = vunpack.c.h.b16 %v878
        %v1492 = vunpack.c.l.b16 %v879
        %v1493 = vunpack.c.h.b16 %v879
        %v1494 = vunpack.c.l.b16 %v880
        %v1495 = vunpack.c.h.b16 %v880
        %v1496 = vunpack.c.l.b16 %v881
        %v1497 = vunpack.c.h.b16 %v881
        %v1498 = vunpack.c.l.b16 %v882
        %v1499 = vunpack.c.h.b16 %v882
        %v1500 = vunpack.c.l.b16 %v883
        %v1501 = vunpack.c.h.b16 %v883
        %v1502 = vunpack.c.l.b16 %v884
        %v1503 = vunpack.c.h.b16 %v884
        %v1504 = vunpack.c.l.b16 %v885
        %v1505 = vunpack.c.h.b16 %v885
        %v1506 = vunpack.c.l.b16 %v886
        %v1507 = vunpack.c.h.b16 %v886
        %v1508 = vunpack.c.l.b16 %v887
        %v1509 = vunpack.c.h.b16 %v887
        %v1510 = vunpack.c.l.b16 %v888
        %v1511 = vunpack.c.h.b16 %v888
        %v1512 = vunpack.c.l.b16 %v889
        %v1513 = vunpack.c.h.b16 %v889
        %v1514 = vunpack.c.l.b16 %v890
        %v1515 = vunpack.c.h.b16 %v890
        %v1516 = vunpack.c.l.b16 %v891
        %v1517 = vunpack.c.h.b16 %v891
        %v1518 = vunpack.c.l.b16 %v892
        %v1519 = vunpack.c.h.b16 %v892
        %v1520 = vunpack.c.l.b16 %v893
        %v1521 = vunpack.c.h.b16 %v893
        %v1522 = vunpack.c.l.b16 %v894
        %v1523 = vunpack.c.h.b16 %v894
        %v1524 = vunpack.c.l.b16 %v895
        %v1525 = vunpack.c.h.b16 %v895
        %v1526 = vunpack.c.l.b16 %v896
        %v1527 = vunpack.c.h.b16 %v896
        %v1528 = vunpack.c.l.b16 %v897
        %v1529 = vunpack.c.h.b16 %v897
        %v1530 = vunpack.c.l.b16 %v898
        %v1531 = vunpack.c.h.b16 %v898
        %v1532 = vunpack.c.l.b16 %v899
        %v1533 = vunpack.c.h.b16 %v899
        %v1534 = vunpack.c.l.b16 %v900
        %v1535 = vunpack.c.h.b16 %v900
        %v1536 = vunpack.c.l.b16 %v901
        %v1537 = vunpack.c.h.b16 %v901
        %v1538 = vunpack.c.l.b16 %v902
        %v1539 = vunpack.c.h.b16 %v902
        %v1540 = vunpack.c.l.b16 %v903
        %v1541 = vunpack.c.h.b16 %v903
        %v1542 = vunpack.c.l.b16 %v904
        %v1543 = vunpack.c.h.b16 %v904
        %v1544 = vunpack.c.l.b16 %v905
        %v1545 = vunpack.c.h.b16 %v905
        %v1546 = vunpack.c.l.b16 %v906
        %v1547 = vunpack.c.h.b16 %v906
        %v1548 = vunpack.c.l.b16 %v907
        %v1549 = vunpack.c.h.b16 %v907
        %v1550 = vunpack.c.l.b16 %v908
        %v1551 = vunpack.c.h.b16 %v908
        %v1552 = vunpack.c.l.b16 %v909
        %v1553 = vunpack.c.h.b16 %v909
        %v1554 = vunpack.c.l.b16 %v910
        %v1555 = vunpack.c.h.b16 %v910
        %v1556 = vunpack.c.l.b16 %v911
        %v1557 = vunpack.c.h.b16 %v911
        %v1558 = vunpack.c.l.b16 %v912
        %v1559 = vunpack.c.h.b16 %v912
        %v1560 = vunpack.c.l.b16 %v913
        %v1561 = vunpack.c.h.b16 %v913
        %v1562 = vunpack.c.l.b16 %v914
        %v1563 = vunpack.c.h.b16 %v914
        %v1564 = vunpack.c.l.b16 %v915
        %v1565 = vunpack.c.h.b16 %v915
        %v1566 = vunpack.c.l.b16 %v916
        %v1567 = vunpack.c.h.b16 %v916
        %v1568 = vunpack.c.l.b16 %v917
        %v1569 = vunpack.c.h.b16 %v917
        %v1570 = vunpack.c.l.b16 %v918
        %v1571 = vunpack.c.h.b16 %v918
        %v1572 = vunpack.c.l.b16 %v919
        %v1573 = vunpack.c.h.b16 %v919
        %v1574 = vunpack.c.l.b16 %v920
        %v1575 = vunpack.c.h.b16 %v920
        %v1576 = vunpack.c.l.b16 %v921
        %v1577 = vunpack.c.h.b16 %v921
        %v1578 = vunpack.c.l.b16 %v922
        %v1579 = vunpack.c.h.b16 %v922
        %v1580 = vunpack.c.l.b16 %v923
        %v1581 = vunpack.c.h.b16 %v923
        %v1582 = vunpack.c.l.b16 %v924
        %v1583 = vunpack.c.h.b16 %v924
        %v1584 = vunpack.c.l.b16 %v925
        %v1585 = vunpack.c.h.b16 %v925
        %v1586 = vunpack.c.l.b16 %v926
        %v1587 = vunpack.c.h.b16 %v926
        %v1588 = vunpack.c.l.b16 %v927
        %v1589 = vunpack.c.h.b16 %v927
        %v1590 = vunpack.c.l.b16 %v928
        %v1591 = vunpack.c.h.b16 %v928
        %v1592 = vunpack.c.l.b16 %v929
        %v1593 = vunpack.c.h.b16 %v929
        %v1594 = vunpack.c.l.b16 %v930
        %v1595 = vunpack.c.h.b16 %v930
        %v1596 = vunpack.c.l.b16 %v931
        %v1597 = vunpack.c.h.b16 %v931
        %v1598 = vunpack.c.l.b16 %v932
        %v1599 = vunpack.c.h.b16 %v932
        %v1600 = vunpack.c.l.b16 %v933
        %v1601 = vunpack.c.h.b16 %v933
        %v1602 = vunpack.c.l.b16 %v934
        %v1603 = vunpack.c.h.b16 %v934
        %v1604 = vunpack.c.l.b16 %v935
        %v1605 = vunpack.c.h.b16 %v935
        %v1606 = vunpack.c.l.b16 %v936
        %v1607 = vunpack.c.h.b16 %v936
        %v1608 = vunpack.c.l.b16 %v937
        %v1609 = vunpack.c.h.b16 %v937
        %v1610 = vunpack.c.l.b16 %v938
        %v1611 = vunpack.c.h.b16 %v938
        %v1612 = vunpack.c.l.b16 %v939
        %v1613 = vunpack.c.h.b16 %v939
        %v1614 = vunpack.c.l.b16 %v940
        %v1615 = vunpack.c.h.b16 %v940
        %v1616 = vunpack.c.l.b16 %v941
        %v1617 = vunpack.c.h.b16 %v941
        %v1618 = vunpack.c.l.b16 %v942
        %v1619 = vunpack.c.h.b16 %v942
        %v1620 = vunpack.c.l.b16 %v943
        %v1621 = vunpack.c.h.b16 %v943
        %v1622 = vunpack.c.l.b16 %v944
        %v1623 = vunpack.c.h.b16 %v944
        %v1624 = vunpack.c.l.b16 %v945
        %v1625 = vunpack.c.h.b16 %v945
        %v1626 = vunpack.c.l.b16 %v946
        %v1627 = vunpack.c.h.b16 %v946
        %v1628 = vunpack.c.l.b16 %v947
        %v1629 = vunpack.c.h.b16 %v947
        %v1630 = vunpack.c.l.b16 %v948
        %v1631 = vunpack.c.h.b16 %v948
        %v1632 = vunpack.c.l.b16 %v949
        %v1633 = vunpack.c.h.b16 %v949
        %v1634 = vunpack.c.l.b16 %v950
        %v1635 = vunpack.c.h.b16 %v950
        %v1636 = vunpack.c.l.b16 %v951
        %v1637 = vunpack.c.h.b16 %v951
        %v1638 = vunpack.c.l.b16 %v952
        %v1639 = vunpack.c.h.b16 %v952
        %v1640 = vunpack.c.l.b16 %v953
        %v1641 = vunpack.c.h.b16 %v953
        %v1642 = vunpack.c.l.b16 %v954
        %v1643 = vunpack.c.h.b16 %v954
        %v1644 = vunpack.c.l.b16 %v955
        %v1645 = vunpack.c.h.b16 %v955
        %v1646 = vunpack.c.l.b16 %v956
        %v1647 = vunpack.c.h.b16 %v956
        %v1648 = vunpack.c.l.b16 %v957
        %v1649 = vunpack.c.h.b16 %v957
        %v1650 = vunpack.c.l.b16 %v958
        %v1651 = vunpack.c.h.b16 %v958
        %v1652 = vunpack.c.l.b16 %v959
        %v1653 = vunpack.c.h.b16 %v959
        %v1654 = vunpack.c.l.b16 %v960
        %v1655 = vunpack.c.h.b16 %v960
        %v1656 = vunpack.c.l.b16 %v961
        %v1657 = vunpack.c.h.b16 %v961
        %v1658 = vunpack.c.l.b16 %v962
        %v1659 = vunpack.c.h.b16 %v962
        %v1660 = vunpack.c.l.b16 %v963
        %v1661 = vunpack.c.h.b16 %v963
        %v1662 = vunpack.c.l.b16 %v964
        %v1663 = vunpack.c.h.b16 %v964
        %v1664 = vunpack.c.l.b16 %v965
        %v1665 = vunpack.c.h.b16 %v965
        %v1666 = vunpack.c.l.b16 %v966
        %v1667 = vunpack.c.h.b16 %v966
        %v1668 = vunpack.c.l.b16 %v967
        %v1669 = vunpack.c.h.b16 %v967
        %v1670 = vunpack.c.l.b16 %v968
        %v1671 = vunpack.c.h.b16 %v968
        %v1672 = vunpack.c.l.b16 %v969
        %v1673 = vunpack.c.h.b16 %v969
        %v1674 = vunpack.c.l.b16 %v970
        %v1675 = vunpack.c.h.b16 %v970
        %v1676 = vunpack.c.l.b16 %v971
        %v1677 = vunpack.c.h.b16 %v971
        %v1678 = vunpack.c.l.b16 %v972
        %v1679 = vunpack.c.h.b16 %v972
        %v1680 = vunpack.c.l.b16 %v973
        %v1681 = vunpack.c.h.b16 %v973
        %v1682 = vunpack.c.l.b16 %v974
        %v1683 = vunpack.c.h.b16 %v974
        %v1684 = vunpack.c.l.b16 %v975
        %v1685 = vunpack.c.h.b16 %v975
        %v1686 = vunpack.c.l.b16 %v976
        %v1687 = vunpack.c.h.b16 %v976
        %v1688 = vunpack.c.l.b16 %v977
        %v1689 = vunpack.c.h.b16 %v977
        %v1690 = vunpack.c.l.b16 %v978
        %v1691 = vunpack.c.h.b16 %v978
        %v1692 = vunpack.c.l.b16 %v979
        %v1693 = vunpack.c.h.b16 %v979
        %v1694 = vunpack.c.l.b16 %v980
        %v1695 = vunpack.c.h.b16 %v980
        %v1696 = vunpack.c.l.b16 %v981
        %v1697 = vunpack.c.h.b16 %v981
        %v1698 = vunpack.c.l.b16 %v982
        %v1699 = vunpack.c.h.b16 %v982
        %v1700 = vunpack.c.l.b16 %v983
        %v1701 = vunpack.c.h.b16 %v983
        %v1702 = vunpack.c.l.b16 %v984
        %v1703 = vunpack.c.h.b16 %v984
        %v1704 = vunpack.c.l.b16 %v985
        %v1705 = vunpack.c.h.b16 %v985
        %v1706 = vunpack.c.l.b16 %v986
        %v1707 = vunpack.c.h.b16 %v986
        %v1708 = vunpack.c.l.b16 %v987
        %v1709 = vunpack.c.h.b16 %v987
        %v1710 = vunpack.c.l.b16 %v988
        %v1711 = vunpack.c.h.b16 %v988
        %v1712 = vunpack.c.l.b16 %v989
        %v1713 = vunpack.c.h.b16 %v989
        %v1714 = vunpack.c.l.b16 %v990
        %v1715 = vunpack.c.h.b16 %v990
        %v1716 = vunpack.c.l.b16 %v991
        %v1717 = vunpack.c.h.b16 %v991
        %v1718 = vunpack.c.l.b16 %v992
        %v1719 = vunpack.c.h.b16 %v992
        %v1720 = vunpack.c.l.b16 %v993
        %v1721 = vunpack.c.h.b16 %v993
        %v1722 = vunpack.c.l.b16 %v994
        %v1723 = vunpack.c.h.b16 %v994
        %v1724 = vunpack.c.l.b16 %v995
        %v1725 = vunpack.c.h.b16 %v995
        %v1726 = vunpack.c.l.b16 %v996
        %v1727 = vunpack.c.h.b16 %v996
        %v1728 = vunpack.c.l.b16 %v997
        %v1729 = vunpack.c.h.b16 %v997
        %v1730 = vunpack.c.l.b16 %v998
        %v1731 = vunpack.c.h.b16 %v998
        %v1732 = vunpack.c.l.b16 %v999
        %v1733 = vunpack.c.h.b16 %v999
        %v1734 = vunpack.c.l.b16 %v1000
        %v1735 = vunpack.c.h.b16 %v1000
        %v1736 = vunpack.c.l.b16 %v1001
        %v1737 = vunpack.c.h.b16 %v1001
        %v1738 = vunpack.c.l.b16 %v1002
        %v1739 = vunpack.c.h.b16 %v1002
        %v1740 = vunpack.c.l.b16 %v1003
        %v1741 = vunpack.c.h.b16 %v1003
        %v1742 = vunpack.c.l.b16 %v1004
        %v1743 = vunpack.c.h.b16 %v1004
        %v1744 = vunpack.c.l.b16 %v1005
        %v1745 = vunpack.c.h.b16 %v1005
        %v1746 = vunpack.c.l.b16 %v1006
        %v1747 = vunpack.c.h.b16 %v1006
        %v1748 = vunpack.c.l.b16 %v1007
        %v1749 = vunpack.c.h.b16 %v1007
        %v1750 = vunpack.c.l.b16 %v1008
        %v1751 = vunpack.c.h.b16 %v1008
        %v1752 = vunpack.c.l.b16 %v1009
        %v1753 = vunpack.c.h.b16 %v1009
        %v1754 = vunpack.c.l.b16 %v1010
        %v1755 = vunpack.c.h.b16 %v1010
        %v1756 = vunpack.c.l.b16 %v1011
        %v1757 = vunpack.c.h.b16 %v1011
        %v1758 = vunpack.c.l.b16 %v1012
        %v1759 = vunpack.c.h.b16 %v1012
        %v1760 = vunpack.c.l.b16 %v1013
        %v1761 = vunpack.c.h.b16 %v1013
        %v1762 = vunpack.c.l.b16 %v1014
        %v1763 = vunpack.c.h.b16 %v1014
        %v1764 = vunpack.c.l.b16 %v1015
        %v1765 = vunpack.c.h.b16 %v1015
        %v1766 = vunpack.c.l.b16 %v1016
        %v1767 = vunpack.c.h.b16 %v1016
        %v1768 = vunpack.c.l.b16 %v1017
        %v1769 = vunpack.c.h.b16 %v1017
        %v1770 = vunpack.c.l.b16 %v1018
        %v1771 = vunpack.c.h.b16 %v1018
        %v1772 = vunpack.c.l.b16 %v1019
        %v1773 = vunpack.c.h.b16 %v1019
        %v1774 = vunpack.c.l.b16 %v1020
        %v1775 = vunpack.c.h.b16 %v1020
        %v1776 = vunpack.c.l.b16 %v1021
        %v1777 = vunpack.c.h.b16 %v1021
        %v1778 = vunpack.c.l.b16 %v1022
        %v1779 = vunpack.c.h.b16 %v1022
        %v1780 = vunpack.c.l.b16 %v1023
        %v1781 = vunpack.c.h.b16 %v1023
        %v1782 = vunpack.c.l.b16 %v1024
        %v1783 = vunpack.c.h.b16 %v1024
        %v1784 = vunpack.c.l.b16 %v1025
        %v1785 = vunpack.c.h.b16 %v1025
        %v1786 = vunpack.c.l.b16 %v1026
        %v1787 = vunpack.c.h.b16 %v1026
        %v1788 = vunpack.c.l.b16 %v1027
        %v1789 = vunpack.c.h.b16 %v1027
        %v1790 = vunpack.c.l.b16 %v1028
        %v1791 = vunpack.c.h.b16 %v1028
        %v1792 = vunpack.c.l.b16 %v1029
        %v1793 = vunpack.c.h.b16 %v1029
        %v1794 = vunpack.c.l.b16 %v1030
        %v1795 = vunpack.c.h.b16 %v1030
        %v1796 = vunpack.c.l.b16 %v1031
        %v1797 = vunpack.c.h.b16 %v1031
        %v1798 = vunpack.c.l.b16 %v1032
        %v1799 = vunpack.c.h.b16 %v1032
        %v1800 = vunpack.c.l.b16 %v1033
        %v1801 = vunpack.c.h.b16 %v1033
        %v1802 = vunpack.c.l.b16 %v1034
        %v1803 = vunpack.c.h.b16 %v1034
        %v1804 = vunpack.c.l.b16 %v1035
        %v1805 = vunpack.c.h.b16 %v1035
        %v1806 = vunpack.c.l.b16 %v1036
        %v1807 = vunpack.c.h.b16 %v1036
        %v1808 = vunpack.c.l.b16 %v1037
        %v1809 = vunpack.c.h.b16 %v1037
        %v1810 = vunpack.c.l.b16 %v1038
        %v1811 = vunpack.c.h.b16 %v1038
        %v1812 = vunpack.c.l.b16 %v1039
        %v1813 = vunpack.c.h.b16 %v1039
        %v1814 = vunpack.c.l.b16 %v1040
        %v1815 = vunpack.c.h.b16 %v1040
        %v1816 = vunpack.c.l.b16 %v1041
        %v1817 = vunpack.c.h.b16 %v1041
        %v1818 = vunpack.c.l.b16 %v1042
        %v1819 = vunpack.c.h.b16 %v1042
        %v1820 = vunpack.c.l.b16 %v1043
        %v1821 = vunpack.c.h.b16 %v1043
        %v1822 = vunpack.c.l.b16 %v1044
        %v1823 = vunpack.c.h.b16 %v1044
        %v1824 = vunpack.c.l.b16 %v1045
        %v1825 = vunpack.c.h.b16 %v1045
        %v1826 = vunpack.c.l.b16 %v1046
        %v1827 = vunpack.c.h.b16 %v1046
        %v1828 = vunpack.c.l.b16 %v1047
        %v1829 = vunpack.c.h.b16 %v1047
        %v1830 = vunpack.c.l.b16 %v1048
        %v1831 = vunpack.c.h.b16 %v1048
        %v1832 = vunpack.c.l.b16 %v1049
        %v1833 = vunpack.c.h.b16 %v1049
        %v1834 = vunpack.c.l.b16 %v1050
        %v1835 = vunpack.c.h.b16 %v1050
        %v1836 = vunpack.c.l.b16 %v1051
        %v1837 = vunpack.c.h.b16 %v1051
        %v1838 = vunpack.c.l.b16 %v1052
        %v1839 = vunpack.c.h.b16 %v1052
        %v1840 = vunpack.c.l.b16 %v1053
        %v1841 = vunpack.c.h.b16 %v1053
        %v1842 = vunpack.c.l.b16 %v1054
        %v1843 = vunpack.c.h.b16 %v1054
        %v1844 = vunpack.c.l.b16 %v1055
        %v1845 = vunpack.c.h.b16 %v1055
        %v1846 = vunpack.c.l.b16 %v1056
        %v1847 = vunpack.c.h.b16 %v1056
        %v1848 = vunpack.c.l.b16 %v1057
        %v1849 = vunpack.c.h.b16 %v1057
        %v1850 = vunpack.c.l.b16 %v1058
        %v1851 = vunpack.c.h.b16 %v1058
        %v1852 = vunpack.c.l.b16 %v1059
        %v1853 = vunpack.c.h.b16 %v1059
        %v1854 = vunpack.c.l.b16 %v1060
        %v1855 = vunpack.c.h.b16 %v1060
        %v1856 = vunpack.c.l.b16 %v1061
        %v1857 = vunpack.c.h.b16 %v1061
        %v1858 = vunpack.c.l.b16 %v1062
        %v1859 = vunpack.c.h.b16 %v1062
        %v1860 = vunpack.c.l.b16 %v1063
        %v1861 = vunpack.c.h.b16 %v1063
        %v1862 = vunpack.c.l.b16 %v1064
        %v1863 = vunpack.c.h.b16 %v1064
        %v1864 = vunpack.c.l.b16 %v1065
        %v1865 = vunpack.c.h.b16 %v1065
        %v1866 = vunpack.c.l.b16 %v1066
        %v1867 = vunpack.c.h.b16 %v1066
        %v1868 = vunpack.c.l.b16 %v1067
        %v1869 = vunpack.c.h.b16 %v1067
        %v1870 = vunpack.c.l.b16 %v1068
        %v1871 = vunpack.c.h.b16 %v1068
        %v1872 = vunpack.c.l.b16 %v1069
        %v1873 = vunpack.c.h.b16 %v1069
        %v1874 = vunpack.c.l.b16 %v1070
        %v1875 = vunpack.c.h.b16 %v1070
        %v1876 = vunpack.c.l.b16 %v1071
        %v1877 = vunpack.c.h.b16 %v1071
        %v1878 = vunpack.c.l.b16 %v1072
        %v1879 = vunpack.c.h.b16 %v1072
        %v1880 = vunpack.c.l.b16 %v1073
        %v1881 = vunpack.c.h.b16 %v1073
        %v1882 = vunpack.c.l.b16 %v1074
        %v1883 = vunpack.c.h.b16 %v1074
        %v1884 = vunpack.c.l.b16 %v1075
        %v1885 = vunpack.c.h.b16 %v1075
        %v1886 = vunpack.c.l.b16 %v1076
        %v1887 = vunpack.c.h.b16 %v1076
        %v1888 = vunpack.c.l.b16 %v1077
        %v1889 = vunpack.c.h.b16 %v1077
        %v1890 = vunpack.c.l.b16 %v1078
        %v1891 = vunpack.c.h.b16 %v1078
        %v1892 = vunpack.c.l.b16 %v1079
        %v1893 = vunpack.c.h.b16 %v1079
        %v1894 = vunpack.c.l.b16 %v1080
        %v1895 = vunpack.c.h.b16 %v1080
        %v1896 = vunpack.c.l.b16 %v1081
        %v1897 = vunpack.c.h.b16 %v1081
        %v1898 = vunpack.c.l.b16 %v1082
        %v1899 = vunpack.c.h.b16 %v1082
        %v1900 = vunpack.c.l.b16 %v1083
        %v1901 = vunpack.c.h.b16 %v1083
        %v1902 = vunpack.c.l.b16 %v1084
        %v1903 = vunpack.c.h.b16 %v1084
        %v1904 = vunpack.c.l.b16 %v1085
        %v1905 = vunpack.c.h.b16 %v1085
        %v1906 = vunpack.c.l.b16 %v1086
        %v1907 = vunpack.c.h.b16 %v1086
        %v1908 = vunpack.c.l.b16 %v1087
        %v1909 = vunpack.c.h.b16 %v1087
        %v1910 = vunpack.c.l.b16 %v1088
        %v1911 = vunpack.c.h.b16 %v1088
        %v1912 = vunpack.c.l.b16 %v1089
        %v1913 = vunpack.c.h.b16 %v1089
        %v1914 = vunpack.c.l.b16 %v1090
        %v1915 = vunpack.c.h.b16 %v1090
        %v1916 = vunpack.c.l.b16 %v1091
        %v1917 = vunpack.c.h.b16 %v1091
        %v1918 = vunpack.c.l.b16 %v1092
        %v1919 = vunpack.c.h.b16 %v1092
        %v1920 = vunpack.c.l.b16 %v1093
        %v1921 = vunpack.c.h.b16 %v1093
        %v1922 = vunpack.c.l.b16 %v1094
        %v1923 = vunpack.c.h.b16 %v1094
        %v1924 = vunpack.c.l.b16 %v1095
        %v1925 = vunpack.c.h.b16 %v1095
        %v1926 = vunpack.c.l.b16 %v1096
        %v1927 = vunpack.c.h.b16 %v1096
        %v1928 = vunpack.c.l.b16 %v1097
        %v1929 = vunpack.c.h.b16 %v1097
        %v1930 = vunpack.c.l.b16 %v1098
        %v1931 = vunpack.c.h.b16 %v1098
        %v1932 = vunpack.c.l.b16 %v1099
        %v1933 = vunpack.c.h.b16 %v1099
        %v1934 = vunpack.c.l.b16 %v1100
        %v1935 = vunpack.c.h.b16 %v1100
        %v1936 = vunpack.c.l.b16 %v1101
        %v1937 = vunpack.c.h.b16 %v1101
        %v1938 = vunpack.c.l.b16 %v1102
        %v1939 = vunpack.c.h.b16 %v1102
        %v1940 = vunpack.c.l.b16 %v1103
        %v1941 = vunpack.c.h.b16 %v1103
        %v1942 = vunpack.c.l.b16 %v1104
        %v1943 = vunpack.c.h.b16 %v1104
        %v1944 = vunpack.c.l.b16 %v1105
        %v1945 = vunpack.c.h.b16 %v1105
        %v1946 = vunpack.c.l.b16 %v1106
        %v1947 = vunpack.c.h.b16 %v1106
        %v1948 = vunpack.c.l.b16 %v1107
        %v1949 = vunpack.c.h.b16 %v1107
        %v1950 = vunpack.c.l.b16 %v1108
        %v1951 = vunpack.c.h.b16 %v1108
        %v1952 = vunpack.c.l.b16 %v1109
        %v1953 = vunpack.c.h.b16 %v1109
        %v1954 = vunpack.c.l.b16 %v1110
        %v1955 = vunpack.c.h.b16 %v1110
        %v1956 = vunpack.c.l.b16 %v1111
        %v1957 = vunpack.c.h.b16 %v1111
        %v1958 = vunpack.c.l.b16 %v1112
        %v1959 = vunpack.c.h.b16 %v1112
        %v1960 = vunpack.c.l.b16 %v1113
        %v1961 = vunpack.c.h.b16 %v1113
        %v1962 = vunpack.c.l.b16 %v1114
        %v1963 = vunpack.c.h.b16 %v1114
        %v1964 = vunpack.c.l.b16 %v1115
        %v1965 = vunpack.c.h.b16 %v1115
        %v1966 = vunpack.c.l.b16 %v1116
        %v1967 = vunpack.c.h.b16 %v1116
        %v1968 = vunpack.c.l.b16 %v1117
        %v1969 = vunpack.c.h.b16 %v1117
        %v1970 = vpack.c.b16 %v1474, %v1458
        %v1971 = vpack.c.b16 %v1475, %v1459
        %v1972 = vpack.c.b16 %v1476, %v1460
        %v1973 = vpack.c.b16 %v1477, %v1461
        %v1974 = vpack.c.b16 %v1478, %v1462
        %v1975 = vpack.c.b16 %v1479, %v1463
        %v1976 = vpack.c.b16 %v1480, %v1464
        %v1977 = vpack.c.b16 %v1481, %v1465
        %v1978 = vpack.c.b16 %v1482, %v1466
        %v1979 = vpack.c.b16 %v1483, %v1467
        %v1980 = vpack.c.b16 %v1484, %v1468
        %v1981 = vpack.c.b16 %v1485, %v1469
        %v1982 = vpack.c.b16 %v1486, %v1470
        %v1983 = vpack.c.b16 %v1487, %v1471
        %v1984 = vpack.c.b16 %v1488, %v1472
        %v1985 = vpack.c.b16 %v1489, %v1473
        %v1986 = vpack.c.b16 %v1506, %v1490
        %v1987 = vpack.c.b16 %v1507, %v1491
        %v1988 = vpack.c.b16 %v1508, %v1492
        %v1989 = vpack.c.b16 %v1509, %v1493
        %v1990 = vpack.c.b16 %v1510, %v1494
        %v1991 = vpack.c.b16 %v1511, %v1495
        %v1992 = vpack.c.b16 %v1512, %v1496
        %v1993 = vpack.c.b16 %v1513, %v1497
        %v1994 = vpack.c.b16 %v1514, %v1498
        %v1995 = vpack.c.b16 %v1515, %v1499
        %v1996 = vpack.c.b16 %v1516, %v1500
        %v1997 = vpack.c.b16 %v1517, %v1501
        %v1998 = vpack.c.b16 %v1518, %v1502
        %v1999 = vpack.c.b16 %v1519, %v1503
        %v2000 = vpack.c.b16 %v1520, %v1504
        %v2001 = vpack.c.b16 %v1521, %v1505
        %v2002 = vpack.c.b16 %v1538, %v1522
        %v2003 = vpack.c.b16 %v1539, %v1523
        %v2004 = vpack.c.b16 %v1540, %v1524
        %v2005 = vpack.c.b16 %v1541, %v1525
        %v2006 = vpack.c.b16 %v1542, %v1526
        %v2007 = vpack.c.b16 %v1543, %v1527
        %v2008 = vpack.c.b16 %v1544, %v1528
        %v2009 = vpack.c.b16 %v1545, %v1529
        %v2010 = vpack.c.b16 %v1546, %v1530
        %v2011 = vpack.c.b16 %v1547, %v1531
        %v2012 = vpack.c.b16 %v1548, %v1532
        %v2013 = vpack.c.b16 %v1549, %v1533
        %v2014 = vpack.c.b16 %v1550, %v1534
        %v2015 = vpack.c.b16 %v1551, %v1535
        %v2016 = vpack.c.b16 %v1552, %v1536
        %v2017 = vpack.c.b16 %v1553, %v1537
        %v2018 = vpack.c.b16 %v1570, %v1554
        %v2019 = vpack.c.b16 %v1571, %v1555
        %v2020 = vpack.c.b16 %v1572, %v1556
        %v2021 = vpack.c.b16 %v1573, %v1557
        %v2022 = vpack.c.b16 %v1574, %v1558
        %v2023 = vpack.c.b16 %v1575, %v1559
        %v2024 = vpack.c.b16 %v1576, %v1560
        %v2025 = vpack.c.b16 %v1577, %v1561
        %v2026 = vpack.c.b16 %v1578, %v1562
        %v2027 = vpack.c.b16 %v1579, %v1563
        %v2028 = vpack.c.b16 %v1580, %v1564
        %v2029 = vpack.c.b16 %v1581, %v1565
        %v2030 = vpack.c.b16 %v1582, %v1566
        %v2031 = vpack.c.b16 %v1583, %v1567
        %v2032 = vpack.c.b16 %v1584, %v1568
        %v2033 = vpack.c.b16 %v1585, %v1569
        %v2034 = vpack.c.b16 %v1602, %v1586
        %v2035 = vpack.c.b16 %v1603, %v1587
        %v2036 = vpack.c.b16 %v1604, %v1588
        %v2037 = vpack.c.b16 %v1605, %v1589
        %v2038 = vpack.c.b16 %v1606, %v1590
        %v2039 = vpack.c.b16 %v1607, %v1591
        %v2040 = vpack.c.b16 %v1608, %v1592
        %v2041 = vpack.c.b16 %v1609, %v1593
        %v2042 = vpack.c.b16 %v1610, %v1594
        %v2043 = vpack.c.b16 %v1611, %v1595
        %v2044 = vpack.c.b16 %v1612, %v1596
        %v2045 = vpack.c.b16 %v1613, %v1597
        %v2046 = vpack.c.b16 %v1614, %v1598
        %v2047 = vpack.c.b16 %v1615, %v1599
        %v2048 = vpack.c.b16 %v1616, %v1600
        %v2049 = vpack.c.b16 %v1617, %v1601
        %v2050 = vpack.c.b16 %v1634, %v1618
        %v2051 = vpack.c.b16 %v1635, %v1619
        %v2052 = vpack.c.b16 %v1636, %v1620
        %v2053 = vpack.c.b16 %v1637, %v1621
        %v2054 = vpack.c.b16 %v1638, %v1622
        %v2055 = vpack.c.b16 %v1639, %v1623
        %v2056 = vpack.c.b16 %v1640, %v1624
        %v2057 = vpack.c.b16 %v1641, %v1625
        %v2058 = vpack.c.b16 %v1642, %v1626
        %v2059 = vpack.c.b16 %v1643, %v1627
        %v2060 = vpack.c.b16 %v1644, %v1628
        %v2061 = vpack.c.b16 %v1645, %v1629
        %v2062 = vpack.c.b16 %v1646, %v1630
        %v2063 = vpack.c.b16 %v1647, %v1631
        %v2064 = vpack.c.b16 %v1648, %v1632
        %v2065 = vpack.c.b16 %v1649, %v1633
        %v2066 = vpack.c.b16 %v1666, %v1650
        %v2067 = vpack.c.b16 %v1667, %v1651
        %v2068 = vpack.c.b16 %v1668, %v1652
        %v2069 = vpack.c.b16 %v1669, %v1653
        %v2070 = vpack.c.b16 %v1670, %v1654
        %v2071 = vpack.c.b16 %v1671, %v1655
        %v2072 = vpack.c.b16 %v1672, %v1656
        %v2073 = vpack.c.b16 %v1673, %v1657
        %v2074 = vpack.c.b16 %v1674, %v1658
        %v2075 = vpack.c.b16 %v1675, %v1659
        %v2076 = vpack.c.b16 %v1676, %v1660
        %v2077 = vpack.c.b16 %v1677, %v1661
        %v2078 = vpack.c.b16 %v1678, %v1662
        %v2079 = vpack.c.b16 %v1679, %v1663
        %v2080 = vpack.c.b16 %v1680, %v1664
        %v2081 = vpack.c.b16 %v1681, %v1665
        %v2082 = vpack.c.b16 %v1698, %v1682
        %v2083 = vpack.c.b16 %v1699, %v1683
        %v2084 = vpack.c.b16 %v1700, %v1684
        %v2085 = vpack.c.b16 %v1701, %v1685
        %v2086 = vpack.c.b16 %v1702, %v1686
        %v2087 = vpack.c.b16 %v1703, %v1687
        %v2088 = vpack.c.b16 %v1704, %v1688
        %v2089 = vpack.c.b16 %v1705, %v1689
        %v2090 = vpack.c.b16 %v1706, %v1690
        %v2091 = vpack.c.b16 %v1707, %v1691
        %v2092 = vpack.c.b16 %v1708, %v1692
        %v2093 = vpack.c.b16 %v1709, %v1693
        %v2094 = vpack.c.b16 %v1710, %v1694
        %v2095 = vpack.c.b16 %v1711, %v1695
        %v2096 = vpack.c.b16 %v1712, %v1696
        %v2097 = vpack.c.b16 %v1713, %v1697
        %v2098 = vpack.c.b16 %v1730, %v1714
        %v2099 = vpack.c.b16 %v1731, %v1715
        %v2100 = vpack.c.b16 %v1732, %v1716
        %v2101 = vpack.c.b16 %v1733, %v1717
        %v2102 = vpack.c.b16 %v1734, %v1718
        %v2103 = vpack.c.b16 %v1735, %v1719
        %v2104 = vpack.c.b16 %v1736, %v1720
        %v2105 = vpack.c.b16 %v1737, %v1721
        %v2106 = vpack.c.b16 %v1738, %v1722
        %v2107 = vpack.c.b16 %v1739, %v1723
        %v2108 = vpack.c.b16 %v1740, %v1724
        %v2109 = vpack.c.b16 %v1741, %v1725
        %v2110 = vpack.c.b16 %v1742, %v1726
        %v2111 = vpack.c.b16 %v1743, %v1727
        %v2112 = vpack.c.b16 %v1744, %v1728
        %v2113 = vpack.c.b16 %v1745, %v1729
        %v2114 = vpack.c.b16 %v1762, %v1746
        %v2115 = vpack.c.b16 %v1763, %v1747
        %v2116 = vpack.c.b16 %v1764, %v1748
        %v2117 = vpack.c.b16 %v1765, %v1749
        %v2118 = vpack.c.b16 %v1766, %v1750
        %v2119 = vpack.c.b16 %v1767, %v1751
        %v2120 = vpack.c.b16 %v1768, %v1752
        %v2121 = vpack.c.b16 %v1769, %v1753
        %v2122 = vpack.c.b16 %v1770, %v1754
        %v2123 = vpack.c.b16 %v1771, %v1755
        %v2124 = vpack.c.b16 %v1772, %v1756
        %v2125 = vpack.c.b16 %v1773, %v1757
        %v2126 = vpack.c.b16 %v1774, %v1758
        %v2127 = vpack.c.b16 %v1775, %v1759
        %v2128 = vpack.c.b16 %v1776, %v1760
        %v2129 = vpack.c.b16 %v1777, %v1761
        %v2130 = vpack.c.b16 %v1794, %v1778
        %v2131 = vpack.c.b16 %v1795, %v1779
        %v2132 = vpack.c.b16 %v1796, %v1780
        %v2133 = vpack.c.b16 %v1797, %v1781
        %v2134 = vpack.c.b16 %v1798, %v1782
        %v2135 = vpack.c.b16 %v1799, %v1783
        %v2136 = vpack.c.b16 %v1800, %v1784
        %v2137 = vpack.c.b16 %v1801, %v1785
        %v2138 = vpack.c.b16 %v1802, %v1786
        %v2139 = vpack.c.b16 %v1803, %v1787
        %v2140 = vpack.c.b16 %v1804, %v1788
        %v2141 = vpack.c.b16 %v1805, %v1789
        %v2142 = vpack.c.b16 %v1806, %v1790
        %v2143 = vpack.c.b16 %v1807, %v1791
        %v2144 = vpack.c.b16 %v1808, %v1792
        %v2145 = vpack.c.b16 %v1809, %v1793
        %v2146 = vpack.c.b16 %v1826, %v1810
        %v2147 = vpack.c.b16 %v1827, %v1811
        %v2148 = vpack.c.b16 %v1828, %v1812
        %v2149 = vpack.c.b16 %v1829, %v1813
        %v2150 = vpack.c.b16 %v1830, %v1814
        %v2151 = vpack.c.b16 %v1831, %v1815
        %v2152 = vpack.c.b16 %v1832, %v1816
        %v2153 = vpack.c.b16 %v1833, %v1817
        %v2154 = vpack.c.b16 %v1834, %v1818
        %v2155 = vpack.c.b16 %v1835, %v1819
        %v2156 = vpack.c.b16 %v1836, %v1820
        %v2157 = vpack.c.b16 %v1837, %v1821
        %v2158 = vpack.c.b16 %v1838, %v1822
        %v2159 = vpack.c.b16 %v1839, %v1823
        %v2160 = vpack.c.b16 %v1840, %v1824
        %v2161 = vpack.c.b16 %v1841, %v1825
        %v2162 = vpack.c.b16 %v1858, %v1842
        %v2163 = vpack.c.b16 %v1859, %v1843
        %v2164 = vpack.c.b16 %v1860, %v1844
        %v2165 = vpack.c.b16 %v1861, %v1845
        %v2166 = vpack.c.b16 %v1862, %v1846
        %v2167 = vpack.c.b16 %v1863, %v1847
        %v2168 = vpack.c.b16 %v1864, %v1848
        %v2169 = vpack.c.b16 %v1865, %v1849
        %v2170 = vpack.c.b16 %v1866, %v1850
        %v2171 = vpack.c.b16 %v1867, %v1851
        %v2172 = vpack.c.b16 %v1868, %v1852
        %v2173 = vpack.c.b16 %v1869, %v1853
        %v2174 = vpack.c.b16 %v1870, %v1854
        %v2175 = vpack.c.b16 %v1871, %v1855
        %v2176 = vpack.c.b16 %v1872, %v1856
        %v2177 = vpack.c.b16 %v1873, %v1857
        %v2178 = vpack.c.b16 %v1890, %v1874
        %v2179 = vpack.c.b16 %v1891, %v1875
        %v2180 = vpack.c.b16 %v1892, %v1876
        %v2181 = vpack.c.b16 %v1893, %v1877
        %v2182 = vpack.c.b16 %v1894, %v1878
        %v2183 = vpack.c.b16 %v1895, %v1879
        %v2184 = vpack.c.b16 %v1896, %v1880
        %v2185 = vpack.c.b16 %v1897, %v1881
        %v2186 = vpack.c.b16 %v1898, %v1882
        %v2187 = vpack.c.b16 %v1899, %v1883
        %v2188 = vpack.c.b16 %v1900, %v1884
        %v2189 = vpack.c.b16 %v1901, %v1885
        %v2190 = vpack.c.b16 %v1902, %v1886
        %v2191 = vpack.c.b16 %v1903, %v1887
        %v2192 = vpack.c.b16 %v1904, %v1888
        %v2193 = vpack.c.b16 %v1905, %v1889
        %v2194 = vpack.c.b16 %v1922, %v1906
        %v2195 = vpack.c.b16 %v1923, %v1907
        %v2196 = vpack.c.b16 %v1924, %v1908
        %v2197 = vpack.c.b16 %v1925, %v1909
        %v2198 = vpack.c.b16 %v1926, %v1910
        %v2199 = vpack.c.b16 %v1927, %v1911
        %v2200 = vpack.c.b16 %v1928, %v1912
        %v2201 = vpack.c.b16 %v1929, %v1913
        %v2202 = vpack.c.b16 %v1930, %v1914
        %v2203 = vpack.c.b16 %v1931, %v1915
        %v2204 = vpack.c.b16 %v1932, %v1916
        %v2205 = vpack.c.b16 %v1933, %v1917
        %v2206 = vpack.c.b16 %v1934, %v1918
        %v2207 = vpack.c.b16 %v1935, %v1919
        %v2208 = vpack.c.b16 %v1936, %v1920
        %v2209 = vpack.c.b16 %v1937, %v1921
        %v2210 = vpack.c.b16 %v1954, %v1938
        %v2211 = vpack.c.b16 %v1955, %v1939
        %v2212 = vpack.c.b16 %v1956, %v1940
        %v2213 = vpack.c.b16 %v1957, %v1941
        %v2214 = vpack.c.b16 %v1958, %v1942
        %v2215 = vpack.c.b16 %v1959, %v1943
        %v2216 = vpack.c.b16 %v1960, %v1944
        %v2217 = vpack.c.b16 %v1961, %v1945
        %v2218 = vpack.c.b16 %v1962, %v1946
        %v2219 = vpack.c.b16 %v1963, %v1947
        %v2220 = vpack.c.b16 %v1964, %v1948
        %v2221 = vpack.c.b16 %v1965, %v1949
        %v2222 = vpack.c.b16 %v1966, %v1950
        %v2223 = vpack.c.b16 %v1967, %v1951
        %v2224 = vpack.c.b16 %v1968, %v1952
        %v2225 = vpack.c.b16 %v1969, %v1953
        %2482 = vmatprep.subr.bf16.mxu0 %v2083
        %2483 = vmatpush1.bf16.msra.mxu0 %v2082
        %2484 = vmatprep.subr.bf16.mxu0 %v2067
        %2485 = vmatpush1.bf16.msra.mxu0 %v2066
        %2486 = vmatprep.subr.bf16.mxu0 %v2051
        %2487 = vmatpush1.bf16.msra.mxu0 %v2050
        %2488 = vmatprep.subr.bf16.mxu0 %v2035
        %2489 = vmatpush1.bf16.msra.mxu0 %v2034
        %2490 = vmatprep.subr.bf16.mxu0 %v2019
        %2491 = vmatpush1.bf16.msra.mxu0 %v2018
        %2492 = vmatprep.subr.bf16.mxu0 %v2003
        %2493 = vmatpush1.bf16.msra.mxu0 %v2002
        %2494 = vmatprep.subr.bf16.mxu0 %v1987
        %2495 = vmatpush1.bf16.msra.mxu0 %v1986
        %2496 = vmatprep.subr.bf16.mxu0 %v1971
        %2497 = vmatpush1.bf16.msra.mxu0 %v1970
        %2498 = vmatprep.subr.bf16.mxu0 %v2211
        %2499 = vmatpush2.bf16.msra.mxu0 %v2210
        %2500 = vmatprep.subr.bf16.mxu0 %v2195
        %2501 = vmatpush2.bf16.msra.mxu0 %v2194
        %2502 = vmatprep.subr.bf16.mxu0 %v2179
        %2503 = vmatpush2.bf16.msra.mxu0 %v2178
        %2504 = vmatprep.subr.bf16.mxu0 %v2163
        %2505 = vmatpush2.bf16.msra.mxu0 %v2162
        %2506 = vmatprep.subr.bf16.mxu0 %v2147
        %2507 = vmatpush2.bf16.msra.mxu0 %v2146
        %2508 = vmatprep.subr.bf16.mxu0 %v2131
        %2509 = vmatpush2.bf16.msra.mxu0 %v2130
        %2510 = vmatprep.subr.bf16.mxu0 %v2115
        %2511 = vmatpush2.bf16.msra.mxu0 %v2114
        %2512 = vmatprep.subr.bf16.mxu0 %v2099
        %2513 = vmatpush2.bf16.msra.mxu0 %v2098
        %2514 = vmatprep.mubr.bf16.mxu0 %v861
        %2515 = vmatmul.mubr.bf16.gmra.mxu0 %v860
        %v2516 = vpop.f32.mrf.mxu0
        %v2517 = vadd.f32 %v1125, %v2516
        %v2518 = vpop.f32.mrf.mxu0
        %v2519 = vadd.f32 %v1129, %v2518
        %v2520 = vpop.f32.mrf.mxu0
        %v2521 = vadd.f32 %v1125, %v2520
        %v2522 = vpop.f32.mrf.mxu0
        %v2523 = vadd.f32 %v1129, %v2522
        %2524 = vdwg.mxu0
        %2525 = vmatprep.subr.bf16.mxu0 %v2085
        %2526 = vmatpush1.bf16.msra.mxu0 %v2084
        %2527 = vmatprep.subr.bf16.mxu0 %v2069
        %2528 = vmatpush1.bf16.msra.mxu0 %v2068
        %2529 = vmatprep.subr.bf16.mxu0 %v2053
        %2530 = vmatpush1.bf16.msra.mxu0 %v2052
        %2531 = vmatprep.subr.bf16.mxu0 %v2037
        %2532 = vmatpush1.bf16.msra.mxu0 %v2036
        %2533 = vmatprep.subr.bf16.mxu0 %v2021
        %2534 = vmatpush1.bf16.msra.mxu0 %v2020
        %2535 = vmatprep.subr.bf16.mxu0 %v2005
        %2536 = vmatpush1.bf16.msra.mxu0 %v2004
        %2537 = vmatprep.subr.bf16.mxu0 %v1989
        %2538 = vmatpush1.bf16.msra.mxu0 %v1988
        %2539 = vmatprep.subr.bf16.mxu0 %v1973
        %2540 = vmatpush1.bf16.msra.mxu0 %v1972
        %2541 = vmatprep.subr.bf16.mxu0 %v2213
        %2542 = vmatpush2.bf16.msra.mxu0 %v2212
        %2543 = vmatprep.subr.bf16.mxu0 %v2197
        %2544 = vmatpush2.bf16.msra.mxu0 %v2196
        %2545 = vmatprep.subr.bf16.mxu0 %v2181
        %2546 = vmatpush2.bf16.msra.mxu0 %v2180
        %2547 = vmatprep.subr.bf16.mxu0 %v2165
        %2548 = vmatpush2.bf16.msra.mxu0 %v2164
        %2549 = vmatprep.subr.bf16.mxu0 %v2149
        %2550 = vmatpush2.bf16.msra.mxu0 %v2148
        %2551 = vmatprep.subr.bf16.mxu0 %v2133
        %2552 = vmatpush2.bf16.msra.mxu0 %v2132
        %2553 = vmatprep.subr.bf16.mxu0 %v2117
        %2554 = vmatpush2.bf16.msra.mxu0 %v2116
        %2555 = vmatprep.subr.bf16.mxu0 %v2101
        %2556 = vmatpush2.bf16.msra.mxu0 %v2100
        %2557 = vmatprep.mubr.bf16.mxu0 %v861
        %2558 = vmatmul.mubr.bf16.gmra.mxu0 %v860
        %v2559 = vpop.f32.mrf.mxu0
        %v2560 = vadd.f32 %v1133, %v2559
        %v2561 = vpop.f32.mrf.mxu0
        %v2562 = vadd.f32 %v1137, %v2561
        %v2563 = vpop.f32.mrf.mxu0
        %v2564 = vadd.f32 %v1133, %v2563
        %v2565 = vpop.f32.mrf.mxu0
        %v2566 = vadd.f32 %v1137, %v2565
        %2567 = vdwg.mxu0
        %2568 = vmatprep.subr.bf16.mxu0 %v2087
        %2569 = vmatpush1.bf16.msra.mxu0 %v2086
        %2570 = vmatprep.subr.bf16.mxu0 %v2071
        %2571 = vmatpush1.bf16.msra.mxu0 %v2070
        %2572 = vmatprep.subr.bf16.mxu0 %v2055
        %2573 = vmatpush1.bf16.msra.mxu0 %v2054
        %2574 = vmatprep.subr.bf16.mxu0 %v2039
        %2575 = vmatpush1.bf16.msra.mxu0 %v2038
        %2576 = vmatprep.subr.bf16.mxu0 %v2023
        %2577 = vmatpush1.bf16.msra.mxu0 %v2022
        %2578 = vmatprep.subr.bf16.mxu0 %v2007
        %2579 = vmatpush1.bf16.msra.mxu0 %v2006
        %2580 = vmatprep.subr.bf16.mxu0 %v1991
        %2581 = vmatpush1.bf16.msra.mxu0 %v1990
        %2582 = vmatprep.subr.bf16.mxu0 %v1975
        %2583 = vmatpush1.bf16.msra.mxu0 %v1974
        %2584 = vmatprep.subr.bf16.mxu0 %v2215
        %2585 = vmatpush2.bf16.msra.mxu0 %v2214
        %2586 = vmatprep.subr.bf16.mxu0 %v2199
        %2587 = vmatpush2.bf16.msra.mxu0 %v2198
        %2588 = vmatprep.subr.bf16.mxu0 %v2183
        %2589 = vmatpush2.bf16.msra.mxu0 %v2182
        %2590 = vmatprep.subr.bf16.mxu0 %v2167
        %2591 = vmatpush2.bf16.msra.mxu0 %v2166
        %2592 = vmatprep.subr.bf16.mxu0 %v2151
        %2593 = vmatpush2.bf16.msra.mxu0 %v2150
        %2594 = vmatprep.subr.bf16.mxu0 %v2135
        %2595 = vmatpush2.bf16.msra.mxu0 %v2134
        %2596 = vmatprep.subr.bf16.mxu0 %v2119
        %2597 = vmatpush2.bf16.msra.mxu0 %v2118
        %2598 = vmatprep.subr.bf16.mxu0 %v2103
        %2599 = vmatpush2.bf16.msra.mxu0 %v2102
        %2600 = vmatprep.mubr.bf16.mxu0 %v861
        %2601 = vmatmul.mubr.bf16.gmra.mxu0 %v860
        %v2602 = vpop.f32.mrf.mxu0
        %v2603 = vadd.f32 %v1141, %v2602
        %v2604 = vpop.f32.mrf.mxu0
        %v2605 = vadd.f32 %v1145, %v2604
        %v2606 = vpop.f32.mrf.mxu0
        %v2607 = vadd.f32 %v1141, %v2606
        %v2608 = vpop.f32.mrf.mxu0
        %v2609 = vadd.f32 %v1145, %v2608
        %2610 = vdwg.mxu0
        %2611 = vmatprep.subr.bf16.mxu0 %v2089
        %2612 = vmatpush1.bf16.msra.mxu0 %v2088
        %2613 = vmatprep.subr.bf16.mxu0 %v2073
        %2614 = vmatpush1.bf16.msra.mxu0 %v2072
        %2615 = vmatprep.subr.bf16.mxu0 %v2057
        %2616 = vmatpush1.bf16.msra.mxu0 %v2056
        %2617 = vmatprep.subr.bf16.mxu0 %v2041
        %2618 = vmatpush1.bf16.msra.mxu0 %v2040
        %2619 = vmatprep.subr.bf16.mxu0 %v2025
        %2620 = vmatpush1.bf16.msra.mxu0 %v2024
        %2621 = vmatprep.subr.bf16.mxu0 %v2009
        %2622 = vmatpush1.bf16.msra.mxu0 %v2008
        %2623 = vmatprep.subr.bf16.mxu0 %v1993
        %2624 = vmatpush1.bf16.msra.mxu0 %v1992
        %2625 = vmatprep.subr.bf16.mxu0 %v1977
        %2626 = vmatpush1.bf16.msra.mxu0 %v1976
        %2627 = vmatprep.subr.bf16.mxu0 %v2217
        %2628 = vmatpush2.bf16.msra.mxu0 %v2216
        %2629 = vmatprep.subr.bf16.mxu0 %v2201
        %2630 = vmatpush2.bf16.msra.mxu0 %v2200
        %2631 = vmatprep.subr.bf16.mxu0 %v2185
        %2632 = vmatpush2.bf16.msra.mxu0 %v2184
        %2633 = vmatprep.subr.bf16.mxu0 %v2169
        %2634 = vmatpush2.bf16.msra.mxu0 %v2168
        %2635 = vmatprep.subr.bf16.mxu0 %v2153
        %2636 = vmatpush2.bf16.msra.mxu0 %v2152
        %2637 = vmatprep.subr.bf16.mxu0 %v2137
        %2638 = vmatpush2.bf16.msra.mxu0 %v2136
        %2639 = vmatprep.subr.bf16.mxu0 %v2121
        %2640 = vmatpush2.bf16.msra.mxu0 %v2120
        %2641 = vmatprep.subr.bf16.mxu0 %v2105
        %2642 = vmatpush2.bf16.msra.mxu0 %v2104
        %2643 = vmatprep.mubr.bf16.mxu0 %v861
        %2644 = vmatmul.mubr.bf16.gmra.mxu0 %v860
        %v2645 = vpop.f32.mrf.mxu0
        %v2646 = vadd.f32 %v1149, %v2645
        %v2647 = vpop.f32.mrf.mxu0
        %v2648 = vadd.f32 %v1153, %v2647
        %v2649 = vpop.f32.mrf.mxu0
        %v2650 = vadd.f32 %v1149, %v2649
        %v2651 = vpop.f32.mrf.mxu0
        %v2652 = vadd.f32 %v1153, %v2651
        %2653 = vdwg.mxu0
        %2654 = vmatprep.subr.bf16.mxu0 %v2091
        %2655 = vmatpush1.bf16.msra.mxu0 %v2090
        %2656 = vmatprep.subr.bf16.mxu0 %v2075
        %2657 = vmatpush1.bf16.msra.mxu0 %v2074
        %2658 = vmatprep.subr.bf16.mxu0 %v2059
        %2659 = vmatpush1.bf16.msra.mxu0 %v2058
        %2660 = vmatprep.subr.bf16.mxu0 %v2043
        %2661 = vmatpush1.bf16.msra.mxu0 %v2042
        %2662 = vmatprep.subr.bf16.mxu0 %v2027
        %2663 = vmatpush1.bf16.msra.mxu0 %v2026
        %2664 = vmatprep.subr.bf16.mxu0 %v2011
        %2665 = vmatpush1.bf16.msra.mxu0 %v2010
        %2666 = vmatprep.subr.bf16.mxu0 %v1995
        %2667 = vmatpush1.bf16.msra.mxu0 %v1994
        %2668 = vmatprep.subr.bf16.mxu0 %v1979
        %2669 = vmatpush1.bf16.msra.mxu0 %v1978
        %2670 = vmatprep.subr.bf16.mxu0 %v2219
        %2671 = vmatpush2.bf16.msra.mxu0 %v2218
        %2672 = vmatprep.subr.bf16.mxu0 %v2203
        %2673 = vmatpush2.bf16.msra.mxu0 %v2202
        %2674 = vmatprep.subr.bf16.mxu0 %v2187
        %2675 = vmatpush2.bf16.msra.mxu0 %v2186
        %2676 = vmatprep.subr.bf16.mxu0 %v2171
        %2677 = vmatpush2.bf16.msra.mxu0 %v2170
        %2678 = vmatprep.subr.bf16.mxu0 %v2155
        %2679 = vmatpush2.bf16.msra.mxu0 %v2154
        %2680 = vmatprep.subr.bf16.mxu0 %v2139
        %2681 = vmatpush2.bf16.msra.mxu0 %v2138
        %2682 = vmatprep.subr.bf16.mxu0 %v2123
        %2683 = vmatpush2.bf16.msra.mxu0 %v2122
        %2684 = vmatprep.subr.bf16.mxu0 %v2107
        %2685 = vmatpush2.bf16.msra.mxu0 %v2106
        %2686 = vmatprep.mubr.bf16.mxu0 %v861
        %2687 = vmatmul.mubr.bf16.gmra.mxu0 %v860
        %v2688 = vpop.f32.mrf.mxu0
        %v2689 = vadd.f32 %v1157, %v2688
        %v2690 = vpop.f32.mrf.mxu0
        %v2691 = vadd.f32 %v1161, %v2690
        %v2692 = vpop.f32.mrf.mxu0
        %v2693 = vadd.f32 %v1157, %v2692
        %v2694 = vpop.f32.mrf.mxu0
        %v2695 = vadd.f32 %v1161, %v2694
        %2696 = vdwg.mxu0
        %2697 = vmatprep.subr.bf16.mxu0 %v2093
        %2698 = vmatpush1.bf16.msra.mxu0 %v2092
        %2699 = vmatprep.subr.bf16.mxu0 %v2077
        %2700 = vmatpush1.bf16.msra.mxu0 %v2076
        %2701 = vmatprep.subr.bf16.mxu0 %v2061
        %2702 = vmatpush1.bf16.msra.mxu0 %v2060
        %2703 = vmatprep.subr.bf16.mxu0 %v2045
        %2704 = vmatpush1.bf16.msra.mxu0 %v2044
        %2705 = vmatprep.subr.bf16.mxu0 %v2029
        %2706 = vmatpush1.bf16.msra.mxu0 %v2028
        %2707 = vmatprep.subr.bf16.mxu0 %v2013
        %2708 = vmatpush1.bf16.msra.mxu0 %v2012
        %2709 = vmatprep.subr.bf16.mxu0 %v1997
        %2710 = vmatpush1.bf16.msra.mxu0 %v1996
        %2711 = vmatprep.subr.bf16.mxu0 %v1981
        %2712 = vmatpush1.bf16.msra.mxu0 %v1980
        %2713 = vmatprep.subr.bf16.mxu0 %v2221
        %2714 = vmatpush2.bf16.msra.mxu0 %v2220
        %2715 = vmatprep.subr.bf16.mxu0 %v2205
        %2716 = vmatpush2.bf16.msra.mxu0 %v2204
        %2717 = vmatprep.subr.bf16.mxu0 %v2189
        %2718 = vmatpush2.bf16.msra.mxu0 %v2188
        %2719 = vmatprep.subr.bf16.mxu0 %v2173
        %2720 = vmatpush2.bf16.msra.mxu0 %v2172
        %2721 = vmatprep.subr.bf16.mxu0 %v2157
        %2722 = vmatpush2.bf16.msra.mxu0 %v2156
        %2723 = vmatprep.subr.bf16.mxu0 %v2141
        %2724 = vmatpush2.bf16.msra.mxu0 %v2140
        %2725 = vmatprep.subr.bf16.mxu0 %v2125
        %2726 = vmatpush2.bf16.msra.mxu0 %v2124
        %2727 = vmatprep.subr.bf16.mxu0 %v2109
        %2728 = vmatpush2.bf16.msra.mxu0 %v2108
        %2729 = vmatprep.mubr.bf16.mxu0 %v861
        %2730 = vmatmul.mubr.bf16.gmra.mxu0 %v860
        %v2731 = vpop.f32.mrf.mxu0
        %v2732 = vadd.f32 %v1165, %v2731
        %v2733 = vpop.f32.mrf.mxu0
        %v2734 = vadd.f32 %v1169, %v2733
        %v2735 = vpop.f32.mrf.mxu0
        %v2736 = vadd.f32 %v1165, %v2735
        %v2737 = vpop.f32.mrf.mxu0
        %v2738 = vadd.f32 %v1169, %v2737
        %2739 = vdwg.mxu0
        %2740 = vmatprep.subr.bf16.mxu0 %v2095
        %2741 = vmatpush1.bf16.msra.mxu0 %v2094
        %2742 = vmatprep.subr.bf16.mxu0 %v2079
        %2743 = vmatpush1.bf16.msra.mxu0 %v2078
        %2744 = vmatprep.subr.bf16.mxu0 %v2063
        %2745 = vmatpush1.bf16.msra.mxu0 %v2062
        %2746 = vmatprep.subr.bf16.mxu0 %v2047
        %2747 = vmatpush1.bf16.msra.mxu0 %v2046
        %2748 = vmatprep.subr.bf16.mxu0 %v2031
        %2749 = vmatpush1.bf16.msra.mxu0 %v2030
        %2750 = vmatprep.subr.bf16.mxu0 %v2015
        %2751 = vmatpush1.bf16.msra.mxu0 %v2014
        %2752 = vmatprep.subr.bf16.mxu0 %v1999
        %2753 = vmatpush1.bf16.msra.mxu0 %v1998
        %2754 = vmatprep.subr.bf16.mxu0 %v1983
        %2755 = vmatpush1.bf16.msra.mxu0 %v1982
        %2756 = vmatprep.subr.bf16.mxu0 %v2223
        %2757 = vmatpush2.bf16.msra.mxu0 %v2222
        %2758 = vmatprep.subr.bf16.mxu0 %v2207
        %2759 = vmatpush2.bf16.msra.mxu0 %v2206
        %2760 = vmatprep.subr.bf16.mxu0 %v2191
        %2761 = vmatpush2.bf16.msra.mxu0 %v2190
        %2762 = vmatprep.subr.bf16.mxu0 %v2175
        %2763 = vmatpush2.bf16.msra.mxu0 %v2174
        %2764 = vmatprep.subr.bf16.mxu0 %v2159
        %2765 = vmatpush2.bf16.msra.mxu0 %v2158
        %2766 = vmatprep.subr.bf16.mxu0 %v2143
        %2767 = vmatpush2.bf16.msra.mxu0 %v2142
        %2768 = vmatprep.subr.bf16.mxu0 %v2127
        %2769 = vmatpush2.bf16.msra.mxu0 %v2126
        %2770 = vmatprep.subr.bf16.mxu0 %v2111
        %2771 = vmatpush2.bf16.msra.mxu0 %v2110
        %2772 = vmatprep.mubr.bf16.mxu0 %v861
        %2773 = vmatmul.mubr.bf16.gmra.mxu0 %v860
        %v2774 = vpop.f32.mrf.mxu0
        %v2775 = vadd.f32 %v1173, %v2774
        %v2776 = vpop.f32.mrf.mxu0
        %v2777 = vadd.f32 %v1177, %v2776
        %v2778 = vpop.f32.mrf.mxu0
        %v2779 = vadd.f32 %v1173, %v2778
        %v2780 = vpop.f32.mrf.mxu0
        %v2781 = vadd.f32 %v1177, %v2780
        %2782 = vdwg.mxu0
        %2783 = vmatprep.subr.bf16.mxu0 %v2097
        %2784 = vmatpush1.bf16.msra.mxu0 %v2096
        %2785 = vmatprep.subr.bf16.mxu0 %v2081
        %2786 = vmatpush1.bf16.msra.mxu0 %v2080
        %2787 = vmatprep.subr.bf16.mxu0 %v2065
        %2788 = vmatpush1.bf16.msra.mxu0 %v2064
        %2789 = vmatprep.subr.bf16.mxu0 %v2049
        %2790 = vmatpush1.bf16.msra.mxu0 %v2048
        %2791 = vmatprep.subr.bf16.mxu0 %v2033
        %2792 = vmatpush1.bf16.msra.mxu0 %v2032
        %2793 = vmatprep.subr.bf16.mxu0 %v2017
        %2794 = vmatpush1.bf16.msra.mxu0 %v2016
        %2795 = vmatprep.subr.bf16.mxu0 %v2001
        %2796 = vmatpush1.bf16.msra.mxu0 %v2000
        %2797 = vmatprep.subr.bf16.mxu0 %v1985
        %2798 = vmatpush1.bf16.msra.mxu0 %v1984
        %2799 = vmatprep.subr.bf16.mxu0 %v2225
        %2800 = vmatpush2.bf16.msra.mxu0 %v2224
        %2801 = vmatprep.subr.bf16.mxu0 %v2209
        %2802 = vmatpush2.bf16.msra.mxu0 %v2208
        %2803 = vmatprep.subr.bf16.mxu0 %v2193
        %2804 = vmatpush2.bf16.msra.mxu0 %v2192
        %2805 = vmatprep.subr.bf16.mxu0 %v2177
        %2806 = vmatpush2.bf16.msra.mxu0 %v2176
        %2807 = vmatprep.subr.bf16.mxu0 %v2161
        %2808 = vmatpush2.bf16.msra.mxu0 %v2160
        %2809 = vmatprep.subr.bf16.mxu0 %v2145
        %2810 = vmatpush2.bf16.msra.mxu0 %v2144
        %2811 = vmatprep.subr.bf16.mxu0 %v2129
        %2812 = vmatpush2.bf16.msra.mxu0 %v2128
        %2813 = vmatprep.subr.bf16.mxu0 %v2113
        %2814 = vmatpush2.bf16.msra.mxu0 %v2112
        %2815 = vmatprep.mubr.bf16.mxu0 %v861
        %2816 = vmatmul.mubr.bf16.gmra.mxu0 %v860
        %v2817 = vpop.f32.mrf.mxu0
        %v2818 = vadd.f32 %v1181, %v2817
        %v2819 = vpop.f32.mrf.mxu0
        %v2820 = vadd.f32 %v1185, %v2819
        %v2821 = vpop.f32.mrf.mxu0
        %v2822 = vadd.f32 %v1181, %v2821
        %v2823 = vpop.f32.mrf.mxu0
        %v2824 = vadd.f32 %v1185, %v2823
        %2825 = vdwg.mxu0
        %v2826 = vpack.c.bf16 %v2521, %v2517
        %v2827 = vpack.c.bf16 %v2607, %v2603
        %v2828 = vpack.c.bf16 %v2693, %v2689
        %v2829 = vpack.c.bf16 %v2695, %v2691
        %2830 = vmatprep.subr.bf16.mxu0 0
        %2831 = vmatpush1.bf16.xpose.msra.mxu0 0
        %2832 = vmatprep.subr.bf16.mxu0 0
        %2833 = vmatpush1.bf16.xpose.msra.mxu0 0
        %2834 = vmatprep.subr.bf16.mxu0 0
        %2835 = vmatpush1.bf16.xpose.msra.mxu0 0
        %2836 = vmatprep.subr.bf16.mxu0 0
        %2837 = vmatpush1.bf16.xpose.msra.mxu0 0
        %2838 = vmatprep.subr.bf16.mxu0 0
        %2839 = vmatpush1.bf16.xpose.msra.mxu0 0
        %2840 = vmatprep.subr.bf16.mxu0 0
        %2841 = vmatpush1.bf16.xpose.msra.mxu0 0
        %2842 = vmatprep.subr.bf16.mxu0 0
        %2843 = vmatpush1.bf16.xpose.msra.mxu0 0
        %2844 = vmatprep.subr.bf16.mxu0 0
        %2845 = vmatpush1.bf16.xpose.msra.mxu0 %v2827
        %2846 = vmatprep.subr.bf16.mxu0 0
        %2847 = vmatpush2.bf16.xpose.msra.mxu0 0
        %2848 = vmatprep.subr.bf16.mxu0 0
        %2849 = vmatpush2.bf16.xpose.msra.mxu0 0
        %2850 = vmatprep.subr.bf16.mxu0 0
        %2851 = vmatpush2.bf16.xpose.msra.mxu0 0
        %2852 = vmatprep.subr.bf16.mxu0 0
        %2853 = vmatpush2.bf16.xpose.msra.mxu0 0
        %2854 = vmatprep.subr.bf16.mxu0 0
        %2855 = vmatpush2.bf16.xpose.msra.mxu0 0
        %2856 = vmatprep.subr.bf16.mxu0 0
        %2857 = vmatpush2.bf16.xpose.msra.mxu0 0
        %2858 = vmatprep.subr.bf16.mxu0 0
        %2859 = vmatpush2.bf16.xpose.msra.mxu0 0
        %2860 = vmatprep.subr.bf16.mxu0 0
        %2861 = vmatpush2.bf16.xpose.msra.mxu0 0
        %2862 = vmatprep.mubr.bf16.mxu0 0
        %2863 = vmatmul.mubr.bf16.gmra.mxu0 %v2826
        %v2864 = vpop.f32.mrf.mxu0
        %v2865 = vadd.f32 0.0, %v2864
        %v2866 = vpop.f32.mrf.mxu0
        %v2867 = vpop.f32.mrf.mxu0
        %v2868 = vadd.f32 0.0, %v2867
        %v2869 = vpop.f32.mrf.mxu0
        %2870 = vdwg.mxu0
        %v2871 = vmul.f32 %v2865, 0.125
        %v2872 = vmul.f32 %v2868, 0.125
        %vm2873 = vcmask 130048
        %v2874 = vsel %vm2873, %v2871, -inf
        %2875 = vmax.xlane.f32.xlu0 %v2874
        %v2876 = vpop.xlane.xlu0 %2875
        %v2877 = vsel %vm2873, %v2872, -inf
        %2878 = vmax.xlane.f32.xlu0 %v2877
        %v2879 = vpop.xlane.xlu0 %2878
        %v2880 = vsub.f32 %v2871, %v2876
        %v2881 = vsub.f32 %v2872, %v2879
        %v2882 = vmul.f32 %v2880, 1.442695
        %v2883 = vpow.pop %v2882
        %v2884 = vmul.f32 %v2881, 1.442695
        %v2885 = vpow.pop %v2884
        %v2886 = vsel %vm2873, %v2883, 0.0
        %2887 = vadd.xlane.f32.xlu0 %v2886
        %v2888 = vpop.xlane.xlu0 %2887
        %v2889 = vsel %vm2873, %v2885, 0.0
        %2890 = vadd.xlane.f32.xlu0 %v2889
        %v2891 = vpop.xlane.xlu0 %2890
        %v2892 = vrcp.pop %v2888
        %v2893 = vrcp.pop %v2891
        %v2894 = vmul.f32 %v2883, %v2892
        %v2895 = vmul.f32 %v2885, %v2893
        %v2896 = vpack.c.bf16 %v2895, %v2894
        %v2897 = vpack.c.bf16 %v2523, %v2519
        %v2898 = vpack.c.bf16 %v2609, %v2605
        %v2899 = vpack.c.bf16 %v2736, %v2732
        %v2900 = vpack.c.bf16 %v2738, %v2734
        %2901 = vmatprep.subr.bf16.mxu0 0
        %2902 = vmatpush1.bf16.xpose.msra.mxu0 0
        %2903 = vmatprep.subr.bf16.mxu0 0
        %2904 = vmatpush1.bf16.xpose.msra.mxu0 0
        %2905 = vmatprep.subr.bf16.mxu0 0
        %2906 = vmatpush1.bf16.xpose.msra.mxu0 0
        %2907 = vmatprep.subr.bf16.mxu0 0
        %2908 = vmatpush1.bf16.xpose.msra.mxu0 0
        %2909 = vmatprep.subr.bf16.mxu0 0
        %2910 = vmatpush1.bf16.xpose.msra.mxu0 0
        %2911 = vmatprep.subr.bf16.mxu0 0
        %2912 = vmatpush1.bf16.xpose.msra.mxu0 0
        %2913 = vmatprep.subr.bf16.mxu0 0
        %2914 = vmatpush1.bf16.xpose.msra.mxu0 0
        %2915 = vmatprep.subr.bf16.mxu0 0
        %2916 = vmatpush1.bf16.xpose.msra.mxu0 %v2898
        %2917 = vmatprep.subr.bf16.mxu0 0
        %2918 = vmatpush2.bf16.xpose.msra.mxu0 0
        %2919 = vmatprep.subr.bf16.mxu0 0
        %2920 = vmatpush2.bf16.xpose.msra.mxu0 0
        %2921 = vmatprep.subr.bf16.mxu0 0
        %2922 = vmatpush2.bf16.xpose.msra.mxu0 0
        %2923 = vmatprep.subr.bf16.mxu0 0
        %2924 = vmatpush2.bf16.xpose.msra.mxu0 0
        %2925 = vmatprep.subr.bf16.mxu0 0
        %2926 = vmatpush2.bf16.xpose.msra.mxu0 0
        %2927 = vmatprep.subr.bf16.mxu0 0
        %2928 = vmatpush2.bf16.xpose.msra.mxu0 0
        %2929 = vmatprep.subr.bf16.mxu0 0
        %2930 = vmatpush2.bf16.xpose.msra.mxu0 0
        %2931 = vmatprep.subr.bf16.mxu0 0
        %2932 = vmatpush2.bf16.xpose.msra.mxu0 0
        %2933 = vmatprep.mubr.bf16.mxu0 0
        %2934 = vmatmul.mubr.bf16.gmra.mxu0 %v2897
        %v2935 = vpop.f32.mrf.mxu0
        %v2936 = vadd.f32 0.0, %v2935
        %v2937 = vpop.f32.mrf.mxu0
        %v2938 = vpop.f32.mrf.mxu0
        %v2939 = vadd.f32 0.0, %v2938
        %v2940 = vpop.f32.mrf.mxu0
        %2941 = vdwg.mxu0
        %v2942 = vmul.f32 %v2936, 0.125
        %v2943 = vmul.f32 %v2939, 0.125
        %v2944 = vsel %vm2873, %v2942, -inf
        %2945 = vmax.xlane.f32.xlu0 %v2944
        %v2946 = vpop.xlane.xlu0 %2945
        %v2947 = vsel %vm2873, %v2943, -inf
        %2948 = vmax.xlane.f32.xlu0 %v2947
        %v2949 = vpop.xlane.xlu0 %2948
        %v2950 = vsub.f32 %v2942, %v2946
        %v2951 = vsub.f32 %v2943, %v2949
        %v2952 = vmul.f32 %v2950, 1.442695
        %v2953 = vpow.pop %v2952
        %v2954 = vmul.f32 %v2951, 1.442695
        %v2955 = vpow.pop %v2954
        %v2956 = vsel %vm2873, %v2953, 0.0
        %2957 = vadd.xlane.f32.xlu0 %v2956
        %v2958 = vpop.xlane.xlu0 %2957
        %v2959 = vsel %vm2873, %v2955, 0.0
        %2960 = vadd.xlane.f32.xlu0 %v2959
        %v2961 = vpop.xlane.xlu0 %2960
        %v2962 = vrcp.pop %v2958
        %v2963 = vrcp.pop %v2961
        %v2964 = vmul.f32 %v2953, %v2962
        %v2965 = vmul.f32 %v2955, %v2963
        %v2966 = vpack.c.bf16 %v2965, %v2964
        %v2968 = vsel %vm2873, %v2966, 0
        %2970 = vmatprep.subr.bf16.mxu0 0
        %2971 = vmatpush1.bf16.msra.mxu0 0
        %2972 = vmatprep.subr.bf16.mxu0 0
        %2973 = vmatpush1.bf16.msra.mxu0 0
        %2974 = vmatprep.subr.bf16.mxu0 0
        %2975 = vmatpush1.bf16.msra.mxu0 0
        %2976 = vmatprep.subr.bf16.mxu0 0
        %2977 = vmatpush1.bf16.msra.mxu0 0
        %2978 = vmatprep.subr.bf16.mxu0 0
        %2979 = vmatpush1.bf16.msra.mxu0 0
        %2980 = vmatprep.subr.bf16.mxu0 0
        %2981 = vmatpush1.bf16.msra.mxu0 0
        %2982 = vmatprep.subr.bf16.mxu0 0
        %2983 = vmatpush1.bf16.msra.mxu0 0
        %2984 = vmatprep.subr.bf16.mxu0 %v2900
        %2985 = vmatpush1.bf16.msra.mxu0 %v2899
        %2986 = vmatprep.subr.bf16.mxu0 0
        %2987 = vmatpush2.bf16.msra.mxu0 0
        %2988 = vmatprep.subr.bf16.mxu0 0
        %2989 = vmatpush2.bf16.msra.mxu0 0
        %2990 = vmatprep.subr.bf16.mxu0 0
        %2991 = vmatpush2.bf16.msra.mxu0 0
        %2992 = vmatprep.subr.bf16.mxu0 0
        %2993 = vmatpush2.bf16.msra.mxu0 0
        %2994 = vmatprep.subr.bf16.mxu0 0
        %2995 = vmatpush2.bf16.msra.mxu0 0
        %2996 = vmatprep.subr.bf16.mxu0 0
        %2997 = vmatpush2.bf16.msra.mxu0 0
        %2998 = vmatprep.subr.bf16.mxu0 0
        %2999 = vmatpush2.bf16.msra.mxu0 0
        %3000 = vmatprep.subr.bf16.mxu0 0
        %3001 = vmatpush2.bf16.msra.mxu0 0
        %3002 = vmatprep.mubr.bf16.mxu0 0
        %3003 = vmatmul.mubr.bf16.gmra.mxu0 %v2968
        %v3004 = vpop.f32.mrf.mxu0
        %v3005 = vadd.f32 0.0, %v3004
        %v3006 = vpop.f32.mrf.mxu0
        %v3007 = vadd.f32 0.0, %v3006
        %v3008 = vpop.f32.mrf.mxu0
        %v3009 = vadd.f32 0.0, %v3008
        %v3010 = vpop.f32.mrf.mxu0
        %v3011 = vadd.f32 0.0, %v3010
        %3012 = vdwg.mxu0
        %v3014 = vsel %vm2873, %v2896, 0
        %3016 = vmatprep.subr.bf16.mxu0 0
        %3017 = vmatpush1.bf16.msra.mxu0 0
        %3018 = vmatprep.subr.bf16.mxu0 0
        %3019 = vmatpush1.bf16.msra.mxu0 0
        %3020 = vmatprep.subr.bf16.mxu0 0
        %3021 = vmatpush1.bf16.msra.mxu0 0
        %3022 = vmatprep.subr.bf16.mxu0 0
        %3023 = vmatpush1.bf16.msra.mxu0 0
        %3024 = vmatprep.subr.bf16.mxu0 0
        %3025 = vmatpush1.bf16.msra.mxu0 0
        %3026 = vmatprep.subr.bf16.mxu0 0
        %3027 = vmatpush1.bf16.msra.mxu0 0
        %3028 = vmatprep.subr.bf16.mxu0 0
        %3029 = vmatpush1.bf16.msra.mxu0 0
        %3030 = vmatprep.subr.bf16.mxu0 %v2829
        %3031 = vmatpush1.bf16.msra.mxu0 %v2828
        %3032 = vmatprep.subr.bf16.mxu0 0
        %3033 = vmatpush2.bf16.msra.mxu0 0
        %3034 = vmatprep.subr.bf16.mxu0 0
        %3035 = vmatpush2.bf16.msra.mxu0 0
        %3036 = vmatprep.subr.bf16.mxu0 0
        %3037 = vmatpush2.bf16.msra.mxu0 0
        %3038 = vmatprep.subr.bf16.mxu0 0
        %3039 = vmatpush2.bf16.msra.mxu0 0
        %3040 = vmatprep.subr.bf16.mxu0 0
        %3041 = vmatpush2.bf16.msra.mxu0 0
        %3042 = vmatprep.subr.bf16.mxu0 0
        %3043 = vmatpush2.bf16.msra.mxu0 0
        %3044 = vmatprep.subr.bf16.mxu0 0
        %3045 = vmatpush2.bf16.msra.mxu0 0
        %3046 = vmatprep.subr.bf16.mxu0 0
        %3047 = vmatpush2.bf16.msra.mxu0 0
        %3048 = vmatprep.mubr.bf16.mxu0 0
        %3049 = vmatmul.mubr.bf16.gmra.mxu0 %v3014
        %v3050 = vpop.f32.mrf.mxu0
        %v3051 = vadd.f32 %v3005, %v3050
        %v3052 = vpop.f32.mrf.mxu0
        %v3053 = vadd.f32 %v3007, %v3052
        %v3054 = vpop.f32.mrf.mxu0
        %v3055 = vadd.f32 %v3009, %v3054
        %v3056 = vpop.f32.mrf.mxu0
        %v3057 = vadd.f32 %v3011, %v3056
        %3058 = vdwg.mxu0
        %v3059 = vpack.c.bf16 %v2564, %v2560
        %v3060 = vpack.c.bf16 %v2650, %v2646
        %v3061 = vpack.c.bf16 %v2779, %v2775
        %v3062 = vpack.c.bf16 %v2781, %v2777
        %3063 = vmatprep.subr.bf16.mxu0 0
        %3064 = vmatpush1.bf16.xpose.msra.mxu0 0
        %3065 = vmatprep.subr.bf16.mxu0 0
        %3066 = vmatpush1.bf16.xpose.msra.mxu0 0
        %3067 = vmatprep.subr.bf16.mxu0 0
        %3068 = vmatpush1.bf16.xpose.msra.mxu0 0
        %3069 = vmatprep.subr.bf16.mxu0 0
        %3070 = vmatpush1.bf16.xpose.msra.mxu0 0
        %3071 = vmatprep.subr.bf16.mxu0 0
        %3072 = vmatpush1.bf16.xpose.msra.mxu0 0
        %3073 = vmatprep.subr.bf16.mxu0 0
        %3074 = vmatpush1.bf16.xpose.msra.mxu0 0
        %3075 = vmatprep.subr.bf16.mxu0 0
        %3076 = vmatpush1.bf16.xpose.msra.mxu0 0
        %3077 = vmatprep.subr.bf16.mxu0 0
        %3078 = vmatpush1.bf16.xpose.msra.mxu0 %v3060
        %3079 = vmatprep.subr.bf16.mxu0 0
        %3080 = vmatpush2.bf16.xpose.msra.mxu0 0
        %3081 = vmatprep.subr.bf16.mxu0 0
        %3082 = vmatpush2.bf16.xpose.msra.mxu0 0
        %3083 = vmatprep.subr.bf16.mxu0 0
        %3084 = vmatpush2.bf16.xpose.msra.mxu0 0
        %3085 = vmatprep.subr.bf16.mxu0 0
        %3086 = vmatpush2.bf16.xpose.msra.mxu0 0
        %3087 = vmatprep.subr.bf16.mxu0 0
        %3088 = vmatpush2.bf16.xpose.msra.mxu0 0
        %3089 = vmatprep.subr.bf16.mxu0 0
        %3090 = vmatpush2.bf16.xpose.msra.mxu0 0
        %3091 = vmatprep.subr.bf16.mxu0 0
        %3092 = vmatpush2.bf16.xpose.msra.mxu0 0
        %3093 = vmatprep.subr.bf16.mxu0 0
        %3094 = vmatpush2.bf16.xpose.msra.mxu0 0
        %3095 = vmatprep.mubr.bf16.mxu0 0
        %3096 = vmatmul.mubr.bf16.gmra.mxu0 %v3059
        %v3097 = vpop.f32.mrf.mxu0
        %v3098 = vadd.f32 0.0, %v3097
        %v3099 = vpop.f32.mrf.mxu0
        %v3100 = vpop.f32.mrf.mxu0
        %v3101 = vadd.f32 0.0, %v3100
        %v3102 = vpop.f32.mrf.mxu0
        %3103 = vdwg.mxu0
        %v3104 = vmul.f32 %v3098, 0.125
        %v3105 = vmul.f32 %v3101, 0.125
        %v3106 = vsel %vm2873, %v3104, -inf
        %3107 = vmax.xlane.f32.xlu0 %v3106
        %v3108 = vpop.xlane.xlu0 %3107
        %v3109 = vsel %vm2873, %v3105, -inf
        %3110 = vmax.xlane.f32.xlu0 %v3109
        %v3111 = vpop.xlane.xlu0 %3110
        %v3112 = vsub.f32 %v3104, %v3108
        %v3113 = vsub.f32 %v3105, %v3111
        %v3114 = vmul.f32 %v3112, 1.442695
        %v3115 = vpow.pop %v3114
        %v3116 = vmul.f32 %v3113, 1.442695
        %v3117 = vpow.pop %v3116
        %v3118 = vsel %vm2873, %v3115, 0.0
        %3119 = vadd.xlane.f32.xlu0 %v3118
        %v3120 = vpop.xlane.xlu0 %3119
        %v3121 = vsel %vm2873, %v3117, 0.0
        %3122 = vadd.xlane.f32.xlu0 %v3121
        %v3123 = vpop.xlane.xlu0 %3122
        %v3124 = vrcp.pop %v3120
        %v3125 = vrcp.pop %v3123
        %v3126 = vmul.f32 %v3115, %v3124
        %v3127 = vmul.f32 %v3117, %v3125
        %v3128 = vpack.c.bf16 %v3127, %v3126
        %v3130 = vsel %vm2873, %v3128, 0
        %3132 = vmatprep.subr.bf16.mxu0 0
        %3133 = vmatpush1.bf16.msra.mxu0 0
        %3134 = vmatprep.subr.bf16.mxu0 0
        %3135 = vmatpush1.bf16.msra.mxu0 0
        %3136 = vmatprep.subr.bf16.mxu0 0
        %3137 = vmatpush1.bf16.msra.mxu0 0
        %3138 = vmatprep.subr.bf16.mxu0 0
        %3139 = vmatpush1.bf16.msra.mxu0 0
        %3140 = vmatprep.subr.bf16.mxu0 0
        %3141 = vmatpush1.bf16.msra.mxu0 0
        %3142 = vmatprep.subr.bf16.mxu0 0
        %3143 = vmatpush1.bf16.msra.mxu0 0
        %3144 = vmatprep.subr.bf16.mxu0 0
        %3145 = vmatpush1.bf16.msra.mxu0 0
        %3146 = vmatprep.subr.bf16.mxu0 %v3062
        %3147 = vmatpush1.bf16.msra.mxu0 %v3061
        %3148 = vmatprep.subr.bf16.mxu0 0
        %3149 = vmatpush2.bf16.msra.mxu0 0
        %3150 = vmatprep.subr.bf16.mxu0 0
        %3151 = vmatpush2.bf16.msra.mxu0 0
        %3152 = vmatprep.subr.bf16.mxu0 0
        %3153 = vmatpush2.bf16.msra.mxu0 0
        %3154 = vmatprep.subr.bf16.mxu0 0
        %3155 = vmatpush2.bf16.msra.mxu0 0
        %3156 = vmatprep.subr.bf16.mxu0 0
        %3157 = vmatpush2.bf16.msra.mxu0 0
        %3158 = vmatprep.subr.bf16.mxu0 0
        %3159 = vmatpush2.bf16.msra.mxu0 0
        %3160 = vmatprep.subr.bf16.mxu0 0
        %3161 = vmatpush2.bf16.msra.mxu0 0
        %3162 = vmatprep.subr.bf16.mxu0 0
        %3163 = vmatpush2.bf16.msra.mxu0 0
        %3164 = vmatprep.mubr.bf16.mxu0 0
        %3165 = vmatmul.mubr.bf16.gmra.mxu0 %v3130
        %v3166 = vpop.f32.mrf.mxu0
        %v3167 = vadd.f32 0.0, %v3166
        %v3168 = vpop.f32.mrf.mxu0
        %v3169 = vadd.f32 0.0, %v3168
        %v3170 = vpop.f32.mrf.mxu0
        %v3171 = vadd.f32 0.0, %v3170
        %v3172 = vpop.f32.mrf.mxu0
        %v3173 = vadd.f32 0.0, %v3172
        %3174 = vdwg.mxu0
        %v3175 = vadd.f32 %v3051, %v3167
        %v3176 = vadd.f32 %v3053, %v3169
        %v3177 = vadd.f32 %v3055, %v3171
        %v3178 = vadd.f32 %v3057, %v3173
        %v3179 = vpack.c.bf16 %v2566, %v2562
        %v3180 = vpack.c.bf16 %v2652, %v2648
        %v3181 = vpack.c.bf16 %v2822, %v2818
        %v3182 = vpack.c.bf16 %v2824, %v2820
        %3183 = vmatprep.subr.bf16.mxu0 0
        %3184 = vmatpush1.bf16.xpose.msra.mxu0 0
        %3185 = vmatprep.subr.bf16.mxu0 0
        %3186 = vmatpush1.bf16.xpose.msra.mxu0 0
        %3187 = vmatprep.subr.bf16.mxu0 0
        %3188 = vmatpush1.bf16.xpose.msra.mxu0 0
        %3189 = vmatprep.subr.bf16.mxu0 0
        %3190 = vmatpush1.bf16.xpose.msra.mxu0 0
        %3191 = vmatprep.subr.bf16.mxu0 0
        %3192 = vmatpush1.bf16.xpose.msra.mxu0 0
        %3193 = vmatprep.subr.bf16.mxu0 0
        %3194 = vmatpush1.bf16.xpose.msra.mxu0 0
        %3195 = vmatprep.subr.bf16.mxu0 0
        %3196 = vmatpush1.bf16.xpose.msra.mxu0 0
        %3197 = vmatprep.subr.bf16.mxu0 0
        %3198 = vmatpush1.bf16.xpose.msra.mxu0 %v3180
        %3199 = vmatprep.subr.bf16.mxu0 0
        %3200 = vmatpush2.bf16.xpose.msra.mxu0 0
        %3201 = vmatprep.subr.bf16.mxu0 0
        %3202 = vmatpush2.bf16.xpose.msra.mxu0 0
        %3203 = vmatprep.subr.bf16.mxu0 0
        %3204 = vmatpush2.bf16.xpose.msra.mxu0 0
        %3205 = vmatprep.subr.bf16.mxu0 0
        %3206 = vmatpush2.bf16.xpose.msra.mxu0 0
        %3207 = vmatprep.subr.bf16.mxu0 0
        %3208 = vmatpush2.bf16.xpose.msra.mxu0 0
        %3209 = vmatprep.subr.bf16.mxu0 0
        %3210 = vmatpush2.bf16.xpose.msra.mxu0 0
        %3211 = vmatprep.subr.bf16.mxu0 0
        %3212 = vmatpush2.bf16.xpose.msra.mxu0 0
        %3213 = vmatprep.subr.bf16.mxu0 0
        %3214 = vmatpush2.bf16.xpose.msra.mxu0 0
        %3215 = vmatprep.mubr.bf16.mxu0 0
        %3216 = vmatmul.mubr.bf16.gmra.mxu0 %v3179
        %v3217 = vpop.f32.mrf.mxu0
        %v3218 = vadd.f32 0.0, %v3217
        %v3219 = vpop.f32.mrf.mxu0
        %v3220 = vpop.f32.mrf.mxu0
        %v3221 = vadd.f32 0.0, %v3220
        %v3222 = vpop.f32.mrf.mxu0
        %3223 = vdwg.mxu0
        %v3224 = vmul.f32 %v3218, 0.125
        %v3225 = vmul.f32 %v3221, 0.125
        %v3226 = vsel %vm2873, %v3224, -inf
        %3227 = vmax.xlane.f32.xlu0 %v3226
        %v3228 = vpop.xlane.xlu0 %3227
        %v3229 = vsel %vm2873, %v3225, -inf
        %3230 = vmax.xlane.f32.xlu0 %v3229
        %v3231 = vpop.xlane.xlu0 %3230
        %v3232 = vsub.f32 %v3224, %v3228
        %v3233 = vsub.f32 %v3225, %v3231
        %v3234 = vmul.f32 %v3232, 1.442695
        %v3235 = vpow.pop %v3234
        %v3236 = vmul.f32 %v3233, 1.442695
        %v3237 = vpow.pop %v3236
        %v3238 = vsel %vm2873, %v3235, 0.0
        %3239 = vadd.xlane.f32.xlu0 %v3238
        %v3240 = vpop.xlane.xlu0 %3239
        %v3241 = vsel %vm2873, %v3237, 0.0
        %3242 = vadd.xlane.f32.xlu0 %v3241
        %v3243 = vpop.xlane.xlu0 %3242
        %v3244 = vrcp.pop %v3240
        %v3245 = vrcp.pop %v3243
        %v3246 = vmul.f32 %v3235, %v3244
        %v3247 = vmul.f32 %v3237, %v3245
        %v3248 = vpack.c.bf16 %v3247, %v3246
        %v3250 = vsel %vm2873, %v3248, 0
        %3252 = vmatprep.subr.bf16.mxu0 0
        %3253 = vmatpush1.bf16.msra.mxu0 0
        %3254 = vmatprep.subr.bf16.mxu0 0
        %3255 = vmatpush1.bf16.msra.mxu0 0
        %3256 = vmatprep.subr.bf16.mxu0 0
        %3257 = vmatpush1.bf16.msra.mxu0 0
        %3258 = vmatprep.subr.bf16.mxu0 0
        %3259 = vmatpush1.bf16.msra.mxu0 0
        %3260 = vmatprep.subr.bf16.mxu0 0
        %3261 = vmatpush1.bf16.msra.mxu0 0
        %3262 = vmatprep.subr.bf16.mxu0 0
        %3263 = vmatpush1.bf16.msra.mxu0 0
        %3264 = vmatprep.subr.bf16.mxu0 0
        %3265 = vmatpush1.bf16.msra.mxu0 0
        %3266 = vmatprep.subr.bf16.mxu0 %v3182
        %3267 = vmatpush1.bf16.msra.mxu0 %v3181
        %3268 = vmatprep.subr.bf16.mxu0 0
        %3269 = vmatpush2.bf16.msra.mxu0 0
        %3270 = vmatprep.subr.bf16.mxu0 0
        %3271 = vmatpush2.bf16.msra.mxu0 0
        %3272 = vmatprep.subr.bf16.mxu0 0
        %3273 = vmatpush2.bf16.msra.mxu0 0
        %3274 = vmatprep.subr.bf16.mxu0 0
        %3275 = vmatpush2.bf16.msra.mxu0 0
        %3276 = vmatprep.subr.bf16.mxu0 0
        %3277 = vmatpush2.bf16.msra.mxu0 0
        %3278 = vmatprep.subr.bf16.mxu0 0
        %3279 = vmatpush2.bf16.msra.mxu0 0
        %3280 = vmatprep.subr.bf16.mxu0 0
        %3281 = vmatpush2.bf16.msra.mxu0 0
        %3282 = vmatprep.subr.bf16.mxu0 0
        %3283 = vmatpush2.bf16.msra.mxu0 0
        %3284 = vmatprep.mubr.bf16.mxu0 0
        %3285 = vmatmul.mubr.bf16.gmra.mxu0 %v3250
        %v3286 = vpop.f32.mrf.mxu0
        %v3287 = vadd.f32 0.0, %v3286
        %v3288 = vpop.f32.mrf.mxu0
        %v3289 = vadd.f32 0.0, %v3288
        %v3290 = vpop.f32.mrf.mxu0
        %v3291 = vadd.f32 0.0, %v3290
        %v3292 = vpop.f32.mrf.mxu0
        %v3293 = vadd.f32 0.0, %v3292
        %3294 = vdwg.mxu0
        %v3295 = vadd.f32 %v3175, %v3287
        %v3296 = vadd.f32 %v3176, %v3289
        %v3297 = vadd.f32 %v3177, %v3291
        %v3298 = vadd.f32 %v3178, %v3293
        %v3299 = vld [vmem:[%s659] sm:$0x3]
        %v3301 = vlaneseq
        %v3302 = vshrl.u32 %v3301, 7
        %v3303 = vsub.s32 0, %v3302
        %v3304 = vrot.slane %v3299, %v3303
        %v3305 = vlaneseq
        %v3306 = vshrl.u32 %v3305, 7
        %v3307 = vsub.s32 1, %v3306
        %v3308 = vrot.slane %v3299, %v3307
        %v3311 = vadd.f32 %v3295, %v3304
        %v3312 = vadd.f32 %v3296, %v3308
        %v3313 = vadd.f32 %v3297, %v3304
        %v3314 = vadd.f32 %v3298, %v3308
        %v3315 = vadd.f32 %v856, %v3311
        %v3316 = vadd.f32 %v857, %v3312
        %v3317 = vadd.f32 %v858, %v3313
        %v3318 = vadd.f32 %v859, %v3314
        %v3319 = vld [vmem:[%s668] sm:$0x3]
        %v3320 = vld [vmem:[%s677] sm:$0x3]
        %v3321 = vadd.f32 %v3315, %v3316
        %3322 = vadd.xlane.f32.xlu0 %v3321
        %v3323 = vpop.xlane.xlu0 %3322
        %v3324 = vadd.f32 %v3317, %v3318
        %3325 = vadd.xlane.f32.xlu0 %v3324
        %v3326 = vpop.xlane.xlu0 %3325
        %v3327 = vrcp.pop 256.0
        %v3328 = vmul.f32 %v3323, %v3327
        %v3329 = vmul.f32 %v3326, %v3327
        %v3330 = vsub.f32 %v3315, %v3328
        %v3331 = vsub.f32 %v3316, %v3328
        %v3332 = vsub.f32 %v3317, %v3329
        %v3333 = vsub.f32 %v3318, %v3329
        %v3334 = vmul.f32 %v3330, %v3330
        %v3335 = vmul.f32 %v3331, %v3331
        %v3336 = vmul.f32 %v3332, %v3332
        %v3337 = vmul.f32 %v3333, %v3333
        %v3338 = vadd.f32 %v3334, %v3335
        %3339 = vadd.xlane.f32.xlu0 %v3338
        %v3340 = vpop.xlane.xlu0 %3339
        %v3341 = vadd.f32 %v3336, %v3337
        %3342 = vadd.xlane.f32.xlu0 %v3341
        %v3343 = vpop.xlane.xlu0 %3342
        %v3344 = vmul.f32 %v3340, %v3327
        %v3345 = vmul.f32 %v3343, %v3327
        %v3346 = vadd.f32 %v3344, 1e-05
        %v3347 = vadd.f32 %v3345, 1e-05
        %v3348 = vrsqrt.pop %v3346
        %v3349 = vrsqrt.pop %v3347
        %v3350 = vmul.f32 %v3330, %v3348
        %v3351 = vmul.f32 %v3331, %v3348
        %v3352 = vmul.f32 %v3332, %v3349
        %v3353 = vmul.f32 %v3333, %v3349
        %v3355 = vlaneseq
        %v3356 = vshrl.u32 %v3355, 7
        %v3357 = vsub.s32 0, %v3356
        %v3358 = vrot.slane %v3319, %v3357
        %v3359 = vlaneseq
        %v3360 = vshrl.u32 %v3359, 7
        %v3361 = vsub.s32 1, %v3360
        %v3362 = vrot.slane %v3319, %v3361
        %v3365 = vmul.f32 %v3350, %v3358
        %v3366 = vmul.f32 %v3351, %v3362
        %v3367 = vmul.f32 %v3352, %v3358
        %v3368 = vmul.f32 %v3353, %v3362
        %v3370 = vlaneseq
        %v3371 = vshrl.u32 %v3370, 7
        %v3372 = vsub.s32 0, %v3371
        %v3373 = vrot.slane %v3320, %v3372
        %v3374 = vlaneseq
        %v3375 = vshrl.u32 %v3374, 7
        %v3376 = vsub.s32 1, %v3375
        %v3377 = vrot.slane %v3320, %v3376
        %v3380 = vadd.f32 %v3365, %v3373
        %v3381 = vadd.f32 %v3366, %v3377
        %v3382 = vadd.f32 %v3367, %v3373
        %v3383 = vadd.f32 %v3368, %v3377
        %v3384 = vpack.c.bf16 %v3382, %v3380
        %v3385 = vpack.c.bf16 %v3383, %v3381
        %v3386 = vld [vmem:[%s686] sm:$0xff]
        %v3387 = vld [vmem:[%s686 + $0x8] sm:$0xff]
        %v3388 = vld [vmem:[%s686 + $0x10] sm:$0xff]
        %v3389 = vld [vmem:[%s686 + $0x18] sm:$0xff]
        %v3390 = vld [vmem:[%s686 + $0x20] sm:$0xff]
        %v3391 = vld [vmem:[%s686 + $0x28] sm:$0xff]
        %v3392 = vld [vmem:[%s686 + $0x30] sm:$0xff]
        %v3393 = vld [vmem:[%s686 + $0x38] sm:$0xff]
        %v3394 = vld [vmem:[%s686 + $0x40] sm:$0xff]
        %v3395 = vld [vmem:[%s686 + $0x48] sm:$0xff]
        %v3396 = vld [vmem:[%s686 + $0x50] sm:$0xff]
        %v3397 = vld [vmem:[%s686 + $0x58] sm:$0xff]
        %v3398 = vld [vmem:[%s686 + $0x60] sm:$0xff]
        %v3399 = vld [vmem:[%s686 + $0x68] sm:$0xff]
        %v3400 = vld [vmem:[%s686 + $0x70] sm:$0xff]
        %v3401 = vld [vmem:[%s686 + $0x78] sm:$0xff]
        %v3402 = vld [vmem:[%s686 + $0x80] sm:$0xff]
        %v3403 = vld [vmem:[%s686 + $0x88] sm:$0xff]
        %v3404 = vld [vmem:[%s686 + $0x90] sm:$0xff]
        %v3405 = vld [vmem:[%s686 + $0x98] sm:$0xff]
        %v3406 = vld [vmem:[%s686 + $0xa0] sm:$0xff]
        %v3407 = vld [vmem:[%s686 + $0xa8] sm:$0xff]
        %v3408 = vld [vmem:[%s686 + $0xb0] sm:$0xff]
        %v3409 = vld [vmem:[%s686 + $0xb8] sm:$0xff]
        %v3410 = vld [vmem:[%s686 + $0xc0] sm:$0xff]
        %v3411 = vld [vmem:[%s686 + $0xc8] sm:$0xff]
        %v3412 = vld [vmem:[%s686 + $0xd0] sm:$0xff]
        %v3413 = vld [vmem:[%s686 + $0xd8] sm:$0xff]
        %v3414 = vld [vmem:[%s686 + $0xe0] sm:$0xff]
        %v3415 = vld [vmem:[%s686 + $0xe8] sm:$0xff]
        %v3416 = vld [vmem:[%s686 + $0xf0] sm:$0xff]
        %v3417 = vld [vmem:[%s686 + $0xf8] sm:$0xff]
        %v3418 = vld [vmem:[%s686 + $0x100] sm:$0xff]
        %v3419 = vld [vmem:[%s686 + $0x108] sm:$0xff]
        %v3420 = vld [vmem:[%s686 + $0x110] sm:$0xff]
        %v3421 = vld [vmem:[%s686 + $0x118] sm:$0xff]
        %v3422 = vld [vmem:[%s686 + $0x120] sm:$0xff]
        %v3423 = vld [vmem:[%s686 + $0x128] sm:$0xff]
        %v3424 = vld [vmem:[%s686 + $0x130] sm:$0xff]
        %v3425 = vld [vmem:[%s686 + $0x138] sm:$0xff]
        %v3426 = vld [vmem:[%s686 + $0x140] sm:$0xff]
        %v3427 = vld [vmem:[%s686 + $0x148] sm:$0xff]
        %v3428 = vld [vmem:[%s686 + $0x150] sm:$0xff]
        %v3429 = vld [vmem:[%s686 + $0x158] sm:$0xff]
        %v3430 = vld [vmem:[%s686 + $0x160] sm:$0xff]
        %v3431 = vld [vmem:[%s686 + $0x168] sm:$0xff]
        %v3432 = vld [vmem:[%s686 + $0x170] sm:$0xff]
        %v3433 = vld [vmem:[%s686 + $0x178] sm:$0xff]
        %v3434 = vld [vmem:[%s686 + $0x180] sm:$0xff]
        %v3435 = vld [vmem:[%s686 + $0x188] sm:$0xff]
        %v3436 = vld [vmem:[%s686 + $0x190] sm:$0xff]
        %v3437 = vld [vmem:[%s686 + $0x198] sm:$0xff]
        %v3438 = vld [vmem:[%s686 + $0x1a0] sm:$0xff]
        %v3439 = vld [vmem:[%s686 + $0x1a8] sm:$0xff]
        %v3440 = vld [vmem:[%s686 + $0x1b0] sm:$0xff]
        %v3441 = vld [vmem:[%s686 + $0x1b8] sm:$0xff]
        %v3442 = vld [vmem:[%s686 + $0x1c0] sm:$0xff]
        %v3443 = vld [vmem:[%s686 + $0x1c8] sm:$0xff]
        %v3444 = vld [vmem:[%s686 + $0x1d0] sm:$0xff]
        %v3445 = vld [vmem:[%s686 + $0x1d8] sm:$0xff]
        %v3446 = vld [vmem:[%s686 + $0x1e0] sm:$0xff]
        %v3447 = vld [vmem:[%s686 + $0x1e8] sm:$0xff]
        %v3448 = vld [vmem:[%s686 + $0x1f0] sm:$0xff]
        %v3449 = vld [vmem:[%s686 + $0x1f8] sm:$0xff]
        %v3450 = vld [vmem:[%s695] sm:$0xf]
        %v3452 = vlaneseq
        %v3453 = vshrl.u32 %v3452, 7
        %v3454 = vsub.s32 0, %v3453
        %v3455 = vrot.slane %v3450, %v3454
        %v3456 = vlaneseq
        %v3457 = vshrl.u32 %v3456, 7
        %v3458 = vsub.s32 1, %v3457
        %v3459 = vrot.slane %v3450, %v3458
        %v3460 = vlaneseq
        %v3461 = vshrl.u32 %v3460, 7
        %v3462 = vsub.s32 2, %v3461
        %v3463 = vrot.slane %v3450, %v3462
        %v3464 = vlaneseq
        %v3465 = vshrl.u32 %v3464, 7
        %v3466 = vsub.s32 3, %v3465
        %v3467 = vrot.slane %v3450, %v3466
        %v3536 = vunpack.c.l.b16 %v3386
        %v3537 = vunpack.c.h.b16 %v3386
        %v3538 = vunpack.c.l.b16 %v3387
        %v3539 = vunpack.c.h.b16 %v3387
        %v3540 = vunpack.c.l.b16 %v3388
        %v3541 = vunpack.c.h.b16 %v3388
        %v3542 = vunpack.c.l.b16 %v3389
        %v3543 = vunpack.c.h.b16 %v3389
        %v3544 = vunpack.c.l.b16 %v3390
        %v3545 = vunpack.c.h.b16 %v3390
        %v3546 = vunpack.c.l.b16 %v3391
        %v3547 = vunpack.c.h.b16 %v3391
        %v3548 = vunpack.c.l.b16 %v3392
        %v3549 = vunpack.c.h.b16 %v3392
        %v3550 = vunpack.c.l.b16 %v3393
        %v3551 = vunpack.c.h.b16 %v3393
        %v3552 = vunpack.c.l.b16 %v3394
        %v3553 = vunpack.c.h.b16 %v3394
        %v3554 = vunpack.c.l.b16 %v3395
        %v3555 = vunpack.c.h.b16 %v3395
        %v3556 = vunpack.c.l.b16 %v3396
        %v3557 = vunpack.c.h.b16 %v3396
        %v3558 = vunpack.c.l.b16 %v3397
        %v3559 = vunpack.c.h.b16 %v3397
        %v3560 = vunpack.c.l.b16 %v3398
        %v3561 = vunpack.c.h.b16 %v3398
        %v3562 = vunpack.c.l.b16 %v3399
        %v3563 = vunpack.c.h.b16 %v3399
        %v3564 = vunpack.c.l.b16 %v3400
        %v3565 = vunpack.c.h.b16 %v3400
        %v3566 = vunpack.c.l.b16 %v3401
        %v3567 = vunpack.c.h.b16 %v3401
        %v3568 = vunpack.c.l.b16 %v3402
        %v3569 = vunpack.c.h.b16 %v3402
        %v3570 = vunpack.c.l.b16 %v3403
        %v3571 = vunpack.c.h.b16 %v3403
        %v3572 = vunpack.c.l.b16 %v3404
        %v3573 = vunpack.c.h.b16 %v3404
        %v3574 = vunpack.c.l.b16 %v3405
        %v3575 = vunpack.c.h.b16 %v3405
        %v3576 = vunpack.c.l.b16 %v3406
        %v3577 = vunpack.c.h.b16 %v3406
        %v3578 = vunpack.c.l.b16 %v3407
        %v3579 = vunpack.c.h.b16 %v3407
        %v3580 = vunpack.c.l.b16 %v3408
        %v3581 = vunpack.c.h.b16 %v3408
        %v3582 = vunpack.c.l.b16 %v3409
        %v3583 = vunpack.c.h.b16 %v3409
        %v3584 = vunpack.c.l.b16 %v3410
        %v3585 = vunpack.c.h.b16 %v3410
        %v3586 = vunpack.c.l.b16 %v3411
        %v3587 = vunpack.c.h.b16 %v3411
        %v3588 = vunpack.c.l.b16 %v3412
        %v3589 = vunpack.c.h.b16 %v3412
        %v3590 = vunpack.c.l.b16 %v3413
        %v3591 = vunpack.c.h.b16 %v3413
        %v3592 = vunpack.c.l.b16 %v3414
        %v3593 = vunpack.c.h.b16 %v3414
        %v3594 = vunpack.c.l.b16 %v3415
        %v3595 = vunpack.c.h.b16 %v3415
        %v3596 = vunpack.c.l.b16 %v3416
        %v3597 = vunpack.c.h.b16 %v3416
        %v3598 = vunpack.c.l.b16 %v3417
        %v3599 = vunpack.c.h.b16 %v3417
        %v3600 = vunpack.c.l.b16 %v3418
        %v3601 = vunpack.c.h.b16 %v3418
        %v3602 = vunpack.c.l.b16 %v3419
        %v3603 = vunpack.c.h.b16 %v3419
        %v3604 = vunpack.c.l.b16 %v3420
        %v3605 = vunpack.c.h.b16 %v3420
        %v3606 = vunpack.c.l.b16 %v3421
        %v3607 = vunpack.c.h.b16 %v3421
        %v3608 = vunpack.c.l.b16 %v3422
        %v3609 = vunpack.c.h.b16 %v3422
        %v3610 = vunpack.c.l.b16 %v3423
        %v3611 = vunpack.c.h.b16 %v3423
        %v3612 = vunpack.c.l.b16 %v3424
        %v3613 = vunpack.c.h.b16 %v3424
        %v3614 = vunpack.c.l.b16 %v3425
        %v3615 = vunpack.c.h.b16 %v3425
        %v3616 = vunpack.c.l.b16 %v3426
        %v3617 = vunpack.c.h.b16 %v3426
        %v3618 = vunpack.c.l.b16 %v3427
        %v3619 = vunpack.c.h.b16 %v3427
        %v3620 = vunpack.c.l.b16 %v3428
        %v3621 = vunpack.c.h.b16 %v3428
        %v3622 = vunpack.c.l.b16 %v3429
        %v3623 = vunpack.c.h.b16 %v3429
        %v3624 = vunpack.c.l.b16 %v3430
        %v3625 = vunpack.c.h.b16 %v3430
        %v3626 = vunpack.c.l.b16 %v3431
        %v3627 = vunpack.c.h.b16 %v3431
        %v3628 = vunpack.c.l.b16 %v3432
        %v3629 = vunpack.c.h.b16 %v3432
        %v3630 = vunpack.c.l.b16 %v3433
        %v3631 = vunpack.c.h.b16 %v3433
        %v3632 = vunpack.c.l.b16 %v3434
        %v3633 = vunpack.c.h.b16 %v3434
        %v3634 = vunpack.c.l.b16 %v3435
        %v3635 = vunpack.c.h.b16 %v3435
        %v3636 = vunpack.c.l.b16 %v3436
        %v3637 = vunpack.c.h.b16 %v3436
        %v3638 = vunpack.c.l.b16 %v3437
        %v3639 = vunpack.c.h.b16 %v3437
        %v3640 = vunpack.c.l.b16 %v3438
        %v3641 = vunpack.c.h.b16 %v3438
        %v3642 = vunpack.c.l.b16 %v3439
        %v3643 = vunpack.c.h.b16 %v3439
        %v3644 = vunpack.c.l.b16 %v3440
        %v3645 = vunpack.c.h.b16 %v3440
        %v3646 = vunpack.c.l.b16 %v3441
        %v3647 = vunpack.c.h.b16 %v3441
        %v3648 = vunpack.c.l.b16 %v3442
        %v3649 = vunpack.c.h.b16 %v3442
        %v3650 = vunpack.c.l.b16 %v3443
        %v3651 = vunpack.c.h.b16 %v3443
        %v3652 = vunpack.c.l.b16 %v3444
        %v3653 = vunpack.c.h.b16 %v3444
        %v3654 = vunpack.c.l.b16 %v3445
        %v3655 = vunpack.c.h.b16 %v3445
        %v3656 = vunpack.c.l.b16 %v3446
        %v3657 = vunpack.c.h.b16 %v3446
        %v3658 = vunpack.c.l.b16 %v3447
        %v3659 = vunpack.c.h.b16 %v3447
        %v3660 = vunpack.c.l.b16 %v3448
        %v3661 = vunpack.c.h.b16 %v3448
        %v3662 = vunpack.c.l.b16 %v3449
        %v3663 = vunpack.c.h.b16 %v3449
        %v3664 = vpack.c.b16 %v3540, %v3536
        %v3665 = vpack.c.b16 %v3541, %v3537
        %v3666 = vpack.c.b16 %v3542, %v3538
        %v3667 = vpack.c.b16 %v3543, %v3539
        %v3668 = vpack.c.b16 %v3548, %v3544
        %v3669 = vpack.c.b16 %v3549, %v3545
        %v3670 = vpack.c.b16 %v3550, %v3546
        %v3671 = vpack.c.b16 %v3551, %v3547
        %v3672 = vpack.c.b16 %v3556, %v3552
        %v3673 = vpack.c.b16 %v3557, %v3553
        %v3674 = vpack.c.b16 %v3558, %v3554
        %v3675 = vpack.c.b16 %v3559, %v3555
        %v3676 = vpack.c.b16 %v3564, %v3560
        %v3677 = vpack.c.b16 %v3565, %v3561
        %v3678 = vpack.c.b16 %v3566, %v3562
        %v3679 = vpack.c.b16 %v3567, %v3563
        %v3680 = vpack.c.b16 %v3572, %v3568
        %v3681 = vpack.c.b16 %v3573, %v3569
        %v3682 = vpack.c.b16 %v3574, %v3570
        %v3683 = vpack.c.b16 %v3575, %v3571
        %v3684 = vpack.c.b16 %v3580, %v3576
        %v3685 = vpack.c.b16 %v3581, %v3577
        %v3686 = vpack.c.b16 %v3582, %v3578
        %v3687 = vpack.c.b16 %v3583, %v3579
        %v3688 = vpack.c.b16 %v3588, %v3584
        %v3689 = vpack.c.b16 %v3589, %v3585
        %v3690 = vpack.c.b16 %v3590, %v3586
        %v3691 = vpack.c.b16 %v3591, %v3587
        %v3692 = vpack.c.b16 %v3596, %v3592
        %v3693 = vpack.c.b16 %v3597, %v3593
        %v3694 = vpack.c.b16 %v3598, %v3594
        %v3695 = vpack.c.b16 %v3599, %v3595
        %v3696 = vpack.c.b16 %v3604, %v3600
        %v3697 = vpack.c.b16 %v3605, %v3601
        %v3698 = vpack.c.b16 %v3606, %v3602
        %v3699 = vpack.c.b16 %v3607, %v3603
        %v3700 = vpack.c.b16 %v3612, %v3608
        %v3701 = vpack.c.b16 %v3613, %v3609
        %v3702 = vpack.c.b16 %v3614, %v3610
        %v3703 = vpack.c.b16 %v3615, %v3611
        %v3704 = vpack.c.b16 %v3620, %v3616
        %v3705 = vpack.c.b16 %v3621, %v3617
        %v3706 = vpack.c.b16 %v3622, %v3618
        %v3707 = vpack.c.b16 %v3623, %v3619
        %v3708 = vpack.c.b16 %v3628, %v3624
        %v3709 = vpack.c.b16 %v3629, %v3625
        %v3710 = vpack.c.b16 %v3630, %v3626
        %v3711 = vpack.c.b16 %v3631, %v3627
        %v3712 = vpack.c.b16 %v3636, %v3632
        %v3713 = vpack.c.b16 %v3637, %v3633
        %v3714 = vpack.c.b16 %v3638, %v3634
        %v3715 = vpack.c.b16 %v3639, %v3635
        %v3716 = vpack.c.b16 %v3644, %v3640
        %v3717 = vpack.c.b16 %v3645, %v3641
        %v3718 = vpack.c.b16 %v3646, %v3642
        %v3719 = vpack.c.b16 %v3647, %v3643
        %v3720 = vpack.c.b16 %v3652, %v3648
        %v3721 = vpack.c.b16 %v3653, %v3649
        %v3722 = vpack.c.b16 %v3654, %v3650
        %v3723 = vpack.c.b16 %v3655, %v3651
        %v3724 = vpack.c.b16 %v3660, %v3656
        %v3725 = vpack.c.b16 %v3661, %v3657
        %v3726 = vpack.c.b16 %v3662, %v3658
        %v3727 = vpack.c.b16 %v3663, %v3659
        %3792 = vmatprep.subr.bf16.mxu0 %v3693
        %3793 = vmatpush1.bf16.msra.mxu0 %v3692
        %3794 = vmatprep.subr.bf16.mxu0 %v3689
        %3795 = vmatpush1.bf16.msra.mxu0 %v3688
        %3796 = vmatprep.subr.bf16.mxu0 %v3685
        %3797 = vmatpush1.bf16.msra.mxu0 %v3684
        %3798 = vmatprep.subr.bf16.mxu0 %v3681
        %3799 = vmatpush1.bf16.msra.mxu0 %v3680
        %3800 = vmatprep.subr.bf16.mxu0 %v3677
        %3801 = vmatpush1.bf16.msra.mxu0 %v3676
        %3802 = vmatprep.subr.bf16.mxu0 %v3673
        %3803 = vmatpush1.bf16.msra.mxu0 %v3672
        %3804 = vmatprep.subr.bf16.mxu0 %v3669
        %3805 = vmatpush1.bf16.msra.mxu0 %v3668
        %3806 = vmatprep.subr.bf16.mxu0 %v3665
        %3807 = vmatpush1.bf16.msra.mxu0 %v3664
        %3808 = vmatprep.subr.bf16.mxu0 %v3725
        %3809 = vmatpush2.bf16.msra.mxu0 %v3724
        %3810 = vmatprep.subr.bf16.mxu0 %v3721
        %3811 = vmatpush2.bf16.msra.mxu0 %v3720
        %3812 = vmatprep.subr.bf16.mxu0 %v3717
        %3813 = vmatpush2.bf16.msra.mxu0 %v3716
        %3814 = vmatprep.subr.bf16.mxu0 %v3713
        %3815 = vmatpush2.bf16.msra.mxu0 %v3712
        %3816 = vmatprep.subr.bf16.mxu0 %v3709
        %3817 = vmatpush2.bf16.msra.mxu0 %v3708
        %3818 = vmatprep.subr.bf16.mxu0 %v3705
        %3819 = vmatpush2.bf16.msra.mxu0 %v3704
        %3820 = vmatprep.subr.bf16.mxu0 %v3701
        %3821 = vmatpush2.bf16.msra.mxu0 %v3700
        %3822 = vmatprep.subr.bf16.mxu0 %v3697
        %3823 = vmatpush2.bf16.msra.mxu0 %v3696
        %3824 = vmatprep.mubr.bf16.mxu0 %v3385
        %3825 = vmatmul.mubr.bf16.gmra.mxu0 %v3384
        %v3826 = vpop.f32.mrf.mxu0
        %v3827 = vadd.f32 %v3455, %v3826
        %v3828 = vpop.f32.mrf.mxu0
        %v3829 = vadd.f32 %v3459, %v3828
        %v3830 = vpop.f32.mrf.mxu0
        %v3831 = vadd.f32 %v3455, %v3830
        %v3832 = vpop.f32.mrf.mxu0
        %v3833 = vadd.f32 %v3459, %v3832
        %3834 = vdwg.mxu0
        %3835 = vmatprep.subr.bf16.mxu0 %v3695
        %3836 = vmatpush1.bf16.msra.mxu0 %v3694
        %3837 = vmatprep.subr.bf16.mxu0 %v3691
        %3838 = vmatpush1.bf16.msra.mxu0 %v3690
        %3839 = vmatprep.subr.bf16.mxu0 %v3687
        %3840 = vmatpush1.bf16.msra.mxu0 %v3686
        %3841 = vmatprep.subr.bf16.mxu0 %v3683
        %3842 = vmatpush1.bf16.msra.mxu0 %v3682
        %3843 = vmatprep.subr.bf16.mxu0 %v3679
        %3844 = vmatpush1.bf16.msra.mxu0 %v3678
        %3845 = vmatprep.subr.bf16.mxu0 %v3675
        %3846 = vmatpush1.bf16.msra.mxu0 %v3674
        %3847 = vmatprep.subr.bf16.mxu0 %v3671
        %3848 = vmatpush1.bf16.msra.mxu0 %v3670
        %3849 = vmatprep.subr.bf16.mxu0 %v3667
        %3850 = vmatpush1.bf16.msra.mxu0 %v3666
        %3851 = vmatprep.subr.bf16.mxu0 %v3727
        %3852 = vmatpush2.bf16.msra.mxu0 %v3726
        %3853 = vmatprep.subr.bf16.mxu0 %v3723
        %3854 = vmatpush2.bf16.msra.mxu0 %v3722
        %3855 = vmatprep.subr.bf16.mxu0 %v3719
        %3856 = vmatpush2.bf16.msra.mxu0 %v3718
        %3857 = vmatprep.subr.bf16.mxu0 %v3715
        %3858 = vmatpush2.bf16.msra.mxu0 %v3714
        %3859 = vmatprep.subr.bf16.mxu0 %v3711
        %3860 = vmatpush2.bf16.msra.mxu0 %v3710
        %3861 = vmatprep.subr.bf16.mxu0 %v3707
        %3862 = vmatpush2.bf16.msra.mxu0 %v3706
        %3863 = vmatprep.subr.bf16.mxu0 %v3703
        %3864 = vmatpush2.bf16.msra.mxu0 %v3702
        %3865 = vmatprep.subr.bf16.mxu0 %v3699
        %3866 = vmatpush2.bf16.msra.mxu0 %v3698
        %3867 = vmatprep.mubr.bf16.mxu0 %v3385
        %3868 = vmatmul.mubr.bf16.gmra.mxu0 %v3384
        %v3869 = vpop.f32.mrf.mxu0
        %v3870 = vadd.f32 %v3463, %v3869
        %v3871 = vpop.f32.mrf.mxu0
        %v3872 = vadd.f32 %v3467, %v3871
        %v3873 = vpop.f32.mrf.mxu0
        %v3874 = vadd.f32 %v3463, %v3873
        %v3875 = vpop.f32.mrf.mxu0
        %v3876 = vadd.f32 %v3467, %v3875
        %3877 = vdwg.mxu0
        %v3878 = vmax.f32 %v3827, 0.0
        %v3879 = vmax.f32 %v3829, 0.0
        %v3880 = vmax.f32 %v3870, 0.0
        %v3881 = vmax.f32 %v3872, 0.0
        %v3882 = vmax.f32 %v3831, 0.0
        %v3883 = vmax.f32 %v3833, 0.0
        %v3884 = vmax.f32 %v3874, 0.0
        %v3885 = vmax.f32 %v3876, 0.0
        %v3886 = vpack.c.bf16 %v3882, %v3878
        %v3887 = vpack.c.bf16 %v3883, %v3879
        %v3888 = vpack.c.bf16 %v3884, %v3880
        %v3889 = vpack.c.bf16 %v3885, %v3881
        %v3890 = vld [vmem:[%s704] sm:$0xff]
        %v3891 = vld [vmem:[%s704 + $0x8] sm:$0xff]
        %v3892 = vld [vmem:[%s704 + $0x10] sm:$0xff]
        %v3893 = vld [vmem:[%s704 + $0x18] sm:$0xff]
        %v3894 = vld [vmem:[%s704 + $0x20] sm:$0xff]
        %v3895 = vld [vmem:[%s704 + $0x28] sm:$0xff]
        %v3896 = vld [vmem:[%s704 + $0x30] sm:$0xff]
        %v3897 = vld [vmem:[%s704 + $0x38] sm:$0xff]
        %v3898 = vld [vmem:[%s704 + $0x40] sm:$0xff]
        %v3899 = vld [vmem:[%s704 + $0x48] sm:$0xff]
        %v3900 = vld [vmem:[%s704 + $0x50] sm:$0xff]
        %v3901 = vld [vmem:[%s704 + $0x58] sm:$0xff]
        %v3902 = vld [vmem:[%s704 + $0x60] sm:$0xff]
        %v3903 = vld [vmem:[%s704 + $0x68] sm:$0xff]
        %v3904 = vld [vmem:[%s704 + $0x70] sm:$0xff]
        %v3905 = vld [vmem:[%s704 + $0x78] sm:$0xff]
        %v3906 = vld [vmem:[%s704 + $0x80] sm:$0xff]
        %v3907 = vld [vmem:[%s704 + $0x88] sm:$0xff]
        %v3908 = vld [vmem:[%s704 + $0x90] sm:$0xff]
        %v3909 = vld [vmem:[%s704 + $0x98] sm:$0xff]
        %v3910 = vld [vmem:[%s704 + $0xa0] sm:$0xff]
        %v3911 = vld [vmem:[%s704 + $0xa8] sm:$0xff]
        %v3912 = vld [vmem:[%s704 + $0xb0] sm:$0xff]
        %v3913 = vld [vmem:[%s704 + $0xb8] sm:$0xff]
        %v3914 = vld [vmem:[%s704 + $0xc0] sm:$0xff]
        %v3915 = vld [vmem:[%s704 + $0xc8] sm:$0xff]
        %v3916 = vld [vmem:[%s704 + $0xd0] sm:$0xff]
        %v3917 = vld [vmem:[%s704 + $0xd8] sm:$0xff]
        %v3918 = vld [vmem:[%s704 + $0xe0] sm:$0xff]
        %v3919 = vld [vmem:[%s704 + $0xe8] sm:$0xff]
        %v3920 = vld [vmem:[%s704 + $0xf0] sm:$0xff]
        %v3921 = vld [vmem:[%s704 + $0xf8] sm:$0xff]
        %v3922 = vld [vmem:[%s704 + $0x100] sm:$0xff]
        %v3923 = vld [vmem:[%s704 + $0x108] sm:$0xff]
        %v3924 = vld [vmem:[%s704 + $0x110] sm:$0xff]
        %v3925 = vld [vmem:[%s704 + $0x118] sm:$0xff]
        %v3926 = vld [vmem:[%s704 + $0x120] sm:$0xff]
        %v3927 = vld [vmem:[%s704 + $0x128] sm:$0xff]
        %v3928 = vld [vmem:[%s704 + $0x130] sm:$0xff]
        %v3929 = vld [vmem:[%s704 + $0x138] sm:$0xff]
        %v3930 = vld [vmem:[%s704 + $0x140] sm:$0xff]
        %v3931 = vld [vmem:[%s704 + $0x148] sm:$0xff]
        %v3932 = vld [vmem:[%s704 + $0x150] sm:$0xff]
        %v3933 = vld [vmem:[%s704 + $0x158] sm:$0xff]
        %v3934 = vld [vmem:[%s704 + $0x160] sm:$0xff]
        %v3935 = vld [vmem:[%s704 + $0x168] sm:$0xff]
        %v3936 = vld [vmem:[%s704 + $0x170] sm:$0xff]
        %v3937 = vld [vmem:[%s704 + $0x178] sm:$0xff]
        %v3938 = vld [vmem:[%s704 + $0x180] sm:$0xff]
        %v3939 = vld [vmem:[%s704 + $0x188] sm:$0xff]
        %v3940 = vld [vmem:[%s704 + $0x190] sm:$0xff]
        %v3941 = vld [vmem:[%s704 + $0x198] sm:$0xff]
        %v3942 = vld [vmem:[%s704 + $0x1a0] sm:$0xff]
        %v3943 = vld [vmem:[%s704 + $0x1a8] sm:$0xff]
        %v3944 = vld [vmem:[%s704 + $0x1b0] sm:$0xff]
        %v3945 = vld [vmem:[%s704 + $0x1b8] sm:$0xff]
        %v3946 = vld [vmem:[%s704 + $0x1c0] sm:$0xff]
        %v3947 = vld [vmem:[%s704 + $0x1c8] sm:$0xff]
        %v3948 = vld [vmem:[%s704 + $0x1d0] sm:$0xff]
        %v3949 = vld [vmem:[%s704 + $0x1d8] sm:$0xff]
        %v3950 = vld [vmem:[%s704 + $0x1e0] sm:$0xff]
        %v3951 = vld [vmem:[%s704 + $0x1e8] sm:$0xff]
        %v3952 = vld [vmem:[%s704 + $0x1f0] sm:$0xff]
        %v3953 = vld [vmem:[%s704 + $0x1f8] sm:$0xff]
        %v3954 = vld [vmem:[%s713] sm:$0x3]
        %v3956 = vlaneseq
        %v3957 = vshrl.u32 %v3956, 7
        %v3958 = vsub.s32 0, %v3957
        %v3959 = vrot.slane %v3954, %v3958
        %v3960 = vlaneseq
        %v3961 = vshrl.u32 %v3960, 7
        %v3962 = vsub.s32 1, %v3961
        %v3963 = vrot.slane %v3954, %v3962
        %v4030 = vunpack.c.l.b16 %v3890
        %v4031 = vunpack.c.h.b16 %v3890
        %v4032 = vunpack.c.l.b16 %v3891
        %v4033 = vunpack.c.h.b16 %v3891
        %v4034 = vunpack.c.l.b16 %v3892
        %v4035 = vunpack.c.h.b16 %v3892
        %v4036 = vunpack.c.l.b16 %v3893
        %v4037 = vunpack.c.h.b16 %v3893
        %v4038 = vunpack.c.l.b16 %v3894
        %v4039 = vunpack.c.h.b16 %v3894
        %v4040 = vunpack.c.l.b16 %v3895
        %v4041 = vunpack.c.h.b16 %v3895
        %v4042 = vunpack.c.l.b16 %v3896
        %v4043 = vunpack.c.h.b16 %v3896
        %v4044 = vunpack.c.l.b16 %v3897
        %v4045 = vunpack.c.h.b16 %v3897
        %v4046 = vunpack.c.l.b16 %v3898
        %v4047 = vunpack.c.h.b16 %v3898
        %v4048 = vunpack.c.l.b16 %v3899
        %v4049 = vunpack.c.h.b16 %v3899
        %v4050 = vunpack.c.l.b16 %v3900
        %v4051 = vunpack.c.h.b16 %v3900
        %v4052 = vunpack.c.l.b16 %v3901
        %v4053 = vunpack.c.h.b16 %v3901
        %v4054 = vunpack.c.l.b16 %v3902
        %v4055 = vunpack.c.h.b16 %v3902
        %v4056 = vunpack.c.l.b16 %v3903
        %v4057 = vunpack.c.h.b16 %v3903
        %v4058 = vunpack.c.l.b16 %v3904
        %v4059 = vunpack.c.h.b16 %v3904
        %v4060 = vunpack.c.l.b16 %v3905
        %v4061 = vunpack.c.h.b16 %v3905
        %v4062 = vunpack.c.l.b16 %v3906
        %v4063 = vunpack.c.h.b16 %v3906
        %v4064 = vunpack.c.l.b16 %v3907
        %v4065 = vunpack.c.h.b16 %v3907
        %v4066 = vunpack.c.l.b16 %v3908
        %v4067 = vunpack.c.h.b16 %v3908
        %v4068 = vunpack.c.l.b16 %v3909
        %v4069 = vunpack.c.h.b16 %v3909
        %v4070 = vunpack.c.l.b16 %v3910
        %v4071 = vunpack.c.h.b16 %v3910
        %v4072 = vunpack.c.l.b16 %v3911
        %v4073 = vunpack.c.h.b16 %v3911
        %v4074 = vunpack.c.l.b16 %v3912
        %v4075 = vunpack.c.h.b16 %v3912
        %v4076 = vunpack.c.l.b16 %v3913
        %v4077 = vunpack.c.h.b16 %v3913
        %v4078 = vunpack.c.l.b16 %v3914
        %v4079 = vunpack.c.h.b16 %v3914
        %v4080 = vunpack.c.l.b16 %v3915
        %v4081 = vunpack.c.h.b16 %v3915
        %v4082 = vunpack.c.l.b16 %v3916
        %v4083 = vunpack.c.h.b16 %v3916
        %v4084 = vunpack.c.l.b16 %v3917
        %v4085 = vunpack.c.h.b16 %v3917
        %v4086 = vunpack.c.l.b16 %v3918
        %v4087 = vunpack.c.h.b16 %v3918
        %v4088 = vunpack.c.l.b16 %v3919
        %v4089 = vunpack.c.h.b16 %v3919
        %v4090 = vunpack.c.l.b16 %v3920
        %v4091 = vunpack.c.h.b16 %v3920
        %v4092 = vunpack.c.l.b16 %v3921
        %v4093 = vunpack.c.h.b16 %v3921
        %v4094 = vunpack.c.l.b16 %v3922
        %v4095 = vunpack.c.h.b16 %v3922
        %v4096 = vunpack.c.l.b16 %v3923
        %v4097 = vunpack.c.h.b16 %v3923
        %v4098 = vunpack.c.l.b16 %v3924
        %v4099 = vunpack.c.h.b16 %v3924
        %v4100 = vunpack.c.l.b16 %v3925
        %v4101 = vunpack.c.h.b16 %v3925
        %v4102 = vunpack.c.l.b16 %v3926
        %v4103 = vunpack.c.h.b16 %v3926
        %v4104 = vunpack.c.l.b16 %v3927
        %v4105 = vunpack.c.h.b16 %v3927
        %v4106 = vunpack.c.l.b16 %v3928
        %v4107 = vunpack.c.h.b16 %v3928
        %v4108 = vunpack.c.l.b16 %v3929
        %v4109 = vunpack.c.h.b16 %v3929
        %v4110 = vunpack.c.l.b16 %v3930
        %v4111 = vunpack.c.h.b16 %v3930
        %v4112 = vunpack.c.l.b16 %v3931
        %v4113 = vunpack.c.h.b16 %v3931
        %v4114 = vunpack.c.l.b16 %v3932
        %v4115 = vunpack.c.h.b16 %v3932
        %v4116 = vunpack.c.l.b16 %v3933
        %v4117 = vunpack.c.h.b16 %v3933
        %v4118 = vunpack.c.l.b16 %v3934
        %v4119 = vunpack.c.h.b16 %v3934
        %v4120 = vunpack.c.l.b16 %v3935
        %v4121 = vunpack.c.h.b16 %v3935
        %v4122 = vunpack.c.l.b16 %v3936
        %v4123 = vunpack.c.h.b16 %v3936
        %v4124 = vunpack.c.l.b16 %v3937
        %v4125 = vunpack.c.h.b16 %v3937
        %v4126 = vunpack.c.l.b16 %v3938
        %v4127 = vunpack.c.h.b16 %v3938
        %v4128 = vunpack.c.l.b16 %v3939
        %v4129 = vunpack.c.h.b16 %v3939
        %v4130 = vunpack.c.l.b16 %v3940
        %v4131 = vunpack.c.h.b16 %v3940
        %v4132 = vunpack.c.l.b16 %v3941
        %v4133 = vunpack.c.h.b16 %v3941
        %v4134 = vunpack.c.l.b16 %v3942
        %v4135 = vunpack.c.h.b16 %v3942
        %v4136 = vunpack.c.l.b16 %v3943
        %v4137 = vunpack.c.h.b16 %v3943
        %v4138 = vunpack.c.l.b16 %v3944
        %v4139 = vunpack.c.h.b16 %v3944
        %v4140 = vunpack.c.l.b16 %v3945
        %v4141 = vunpack.c.h.b16 %v3945
        %v4142 = vunpack.c.l.b16 %v3946
        %v4143 = vunpack.c.h.b16 %v3946
        %v4144 = vunpack.c.l.b16 %v3947
        %v4145 = vunpack.c.h.b16 %v3947
        %v4146 = vunpack.c.l.b16 %v3948
        %v4147 = vunpack.c.h.b16 %v3948
        %v4148 = vunpack.c.l.b16 %v3949
        %v4149 = vunpack.c.h.b16 %v3949
        %v4150 = vunpack.c.l.b16 %v3950
        %v4151 = vunpack.c.h.b16 %v3950
        %v4152 = vunpack.c.l.b16 %v3951
        %v4153 = vunpack.c.h.b16 %v3951
        %v4154 = vunpack.c.l.b16 %v3952
        %v4155 = vunpack.c.h.b16 %v3952
        %v4156 = vunpack.c.l.b16 %v3953
        %v4157 = vunpack.c.h.b16 %v3953
        %v4158 = vpack.c.b16 %v4032, %v4030
        %v4159 = vpack.c.b16 %v4033, %v4031
        %v4160 = vpack.c.b16 %v4036, %v4034
        %v4161 = vpack.c.b16 %v4037, %v4035
        %v4162 = vpack.c.b16 %v4040, %v4038
        %v4163 = vpack.c.b16 %v4041, %v4039
        %v4164 = vpack.c.b16 %v4044, %v4042
        %v4165 = vpack.c.b16 %v4045, %v4043
        %v4166 = vpack.c.b16 %v4048, %v4046
        %v4167 = vpack.c.b16 %v4049, %v4047
        %v4168 = vpack.c.b16 %v4052, %v4050
        %v4169 = vpack.c.b16 %v4053, %v4051
        %v4170 = vpack.c.b16 %v4056, %v4054
        %v4171 = vpack.c.b16 %v4057, %v4055
        %v4172 = vpack.c.b16 %v4060, %v4058
        %v4173 = vpack.c.b16 %v4061, %v4059
        %v4174 = vpack.c.b16 %v4064, %v4062
        %v4175 = vpack.c.b16 %v4065, %v4063
        %v4176 = vpack.c.b16 %v4068, %v4066
        %v4177 = vpack.c.b16 %v4069, %v4067
        %v4178 = vpack.c.b16 %v4072, %v4070
        %v4179 = vpack.c.b16 %v4073, %v4071
        %v4180 = vpack.c.b16 %v4076, %v4074
        %v4181 = vpack.c.b16 %v4077, %v4075
        %v4182 = vpack.c.b16 %v4080, %v4078
        %v4183 = vpack.c.b16 %v4081, %v4079
        %v4184 = vpack.c.b16 %v4084, %v4082
        %v4185 = vpack.c.b16 %v4085, %v4083
        %v4186 = vpack.c.b16 %v4088, %v4086
        %v4187 = vpack.c.b16 %v4089, %v4087
        %v4188 = vpack.c.b16 %v4092, %v4090
        %v4189 = vpack.c.b16 %v4093, %v4091
        %v4190 = vpack.c.b16 %v4096, %v4094
        %v4191 = vpack.c.b16 %v4097, %v4095
        %v4192 = vpack.c.b16 %v4100, %v4098
        %v4193 = vpack.c.b16 %v4101, %v4099
        %v4194 = vpack.c.b16 %v4104, %v4102
        %v4195 = vpack.c.b16 %v4105, %v4103
        %v4196 = vpack.c.b16 %v4108, %v4106
        %v4197 = vpack.c.b16 %v4109, %v4107
        %v4198 = vpack.c.b16 %v4112, %v4110
        %v4199 = vpack.c.b16 %v4113, %v4111
        %v4200 = vpack.c.b16 %v4116, %v4114
        %v4201 = vpack.c.b16 %v4117, %v4115
        %v4202 = vpack.c.b16 %v4120, %v4118
        %v4203 = vpack.c.b16 %v4121, %v4119
        %v4204 = vpack.c.b16 %v4124, %v4122
        %v4205 = vpack.c.b16 %v4125, %v4123
        %v4206 = vpack.c.b16 %v4128, %v4126
        %v4207 = vpack.c.b16 %v4129, %v4127
        %v4208 = vpack.c.b16 %v4132, %v4130
        %v4209 = vpack.c.b16 %v4133, %v4131
        %v4210 = vpack.c.b16 %v4136, %v4134
        %v4211 = vpack.c.b16 %v4137, %v4135
        %v4212 = vpack.c.b16 %v4140, %v4138
        %v4213 = vpack.c.b16 %v4141, %v4139
        %v4214 = vpack.c.b16 %v4144, %v4142
        %v4215 = vpack.c.b16 %v4145, %v4143
        %v4216 = vpack.c.b16 %v4148, %v4146
        %v4217 = vpack.c.b16 %v4149, %v4147
        %v4218 = vpack.c.b16 %v4152, %v4150
        %v4219 = vpack.c.b16 %v4153, %v4151
        %v4220 = vpack.c.b16 %v4156, %v4154
        %v4221 = vpack.c.b16 %v4157, %v4155
        %4286 = vmatprep.subr.bf16.mxu0 %v4173
        %4287 = vmatpush1.bf16.msra.mxu0 %v4172
        %4288 = vmatprep.subr.bf16.mxu0 %v4171
        %4289 = vmatpush1.bf16.msra.mxu0 %v4170
        %4290 = vmatprep.subr.bf16.mxu0 %v4169
        %4291 = vmatpush1.bf16.msra.mxu0 %v4168
        %4292 = vmatprep.subr.bf16.mxu0 %v4167
        %4293 = vmatpush1.bf16.msra.mxu0 %v4166
        %4294 = vmatprep.subr.bf16.mxu0 %v4165
        %4295 = vmatpush1.bf16.msra.mxu0 %v4164
        %4296 = vmatprep.subr.bf16.mxu0 %v4163
        %4297 = vmatpush1.bf16.msra.mxu0 %v4162
        %4298 = vmatprep.subr.bf16.mxu0 %v4161
        %4299 = vmatpush1.bf16.msra.mxu0 %v4160
        %4300 = vmatprep.subr.bf16.mxu0 %v4159
        %4301 = vmatpush1.bf16.msra.mxu0 %v4158
        %4302 = vmatprep.subr.bf16.mxu0 %v4189
        %4303 = vmatpush2.bf16.msra.mxu0 %v4188
        %4304 = vmatprep.subr.bf16.mxu0 %v4187
        %4305 = vmatpush2.bf16.msra.mxu0 %v4186
        %4306 = vmatprep.subr.bf16.mxu0 %v4185
        %4307 = vmatpush2.bf16.msra.mxu0 %v4184
        %4308 = vmatprep.subr.bf16.mxu0 %v4183
        %4309 = vmatpush2.bf16.msra.mxu0 %v4182
        %4310 = vmatprep.subr.bf16.mxu0 %v4181
        %4311 = vmatpush2.bf16.msra.mxu0 %v4180
        %4312 = vmatprep.subr.bf16.mxu0 %v4179
        %4313 = vmatpush2.bf16.msra.mxu0 %v4178
        %4314 = vmatprep.subr.bf16.mxu0 %v4177
        %4315 = vmatpush2.bf16.msra.mxu0 %v4176
        %4316 = vmatprep.subr.bf16.mxu0 %v4175
        %4317 = vmatpush2.bf16.msra.mxu0 %v4174
        %4318 = vmatprep.mubr.bf16.mxu0 %v3887
        %4319 = vmatmul.mubr.bf16.gmra.mxu0 %v3886
        %v4320 = vpop.f32.mrf.mxu0
        %v4321 = vadd.f32 %v3959, %v4320
        %v4322 = vpop.f32.mrf.mxu0
        %v4323 = vadd.f32 %v3963, %v4322
        %v4324 = vpop.f32.mrf.mxu0
        %v4325 = vadd.f32 %v3959, %v4324
        %v4326 = vpop.f32.mrf.mxu0
        %v4327 = vadd.f32 %v3963, %v4326
        %4328 = vdwg.mxu0
        %4329 = vmatprep.subr.bf16.mxu0 %v4205
        %4330 = vmatpush1.bf16.msra.mxu0 %v4204
        %4331 = vmatprep.subr.bf16.mxu0 %v4203
        %4332 = vmatpush1.bf16.msra.mxu0 %v4202
        %4333 = vmatprep.subr.bf16.mxu0 %v4201
        %4334 = vmatpush1.bf16.msra.mxu0 %v4200
        %4335 = vmatprep.subr.bf16.mxu0 %v4199
        %4336 = vmatpush1.bf16.msra.mxu0 %v4198
        %4337 = vmatprep.subr.bf16.mxu0 %v4197
        %4338 = vmatpush1.bf16.msra.mxu0 %v4196
        %4339 = vmatprep.subr.bf16.mxu0 %v4195
        %4340 = vmatpush1.bf16.msra.mxu0 %v4194
        %4341 = vmatprep.subr.bf16.mxu0 %v4193
        %4342 = vmatpush1.bf16.msra.mxu0 %v4192
        %4343 = vmatprep.subr.bf16.mxu0 %v4191
        %4344 = vmatpush1.bf16.msra.mxu0 %v4190
        %4345 = vmatprep.subr.bf16.mxu0 %v4221
        %4346 = vmatpush2.bf16.msra.mxu0 %v4220
        %4347 = vmatprep.subr.bf16.mxu0 %v4219
        %4348 = vmatpush2.bf16.msra.mxu0 %v4218
        %4349 = vmatprep.subr.bf16.mxu0 %v4217
        %4350 = vmatpush2.bf16.msra.mxu0 %v4216
        %4351 = vmatprep.subr.bf16.mxu0 %v4215
        %4352 = vmatpush2.bf16.msra.mxu0 %v4214
        %4353 = vmatprep.subr.bf16.mxu0 %v4213
        %4354 = vmatpush2.bf16.msra.mxu0 %v4212
        %4355 = vmatprep.subr.bf16.mxu0 %v4211
        %4356 = vmatpush2.bf16.msra.mxu0 %v4210
        %4357 = vmatprep.subr.bf16.mxu0 %v4209
        %4358 = vmatpush2.bf16.msra.mxu0 %v4208
        %4359 = vmatprep.subr.bf16.mxu0 %v4207
        %4360 = vmatpush2.bf16.msra.mxu0 %v4206
        %4361 = vmatprep.mubr.bf16.mxu0 %v3889
        %4362 = vmatmul.mubr.bf16.gmra.mxu0 %v3888
        %v4363 = vpop.f32.mrf.mxu0
        %v4364 = vadd.f32 %v4321, %v4363
        %v4365 = vpop.f32.mrf.mxu0
        %v4366 = vadd.f32 %v4323, %v4365
        %v4367 = vpop.f32.mrf.mxu0
        %v4368 = vadd.f32 %v4325, %v4367
        %v4369 = vpop.f32.mrf.mxu0
        %v4370 = vadd.f32 %v4327, %v4369
        %4371 = vdwg.mxu0
        %v4372 = vadd.f32 %v3380, %v4364
        %v4373 = vadd.f32 %v3381, %v4366
        %v4374 = vadd.f32 %v3382, %v4368
        %v4375 = vadd.f32 %v3383, %v4370
        %v4376 = vld [vmem:[%s722] sm:$0x3]
        %v4377 = vld [vmem:[%s731] sm:$0x3]
        %v4378 = vadd.f32 %v4372, %v4373
        %4379 = vadd.xlane.f32.xlu0 %v4378
        %v4380 = vpop.xlane.xlu0 %4379
        %v4381 = vadd.f32 %v4374, %v4375
        %4382 = vadd.xlane.f32.xlu0 %v4381
        %v4383 = vpop.xlane.xlu0 %4382
        %v4384 = vmul.f32 %v4380, %v3327
        %v4385 = vmul.f32 %v4383, %v3327
        %v4386 = vsub.f32 %v4372, %v4384
        %v4387 = vsub.f32 %v4373, %v4384
        %v4388 = vsub.f32 %v4374, %v4385
        %v4389 = vsub.f32 %v4375, %v4385
        %v4390 = vmul.f32 %v4386, %v4386
        %v4391 = vmul.f32 %v4387, %v4387
        %v4392 = vmul.f32 %v4388, %v4388
        %v4393 = vmul.f32 %v4389, %v4389
        %v4394 = vadd.f32 %v4390, %v4391
        %4395 = vadd.xlane.f32.xlu0 %v4394
        %v4396 = vpop.xlane.xlu0 %4395
        %v4397 = vadd.f32 %v4392, %v4393
        %4398 = vadd.xlane.f32.xlu0 %v4397
        %v4399 = vpop.xlane.xlu0 %4398
        %v4400 = vmul.f32 %v4396, %v3327
        %v4401 = vmul.f32 %v4399, %v3327
        %v4402 = vadd.f32 %v4400, 1e-05
        %v4403 = vadd.f32 %v4401, 1e-05
        %v4404 = vrsqrt.pop %v4402
        %v4405 = vrsqrt.pop %v4403
        %v4406 = vmul.f32 %v4386, %v4404
        %v4407 = vmul.f32 %v4387, %v4404
        %v4408 = vmul.f32 %v4388, %v4405
        %v4409 = vmul.f32 %v4389, %v4405
        %v4411 = vlaneseq
        %v4412 = vshrl.u32 %v4411, 7
        %v4413 = vsub.s32 0, %v4412
        %v4414 = vrot.slane %v4376, %v4413
        %v4415 = vlaneseq
        %v4416 = vshrl.u32 %v4415, 7
        %v4417 = vsub.s32 1, %v4416
        %v4418 = vrot.slane %v4376, %v4417
        %v4421 = vmul.f32 %v4406, %v4414
        %v4422 = vmul.f32 %v4407, %v4418
        %v4423 = vmul.f32 %v4408, %v4414
        %v4424 = vmul.f32 %v4409, %v4418
        %v4426 = vlaneseq
        %v4427 = vshrl.u32 %v4426, 7
        %v4428 = vsub.s32 0, %v4427
        %v4429 = vrot.slane %v4377, %v4428
        %v4430 = vlaneseq
        %v4431 = vshrl.u32 %v4430, 7
        %v4432 = vsub.s32 1, %v4431
        %v4433 = vrot.slane %v4377, %v4432
        %v4436 = vadd.f32 %v4421, %v4429
        %v4437 = vadd.f32 %v4422, %v4433
        %v4438 = vadd.f32 %v4423, %v4429
        %v4439 = vadd.f32 %v4424, %v4433
        %4440 = vst [vmem:[#allocation2] sm:$0xff] %v4436
        %4441 = vst [vmem:[#allocation2 + $0x8] sm:$0xff] %v4437
        %4442 = vst [vmem:[#allocation2 + $0x10] sm:$0xff] %v4438
        %4443 = vst [vmem:[#allocation2 + $0x18] sm:$0xff] %v4439
        %4444 = vst [vmem:[%s841] sm:$0xff] %v4436
        %4445 = vst [vmem:[%s841 + $0x8] sm:$0xff] %v4437
        %4446 = vst [vmem:[%s841 + $0x10] sm:$0xff] %v4438
        %4447 = vst [vmem:[%s841 + $0x18] sm:$0xff] %v4439
        %s4448 = smul.u32 2, %s45
        %p4449 = scmp.lt.s32.totalorder %s4448, 3
        %s4450 = scalar_select %p4449, %s4448, 3
        %s4451 = smul.addr %s4450, 2
        %s4452 = smul.addr %s4451, 8
        %s4453 = scalar_lea.vmem %s12, %s4452
        // Predicated region
        $region117: #{gpt2_forward.2} parent=67 // pred_check
          %p4454 = pneg %p383
        $region118: #{gpt2_forward.2} parent=67 // pred_check_branch
          %4456 = sbr.rel (%p4454) target = $region120
        $region119: #{gpt2_forward.2} parent=67 // pred_region
          %s4457 = smul.u32 2, %s45
        $region120: #{gpt2_forward.2} parent=67 // pred_fallthru
          _
      $region68: #{gpt2_forward.2} parent=5 // pred_fallthru
        _
      %p4458 = scmp.le.s32.totalorder 2, %s36
      // Predicated region
      $region121: #{gpt2_forward.2} parent=5 // pred_check
        %p4459 = pneg %p4458
      $region122: #{gpt2_forward.2} parent=5 // pred_check_branch
        %4461 = sbr.rel (%p4459) target = $region124
      $region123: #{gpt2_forward.2} parent=5 // pred_region
        %s4462 = ssub.s32 %s36, 2
        // Predicated region
        $region125: #{gpt2_forward.2} parent=123 // pred_check
          %p4463 = pneg %p389
        $region126: #{gpt2_forward.2} parent=123 // pred_check_branch
          %4465 = sbr.rel (%p4463) target = $region128
        $region127: #{gpt2_forward.2} parent=123 // pred_region
          %s4466 = smul.u32 2, %s47
          %p4467 = scmp.lt.s32.totalorder %s4466, 3
          %s4468 = scalar_select %p4467, %s4466, 3
          %s4469 = smul.addr %s4468, 2
          %s4470 = smul.addr %s4469, 8
          %s4471 = scalar_lea.vmem %s12, %s4470
        $region128: #{gpt2_forward.2} parent=123 // pred_fallthru
          _
      $region124: #{gpt2_forward.2} parent=5 // pred_fallthru
        _
    $region6: #{gpt2_forward.2} parent=1 // loop_footer
      %s40 = sadd.s32 1, %s36
    $region7: #{gpt2_forward.2} parent=1 // loop_footer_branch
      %35 = sbr.rel target = $region3
    $region8: #{gpt2_forward.2} parent=1 // loop_exit
      _
    %4472 = vsyncpa [#allocation4], 1
    %s4473 = scalar_lea.sflag [#allocation4], 1
    %4474 = vsyncpa %s4473, 1
    %4475 = vsyncpa [#allocation6], 1
    %s4476 = scalar_lea.sflag [#allocation6], 1
    %4477 = vsyncpa %s4476, 1
    %4478 = vsyncpa [#allocation9], 1
    %s4479 = scalar_lea.sflag [#allocation9], 1
    %4480 = vsyncpa %s4479, 1
    %4481 = vsyncpa [#allocation12], 1
    %s4482 = scalar_lea.sflag [#allocation12], 1
    %4483 = vsyncpa %s4482, 1
    %4484 = vsyncpa [#allocation15], 1
    %s4485 = scalar_lea.sflag [#allocation15], 1
    %4486 = vsyncpa %s4485, 1
    %4487 = vsyncpa [#allocation18], 1
    %s4488 = scalar_lea.sflag [#allocation18], 1
    %4489 = vsyncpa %s4488, 1

</llo_original>
